<compile_context>
chip_gen: v7x
topology: tpu7x:2x2x1
jax: 0.10.0
libtpu: 0.0.40
codegen_flags: <defaults>
</compile_context>

<pallas_src>
import jax
import jax.numpy as jnp
import numpy as np
from jax.experimental import pallas as pl
from jax.experimental.pallas import tpu as pltpu


# ----------------------------- fused kernel ---------------------------------
def make_dense_block_kernel(Nb, H, W, C0, growth, n_layers, compute_dtype):
    """Builds the fused kernel for fixed (Nb, H, W, C0, growth, n_layers)."""
    g = growth
    L = n_layers
    W_pad = W + 16          # zpad interior at columns [8, W+8): aligned stores

    def kernel(x_ref, scale_ref, shift_ref, bias_ref, *rest):
        # rest = [w_0 ... w_{L-1}, out, raw_scratch, zpad_scratch]
        w_refs = rest[:L]
        o_ref = rest[L]
        raw_ref = rest[L + 1]     # (Nb, H, W, C0 + L*g)   f32  raw (pre-BN) features
        zpad_ref = rest[L + 2]    # (Nb, H+2, W+16, 9*g)   f32  zero-halo tap slabs

        # Zero only the halo of the tap-slab scratch with 8-sublane-aligned
        # block stores; the interior is fully overwritten every layer.
        # Done every grid step (megacore-safe).
        zpad_ref[:, 0:1, :, :] = jnp.zeros((Nb, 1, W_pad, 9 * g), zpad_ref.dtype)
        zpad_ref[:, H + 1:H + 2, :, :] = jnp.zeros((Nb, 1, W_pad, 9 * g), zpad_ref.dtype)
        zpad_ref[:, :, 0:8, :] = jnp.zeros((Nb, H + 2, 8, 9 * g), zpad_ref.dtype)
        zpad_ref[:, :, W + 8:W + 16, :] = jnp.zeros((Nb, H + 2, 8, 9 * g), zpad_ref.dtype)

        # Stage the block input once into the raw-features scratch (channels [0:C0]).
        raw_ref[:, :, :, 0:C0] = x_ref[...]

        for l in range(L):
            cin = C0 + l * g
            sc = scale_ref[l, :cin]          # (cin,) f32
            sh = shift_ref[l, :cin]          # (cin,) f32
            b = bias_ref[l, :]               # (g,)   f32

            # BatchNorm (eval affine) + ReLU over ALL previous channels in one
            # contiguous read/compute (each layer has its own BN params for all
            # previous channels, so re-normalizing is required).  BN math stays
            # f32 on the VPU; the cast to the matmul dtype is fused here.
            a = jnp.maximum(raw_ref[:, :, :, :cin] * sc + sh, 0.0)      # f32
            a2 = a.astype(compute_dtype).reshape(Nb * H * W, cin)

            # One MXU matmul for the whole 3x3 conv:
            # (Nb*H*W, cin) x (cin, 9*g), f32 accumulation.  Column block
            # k*g:(k+1)*g of z is the contribution of conv tap k = 3*dy + dx.
            z = jnp.dot(a2, w_refs[l][...], preferred_element_type=jnp.float32)

            # Aligned, unmasked writeback of the tap slabs into the zero-halo
            # scratch (interior starts at sublane offset 8; halo == SAME
            # zero padding of the conv input).
            zpad_ref[:, 1:H + 1, 8:W + 8, :] = z.reshape(Nb, H, W, 9 * g)

            # Shift-accumulate the 9 tap slabs (VPU adds; lane/sublane shifts
            # on the XLU).
            acc = None
            for dy in range(3):
                for dx in range(3):
                    k = 3 * dy + dx
                    slab = zpad_ref[:, dy:dy + H, 7 + dx:7 + dx + W,
                                    k * g:(k + 1) * g]
                    acc = slab if acc is None else acc + slab
            out_l = acc + b                                              # (Nb,H,W,g) f32

            # Dense connectivity: new features go back into the raw scratch so
            # later layers read them contiguously.
            raw_ref[:, :, :, cin:cin + g] = out_l

        # ONE contiguous store of all new features per grid step
        # (single output DMA back to HBM per block of images).
        o_ref[...] = raw_ref[:, :, :, C0:C0 + L * g].astype(o_ref.dtype)

    return kernel


# ------------------------------- wrapper -------------------------------------
def _padded_bytes(shape, dtype):
    """Rough VMEM footprint of an array: last dim -> 128 lanes, 2nd-last -> native sublane tile."""
    itemsize = jnp.dtype(dtype).itemsize
    s = list(shape)
    s[-1] = -(-s[-1] // 128) * 128
    if len(s) >= 2:
        sub = max(8, 32 // itemsize)          # 8 for f32, 16 for bf16
        s[-2] = -(-s[-2] // sub) * sub
    return int(np.prod(s)) * itemsize


def dense_block_pallas(x_nhwc, params, *, compute_dtype=None, block_n=None):
    """DenseBlock forward.  x_nhwc: (N, H, W, C0) f32.  Returns (N, H, W, L*growth)."""
    N, H, W, C0 = x_nhwc.shape
    L = len(params)
    g = params[0]["w"].shape[-1]
    c_new = L * g
    c_max = C0 + (L - 1) * g          # widest BN/conv input
    c_total = C0 + L * g              # all raw features

    # Matmul operand dtype: f32 while channel counts are tiny (MXU has huge
    # slack, exact-f32 numerics for free); bf16 once cin reaches MXU-relevant
    # sizes (halves weight DMA / operand footprint).
    if compute_dtype is None:
        compute_dtype = jnp.bfloat16 if c_max >= 128 else jnp.float32

    # Batch blocking: several images per grid step when spatial work is tiny,
    # but keep at least 2 grid steps so both v7x TensorCores get work.
    if block_n is None:
        cap = max(1, (8 * 2 ** 20) // (4 * H * W * max(c_total, 128)))
        block_n = 1
        for d in range(1, max(1, N // 2) + 1):
            if N % d == 0 and d <= cap:
                block_n = d
    assert N % block_n == 0, f"block_n={block_n} must divide N={N}"
    Nb = block_n

    # ---- pack parameters -----------------------------------------------------
    scale_all = jnp.zeros((L, c_max), jnp.float32)
    shift_all = jnp.zeros((L, c_max), jnp.float32)
    bias_all = jnp.zeros((L, g), jnp.float32)
    w_list = []
    for l, p in enumerate(params):
        cin = C0 + l * g
        scale_all = scale_all.at[l, :cin].set(p["scale"].astype(jnp.float32))
        shift_all = shift_all.at[l, :cin].set(p["shift"].astype(jnp.float32))
        bias_all = bias_all.at[l, :].set(p["b"].astype(jnp.float32))
        # HWIO (3,3,cin,g) -> (cin, 9*g); column (3*dy+dx)*g + co.
        w_all = jnp.transpose(p["w"], (2, 0, 1, 3)).reshape(cin, 9 * g)
        w_list.append(w_all.astype(compute_dtype))

    inputs = [x_nhwc.astype(jnp.float32), scale_all, shift_all, bias_all] + w_list

    in_specs = [
        pl.BlockSpec((Nb, H, W, C0), lambda n: (n, 0, 0, 0)),
        pl.BlockSpec((L, c_max), lambda n: (0, 0)),
        pl.BlockSpec((L, c_max), lambda n: (0, 0)),
        pl.BlockSpec((L, g), lambda n: (0, 0)),
    ]
    for l in range(L):
        cin = C0 + l * g
        in_specs.append(pl.BlockSpec((cin, 9 * g), lambda n: (0, 0)))

    scratch_shapes = [
        pltpu.VMEM((Nb, H, W, c_total), jnp.float32),          # raw features
        pltpu.VMEM((Nb, H + 2, W + 16, 9 * g), jnp.float32),   # zero-halo tap slabs
    ]

    # ---- size-dependent VMEM limit (double-buffered blocks + scratch), 2x headroom
    est = 2 * _padded_bytes((Nb, H, W, C0), jnp.float32)
    est += 2 * _padded_bytes((Nb, H, W, c_new), jnp.float32)
    est += 2 * (2 * _padded_bytes((L, c_max), jnp.float32)
                + _padded_bytes((L, g), jnp.float32))
    for l in range(L):
        est += 2 * _padded_bytes((C0 + l * g, 9 * g), compute_dtype)
    est += _padded_bytes((Nb, H, W, c_total), jnp.float32)
    est += _padded_bytes((Nb, H + 2, W + 16, 9 * g), jnp.float32)
    vmem_limit = int(min(64 * 2 ** 20, max(32 * 2 ** 20, 2 * est)))

    kernel = make_dense_block_kernel(Nb, H, W, C0, g, L, compute_dtype)

    return pl.pallas_call(
        kernel,
        out_shape=jax.ShapeDtypeStruct((N, H, W, c_new), jnp.float32),
        grid_spec=pltpu.PrefetchScalarGridSpec(
            num_scalar_prefetch=0,
            grid=(N // Nb,),
            in_specs=in_specs,
            out_specs=pl.BlockSpec((Nb, H, W, c_new), lambda n: (n, 0, 0, 0)),
            scratch_shapes=scratch_shapes,
        ),
        compiler_params=pltpu.CompilerParams(
            dimension_semantics=("parallel",),     # v7x: batch blocks split across 2 TCs
            vmem_limit_bytes=vmem_limit,
        ),
    )(*inputs)


# ---------------- pure-JAX reference (for correctness check) ----------------
def ref_layer(x, scale, shift, w, b):
    a = jnp.maximum(x * scale + shift, 0.0)
    y = jax.lax.conv_general_dilated(
        a, w, window_strides=(1, 1), padding="SAME",
        dimension_numbers=("NHWC", "HWIO", "NHWC"),
        precision=jax.lax.Precision.HIGHEST)
    return y + b


def ref_dense_block(x_nhwc, params):
    feats = [x_nhwc]
    new_feats = []
    for p in params:
        inp = jnp.concatenate(feats, axis=-1)
        out = ref_layer(inp, p["scale"], p["shift"], p["w"], p["b"])
        feats.append(out)
        new_feats.append(out)
    return jnp.concatenate(new_feats, axis=-1)


def make_params(key, in_channels, n_layers, growth_rate, eps=1e-5):
    params = []
    cin = in_channels
    for _ in range(n_layers):
        key, k1, k2, k3, k4, k5, k6 = jax.random.split(key, 7)
        gamma = 1.0 + 0.1 * jax.random.normal(k1, (cin,), jnp.float32)
        beta = 0.1 * jax.random.normal(k2, (cin,), jnp.float32)
        r_mean = 0.1 * jax.random.normal(k3, (cin,), jnp.float32)
        r_var = 1.0 + 0.1 * jax.random.uniform(k4, (cin,), jnp.float32)
        w = 0.1 * jax.random.normal(k5, (3, 3, cin, growth_rate), jnp.float32)  # HWIO
        b = 0.05 * jax.random.normal(k6, (growth_rate,), jnp.float32)
        scale = gamma / jnp.sqrt(r_var + eps)
        shift = beta - r_mean * scale
        params.append(dict(scale=scale, shift=shift, w=w, b=b))
        cin += growth_rate
    return params


if __name__ == "__main__":
    in_channels, n_layers, growth_rate = 4, 3, 4
    H = W = 16

    key = jax.random.PRNGKey(0)
    key, kx = jax.random.split(key)
    params = make_params(key, in_channels, n_layers, growth_rate)

    # --- check 1: default (f32 matmul operands at these tiny channel counts),
    #              tight tolerance against the f32 reference -------------------
    N = 2
    x_nchw = jax.random.normal(kx, (N, in_channels, H, W), jnp.float32)  # PyTorch layout
    x_nhwc = jnp.transpose(x_nchw, (0, 2, 3, 1))                         # kernel layout
    out = jax.block_until_ready(dense_block_pallas(x_nhwc, params))
    expected = jax.block_until_ready(ref_dense_block(x_nhwc, params))
    assert out.shape == (N, H, W, n_layers * growth_rate), out.shape
    np.testing.assert_allclose(np.asarray(out), np.asarray(expected),
                               rtol=5e-3, atol=5e-3)

    # --- check 2: bf16 matmul operands + 2 images per grid step ---------------
    N2 = 4
    key, kx2 = jax.random.split(key)
    x2 = jnp.transpose(
        jax.random.normal(kx2, (N2, in_channels, H, W), jnp.float32), (0, 2, 3, 1))
    out2 = jax.block_until_ready(
        dense_block_pallas(x2, params, compute_dtype=jnp.bfloat16, block_n=2))
    expected2 = jax.block_until_ready(ref_dense_block(x2, params))
    assert out2.shape == (N2, H, W, n_layers * growth_rate), out2.shape
    np.testing.assert_allclose(np.asarray(out2), np.asarray(expected2),
                               rtol=5e-2, atol=5e-2)

    print("KERNEL_OK")
</pallas_src>

<mosaic_0001>
module attributes {stable_mosaic.version = 11 : i64} {
  func.func @kernel(%arg0: i32, %arg1: memref<1x16x16x4xf32, #tpu.memory_space<vmem>>, %arg2: memref<3x12xf32, #tpu.memory_space<vmem>>, %arg3: memref<3x12xf32, #tpu.memory_space<vmem>>, %arg4: memref<3x4xf32, #tpu.memory_space<vmem>>, %arg5: memref<4x36xf32, #tpu.memory_space<vmem>>, %arg6: memref<8x36xf32, #tpu.memory_space<vmem>>, %arg7: memref<12x36xf32, #tpu.memory_space<vmem>>, %arg8: memref<1x16x16x12xf32, #tpu.memory_space<vmem>>, %arg9: memref<1x16x16x16xf32, #tpu.memory_space<vmem>>, %arg10: memref<1x18x32x36xf32, #tpu.memory_space<vmem>>) attributes {dimension_semantics = [#tpu.dimension_semantics<parallel>], iteration_bounds = array<i64: 2>, scalar_prefetch = 0 : i64, scratch_operands = 2 : i64, tpu.core_type = #tpu.core_type<tc>, window_params = [{transform_indices = @transform_0, window_bounds = array<i64: 1, 16, 16, 4>}, {pipeline_mode = #tpu.pipeline_mode<synchronous>, transform_indices = @transform_1, window_bounds = array<i64: 3, 12>}, {pipeline_mode = #tpu.pipeline_mode<synchronous>, transform_indices = @transform_2, window_bounds = array<i64: 3, 12>}, {pipeline_mode = #tpu.pipeline_mode<synchronous>, transform_indices = @transform_3, window_bounds = array<i64: 3, 4>}, {pipeline_mode = #tpu.pipeline_mode<synchronous>, transform_indices = @transform_4, window_bounds = array<i64: 4, 36>}, {pipeline_mode = #tpu.pipeline_mode<synchronous>, transform_indices = @transform_5, window_bounds = array<i64: 8, 36>}, {pipeline_mode = #tpu.pipeline_mode<synchronous>, transform_indices = @transform_6, window_bounds = array<i64: 12, 36>}, {transform_indices = @transform_7, window_bounds = array<i64: 1, 16, 16, 12>}]} {
    %cst = arith.constant 0.000000e+00 : f32
    %0 = vector.broadcast %cst : f32 to vector<1x1x32x36xf32>
    %c0 = arith.constant 0 : index
    %c0_0 = arith.constant 0 : index
    %c0_1 = arith.constant 0 : index
    %c0_2 = arith.constant 0 : index
    %1 = vector.load %arg10[%c0, %c0_0, %c0_1, %c0_2] : memref<1x18x32x36xf32, #tpu.memory_space<vmem>>, vector<1x1x32x36xf32>
    tpu.vector_store %arg10[%c0, %c0_0, %c0_1, %c0_2], %0 {strides = array<i32>} : memref<1x18x32x36xf32, #tpu.memory_space<vmem>>, vector<1x1x32x36xf32>,
    %cst_3 = arith.constant 0.000000e+00 : f32
    %2 = vector.broadcast %cst_3 : f32 to vector<1x1x32x36xf32>
    %c0_4 = arith.constant 0 : index
    %c17 = arith.constant 17 : index
    %c0_5 = arith.constant 0 : index
    %c0_6 = arith.constant 0 : index
    %3 = vector.load %arg10[%c0_4, %c17, %c0_5, %c0_6] : memref<1x18x32x36xf32, #tpu.memory_space<vmem>>, vector<1x1x32x36xf32>
    tpu.vector_store %arg10[%c0_4, %c17, %c0_5, %c0_6], %2 {strides = array<i32>} : memref<1x18x32x36xf32, #tpu.memory_space<vmem>>, vector<1x1x32x36xf32>,
    %cst_7 = arith.constant 0.000000e+00 : f32
    %4 = vector.broadcast %cst_7 : f32 to vector<1x18x8x36xf32>
    %c0_8 = arith.constant 0 : index
    %c0_9 = arith.constant 0 : index
    %c0_10 = arith.constant 0 : index
    %c0_11 = arith.constant 0 : index
    %5 = vector.load %arg10[%c0_8, %c0_9, %c0_10, %c0_11] : memref<1x18x32x36xf32, #tpu.memory_space<vmem>>, vector<1x18x8x36xf32>
    tpu.vector_store %arg10[%c0_8, %c0_9, %c0_10, %c0_11], %4 {strides = array<i32>} : memref<1x18x32x36xf32, #tpu.memory_space<vmem>>, vector<1x18x8x36xf32>,
    %cst_12 = arith.constant 0.000000e+00 : f32
    %6 = vector.broadcast %cst_12 : f32 to vector<1x18x8x36xf32>
    %c0_13 = arith.constant 0 : index
    %c0_14 = arith.constant 0 : index
    %c24 = arith.constant 24 : index
    %c0_15 = arith.constant 0 : index
    %7 = vector.load %arg10[%c0_13, %c0_14, %c24, %c0_15] : memref<1x18x32x36xf32, #tpu.memory_space<vmem>>, vector<1x18x8x36xf32>
    tpu.vector_store %arg10[%c0_13, %c0_14, %c24, %c0_15], %6 {strides = array<i32>} : memref<1x18x32x36xf32, #tpu.memory_space<vmem>>, vector<1x18x8x36xf32>,
    %c0_16 = arith.constant 0 : index
    %c0_17 = arith.constant 0 : index
    %c0_18 = arith.constant 0 : index
    %c0_19 = arith.constant 0 : index
    %8 = vector.load %arg1[%c0_16, %c0_17, %c0_18, %c0_19] : memref<1x16x16x4xf32, #tpu.memory_space<vmem>>, vector<1x16x16x4xf32>
    %c0_20 = arith.constant 0 : index
    %c0_21 = arith.constant 0 : index
    %c0_22 = arith.constant 0 : index
    %c0_23 = arith.constant 0 : index
    %9 = vector.load %arg9[%c0_20, %c0_21, %c0_22, %c0_23] : memref<1x16x16x16xf32, #tpu.memory_space<vmem>>, vector<1x16x16x4xf32>
    tpu.vector_store %arg9[%c0_20, %c0_21, %c0_22, %c0_23], %8 {strides = array<i32>} : memref<1x16x16x16xf32, #tpu.memory_space<vmem>>, vector<1x16x16x4xf32>,
    %c0_24 = arith.constant 0 : index
    %c0_25 = arith.constant 0 : index
    %10 = vector.load %arg2[%c0_24, %c0_25] : memref<3x12xf32, #tpu.memory_space<vmem>>, vector<1x4xf32>
    %11 = vector.shape_cast %10 : vector<1x4xf32> to vector<4xf32>
    %c0_26 = arith.constant 0 : index
    %c0_27 = arith.constant 0 : index
    %12 = vector.load %arg3[%c0_26, %c0_27] : memref<3x12xf32, #tpu.memory_space<vmem>>, vector<1x4xf32>
    %13 = vector.shape_cast %12 : vector<1x4xf32> to vector<4xf32>
    %c0_28 = arith.constant 0 : index
    %c0_29 = arith.constant 0 : index
    %14 = vector.load %arg4[%c0_28, %c0_29] : memref<3x4xf32, #tpu.memory_space<vmem>>, vector<1x4xf32>
    %15 = vector.shape_cast %14 : vector<1x4xf32> to vector<4xf32>
    %c0_30 = arith.constant 0 : index
    %c0_31 = arith.constant 0 : index
    %c0_32 = arith.constant 0 : index
    %c0_33 = arith.constant 0 : index
    %16 = vector.load %arg9[%c0_30, %c0_31, %c0_32, %c0_33] : memref<1x16x16x16xf32, #tpu.memory_space<vmem>>, vector<1x16x16x4xf32>
    %17 = vector.shape_cast %11 : vector<4xf32> to vector<1x1x1x4xf32>
    %18 = vector.broadcast %17 : vector<1x1x1x4xf32> to vector<1x16x16x4xf32>
    %19 = arith.mulf %16, %18 : vector<1x16x16x4xf32>
    %20 = vector.shape_cast %13 : vector<4xf32> to vector<1x1x1x4xf32>
    %21 = vector.broadcast %20 : vector<1x1x1x4xf32> to vector<1x16x16x4xf32>
    %22 = arith.addf %19, %21 : vector<1x16x16x4xf32>
    %cst_34 = arith.constant 0.000000e+00 : f32
    %23 = vector.broadcast %cst_34 : f32 to vector<1x16x16x4xf32>
    %24 = arith.maximumf %22, %23 : vector<1x16x16x4xf32>
    %25 = vector.shape_cast %24 : vector<1x16x16x4xf32> to vector<256x4xf32>
    %c0_35 = arith.constant 0 : index
    %c0_36 = arith.constant 0 : index
    %26 = vector.load %arg5[%c0_35, %c0_36] : memref<4x36xf32, #tpu.memory_space<vmem>>, vector<4x36xf32>
    %cst_37 = arith.constant dense<0.000000e+00> : vector<256x36xf32>
    %27 = tpu.matmul %25, %26, %cst_37 {dimension_numbers = #tpu.dot_dimension_numbers<[1], [0], [0], [1], [0, 0, 1, 1], [], []>} : vector<256x4xf32>, vector<4x36xf32>, vector<256x36xf32> -> vector<256x36xf32>
    %28 = vector.shape_cast %27 : vector<256x36xf32> to vector<1x16x16x36xf32>
    %c0_38 = arith.constant 0 : index
    %c1 = arith.constant 1 : index
    %c8 = arith.constant 8 : index
    %c0_39 = arith.constant 0 : index
    %29 = vector.load %arg10[%c0_38, %c1, %c8, %c0_39] : memref<1x18x32x36xf32, #tpu.memory_space<vmem>>, vector<1x16x16x36xf32>
    tpu.vector_store %arg10[%c0_38, %c1, %c8, %c0_39], %28 {strides = array<i32>} : memref<1x18x32x36xf32, #tpu.memory_space<vmem>>, vector<1x16x16x36xf32>,
    %c0_40 = arith.constant 0 : index
    %c0_41 = arith.constant 0 : index
    %c7 = arith.constant 7 : index
    %c0_42 = arith.constant 0 : index
    %30 = vector.load %arg10[%c0_40, %c0_41, %c7, %c0_42] : memref<1x18x32x36xf32, #tpu.memory_space<vmem>>, vector<1x16x16x4xf32>
    %c0_43 = arith.constant 0 : index
    %c0_44 = arith.constant 0 : index
    %c8_45 = arith.constant 8 : index
    %c4 = arith.constant 4 : index
    %31 = vector.load %arg10[%c0_43, %c0_44, %c8_45, %c4] : memref<1x18x32x36xf32, #tpu.memory_space<vmem>>, vector<1x16x16x4xf32>
    %32 = arith.addf %30, %31 : vector<1x16x16x4xf32>
    %c0_46 = arith.constant 0 : index
    %c0_47 = arith.constant 0 : index
    %c9 = arith.constant 9 : index
    %c8_48 = arith.constant 8 : index
    %33 = vector.load %arg10[%c0_46, %c0_47, %c9, %c8_48] : memref<1x18x32x36xf32, #tpu.memory_space<vmem>>, vector<1x16x16x4xf32>
    %34 = arith.addf %32, %33 : vector<1x16x16x4xf32>
    %c0_49 = arith.constant 0 : index
    %c1_50 = arith.constant 1 : index
    %c7_51 = arith.constant 7 : index
    %c12 = arith.constant 12 : index
    %35 = vector.load %arg10[%c0_49, %c1_50, %c7_51, %c12] : memref<1x18x32x36xf32, #tpu.memory_space<vmem>>, vector<1x16x16x4xf32>
    %36 = arith.addf %34, %35 : vector<1x16x16x4xf32>
    %c0_52 = arith.constant 0 : index
    %c1_53 = arith.constant 1 : index
    %c8_54 = arith.constant 8 : index
    %c16 = arith.constant 16 : index
    %37 = vector.load %arg10[%c0_52, %c1_53, %c8_54, %c16] : memref<1x18x32x36xf32, #tpu.memory_space<vmem>>, vector<1x16x16x4xf32>
    %38 = arith.addf %36, %37 : vector<1x16x16x4xf32>
    %c0_55 = arith.constant 0 : index
    %c1_56 = arith.constant 1 : index
    %c9_57 = arith.constant 9 : index
    %c20 = arith.constant 20 : index
    %39 = vector.load %arg10[%c0_55, %c1_56, %c9_57, %c20] : memref<1x18x32x36xf32, #tpu.memory_space<vmem>>, vector<1x16x16x4xf32>
    %40 = arith.addf %38, %39 : vector<1x16x16x4xf32>
    %c0_58 = arith.constant 0 : index
    %c2 = arith.constant 2 : index
    %c7_59 = arith.constant 7 : index
    %c24_60 = arith.constant 24 : index
    %41 = vector.load %arg10[%c0_58, %c2, %c7_59, %c24_60] : memref<1x18x32x36xf32, #tpu.memory_space<vmem>>, vector<1x16x16x4xf32>
    %42 = arith.addf %40, %41 : vector<1x16x16x4xf32>
    %c0_61 = arith.constant 0 : index
    %c2_62 = arith.constant 2 : index
    %c8_63 = arith.constant 8 : index
    %c28 = arith.constant 28 : index
    %43 = vector.load %arg10[%c0_61, %c2_62, %c8_63, %c28] : memref<1x18x32x36xf32, #tpu.memory_space<vmem>>, vector<1x16x16x4xf32>
    %44 = arith.addf %42, %43 : vector<1x16x16x4xf32>
    %c0_64 = arith.constant 0 : index
    %c2_65 = arith.constant 2 : index
    %c9_66 = arith.constant 9 : index
    %c32 = arith.constant 32 : index
    %45 = vector.load %arg10[%c0_64, %c2_65, %c9_66, %c32] : memref<1x18x32x36xf32, #tpu.memory_space<vmem>>, vector<1x16x16x4xf32>
    %46 = arith.addf %44, %45 : vector<1x16x16x4xf32>
    %47 = vector.shape_cast %15 : vector<4xf32> to vector<1x1x1x4xf32>
    %48 = vector.broadcast %47 : vector<1x1x1x4xf32> to vector<1x16x16x4xf32>
    %49 = arith.addf %46, %48 : vector<1x16x16x4xf32>
    %c0_67 = arith.constant 0 : index
    %c0_68 = arith.constant 0 : index
    %c0_69 = arith.constant 0 : index
    %c4_70 = arith.constant 4 : index
    %50 = vector.load %arg9[%c0_67, %c0_68, %c0_69, %c4_70] : memref<1x16x16x16xf32, #tpu.memory_space<vmem>>, vector<1x16x16x4xf32>
    tpu.vector_store %arg9[%c0_67, %c0_68, %c0_69, %c4_70], %49 {strides = array<i32>} : memref<1x16x16x16xf32, #tpu.memory_space<vmem>>, vector<1x16x16x4xf32>,
    %c1_71 = arith.constant 1 : index
    %c0_72 = arith.constant 0 : index
    %51 = vector.load %arg2[%c1_71, %c0_72] : memref<3x12xf32, #tpu.memory_space<vmem>>, vector<1x8xf32>
    %52 = vector.shape_cast %51 : vector<1x8xf32> to vector<8xf32>
    %c1_73 = arith.constant 1 : index
    %c0_74 = arith.constant 0 : index
    %53 = vector.load %arg3[%c1_73, %c0_74] : memref<3x12xf32, #tpu.memory_space<vmem>>, vector<1x8xf32>
    %54 = vector.shape_cast %53 : vector<1x8xf32> to vector<8xf32>
    %c1_75 = arith.constant 1 : index
    %c0_76 = arith.constant 0 : index
    %55 = vector.load %arg4[%c1_75, %c0_76] : memref<3x4xf32, #tpu.memory_space<vmem>>, vector<1x4xf32>
    %56 = vector.shape_cast %55 : vector<1x4xf32> to vector<4xf32>
    %c0_77 = arith.constant 0 : index
    %c0_78 = arith.constant 0 : index
    %c0_79 = arith.constant 0 : index
    %c0_80 = arith.constant 0 : index
    %57 = vector.load %arg9[%c0_77, %c0_78, %c0_79, %c0_80] : memref<1x16x16x16xf32, #tpu.memory_space<vmem>>, vector<1x16x16x8xf32>
    %58 = vector.shape_cast %52 : vector<8xf32> to vector<1x1x1x8xf32>
    %59 = vector.broadcast %58 : vector<1x1x1x8xf32> to vector<1x16x16x8xf32>
    %60 = arith.mulf %57, %59 : vector<1x16x16x8xf32>
    %61 = vector.shape_cast %54 : vector<8xf32> to vector<1x1x1x8xf32>
    %62 = vector.broadcast %61 : vector<1x1x1x8xf32> to vector<1x16x16x8xf32>
    %63 = arith.addf %60, %62 : vector<1x16x16x8xf32>
    %cst_81 = arith.constant 0.000000e+00 : f32
    %64 = vector.broadcast %cst_81 : f32 to vector<1x16x16x8xf32>
    %65 = arith.maximumf %63, %64 : vector<1x16x16x8xf32>
    %66 = vector.shape_cast %65 : vector<1x16x16x8xf32> to vector<256x8xf32>
    %c0_82 = arith.constant 0 : index
    %c0_83 = arith.constant 0 : index
    %67 = vector.load %arg6[%c0_82, %c0_83] : memref<8x36xf32, #tpu.memory_space<vmem>>, vector<8x36xf32>
    %cst_84 = arith.constant dense<0.000000e+00> : vector<256x36xf32>
    %68 = tpu.matmul %66, %67, %cst_84 {dimension_numbers = #tpu.dot_dimension_numbers<[1], [0], [0], [1], [0, 0, 1, 1], [], []>} : vector<256x8xf32>, vector<8x36xf32>, vector<256x36xf32> -> vector<256x36xf32>
    %69 = vector.shape_cast %68 : vector<256x36xf32> to vector<1x16x16x36xf32>
    %c0_85 = arith.constant 0 : index
    %c1_86 = arith.constant 1 : index
    %c8_87 = arith.constant 8 : index
    %c0_88 = arith.constant 0 : index
    %70 = vector.load %arg10[%c0_85, %c1_86, %c8_87, %c0_88] : memref<1x18x32x36xf32, #tpu.memory_space<vmem>>, vector<1x16x16x36xf32>
    tpu.vector_store %arg10[%c0_85, %c1_86, %c8_87, %c0_88], %69 {strides = array<i32>} : memref<1x18x32x36xf32, #tpu.memory_space<vmem>>, vector<1x16x16x36xf32>,
    %c0_89 = arith.constant 0 : index
    %c0_90 = arith.constant 0 : index
    %c7_91 = arith.constant 7 : index
    %c0_92 = arith.constant 0 : index
    %71 = vector.load %arg10[%c0_89, %c0_90, %c7_91, %c0_92] : memref<1x18x32x36xf32, #tpu.memory_space<vmem>>, vector<1x16x16x4xf32>
    %c0_93 = arith.constant 0 : index
    %c0_94 = arith.constant 0 : index
    %c8_95 = arith.constant 8 : index
    %c4_96 = arith.constant 4 : index
    %72 = vector.load %arg10[%c0_93, %c0_94, %c8_95, %c4_96] : memref<1x18x32x36xf32, #tpu.memory_space<vmem>>, vector<1x16x16x4xf32>
    %73 = arith.addf %71, %72 : vector<1x16x16x4xf32>
    %c0_97 = arith.constant 0 : index
    %c0_98 = arith.constant 0 : index
    %c9_99 = arith.constant 9 : index
    %c8_100 = arith.constant 8 : index
    %74 = vector.load %arg10[%c0_97, %c0_98, %c9_99, %c8_100] : memref<1x18x32x36xf32, #tpu.memory_space<vmem>>, vector<1x16x16x4xf32>
    %75 = arith.addf %73, %74 : vector<1x16x16x4xf32>
    %c0_101 = arith.constant 0 : index
    %c1_102 = arith.constant 1 : index
    %c7_103 = arith.constant 7 : index
    %c12_104 = arith.constant 12 : index
    %76 = vector.load %arg10[%c0_101, %c1_102, %c7_103, %c12_104] : memref<1x18x32x36xf32, #tpu.memory_space<vmem>>, vector<1x16x16x4xf32>
    %77 = arith.addf %75, %76 : vector<1x16x16x4xf32>
    %c0_105 = arith.constant 0 : index
    %c1_106 = arith.constant 1 : index
    %c8_107 = arith.constant 8 : index
    %c16_108 = arith.constant 16 : index
    %78 = vector.load %arg10[%c0_105, %c1_106, %c8_107, %c16_108] : memref<1x18x32x36xf32, #tpu.memory_space<vmem>>, vector<1x16x16x4xf32>
    %79 = arith.addf %77, %78 : vector<1x16x16x4xf32>
    %c0_109 = arith.constant 0 : index
    %c1_110 = arith.constant 1 : index
    %c9_111 = arith.constant 9 : index
    %c20_112 = arith.constant 20 : index
    %80 = vector.load %arg10[%c0_109, %c1_110, %c9_111, %c20_112] : memref<1x18x32x36xf32, #tpu.memory_space<vmem>>, vector<1x16x16x4xf32>
    %81 = arith.addf %79, %80 : vector<1x16x16x4xf32>
    %c0_113 = arith.constant 0 : index
    %c2_114 = arith.constant 2 : index
    %c7_115 = arith.constant 7 : index
    %c24_116 = arith.constant 24 : index
    %82 = vector.load %arg10[%c0_113, %c2_114, %c7_115, %c24_116] : memref<1x18x32x36xf32, #tpu.memory_space<vmem>>, vector<1x16x16x4xf32>
    %83 = arith.addf %81, %82 : vector<1x16x16x4xf32>
    %c0_117 = arith.constant 0 : index
    %c2_118 = arith.constant 2 : index
    %c8_119 = arith.constant 8 : index
    %c28_120 = arith.constant 28 : index
    %84 = vector.load %arg10[%c0_117, %c2_118, %c8_119, %c28_120] : memref<1x18x32x36xf32, #tpu.memory_space<vmem>>, vector<1x16x16x4xf32>
    %85 = arith.addf %83, %84 : vector<1x16x16x4xf32>
    %c0_121 = arith.constant 0 : index
    %c2_122 = arith.constant 2 : index
    %c9_123 = arith.constant 9 : index
    %c32_124 = arith.constant 32 : index
    %86 = vector.load %arg10[%c0_121, %c2_122, %c9_123, %c32_124] : memref<1x18x32x36xf32, #tpu.memory_space<vmem>>, vector<1x16x16x4xf32>
    %87 = arith.addf %85, %86 : vector<1x16x16x4xf32>
    %88 = vector.shape_cast %56 : vector<4xf32> to vector<1x1x1x4xf32>
    %89 = vector.broadcast %88 : vector<1x1x1x4xf32> to vector<1x16x16x4xf32>
    %90 = arith.addf %87, %89 : vector<1x16x16x4xf32>
    %c0_125 = arith.constant 0 : index
    %c0_126 = arith.constant 0 : index
    %c0_127 = arith.constant 0 : index
    %c8_128 = arith.constant 8 : index
    %91 = vector.load %arg9[%c0_125, %c0_126, %c0_127, %c8_128] : memref<1x16x16x16xf32, #tpu.memory_space<vmem>>, vector<1x16x16x4xf32>
    tpu.vector_store %arg9[%c0_125, %c0_126, %c0_127, %c8_128], %90 {strides = array<i32>} : memref<1x16x16x16xf32, #tpu.memory_space<vmem>>, vector<1x16x16x4xf32>,
    %c2_129 = arith.constant 2 : index
    %c0_130 = arith.constant 0 : index
    %92 = vector.load %arg2[%c2_129, %c0_130] : memref<3x12xf32, #tpu.memory_space<vmem>>, vector<1x12xf32>
    %93 = vector.shape_cast %92 : vector<1x12xf32> to vector<12xf32>
    %c2_131 = arith.constant 2 : index
    %c0_132 = arith.constant 0 : index
    %94 = vector.load %arg3[%c2_131, %c0_132] : memref<3x12xf32, #tpu.memory_space<vmem>>, vector<1x12xf32>
    %95 = vector.shape_cast %94 : vector<1x12xf32> to vector<12xf32>
    %c2_133 = arith.constant 2 : index
    %c0_134 = arith.constant 0 : index
    %96 = vector.load %arg4[%c2_133, %c0_134] : memref<3x4xf32, #tpu.memory_space<vmem>>, vector<1x4xf32>
    %97 = vector.shape_cast %96 : vector<1x4xf32> to vector<4xf32>
    %c0_135 = arith.constant 0 : index
    %c0_136 = arith.constant 0 : index
    %c0_137 = arith.constant 0 : index
    %c0_138 = arith.constant 0 : index
    %98 = vector.load %arg9[%c0_135, %c0_136, %c0_137, %c0_138] : memref<1x16x16x16xf32, #tpu.memory_space<vmem>>, vector<1x16x16x12xf32>
    %99 = vector.shape_cast %93 : vector<12xf32> to vector<1x1x1x12xf32>
    %100 = vector.broadcast %99 : vector<1x1x1x12xf32> to vector<1x16x16x12xf32>
    %101 = arith.mulf %98, %100 : vector<1x16x16x12xf32>
    %102 = vector.shape_cast %95 : vector<12xf32> to vector<1x1x1x12xf32>
    %103 = vector.broadcast %102 : vector<1x1x1x12xf32> to vector<1x16x16x12xf32>
    %104 = arith.addf %101, %103 : vector<1x16x16x12xf32>
    %cst_139 = arith.constant 0.000000e+00 : f32
    %105 = vector.broadcast %cst_139 : f32 to vector<1x16x16x12xf32>
    %106 = arith.maximumf %104, %105 : vector<1x16x16x12xf32>
    %107 = vector.shape_cast %106 : vector<1x16x16x12xf32> to vector<256x12xf32>
    %c0_140 = arith.constant 0 : index
    %c0_141 = arith.constant 0 : index
    %108 = vector.load %arg7[%c0_140, %c0_141] : memref<12x36xf32, #tpu.memory_space<vmem>>, vector<12x36xf32>
    %cst_142 = arith.constant dense<0.000000e+00> : vector<256x36xf32>
    %109 = tpu.matmul %107, %108, %cst_142 {dimension_numbers = #tpu.dot_dimension_numbers<[1], [0], [0], [1], [0, 0, 1, 1], [], []>} : vector<256x12xf32>, vector<12x36xf32>, vector<256x36xf32> -> vector<256x36xf32>
    %110 = vector.shape_cast %109 : vector<256x36xf32> to vector<1x16x16x36xf32>
    %c0_143 = arith.constant 0 : index
    %c1_144 = arith.constant 1 : index
    %c8_145 = arith.constant 8 : index
    %c0_146 = arith.constant 0 : index
    %111 = vector.load %arg10[%c0_143, %c1_144, %c8_145, %c0_146] : memref<1x18x32x36xf32, #tpu.memory_space<vmem>>, vector<1x16x16x36xf32>
    tpu.vector_store %arg10[%c0_143, %c1_144, %c8_145, %c0_146], %110 {strides = array<i32>} : memref<1x18x32x36xf32, #tpu.memory_space<vmem>>, vector<1x16x16x36xf32>,
    %c0_147 = arith.constant 0 : index
    %c0_148 = arith.constant 0 : index
    %c7_149 = arith.constant 7 : index
    %c0_150 = arith.constant 0 : index
    %112 = vector.load %arg10[%c0_147, %c0_148, %c7_149, %c0_150] : memref<1x18x32x36xf32, #tpu.memory_space<vmem>>, vector<1x16x16x4xf32>
    %c0_151 = arith.constant 0 : index
    %c0_152 = arith.constant 0 : index
    %c8_153 = arith.constant 8 : index
    %c4_154 = arith.constant 4 : index
    %113 = vector.load %arg10[%c0_151, %c0_152, %c8_153, %c4_154] : memref<1x18x32x36xf32, #tpu.memory_space<vmem>>, vector<1x16x16x4xf32>
    %114 = arith.addf %112, %113 : vector<1x16x16x4xf32>
    %c0_155 = arith.constant 0 : index
    %c0_156 = arith.constant 0 : index
    %c9_157 = arith.constant 9 : index
    %c8_158 = arith.constant 8 : index
    %115 = vector.load %arg10[%c0_155, %c0_156, %c9_157, %c8_158] : memref<1x18x32x36xf32, #tpu.memory_space<vmem>>, vector<1x16x16x4xf32>
    %116 = arith.addf %114, %115 : vector<1x16x16x4xf32>
    %c0_159 = arith.constant 0 : index
    %c1_160 = arith.constant 1 : index
    %c7_161 = arith.constant 7 : index
    %c12_162 = arith.constant 12 : index
    %117 = vector.load %arg10[%c0_159, %c1_160, %c7_161, %c12_162] : memref<1x18x32x36xf32, #tpu.memory_space<vmem>>, vector<1x16x16x4xf32>
    %118 = arith.addf %116, %117 : vector<1x16x16x4xf32>
    %c0_163 = arith.constant 0 : index
    %c1_164 = arith.constant 1 : index
    %c8_165 = arith.constant 8 : index
    %c16_166 = arith.constant 16 : index
    %119 = vector.load %arg10[%c0_163, %c1_164, %c8_165, %c16_166] : memref<1x18x32x36xf32, #tpu.memory_space<vmem>>, vector<1x16x16x4xf32>
    %120 = arith.addf %118, %119 : vector<1x16x16x4xf32>
    %c0_167 = arith.constant 0 : index
    %c1_168 = arith.constant 1 : index
    %c9_169 = arith.constant 9 : index
    %c20_170 = arith.constant 20 : index
    %121 = vector.load %arg10[%c0_167, %c1_168, %c9_169, %c20_170] : memref<1x18x32x36xf32, #tpu.memory_space<vmem>>, vector<1x16x16x4xf32>
    %122 = arith.addf %120, %121 : vector<1x16x16x4xf32>
    %c0_171 = arith.constant 0 : index
    %c2_172 = arith.constant 2 : index
    %c7_173 = arith.constant 7 : index
    %c24_174 = arith.constant 24 : index
    %123 = vector.load %arg10[%c0_171, %c2_172, %c7_173, %c24_174] : memref<1x18x32x36xf32, #tpu.memory_space<vmem>>, vector<1x16x16x4xf32>
    %124 = arith.addf %122, %123 : vector<1x16x16x4xf32>
    %c0_175 = arith.constant 0 : index
    %c2_176 = arith.constant 2 : index
    %c8_177 = arith.constant 8 : index
    %c28_178 = arith.constant 28 : index
    %125 = vector.load %arg10[%c0_175, %c2_176, %c8_177, %c28_178] : memref<1x18x32x36xf32, #tpu.memory_space<vmem>>, vector<1x16x16x4xf32>
    %126 = arith.addf %124, %125 : vector<1x16x16x4xf32>
    %c0_179 = arith.constant 0 : index
    %c2_180 = arith.constant 2 : index
    %c9_181 = arith.constant 9 : index
    %c32_182 = arith.constant 32 : index
    %127 = vector.load %arg10[%c0_179, %c2_180, %c9_181, %c32_182] : memref<1x18x32x36xf32, #tpu.memory_space<vmem>>, vector<1x16x16x4xf32>
    %128 = arith.addf %126, %127 : vector<1x16x16x4xf32>
    %129 = vector.shape_cast %97 : vector<4xf32> to vector<1x1x1x4xf32>
    %130 = vector.broadcast %129 : vector<1x1x1x4xf32> to vector<1x16x16x4xf32>
    %131 = arith.addf %128, %130 : vector<1x16x16x4xf32>
    %c0_183 = arith.constant 0 : index
    %c0_184 = arith.constant 0 : index
    %c0_185 = arith.constant 0 : index
    %c12_186 = arith.constant 12 : index
    %132 = vector.load %arg9[%c0_183, %c0_184, %c0_185, %c12_186] : memref<1x16x16x16xf32, #tpu.memory_space<vmem>>, vector<1x16x16x4xf32>
    tpu.vector_store %arg9[%c0_183, %c0_184, %c0_185, %c12_186], %131 {strides = array<i32>} : memref<1x16x16x16xf32, #tpu.memory_space<vmem>>, vector<1x16x16x4xf32>,
    %c0_187 = arith.constant 0 : index
    %c0_188 = arith.constant 0 : index
    %c0_189 = arith.constant 0 : index
    %c4_190 = arith.constant 4 : index
    %133 = vector.load %arg9[%c0_187, %c0_188, %c0_189, %c4_190] : memref<1x16x16x16xf32, #tpu.memory_space<vmem>>, vector<1x16x16x12xf32>
    %c0_191 = arith.constant 0 : index
    %c0_192 = arith.constant 0 : index
    %c0_193 = arith.constant 0 : index
    %c0_194 = arith.constant 0 : index
    %134 = vector.load %arg8[%c0_191, %c0_192, %c0_193, %c0_194] : memref<1x16x16x12xf32, #tpu.memory_space<vmem>>, vector<1x16x16x12xf32>
    tpu.vector_store %arg8[%c0_191, %c0_192, %c0_193, %c0_194], %133 {strides = array<i32>} : memref<1x16x16x12xf32, #tpu.memory_space<vmem>>, vector<1x16x16x12xf32>,
    return
  }
  func.func @transform_0(%arg0: i32) -> (i32, i32, i32, i32) {
    %c0_i32 = arith.constant 0 : i32
    %c0_i32_0 = arith.constant 0 : i32
    %c0_i32_1 = arith.constant 0 : i32
    %c0_i32_2 = arith.constant 0 : i32
    return %arg0, %c0_i32, %c0_i32_0, %c0_i32_1 : i32, i32, i32, i32
  }
  func.func @transform_1(%arg0: i32) -> (i32, i32) {
    %c0_i32 = arith.constant 0 : i32
    %c0_i32_0 = arith.constant 0 : i32
    %c0_i32_1 = arith.constant 0 : i32
    return %c0_i32, %c0_i32_0 : i32, i32
  }
  func.func @transform_2(%arg0: i32) -> (i32, i32) {
    %c0_i32 = arith.constant 0 : i32
    %c0_i32_0 = arith.constant 0 : i32
    %c0_i32_1 = arith.constant 0 : i32
    return %c0_i32, %c0_i32_0 : i32, i32
  }
  func.func @transform_3(%arg0: i32) -> (i32, i32) {
    %c0_i32 = arith.constant 0 : i32
    %c0_i32_0 = arith.constant 0 : i32
    %c0_i32_1 = arith.constant 0 : i32
    return %c0_i32, %c0_i32_0 : i32, i32
  }
  func.func @transform_4(%arg0: i32) -> (i32, i32) {
    %c0_i32 = arith.constant 0 : i32
    %c0_i32_0 = arith.constant 0 : i32
    %c0_i32_1 = arith.constant 0 : i32
    return %c0_i32, %c0_i32_0 : i32, i32
  }
  func.func @transform_5(%arg0: i32) -> (i32, i32) {
    %c0_i32 = arith.constant 0 : i32
    %c0_i32_0 = arith.constant 0 : i32
    %c0_i32_1 = arith.constant 0 : i32
    return %c0_i32, %c0_i32_0 : i32, i32
  }
  func.func @transform_6(%arg0: i32) -> (i32, i32) {
    %c0_i32 = arith.constant 0 : i32
    %c0_i32_0 = arith.constant 0 : i32
    %c0_i32_1 = arith.constant 0 : i32
    return %c0_i32, %c0_i32_0 : i32, i32
  }
  func.func @transform_7(%arg0: i32) -> (i32, i32, i32, i32) {
    %c0_i32 = arith.constant 0 : i32
    %c0_i32_0 = arith.constant 0 : i32
    %c0_i32_1 = arith.constant 0 : i32
    %c0_i32_2 = arith.constant 0 : i32
    return %arg0, %c0_i32, %c0_i32_0, %c0_i32_1 : i32, i32, i32, i32
  }
}

</mosaic_0001>

<llo_original>
// kernel: tpu_custom_call.1
$region0: #{tpu_custom_call.1}
  #allocation0 [shape = 'u32[]', space=smem, size = 0x4, offset = 0x4, fixed_abs, tag = 'smem constant byte address 0x4 - core index']
  #allocation1 [shape = 'u32[144,128]{1,0:T(1,128)}', space=vmem, size = 0x12000, scoped, tag = 'internal scratch']
  #allocation2 [shape = 'f32[1,16,16,16]{3,2,1,0:T(8,128)}', space=vmem, size = 0x20000, scoped, tag = 'scratch operand']
  #allocation3 [shape = 'f32[1,18,32,36]{3,2,1,0:T(8,128)}', space=vmem, size = 0x48000, scoped, tag = 'scratch operand']
  %s0 = inlined_call_operand.vmem [shape: f32[2,16,16,4], index: 0, kind: input, shape index: {}]
  %s1 = inlined_call_operand.vmem [shape: f32[3,12], index: 1, kind: input, shape index: {}]
  %s2 = inlined_call_operand.vmem [shape: f32[3,12], index: 2, kind: input, shape index: {}]
  %s3 = inlined_call_operand.vmem [shape: f32[3,4], index: 3, kind: input, shape index: {}]
  %s4 = inlined_call_operand.vmem [shape: f32[4,36], index: 4, kind: input, shape index: {}]
  %s5 = inlined_call_operand.vmem [shape: f32[8,36], index: 5, kind: input, shape index: {}]
  %s6 = inlined_call_operand.vmem [shape: f32[12,36], index: 6, kind: input, shape index: {}]
  %s7 = inlined_call_operand.vmem [shape: f32[2,16,16,12], index: 7, kind: output, shape index: {}]
  %s8 = sld [smem:[#allocation0]]
  $region61: #{tpu_custom_call.1} parent=0
    _
  %s10 = ssub.s32 1, %s8
  %s11 = scalar_select 0, %s10, %s8
  loop: start=0, step=1, limit=4
  $region2: #{tpu_custom_call.1} parent=0 // loop_pre_header
    _
  $region3: #{tpu_custom_call.1} parent=0 // loop_header
    %s13 = sphi 0, %s17
    %p14 = scmp.ge.s32.totalorder %s13, 4
    %s23 = sphi 0, %s25
    %s26 = sphi 0, %s23
    %s27 = sphi 0, %s26
    %s43 = sphi 0, %s27
    %s47 = sphi 0, %s47
    %s49 = sphi 0, %s47
    %s50 = sphi 0, %s49
    %s64 = sphi 0, %s50
    %s68 = sphi 0, %s68
    %s70 = sphi 0, %s68
    %s71 = sphi 0, %s70
    %s85 = sphi 0, %s71
    %s89 = sphi 0, %s89
    %s91 = sphi 0, %s89
    %s92 = sphi 0, %s91
    %s106 = sphi 0, %s92
    %s110 = sphi 0, %s110
    %s112 = sphi 0, %s110
    %s113 = sphi 0, %s112
    %s127 = sphi 0, %s113
    %s131 = sphi 0, %s131
    %s133 = sphi 0, %s131
    %s134 = sphi 0, %s133
    %s148 = sphi 0, %s134
    %s152 = sphi 0, %s152
    %s154 = sphi 0, %s152
    %s155 = sphi 0, %s154
    %s169 = sphi 0, %s155
    %s175 = sphi 0, %s177
    %s178 = sphi 0, %s175
    %s179 = sphi 0, %s178
    %s195 = sphi 0, %s179
  $region4: #{tpu_custom_call.1} parent=0 // loop_header_branch
    %16 = sbr.rel (%p14) target = $region8
  $region5: #{tpu_custom_call.1} parent=0 // loop_body
    %s18 = ssub.s32 %s13, 1
    %s19 = ssub.s32 %s13, 2
    %s20 = sadd.s32 %s13, 1
    %s21 = ssub.s32 %s13, %s20
    %p22 = scmp.eq.s32.totalorder %s21, 0
    %s24 = sadd.s32 %s23, 1
    %s25 = scalar_select %p22, %s23, %s24
    %p28 = pneg %p22
    %p29 = scmp.eq.s32.totalorder %s13, 1
    %p30 = por %p28, %p29
    %p31 = scmp.ne.s32.totalorder %s23, %s26
    %p32 = scmp.eq.s32.totalorder %s13, 0
    %p33 = por %p31, %p32
    %p34 = scmp.ne.s32.totalorder %s23, %s26
    %p35 = scmp.eq.s32.totalorder %s18, 1
    %p36 = por %p34, %p35
    %p37 = scmp.ne.s32.totalorder %s26, %s27
    %p38 = scmp.eq.s32.totalorder %s18, 0
    %p39 = por %p37, %p38
    %p40 = scmp.ne.s32.totalorder %s26, %s27
    %p41 = scmp.eq.s32.totalorder %s19, 1
    %p42 = por %p40, %p41
    %p44 = scmp.ne.s32.totalorder %s27, %s43
    %p45 = scmp.eq.s32.totalorder %s19, 0
    %p46 = por %p44, %p45
    %s48 = sadd.s32 %s47, 1
    %p51 = scmp.eq.s32.totalorder %s13, 1
    %p52 = scmp.ne.s32.totalorder %s47, %s49
    %p53 = scmp.eq.s32.totalorder %s13, 0
    %p54 = por %p52, %p53
    %p55 = scmp.ne.s32.totalorder %s47, %s49
    %p56 = scmp.eq.s32.totalorder %s18, 1
    %p57 = por %p55, %p56
    %p58 = scmp.ne.s32.totalorder %s49, %s50
    %p59 = scmp.eq.s32.totalorder %s18, 0
    %p60 = por %p58, %p59
    %p61 = scmp.ne.s32.totalorder %s49, %s50
    %p62 = scmp.eq.s32.totalorder %s19, 1
    %p63 = por %p61, %p62
    %p65 = scmp.ne.s32.totalorder %s50, %s64
    %p66 = scmp.eq.s32.totalorder %s19, 0
    %p67 = por %p65, %p66
    %s69 = sadd.s32 %s68, 1
    %p72 = scmp.eq.s32.totalorder %s13, 1
    %p73 = scmp.ne.s32.totalorder %s68, %s70
    %p74 = scmp.eq.s32.totalorder %s13, 0
    %p75 = por %p73, %p74
    %p76 = scmp.ne.s32.totalorder %s68, %s70
    %p77 = scmp.eq.s32.totalorder %s18, 1
    %p78 = por %p76, %p77
    %p79 = scmp.ne.s32.totalorder %s70, %s71
    %p80 = scmp.eq.s32.totalorder %s18, 0
    %p81 = por %p79, %p80
    %p82 = scmp.ne.s32.totalorder %s70, %s71
    %p83 = scmp.eq.s32.totalorder %s19, 1
    %p84 = por %p82, %p83
    %p86 = scmp.ne.s32.totalorder %s71, %s85
    %p87 = scmp.eq.s32.totalorder %s19, 0
    %p88 = por %p86, %p87
    %s90 = sadd.s32 %s89, 1
    %p93 = scmp.eq.s32.totalorder %s13, 1
    %p94 = scmp.ne.s32.totalorder %s89, %s91
    %p95 = scmp.eq.s32.totalorder %s13, 0
    %p96 = por %p94, %p95
    %p97 = scmp.ne.s32.totalorder %s89, %s91
    %p98 = scmp.eq.s32.totalorder %s18, 1
    %p99 = por %p97, %p98
    %p100 = scmp.ne.s32.totalorder %s91, %s92
    %p101 = scmp.eq.s32.totalorder %s18, 0
    %p102 = por %p100, %p101
    %p103 = scmp.ne.s32.totalorder %s91, %s92
    %p104 = scmp.eq.s32.totalorder %s19, 1
    %p105 = por %p103, %p104
    %p107 = scmp.ne.s32.totalorder %s92, %s106
    %p108 = scmp.eq.s32.totalorder %s19, 0
    %p109 = por %p107, %p108
    %s111 = sadd.s32 %s110, 1
    %p114 = scmp.eq.s32.totalorder %s13, 1
    %p115 = scmp.ne.s32.totalorder %s110, %s112
    %p116 = scmp.eq.s32.totalorder %s13, 0
    %p117 = por %p115, %p116
    %p118 = scmp.ne.s32.totalorder %s110, %s112
    %p119 = scmp.eq.s32.totalorder %s18, 1
    %p120 = por %p118, %p119
    %p121 = scmp.ne.s32.totalorder %s112, %s113
    %p122 = scmp.eq.s32.totalorder %s18, 0
    %p123 = por %p121, %p122
    %p124 = scmp.ne.s32.totalorder %s112, %s113
    %p125 = scmp.eq.s32.totalorder %s19, 1
    %p126 = por %p124, %p125
    %p128 = scmp.ne.s32.totalorder %s113, %s127
    %p129 = scmp.eq.s32.totalorder %s19, 0
    %p130 = por %p128, %p129
    %s132 = sadd.s32 %s131, 1
    %p135 = scmp.eq.s32.totalorder %s13, 1
    %p136 = scmp.ne.s32.totalorder %s131, %s133
    %p137 = scmp.eq.s32.totalorder %s13, 0
    %p138 = por %p136, %p137
    %p139 = scmp.ne.s32.totalorder %s131, %s133
    %p140 = scmp.eq.s32.totalorder %s18, 1
    %p141 = por %p139, %p140
    %p142 = scmp.ne.s32.totalorder %s133, %s134
    %p143 = scmp.eq.s32.totalorder %s18, 0
    %p144 = por %p142, %p143
    %p145 = scmp.ne.s32.totalorder %s133, %s134
    %p146 = scmp.eq.s32.totalorder %s19, 1
    %p147 = por %p145, %p146
    %p149 = scmp.ne.s32.totalorder %s134, %s148
    %p150 = scmp.eq.s32.totalorder %s19, 0
    %p151 = por %p149, %p150
    %s153 = sadd.s32 %s152, 1
    %p156 = scmp.eq.s32.totalorder %s13, 1
    %p157 = scmp.ne.s32.totalorder %s152, %s154
    %p158 = scmp.eq.s32.totalorder %s13, 0
    %p159 = por %p157, %p158
    %p160 = scmp.ne.s32.totalorder %s152, %s154
    %p161 = scmp.eq.s32.totalorder %s18, 1
    %p162 = por %p160, %p161
    %p163 = scmp.ne.s32.totalorder %s154, %s155
    %p164 = scmp.eq.s32.totalorder %s18, 0
    %p165 = por %p163, %p164
    %p166 = scmp.ne.s32.totalorder %s154, %s155
    %p167 = scmp.eq.s32.totalorder %s19, 1
    %p168 = por %p166, %p167
    %p170 = scmp.ne.s32.totalorder %s155, %s169
    %p171 = scmp.eq.s32.totalorder %s19, 0
    %p172 = por %p170, %p171
    %s173 = ssub.s32 %s13, %s20
    %p174 = scmp.eq.s32.totalorder %s173, 0
    %s176 = sadd.s32 %s175, 1
    %s177 = scalar_select %p174, %s175, %s176
    %p180 = pneg %p174
    %p181 = scmp.eq.s32.totalorder %s13, 1
    %p182 = por %p180, %p181
    %p183 = scmp.ne.s32.totalorder %s175, %s178
    %p184 = scmp.eq.s32.totalorder %s13, 0
    %p185 = por %p183, %p184
    %p186 = scmp.ne.s32.totalorder %s175, %s178
    %p187 = scmp.eq.s32.totalorder %s18, 1
    %p188 = por %p186, %p187
    %p189 = scmp.ne.s32.totalorder %s178, %s179
    %p190 = scmp.eq.s32.totalorder %s18, 0
    %p191 = por %p189, %p190
    %p192 = scmp.ne.s32.totalorder %s178, %s179
    %p193 = scmp.eq.s32.totalorder %s19, 1
    %p194 = por %p192, %p193
    %p196 = scmp.ne.s32.totalorder %s179, %s195
    %p197 = scmp.eq.s32.totalorder %s19, 0
    %p198 = por %p196, %p197
    %p199 = scmp.le.s32.totalorder 1, %s13
    %p200 = scmp.lt.s32.totalorder %s13, 3
    %p201 = pnand %p199, %p200
    %p202 = pneg %p201
    // Predicated region
    $region9: #{tpu_custom_call.1} parent=5 // pred_check
      _
    $region10: #{tpu_custom_call.1} parent=5 // pred_check_branch
      %204 = sbr.rel (%p201) target = $region12
    $region11: #{tpu_custom_call.1} parent=5 // pred_region
      %s205 = ssub.s32 %s13, 1
      // Predicated region
      $region13: #{tpu_custom_call.1} parent=11 // pred_check
        %p206 = pneg %p60
      $region14: #{tpu_custom_call.1} parent=11 // pred_check_branch
        %208 = sbr.rel (%p206) target = $region16
      $region15: #{tpu_custom_call.1} parent=11 // pred_region
        _
      $region16: #{tpu_custom_call.1} parent=11 // pred_fallthru
        _
      // Predicated region
      $region17: #{tpu_custom_call.1} parent=11 // pred_check
        %p209 = pneg %p81
      $region18: #{tpu_custom_call.1} parent=11 // pred_check_branch
        %211 = sbr.rel (%p209) target = $region20
      $region19: #{tpu_custom_call.1} parent=11 // pred_region
        _
      $region20: #{tpu_custom_call.1} parent=11 // pred_fallthru
        _
      // Predicated region
      $region21: #{tpu_custom_call.1} parent=11 // pred_check
        %p212 = pneg %p102
      $region22: #{tpu_custom_call.1} parent=11 // pred_check_branch
        %214 = sbr.rel (%p212) target = $region24
      $region23: #{tpu_custom_call.1} parent=11 // pred_region
        _
      $region24: #{tpu_custom_call.1} parent=11 // pred_fallthru
        _
      // Predicated region
      $region25: #{tpu_custom_call.1} parent=11 // pred_check
        %p215 = pneg %p123
      $region26: #{tpu_custom_call.1} parent=11 // pred_check_branch
        %217 = sbr.rel (%p215) target = $region28
      $region27: #{tpu_custom_call.1} parent=11 // pred_region
        _
      $region28: #{tpu_custom_call.1} parent=11 // pred_fallthru
        _
      // Predicated region
      $region29: #{tpu_custom_call.1} parent=11 // pred_check
        %p218 = pneg %p144
      $region30: #{tpu_custom_call.1} parent=11 // pred_check_branch
        %220 = sbr.rel (%p218) target = $region32
      $region31: #{tpu_custom_call.1} parent=11 // pred_region
        _
      $region32: #{tpu_custom_call.1} parent=11 // pred_fallthru
        _
      // Predicated region
      $region33: #{tpu_custom_call.1} parent=11 // pred_check
        %p221 = pneg %p165
      $region34: #{tpu_custom_call.1} parent=11 // pred_check_branch
        %223 = sbr.rel (%p221) target = $region36
      $region35: #{tpu_custom_call.1} parent=11 // pred_region
        _
      $region36: #{tpu_custom_call.1} parent=11 // pred_fallthru
        _
    $region12: #{tpu_custom_call.1} parent=5 // pred_fallthru
      _
    %p224 = scmp.lt.s32.totalorder %s13, 2
    // Predicated region
    $region37: #{tpu_custom_call.1} parent=5 // pred_check
      %p225 = pneg %p224
    $region38: #{tpu_custom_call.1} parent=5 // pred_check_branch
      %227 = sbr.rel (%p225) target = $region40
    $region39: #{tpu_custom_call.1} parent=5 // pred_region
      // Predicated region
      $region41: #{tpu_custom_call.1} parent=39 // pred_check
        %p228 = pneg %p33
      $region42: #{tpu_custom_call.1} parent=39 // pred_check_branch
        %230 = sbr.rel (%p228) target = $region44
      $region43: #{tpu_custom_call.1} parent=39 // pred_region
        %p231 = scmp.lt.s32.totalorder %s13, 1
        %s232 = scalar_select %p231, %s13, 1
        %s233 = smul.addr %s232, 32
        %s234 = smul.addr %s233, 8
        %s235 = scalar_lea.vmem %s0, %s234
      $region44: #{tpu_custom_call.1} parent=39 // pred_fallthru
        _
    $region40: #{tpu_custom_call.1} parent=5 // pred_fallthru
      _
    %p236 = scmp.le.s32.totalorder 1, %s13
    %p237 = scmp.lt.s32.totalorder %s13, 3
    %p238 = pnand %p236, %p237
    %p239 = pneg %p238
    // Predicated region
    $region45: #{tpu_custom_call.1} parent=5 // pred_check
      _
    $region46: #{tpu_custom_call.1} parent=5 // pred_check_branch
      %241 = sbr.rel (%p238) target = $region48
    $region47: #{tpu_custom_call.1} parent=5 // pred_region
      %s242 = ssub.s32 %s13, 1
      %p243 = scmp.lt.s32.totalorder %s18, 1
      %s244 = scalar_select %p243, %s18, 1
      %s245 = smul.addr %s244, 32
      %s246 = smul.addr %s245, 8
      %s247 = scalar_lea.vmem %s0, %s246
      %p248 = pneg %p39
      %p249 = pneg %p36
      %p250 = pneg %p60
      %p251 = pneg %p57
      %p252 = pneg %p81
      %p253 = pneg %p78
      %p254 = pneg %p102
      %p255 = pneg %p99
      %p256 = pneg %p123
      %p257 = pneg %p120
      %p258 = pneg %p144
      %p259 = pneg %p141
      %p260 = pneg %p165
      %p261 = pneg %p162
      %p262 = pneg %p191
      %p263 = pneg %p188
      %p264 = scmp.lt.s32.totalorder %s18, 1
      %s265 = scalar_select %p264, %s18, 1
      %s266 = smul.addr %s265, 32
      %s267 = smul.addr %s266, 8
      %s268 = scalar_lea.vmem %s7, %s267
      %p269 = scmp.lt.s32.totalorder %s18, 1
      %s270 = scalar_select %p269, %s18, 1
      %s271 = smul.addr %s270, 32
      %s272 = smul.addr %s271, 8
      %s273 = scalar_lea.vmem %s0, %s272
      %p274 = scmp.lt.s32.totalorder %s18, 1
      %s275 = scalar_select %p274, %s18, 1
      %s276 = smul.addr %s275, 32
      %s277 = smul.addr %s276, 8
      %s278 = scalar_lea.vmem %s7, %s277
      %vm279 = vcmask 293888
      %280 = vst.msk [vmem:[#allocation3] sm:$0xff] %vm279, 0.0
      %281 = vst.msk [vmem:[#allocation3 + $0x8] sm:$0xff] %vm279, 0.0
      %282 = vst.msk [vmem:[#allocation3 + $0x10] sm:$0xff] %vm279, 0.0
      %283 = vst.msk [vmem:[#allocation3 + $0x18] sm:$0xff] %vm279, 0.0
      %s284 = scalar_lea.vmem [#allocation3], 544
      %285 = vst.msk [vmem:[%s284] sm:$0xff] %vm279, 0.0
      %286 = vst.msk [vmem:[%s284 + $0x8] sm:$0xff] %vm279, 0.0
      %287 = vst.msk [vmem:[%s284 + $0x10] sm:$0xff] %vm279, 0.0
      %288 = vst.msk [vmem:[%s284 + $0x18] sm:$0xff] %vm279, 0.0
      %289 = vst.msk [vmem:[#allocation3] sm:$0xff] %vm279, 0.0
      %290 = vst.msk [vmem:[#allocation3 + $0x20] sm:$0xff] %vm279, 0.0
      %291 = vst.msk [vmem:[#allocation3 + $0x40] sm:$0xff] %vm279, 0.0
      %292 = vst.msk [vmem:[#allocation3 + $0x60] sm:$0xff] %vm279, 0.0
      %293 = vst.msk [vmem:[#allocation3 + $0x80] sm:$0xff] %vm279, 0.0
      %294 = vst.msk [vmem:[#allocation3 + $0xa0] sm:$0xff] %vm279, 0.0
      %295 = vst.msk [vmem:[#allocation3 + $0xc0] sm:$0xff] %vm279, 0.0
      %296 = vst.msk [vmem:[#allocation3 + $0xe0] sm:$0xff] %vm279, 0.0
      %297 = vst.msk [vmem:[#allocation3 + $0x100] sm:$0xff] %vm279, 0.0
      %298 = vst.msk [vmem:[#allocation3 + $0x120] sm:$0xff] %vm279, 0.0
      %299 = vst.msk [vmem:[#allocation3 + $0x140] sm:$0xff] %vm279, 0.0
      %300 = vst.msk [vmem:[#allocation3 + $0x160] sm:$0xff] %vm279, 0.0
      %301 = vst.msk [vmem:[#allocation3 + $0x180] sm:$0xff] %vm279, 0.0
      %302 = vst.msk [vmem:[#allocation3 + $0x1a0] sm:$0xff] %vm279, 0.0
      %303 = vst.msk [vmem:[#allocation3 + $0x1c0] sm:$0xff] %vm279, 0.0
      %304 = vst.msk [vmem:[#allocation3 + $0x1e0] sm:$0xff] %vm279, 0.0
      %305 = vst.msk [vmem:[#allocation3 + $0x200] sm:$0xff] %vm279, 0.0
      %306 = vst.msk [vmem:[#allocation3 + $0x220] sm:$0xff] %vm279, 0.0
      %307 = vst.msk [vmem:[#allocation3 + $0x18] sm:$0xff] %vm279, 0.0
      %308 = vst.msk [vmem:[#allocation3 + $0x38] sm:$0xff] %vm279, 0.0
      %309 = vst.msk [vmem:[#allocation3 + $0x58] sm:$0xff] %vm279, 0.0
      %310 = vst.msk [vmem:[#allocation3 + $0x78] sm:$0xff] %vm279, 0.0
      %311 = vst.msk [vmem:[#allocation3 + $0x98] sm:$0xff] %vm279, 0.0
      %312 = vst.msk [vmem:[#allocation3 + $0xb8] sm:$0xff] %vm279, 0.0
      %313 = vst.msk [vmem:[#allocation3 + $0xd8] sm:$0xff] %vm279, 0.0
      %314 = vst.msk [vmem:[#allocation3 + $0xf8] sm:$0xff] %vm279, 0.0
      %315 = vst.msk [vmem:[#allocation3 + $0x118] sm:$0xff] %vm279, 0.0
      %316 = vst.msk [vmem:[#allocation3 + $0x138] sm:$0xff] %vm279, 0.0
      %317 = vst.msk [vmem:[#allocation3 + $0x158] sm:$0xff] %vm279, 0.0
      %318 = vst.msk [vmem:[#allocation3 + $0x178] sm:$0xff] %vm279, 0.0
      %319 = vst.msk [vmem:[#allocation3 + $0x198] sm:$0xff] %vm279, 0.0
      %320 = vst.msk [vmem:[#allocation3 + $0x1b8] sm:$0xff] %vm279, 0.0
      %321 = vst.msk [vmem:[#allocation3 + $0x1d8] sm:$0xff] %vm279, 0.0
      %322 = vst.msk [vmem:[#allocation3 + $0x1f8] sm:$0xff] %vm279, 0.0
      %323 = vst.msk [vmem:[#allocation3 + $0x218] sm:$0xff] %vm279, 0.0
      %324 = vst.msk [vmem:[#allocation3 + $0x238] sm:$0xff] %vm279, 0.0
      %v325 = vld [vmem:[%s273] sm:$0xff]
      %v326 = vld [vmem:[%s273 + $0x8] sm:$0xff]
      %v327 = vld [vmem:[%s273 + $0x10] sm:$0xff]
      %v328 = vld [vmem:[%s273 + $0x18] sm:$0xff]
      %v329 = vld [vmem:[%s273 + $0x20] sm:$0xff]
      %v330 = vld [vmem:[%s273 + $0x28] sm:$0xff]
      %v331 = vld [vmem:[%s273 + $0x30] sm:$0xff]
      %v332 = vld [vmem:[%s273 + $0x38] sm:$0xff]
      %v333 = vld [vmem:[%s273 + $0x40] sm:$0xff]
      %v334 = vld [vmem:[%s273 + $0x48] sm:$0xff]
      %v335 = vld [vmem:[%s273 + $0x50] sm:$0xff]
      %v336 = vld [vmem:[%s273 + $0x58] sm:$0xff]
      %v337 = vld [vmem:[%s273 + $0x60] sm:$0xff]
      %v338 = vld [vmem:[%s273 + $0x68] sm:$0xff]
      %v339 = vld [vmem:[%s273 + $0x70] sm:$0xff]
      %v340 = vld [vmem:[%s273 + $0x78] sm:$0xff]
      %v341 = vld [vmem:[%s273 + $0x80] sm:$0xff]
      %v342 = vld [vmem:[%s273 + $0x88] sm:$0xff]
      %v343 = vld [vmem:[%s273 + $0x90] sm:$0xff]
      %v344 = vld [vmem:[%s273 + $0x98] sm:$0xff]
      %v345 = vld [vmem:[%s273 + $0xa0] sm:$0xff]
      %v346 = vld [vmem:[%s273 + $0xa8] sm:$0xff]
      %v347 = vld [vmem:[%s273 + $0xb0] sm:$0xff]
      %v348 = vld [vmem:[%s273 + $0xb8] sm:$0xff]
      %v349 = vld [vmem:[%s273 + $0xc0] sm:$0xff]
      %v350 = vld [vmem:[%s273 + $0xc8] sm:$0xff]
      %v351 = vld [vmem:[%s273 + $0xd0] sm:$0xff]
      %v352 = vld [vmem:[%s273 + $0xd8] sm:$0xff]
      %v353 = vld [vmem:[%s273 + $0xe0] sm:$0xff]
      %v354 = vld [vmem:[%s273 + $0xe8] sm:$0xff]
      %v355 = vld [vmem:[%s273 + $0xf0] sm:$0xff]
      %v356 = vld [vmem:[%s273 + $0xf8] sm:$0xff]
      %vm357 = vcmask 31744
      %358 = vst.msk [vmem:[#allocation2] sm:$0xff] %vm357, %v325
      %359 = vst.msk [vmem:[#allocation2 + $0x8] sm:$0xff] %vm357, %v326
      %360 = vst.msk [vmem:[#allocation2 + $0x10] sm:$0xff] %vm357, %v327
      %361 = vst.msk [vmem:[#allocation2 + $0x18] sm:$0xff] %vm357, %v328
      %362 = vst.msk [vmem:[#allocation2 + $0x20] sm:$0xff] %vm357, %v329
      %363 = vst.msk [vmem:[#allocation2 + $0x28] sm:$0xff] %vm357, %v330
      %364 = vst.msk [vmem:[#allocation2 + $0x30] sm:$0xff] %vm357, %v331
      %365 = vst.msk [vmem:[#allocation2 + $0x38] sm:$0xff] %vm357, %v332
      %366 = vst.msk [vmem:[#allocation2 + $0x40] sm:$0xff] %vm357, %v333
      %367 = vst.msk [vmem:[#allocation2 + $0x48] sm:$0xff] %vm357, %v334
      %368 = vst.msk [vmem:[#allocation2 + $0x50] sm:$0xff] %vm357, %v335
      %369 = vst.msk [vmem:[#allocation2 + $0x58] sm:$0xff] %vm357, %v336
      %370 = vst.msk [vmem:[#allocation2 + $0x60] sm:$0xff] %vm357, %v337
      %371 = vst.msk [vmem:[#allocation2 + $0x68] sm:$0xff] %vm357, %v338
      %372 = vst.msk [vmem:[#allocation2 + $0x70] sm:$0xff] %vm357, %v339
      %373 = vst.msk [vmem:[#allocation2 + $0x78] sm:$0xff] %vm357, %v340
      %374 = vst.msk [vmem:[#allocation2 + $0x80] sm:$0xff] %vm357, %v341
      %375 = vst.msk [vmem:[#allocation2 + $0x88] sm:$0xff] %vm357, %v342
      %376 = vst.msk [vmem:[#allocation2 + $0x90] sm:$0xff] %vm357, %v343
      %377 = vst.msk [vmem:[#allocation2 + $0x98] sm:$0xff] %vm357, %v344
      %378 = vst.msk [vmem:[#allocation2 + $0xa0] sm:$0xff] %vm357, %v345
      %379 = vst.msk [vmem:[#allocation2 + $0xa8] sm:$0xff] %vm357, %v346
      %380 = vst.msk [vmem:[#allocation2 + $0xb0] sm:$0xff] %vm357, %v347
      %381 = vst.msk [vmem:[#allocation2 + $0xb8] sm:$0xff] %vm357, %v348
      %382 = vst.msk [vmem:[#allocation2 + $0xc0] sm:$0xff] %vm357, %v349
      %383 = vst.msk [vmem:[#allocation2 + $0xc8] sm:$0xff] %vm357, %v350
      %384 = vst.msk [vmem:[#allocation2 + $0xd0] sm:$0xff] %vm357, %v351
      %385 = vst.msk [vmem:[#allocation2 + $0xd8] sm:$0xff] %vm357, %v352
      %386 = vst.msk [vmem:[#allocation2 + $0xe0] sm:$0xff] %vm357, %v353
      %387 = vst.msk [vmem:[#allocation2 + $0xe8] sm:$0xff] %vm357, %v354
      %388 = vst.msk [vmem:[#allocation2 + $0xf0] sm:$0xff] %vm357, %v355
      %389 = vst.msk [vmem:[#allocation2 + $0xf8] sm:$0xff] %vm357, %v356
      %v390 = vld [vmem:[%s1] sm:$0x1]
      %v391 = vld [vmem:[%s2] sm:$0x1]
      %v392 = vld [vmem:[%s3] sm:$0x1]
      %v393 = vld [vmem:[#allocation2] sm:$0xff]
      %v394 = vld [vmem:[#allocation2 + $0x8] sm:$0xff]
      %v395 = vld [vmem:[#allocation2 + $0x10] sm:$0xff]
      %v396 = vld [vmem:[#allocation2 + $0x18] sm:$0xff]
      %v397 = vld [vmem:[#allocation2 + $0x20] sm:$0xff]
      %v398 = vld [vmem:[#allocation2 + $0x28] sm:$0xff]
      %v399 = vld [vmem:[#allocation2 + $0x30] sm:$0xff]
      %v400 = vld [vmem:[#allocation2 + $0x38] sm:$0xff]
      %v401 = vld [vmem:[#allocation2 + $0x40] sm:$0xff]
      %v402 = vld [vmem:[#allocation2 + $0x48] sm:$0xff]
      %v403 = vld [vmem:[#allocation2 + $0x50] sm:$0xff]
      %v404 = vld [vmem:[#allocation2 + $0x58] sm:$0xff]
      %v405 = vld [vmem:[#allocation2 + $0x60] sm:$0xff]
      %v406 = vld [vmem:[#allocation2 + $0x68] sm:$0xff]
      %v407 = vld [vmem:[#allocation2 + $0x70] sm:$0xff]
      %v408 = vld [vmem:[#allocation2 + $0x78] sm:$0xff]
      %v409 = vld [vmem:[#allocation2 + $0x80] sm:$0xff]
      %v410 = vld [vmem:[#allocation2 + $0x88] sm:$0xff]
      %v411 = vld [vmem:[#allocation2 + $0x90] sm:$0xff]
      %v412 = vld [vmem:[#allocation2 + $0x98] sm:$0xff]
      %v413 = vld [vmem:[#allocation2 + $0xa0] sm:$0xff]
      %v414 = vld [vmem:[#allocation2 + $0xa8] sm:$0xff]
      %v415 = vld [vmem:[#allocation2 + $0xb0] sm:$0xff]
      %v416 = vld [vmem:[#allocation2 + $0xb8] sm:$0xff]
      %v417 = vld [vmem:[#allocation2 + $0xc0] sm:$0xff]
      %v418 = vld [vmem:[#allocation2 + $0xc8] sm:$0xff]
      %v419 = vld [vmem:[#allocation2 + $0xd0] sm:$0xff]
      %v420 = vld [vmem:[#allocation2 + $0xd8] sm:$0xff]
      %v421 = vld [vmem:[#allocation2 + $0xe0] sm:$0xff]
      %v422 = vld [vmem:[#allocation2 + $0xe8] sm:$0xff]
      %v423 = vld [vmem:[#allocation2 + $0xf0] sm:$0xff]
      %v424 = vld [vmem:[#allocation2 + $0xf8] sm:$0xff]
      %v425 = vlaneseq
      %v426 = vshrl.u32 %v425, 7
      %v427 = vsub.s32 0, %v426
      %v428 = vrot.slane %v390, %v427
      %v429 = vmul.f32 %v393, %v428
      %v430 = vmul.f32 %v394, %v428
      %v431 = vmul.f32 %v395, %v428
      %v432 = vmul.f32 %v396, %v428
      %v433 = vmul.f32 %v397, %v428
      %v434 = vmul.f32 %v398, %v428
      %v435 = vmul.f32 %v399, %v428
      %v436 = vmul.f32 %v400, %v428
      %v437 = vmul.f32 %v401, %v428
      %v438 = vmul.f32 %v402, %v428
      %v439 = vmul.f32 %v403, %v428
      %v440 = vmul.f32 %v404, %v428
      %v441 = vmul.f32 %v405, %v428
      %v442 = vmul.f32 %v406, %v428
      %v443 = vmul.f32 %v407, %v428
      %v444 = vmul.f32 %v408, %v428
      %v445 = vmul.f32 %v409, %v428
      %v446 = vmul.f32 %v410, %v428
      %v447 = vmul.f32 %v411, %v428
      %v448 = vmul.f32 %v412, %v428
      %v449 = vmul.f32 %v413, %v428
      %v450 = vmul.f32 %v414, %v428
      %v451 = vmul.f32 %v415, %v428
      %v452 = vmul.f32 %v416, %v428
      %v453 = vmul.f32 %v417, %v428
      %v454 = vmul.f32 %v418, %v428
      %v455 = vmul.f32 %v419, %v428
      %v456 = vmul.f32 %v420, %v428
      %v457 = vmul.f32 %v421, %v428
      %v458 = vmul.f32 %v422, %v428
      %v459 = vmul.f32 %v423, %v428
      %v460 = vmul.f32 %v424, %v428
      %v461 = vlaneseq
      %v462 = vshrl.u32 %v461, 7
      %v463 = vsub.s32 0, %v462
      %v464 = vrot.slane %v391, %v463
      %v465 = vadd.f32 %v429, %v464
      %v466 = vadd.f32 %v430, %v464
      %v467 = vadd.f32 %v431, %v464
      %v468 = vadd.f32 %v432, %v464
      %v469 = vadd.f32 %v433, %v464
      %v470 = vadd.f32 %v434, %v464
      %v471 = vadd.f32 %v435, %v464
      %v472 = vadd.f32 %v436, %v464
      %v473 = vadd.f32 %v437, %v464
      %v474 = vadd.f32 %v438, %v464
      %v475 = vadd.f32 %v439, %v464
      %v476 = vadd.f32 %v440, %v464
      %v477 = vadd.f32 %v441, %v464
      %v478 = vadd.f32 %v442, %v464
      %v479 = vadd.f32 %v443, %v464
      %v480 = vadd.f32 %v444, %v464
      %v481 = vadd.f32 %v445, %v464
      %v482 = vadd.f32 %v446, %v464
      %v483 = vadd.f32 %v447, %v464
      %v484 = vadd.f32 %v448, %v464
      %v485 = vadd.f32 %v449, %v464
      %v486 = vadd.f32 %v450, %v464
      %v487 = vadd.f32 %v451, %v464
      %v488 = vadd.f32 %v452, %v464
      %v489 = vadd.f32 %v453, %v464
      %v490 = vadd.f32 %v454, %v464
      %v491 = vadd.f32 %v455, %v464
      %v492 = vadd.f32 %v456, %v464
      %v493 = vadd.f32 %v457, %v464
      %v494 = vadd.f32 %v458, %v464
      %v495 = vadd.f32 %v459, %v464
      %v496 = vadd.f32 %v460, %v464
      %v497 = vmax.f32 %v465, 0.0
      %v498 = vmax.f32 %v466, 0.0
      %v499 = vmax.f32 %v467, 0.0
      %v500 = vmax.f32 %v468, 0.0
      %v501 = vmax.f32 %v469, 0.0
      %v502 = vmax.f32 %v470, 0.0
      %v503 = vmax.f32 %v471, 0.0
      %v504 = vmax.f32 %v472, 0.0
      %v505 = vmax.f32 %v473, 0.0
      %v506 = vmax.f32 %v474, 0.0
      %v507 = vmax.f32 %v475, 0.0
      %v508 = vmax.f32 %v476, 0.0
      %v509 = vmax.f32 %v477, 0.0
      %v510 = vmax.f32 %v478, 0.0
      %v511 = vmax.f32 %v479, 0.0
      %v512 = vmax.f32 %v480, 0.0
      %v513 = vmax.f32 %v481, 0.0
      %v514 = vmax.f32 %v482, 0.0
      %v515 = vmax.f32 %v483, 0.0
      %v516 = vmax.f32 %v484, 0.0
      %v517 = vmax.f32 %v485, 0.0
      %v518 = vmax.f32 %v486, 0.0
      %v519 = vmax.f32 %v487, 0.0
      %v520 = vmax.f32 %v488, 0.0
      %v521 = vmax.f32 %v489, 0.0
      %v522 = vmax.f32 %v490, 0.0
      %v523 = vmax.f32 %v491, 0.0
      %v524 = vmax.f32 %v492, 0.0
      %v525 = vmax.f32 %v493, 0.0
      %v526 = vmax.f32 %v494, 0.0
      %v527 = vmax.f32 %v495, 0.0
      %v528 = vmax.f32 %v496, 0.0
      %v529 = vld [vmem:[%s4] sm:$0xf]
      %v531 = vsel %vm357, %v497, 0
      %v534 = vsel %vm357, %v498, 0
      %v537 = vsel %vm357, %v499, 0
      %v540 = vsel %vm357, %v500, 0
      %v543 = vsel %vm357, %v501, 0
      %v546 = vsel %vm357, %v502, 0
      %v549 = vsel %vm357, %v503, 0
      %v552 = vsel %vm357, %v504, 0
      %v555 = vsel %vm357, %v505, 0
      %v558 = vsel %vm357, %v506, 0
      %v561 = vsel %vm357, %v507, 0
      %v564 = vsel %vm357, %v508, 0
      %v567 = vsel %vm357, %v509, 0
      %v570 = vsel %vm357, %v510, 0
      %v573 = vsel %vm357, %v511, 0
      %v576 = vsel %vm357, %v512, 0
      %v579 = vsel %vm357, %v513, 0
      %v582 = vsel %vm357, %v514, 0
      %v585 = vsel %vm357, %v515, 0
      %v588 = vsel %vm357, %v516, 0
      %v591 = vsel %vm357, %v517, 0
      %v594 = vsel %vm357, %v518, 0
      %v597 = vsel %vm357, %v519, 0
      %v600 = vsel %vm357, %v520, 0
      %v603 = vsel %vm357, %v521, 0
      %v606 = vsel %vm357, %v522, 0
      %v609 = vsel %vm357, %v523, 0
      %v612 = vsel %vm357, %v524, 0
      %v615 = vsel %vm357, %v525, 0
      %v618 = vsel %vm357, %v526, 0
      %v621 = vsel %vm357, %v527, 0
      %v624 = vsel %vm357, %v528, 0
      %vm626 = vcmask 1043456
      %v628 = vsel %vm626, %v529, 0
      %630 = vmatprep.subr.mxu0 0.0
      %631 = vmatpush1.msra.mxu0 %v628
      %632 = vmatprep.subr.mxu0 0.0
      %633 = vmatpush1.msra.mxu0 0.0
      %634 = vmatprep.subr.mxu0 0.0
      %635 = vmatpush1.msra.mxu0 0.0
      %636 = vmatprep.subr.mxu0 0.0
      %637 = vmatpush1.msra.mxu0 0.0
      %638 = vmatprep.subr.mxu0 0.0
      %639 = vmatpush1.msra.mxu0 0.0
      %640 = vmatprep.subr.mxu0 0.0
      %641 = vmatpush1.msra.mxu0 0.0
      %642 = vmatprep.subr.mxu0 0.0
      %643 = vmatpush1.msra.mxu0 0.0
      %644 = vmatprep.subr.mxu0 0.0
      %645 = vmatpush1.msra.mxu0 0.0
      %646 = vmatprep.subr.mxu0 0.0
      %647 = vmatpush1.msra.mxu0 0.0
      %648 = vmatprep.subr.mxu0 0.0
      %649 = vmatpush1.msra.mxu0 0.0
      %650 = vmatprep.subr.mxu0 0.0
      %651 = vmatpush1.msra.mxu0 0.0
      %652 = vmatprep.subr.mxu0 0.0
      %653 = vmatpush1.msra.mxu0 0.0
      %654 = vmatprep.subr.mxu0 0.0
      %655 = vmatpush1.msra.mxu0 0.0
      %656 = vmatprep.subr.mxu0 0.0
      %657 = vmatpush1.msra.mxu0 0.0
      %658 = vmatprep.subr.mxu0 0.0
      %659 = vmatpush1.msra.mxu0 0.0
      %660 = vmatprep.subr.mxu0 0.0
      %661 = vmatpush1.msra.mxu0 0.0
      %662 = vmatprep.subr.mxu0 0.0
      %663 = vmatpush1.msra.mxu0 0.0
      %664 = vmatprep.subr.mxu0 0.0
      %665 = vmatpush1.msra.mxu0 0.0
      %666 = vmatprep.subr.mxu0 0.0
      %667 = vmatpush1.msra.mxu0 0.0
      %668 = vmatprep.subr.mxu0 0.0
      %669 = vmatpush1.msra.mxu0 0.0
      %670 = vmatprep.subr.mxu0 0.0
      %671 = vmatpush1.msra.mxu0 0.0
      %672 = vmatprep.subr.mxu0 0.0
      %673 = vmatpush1.msra.mxu0 0.0
      %674 = vmatprep.subr.mxu0 0.0
      %675 = vmatpush1.msra.mxu0 0.0
      %676 = vmatprep.subr.mxu0 0.0
      %677 = vmatpush1.msra.mxu0 0.0
      %678 = vmatprep.subr.mxu0 0.0
      %679 = vmatpush1.msra.mxu0 0.0
      %680 = vmatprep.subr.mxu0 0.0
      %681 = vmatpush1.msra.mxu0 0.0
      %682 = vmatprep.subr.mxu0 0.0
      %683 = vmatpush1.msra.mxu0 0.0
      %684 = vmatprep.subr.mxu0 0.0
      %685 = vmatpush1.msra.mxu0 0.0
      %686 = vmatprep.subr.mxu0 0.0
      %687 = vmatpush1.msra.mxu0 0.0
      %688 = vmatprep.subr.mxu0 0.0
      %689 = vmatpush1.msra.mxu0 0.0
      %690 = vmatprep.subr.mxu0 0.0
      %691 = vmatpush1.msra.mxu0 0.0
      %692 = vmatprep.subr.mxu0 0.0
      %693 = vmatpush1.msra.mxu0 0.0
      %694 = vmatprep.mubr.f32.mxu0 0.0
      %695 = vmatmul.mubr.f32.gmra.mrb[0].mxu0 %v531
      %v696 = vpop.f32.mrb[0].mxu0
      %v697 = vadd.f32 0.0, %v696
      %v698 = vpop.f32.mrb[0].mxu0
      %699 = vmatprep.mubr.f32.mxu0 0.0
      %700 = vmatmul.mubr.f32.gmra.mrb[0].mxu0 %v534
      %v701 = vpop.f32.mrb[0].mxu0
      %v702 = vadd.f32 0.0, %v701
      %v703 = vpop.f32.mrb[0].mxu0
      %704 = vmatprep.mubr.f32.mxu0 0.0
      %705 = vmatmul.mubr.f32.gmra.mrb[0].mxu0 %v537
      %v706 = vpop.f32.mrb[0].mxu0
      %v707 = vadd.f32 0.0, %v706
      %v708 = vpop.f32.mrb[0].mxu0
      %709 = vmatprep.mubr.f32.mxu0 0.0
      %710 = vmatmul.mubr.f32.gmra.mrb[0].mxu0 %v540
      %v711 = vpop.f32.mrb[0].mxu0
      %v712 = vadd.f32 0.0, %v711
      %v713 = vpop.f32.mrb[0].mxu0
      %714 = vmatprep.mubr.f32.mxu0 0.0
      %715 = vmatmul.mubr.f32.gmra.mrb[0].mxu0 %v543
      %v716 = vpop.f32.mrb[0].mxu0
      %v717 = vadd.f32 0.0, %v716
      %v718 = vpop.f32.mrb[0].mxu0
      %719 = vmatprep.mubr.f32.mxu0 0.0
      %720 = vmatmul.mubr.f32.gmra.mrb[0].mxu0 %v546
      %v721 = vpop.f32.mrb[0].mxu0
      %v722 = vadd.f32 0.0, %v721
      %v723 = vpop.f32.mrb[0].mxu0
      %724 = vmatprep.mubr.f32.mxu0 0.0
      %725 = vmatmul.mubr.f32.gmra.mrb[0].mxu0 %v549
      %v726 = vpop.f32.mrb[0].mxu0
      %v727 = vadd.f32 0.0, %v726
      %v728 = vpop.f32.mrb[0].mxu0
      %729 = vmatprep.mubr.f32.mxu0 0.0
      %730 = vmatmul.mubr.f32.gmra.mrb[0].mxu0 %v552
      %v731 = vpop.f32.mrb[0].mxu0
      %v732 = vadd.f32 0.0, %v731
      %v733 = vpop.f32.mrb[0].mxu0
      %734 = vmatprep.mubr.f32.mxu0 0.0
      %735 = vmatmul.mubr.f32.gmra.mrb[0].mxu0 %v555
      %v736 = vpop.f32.mrb[0].mxu0
      %v737 = vadd.f32 0.0, %v736
      %v738 = vpop.f32.mrb[0].mxu0
      %739 = vmatprep.mubr.f32.mxu0 0.0
      %740 = vmatmul.mubr.f32.gmra.mrb[0].mxu0 %v558
      %v741 = vpop.f32.mrb[0].mxu0
      %v742 = vadd.f32 0.0, %v741
      %v743 = vpop.f32.mrb[0].mxu0
      %744 = vmatprep.mubr.f32.mxu0 0.0
      %745 = vmatmul.mubr.f32.gmra.mrb[0].mxu0 %v561
      %v746 = vpop.f32.mrb[0].mxu0
      %v747 = vadd.f32 0.0, %v746
      %v748 = vpop.f32.mrb[0].mxu0
      %749 = vmatprep.mubr.f32.mxu0 0.0
      %750 = vmatmul.mubr.f32.gmra.mrb[0].mxu0 %v564
      %v751 = vpop.f32.mrb[0].mxu0
      %v752 = vadd.f32 0.0, %v751
      %v753 = vpop.f32.mrb[0].mxu0
      %754 = vmatprep.mubr.f32.mxu0 0.0
      %755 = vmatmul.mubr.f32.gmra.mrb[0].mxu0 %v567
      %v756 = vpop.f32.mrb[0].mxu0
      %v757 = vadd.f32 0.0, %v756
      %v758 = vpop.f32.mrb[0].mxu0
      %759 = vmatprep.mubr.f32.mxu0 0.0
      %760 = vmatmul.mubr.f32.gmra.mrb[0].mxu0 %v570
      %v761 = vpop.f32.mrb[0].mxu0
      %v762 = vadd.f32 0.0, %v761
      %v763 = vpop.f32.mrb[0].mxu0
      %764 = vmatprep.mubr.f32.mxu0 0.0
      %765 = vmatmul.mubr.f32.gmra.mrb[0].mxu0 %v573
      %v766 = vpop.f32.mrb[0].mxu0
      %v767 = vadd.f32 0.0, %v766
      %v768 = vpop.f32.mrb[0].mxu0
      %769 = vmatprep.mubr.f32.mxu0 0.0
      %770 = vmatmul.mubr.f32.gmra.mrb[0].mxu0 %v576
      %v771 = vpop.f32.mrb[0].mxu0
      %v772 = vadd.f32 0.0, %v771
      %v773 = vpop.f32.mrb[0].mxu0
      %774 = vmatprep.mubr.f32.mxu0 0.0
      %775 = vmatmul.mubr.f32.gmra.mrb[0].mxu0 %v579
      %v776 = vpop.f32.mrb[0].mxu0
      %v777 = vadd.f32 0.0, %v776
      %v778 = vpop.f32.mrb[0].mxu0
      %779 = vmatprep.mubr.f32.mxu0 0.0
      %780 = vmatmul.mubr.f32.gmra.mrb[0].mxu0 %v582
      %v781 = vpop.f32.mrb[0].mxu0
      %v782 = vadd.f32 0.0, %v781
      %v783 = vpop.f32.mrb[0].mxu0
      %784 = vmatprep.mubr.f32.mxu0 0.0
      %785 = vmatmul.mubr.f32.gmra.mrb[0].mxu0 %v585
      %v786 = vpop.f32.mrb[0].mxu0
      %v787 = vadd.f32 0.0, %v786
      %v788 = vpop.f32.mrb[0].mxu0
      %789 = vmatprep.mubr.f32.mxu0 0.0
      %790 = vmatmul.mubr.f32.gmra.mrb[0].mxu0 %v588
      %v791 = vpop.f32.mrb[0].mxu0
      %v792 = vadd.f32 0.0, %v791
      %v793 = vpop.f32.mrb[0].mxu0
      %794 = vmatprep.mubr.f32.mxu0 0.0
      %795 = vmatmul.mubr.f32.gmra.mrb[0].mxu0 %v591
      %v796 = vpop.f32.mrb[0].mxu0
      %v797 = vadd.f32 0.0, %v796
      %v798 = vpop.f32.mrb[0].mxu0
      %799 = vmatprep.mubr.f32.mxu0 0.0
      %800 = vmatmul.mubr.f32.gmra.mrb[0].mxu0 %v594
      %v801 = vpop.f32.mrb[0].mxu0
      %v802 = vadd.f32 0.0, %v801
      %v803 = vpop.f32.mrb[0].mxu0
      %804 = vmatprep.mubr.f32.mxu0 0.0
      %805 = vmatmul.mubr.f32.gmra.mrb[0].mxu0 %v597
      %v806 = vpop.f32.mrb[0].mxu0
      %v807 = vadd.f32 0.0, %v806
      %v808 = vpop.f32.mrb[0].mxu0
      %809 = vmatprep.mubr.f32.mxu0 0.0
      %810 = vmatmul.mubr.f32.gmra.mrb[0].mxu0 %v600
      %v811 = vpop.f32.mrb[0].mxu0
      %v812 = vadd.f32 0.0, %v811
      %v813 = vpop.f32.mrb[0].mxu0
      %814 = vmatprep.mubr.f32.mxu0 0.0
      %815 = vmatmul.mubr.f32.gmra.mrb[0].mxu0 %v603
      %v816 = vpop.f32.mrb[0].mxu0
      %v817 = vadd.f32 0.0, %v816
      %v818 = vpop.f32.mrb[0].mxu0
      %819 = vmatprep.mubr.f32.mxu0 0.0
      %820 = vmatmul.mubr.f32.gmra.mrb[0].mxu0 %v606
      %v821 = vpop.f32.mrb[0].mxu0
      %v822 = vadd.f32 0.0, %v821
      %v823 = vpop.f32.mrb[0].mxu0
      %824 = vmatprep.mubr.f32.mxu0 0.0
      %825 = vmatmul.mubr.f32.gmra.mrb[0].mxu0 %v609
      %v826 = vpop.f32.mrb[0].mxu0
      %v827 = vadd.f32 0.0, %v826
      %v828 = vpop.f32.mrb[0].mxu0
      %829 = vmatprep.mubr.f32.mxu0 0.0
      %830 = vmatmul.mubr.f32.gmra.mrb[0].mxu0 %v612
      %v831 = vpop.f32.mrb[0].mxu0
      %v832 = vadd.f32 0.0, %v831
      %v833 = vpop.f32.mrb[0].mxu0
      %834 = vmatprep.mubr.f32.mxu0 0.0
      %835 = vmatmul.mubr.f32.gmra.mrb[0].mxu0 %v615
      %v836 = vpop.f32.mrb[0].mxu0
      %v837 = vadd.f32 0.0, %v836
      %v838 = vpop.f32.mrb[0].mxu0
      %839 = vmatprep.mubr.f32.mxu0 0.0
      %840 = vmatmul.mubr.f32.gmra.mrb[0].mxu0 %v618
      %v841 = vpop.f32.mrb[0].mxu0
      %v842 = vadd.f32 0.0, %v841
      %v843 = vpop.f32.mrb[0].mxu0
      %844 = vmatprep.mubr.f32.mxu0 0.0
      %845 = vmatmul.mubr.f32.gmra.mrb[0].mxu0 %v621
      %v846 = vpop.f32.mrb[0].mxu0
      %v847 = vadd.f32 0.0, %v846
      %v848 = vpop.f32.mrb[0].mxu0
      %849 = vmatprep.mubr.f32.mxu0 0.0
      %850 = vmatmul.mubr.f32.gmra.mrb[0].mxu0 %v624
      %v851 = vpop.f32.mrb[0].mxu0
      %v852 = vadd.f32 0.0, %v851
      %v853 = vpop.f32.mrb[0].mxu0
      %854 = vdwg.mxu0
      %s855 = scalar_lea.vmem [#allocation3], 32
      %856 = vst.msk [vmem:[%s855 + $0x8] sm:$0xff] %vm279, %v697
      %857 = vst.msk [vmem:[%s855 + $0x10] sm:$0xff] %vm279, %v702
      %858 = vst.msk [vmem:[%s855 + $0x28] sm:$0xff] %vm279, %v707
      %859 = vst.msk [vmem:[%s855 + $0x30] sm:$0xff] %vm279, %v712
      %860 = vst.msk [vmem:[%s855 + $0x48] sm:$0xff] %vm279, %v717
      %861 = vst.msk [vmem:[%s855 + $0x50] sm:$0xff] %vm279, %v722
      %862 = vst.msk [vmem:[%s855 + $0x68] sm:$0xff] %vm279, %v727
      %863 = vst.msk [vmem:[%s855 + $0x70] sm:$0xff] %vm279, %v732
      %864 = vst.msk [vmem:[%s855 + $0x88] sm:$0xff] %vm279, %v737
      %865 = vst.msk [vmem:[%s855 + $0x90] sm:$0xff] %vm279, %v742
      %866 = vst.msk [vmem:[%s855 + $0xa8] sm:$0xff] %vm279, %v747
      %867 = vst.msk [vmem:[%s855 + $0xb0] sm:$0xff] %vm279, %v752
      %868 = vst.msk [vmem:[%s855 + $0xc8] sm:$0xff] %vm279, %v757
      %869 = vst.msk [vmem:[%s855 + $0xd0] sm:$0xff] %vm279, %v762
      %870 = vst.msk [vmem:[%s855 + $0xe8] sm:$0xff] %vm279, %v767
      %871 = vst.msk [vmem:[%s855 + $0xf0] sm:$0xff] %vm279, %v772
      %872 = vst.msk [vmem:[%s855 + $0x108] sm:$0xff] %vm279, %v777
      %873 = vst.msk [vmem:[%s855 + $0x110] sm:$0xff] %vm279, %v782
      %874 = vst.msk [vmem:[%s855 + $0x128] sm:$0xff] %vm279, %v787
      %875 = vst.msk [vmem:[%s855 + $0x130] sm:$0xff] %vm279, %v792
      %876 = vst.msk [vmem:[%s855 + $0x148] sm:$0xff] %vm279, %v797
      %877 = vst.msk [vmem:[%s855 + $0x150] sm:$0xff] %vm279, %v802
      %878 = vst.msk [vmem:[%s855 + $0x168] sm:$0xff] %vm279, %v807
      %879 = vst.msk [vmem:[%s855 + $0x170] sm:$0xff] %vm279, %v812
      %880 = vst.msk [vmem:[%s855 + $0x188] sm:$0xff] %vm279, %v817
      %881 = vst.msk [vmem:[%s855 + $0x190] sm:$0xff] %vm279, %v822
      %882 = vst.msk [vmem:[%s855 + $0x1a8] sm:$0xff] %vm279, %v827
      %883 = vst.msk [vmem:[%s855 + $0x1b0] sm:$0xff] %vm279, %v832
      %884 = vst.msk [vmem:[%s855 + $0x1c8] sm:$0xff] %vm279, %v837
      %885 = vst.msk [vmem:[%s855 + $0x1d0] sm:$0xff] %vm279, %v842
      %886 = vst.msk [vmem:[%s855 + $0x1e8] sm:$0xff] %vm279, %v847
      %887 = vst.msk [vmem:[%s855 + $0x1f0] sm:$0xff] %vm279, %v852
      %v888 = vld [vmem:[#allocation3 + $0x7] sm:$0xff]
      %v889 = vld [vmem:[#allocation3 + $0xf] sm:$0xff]
      %v890 = vld [vmem:[#allocation3 + $0x27] sm:$0xff]
      %v891 = vld [vmem:[#allocation3 + $0x2f] sm:$0xff]
      %v892 = vld [vmem:[#allocation3 + $0x47] sm:$0xff]
      %v893 = vld [vmem:[#allocation3 + $0x4f] sm:$0xff]
      %v894 = vld [vmem:[#allocation3 + $0x67] sm:$0xff]
      %v895 = vld [vmem:[#allocation3 + $0x6f] sm:$0xff]
      %v896 = vld [vmem:[#allocation3 + $0x87] sm:$0xff]
      %v897 = vld [vmem:[#allocation3 + $0x8f] sm:$0xff]
      %v898 = vld [vmem:[#allocation3 + $0xa7] sm:$0xff]
      %v899 = vld [vmem:[#allocation3 + $0xaf] sm:$0xff]
      %v900 = vld [vmem:[#allocation3 + $0xc7] sm:$0xff]
      %v901 = vld [vmem:[#allocation3 + $0xcf] sm:$0xff]
      %v902 = vld [vmem:[#allocation3 + $0xe7] sm:$0xff]
      %v903 = vld [vmem:[#allocation3 + $0xef] sm:$0xff]
      %v904 = vld [vmem:[#allocation3 + $0x107] sm:$0xff]
      %v905 = vld [vmem:[#allocation3 + $0x10f] sm:$0xff]
      %v906 = vld [vmem:[#allocation3 + $0x127] sm:$0xff]
      %v907 = vld [vmem:[#allocation3 + $0x12f] sm:$0xff]
      %v908 = vld [vmem:[#allocation3 + $0x147] sm:$0xff]
      %v909 = vld [vmem:[#allocation3 + $0x14f] sm:$0xff]
      %v910 = vld [vmem:[#allocation3 + $0x167] sm:$0xff]
      %v911 = vld [vmem:[#allocation3 + $0x16f] sm:$0xff]
      %v912 = vld [vmem:[#allocation3 + $0x187] sm:$0xff]
      %v913 = vld [vmem:[#allocation3 + $0x18f] sm:$0xff]
      %v914 = vld [vmem:[#allocation3 + $0x1a7] sm:$0xff]
      %v915 = vld [vmem:[#allocation3 + $0x1af] sm:$0xff]
      %v916 = vld [vmem:[#allocation3 + $0x1c7] sm:$0xff]
      %v917 = vld [vmem:[#allocation3 + $0x1cf] sm:$0xff]
      %v918 = vld [vmem:[#allocation3 + $0x1e7] sm:$0xff]
      %v919 = vld [vmem:[#allocation3 + $0x1ef] sm:$0xff]
      %v920 = vld [vmem:[#allocation3 + $0x8] sm:$0xff]
      %v921 = vld [vmem:[#allocation3 + $0x10] sm:$0xff]
      %v922 = vld [vmem:[#allocation3 + $0x28] sm:$0xff]
      %v923 = vld [vmem:[#allocation3 + $0x30] sm:$0xff]
      %v924 = vld [vmem:[#allocation3 + $0x48] sm:$0xff]
      %v925 = vld [vmem:[#allocation3 + $0x50] sm:$0xff]
      %v926 = vld [vmem:[#allocation3 + $0x68] sm:$0xff]
      %v927 = vld [vmem:[#allocation3 + $0x70] sm:$0xff]
      %v928 = vld [vmem:[#allocation3 + $0x88] sm:$0xff]
      %v929 = vld [vmem:[#allocation3 + $0x90] sm:$0xff]
      %v930 = vld [vmem:[#allocation3 + $0xa8] sm:$0xff]
      %v931 = vld [vmem:[#allocation3 + $0xb0] sm:$0xff]
      %v932 = vld [vmem:[#allocation3 + $0xc8] sm:$0xff]
      %v933 = vld [vmem:[#allocation3 + $0xd0] sm:$0xff]
      %v934 = vld [vmem:[#allocation3 + $0xe8] sm:$0xff]
      %v935 = vld [vmem:[#allocation3 + $0xf0] sm:$0xff]
      %v936 = vld [vmem:[#allocation3 + $0x108] sm:$0xff]
      %v937 = vld [vmem:[#allocation3 + $0x110] sm:$0xff]
      %v938 = vld [vmem:[#allocation3 + $0x128] sm:$0xff]
      %v939 = vld [vmem:[#allocation3 + $0x130] sm:$0xff]
      %v940 = vld [vmem:[#allocation3 + $0x148] sm:$0xff]
      %v941 = vld [vmem:[#allocation3 + $0x150] sm:$0xff]
      %v942 = vld [vmem:[#allocation3 + $0x168] sm:$0xff]
      %v943 = vld [vmem:[#allocation3 + $0x170] sm:$0xff]
      %v944 = vld [vmem:[#allocation3 + $0x188] sm:$0xff]
      %v945 = vld [vmem:[#allocation3 + $0x190] sm:$0xff]
      %v946 = vld [vmem:[#allocation3 + $0x1a8] sm:$0xff]
      %v947 = vld [vmem:[#allocation3 + $0x1b0] sm:$0xff]
      %v948 = vld [vmem:[#allocation3 + $0x1c8] sm:$0xff]
      %v949 = vld [vmem:[#allocation3 + $0x1d0] sm:$0xff]
      %v950 = vld [vmem:[#allocation3 + $0x1e8] sm:$0xff]
      %v951 = vld [vmem:[#allocation3 + $0x1f0] sm:$0xff]
      %984 = vrot.lane.b32.xlu0 %v920, 124
      %v985 = vpop.permute.xlu0 %984
      %986 = vrot.lane.b32.xlu0 %v921, 124
      %v987 = vpop.permute.xlu0 %986
      %988 = vrot.lane.b32.xlu0 %v922, 124
      %v989 = vpop.permute.xlu0 %988
      %990 = vrot.lane.b32.xlu0 %v923, 124
      %v991 = vpop.permute.xlu0 %990
      %992 = vrot.lane.b32.xlu0 %v924, 124
      %v993 = vpop.permute.xlu0 %992
      %994 = vrot.lane.b32.xlu0 %v925, 124
      %v995 = vpop.permute.xlu0 %994
      %996 = vrot.lane.b32.xlu0 %v926, 124
      %v997 = vpop.permute.xlu0 %996
      %998 = vrot.lane.b32.xlu0 %v927, 124
      %v999 = vpop.permute.xlu0 %998
      %1000 = vrot.lane.b32.xlu0 %v928, 124
      %v1001 = vpop.permute.xlu0 %1000
      %1002 = vrot.lane.b32.xlu0 %v929, 124
      %v1003 = vpop.permute.xlu0 %1002
      %1004 = vrot.lane.b32.xlu0 %v930, 124
      %v1005 = vpop.permute.xlu0 %1004
      %1006 = vrot.lane.b32.xlu0 %v931, 124
      %v1007 = vpop.permute.xlu0 %1006
      %1008 = vrot.lane.b32.xlu0 %v932, 124
      %v1009 = vpop.permute.xlu0 %1008
      %1010 = vrot.lane.b32.xlu0 %v933, 124
      %v1011 = vpop.permute.xlu0 %1010
      %1012 = vrot.lane.b32.xlu0 %v934, 124
      %v1013 = vpop.permute.xlu0 %1012
      %1014 = vrot.lane.b32.xlu0 %v935, 124
      %v1015 = vpop.permute.xlu0 %1014
      %1016 = vrot.lane.b32.xlu0 %v936, 124
      %v1017 = vpop.permute.xlu0 %1016
      %1018 = vrot.lane.b32.xlu0 %v937, 124
      %v1019 = vpop.permute.xlu0 %1018
      %1020 = vrot.lane.b32.xlu0 %v938, 124
      %v1021 = vpop.permute.xlu0 %1020
      %1022 = vrot.lane.b32.xlu0 %v939, 124
      %v1023 = vpop.permute.xlu0 %1022
      %1024 = vrot.lane.b32.xlu0 %v940, 124
      %v1025 = vpop.permute.xlu0 %1024
      %1026 = vrot.lane.b32.xlu0 %v941, 124
      %v1027 = vpop.permute.xlu0 %1026
      %1028 = vrot.lane.b32.xlu0 %v942, 124
      %v1029 = vpop.permute.xlu0 %1028
      %1030 = vrot.lane.b32.xlu0 %v943, 124
      %v1031 = vpop.permute.xlu0 %1030
      %1032 = vrot.lane.b32.xlu0 %v944, 124
      %v1033 = vpop.permute.xlu0 %1032
      %1034 = vrot.lane.b32.xlu0 %v945, 124
      %v1035 = vpop.permute.xlu0 %1034
      %1036 = vrot.lane.b32.xlu0 %v946, 124
      %v1037 = vpop.permute.xlu0 %1036
      %1038 = vrot.lane.b32.xlu0 %v947, 124
      %v1039 = vpop.permute.xlu0 %1038
      %1040 = vrot.lane.b32.xlu0 %v948, 124
      %v1041 = vpop.permute.xlu0 %1040
      %1042 = vrot.lane.b32.xlu0 %v949, 124
      %v1043 = vpop.permute.xlu0 %1042
      %1044 = vrot.lane.b32.xlu0 %v950, 124
      %v1045 = vpop.permute.xlu0 %1044
      %1046 = vrot.lane.b32.xlu0 %v951, 124
      %v1047 = vpop.permute.xlu0 %1046
      %v1080 = vadd.f32 %v888, %v985
      %v1081 = vadd.f32 %v889, %v987
      %v1082 = vadd.f32 %v890, %v989
      %v1083 = vadd.f32 %v891, %v991
      %v1084 = vadd.f32 %v892, %v993
      %v1085 = vadd.f32 %v893, %v995
      %v1086 = vadd.f32 %v894, %v997
      %v1087 = vadd.f32 %v895, %v999
      %v1088 = vadd.f32 %v896, %v1001
      %v1089 = vadd.f32 %v897, %v1003
      %v1090 = vadd.f32 %v898, %v1005
      %v1091 = vadd.f32 %v899, %v1007
      %v1092 = vadd.f32 %v900, %v1009
      %v1093 = vadd.f32 %v901, %v1011
      %v1094 = vadd.f32 %v902, %v1013
      %v1095 = vadd.f32 %v903, %v1015
      %v1096 = vadd.f32 %v904, %v1017
      %v1097 = vadd.f32 %v905, %v1019
      %v1098 = vadd.f32 %v906, %v1021
      %v1099 = vadd.f32 %v907, %v1023
      %v1100 = vadd.f32 %v908, %v1025
      %v1101 = vadd.f32 %v909, %v1027
      %v1102 = vadd.f32 %v910, %v1029
      %v1103 = vadd.f32 %v911, %v1031
      %v1104 = vadd.f32 %v912, %v1033
      %v1105 = vadd.f32 %v913, %v1035
      %v1106 = vadd.f32 %v914, %v1037
      %v1107 = vadd.f32 %v915, %v1039
      %v1108 = vadd.f32 %v916, %v1041
      %v1109 = vadd.f32 %v917, %v1043
      %v1110 = vadd.f32 %v918, %v1045
      %v1111 = vadd.f32 %v919, %v1047
      %v1112 = vld [vmem:[#allocation3 + $0x9] sm:$0xff]
      %v1113 = vld [vmem:[#allocation3 + $0x11] sm:$0xff]
      %v1114 = vld [vmem:[#allocation3 + $0x29] sm:$0xff]
      %v1115 = vld [vmem:[#allocation3 + $0x31] sm:$0xff]
      %v1116 = vld [vmem:[#allocation3 + $0x49] sm:$0xff]
      %v1117 = vld [vmem:[#allocation3 + $0x51] sm:$0xff]
      %v1118 = vld [vmem:[#allocation3 + $0x69] sm:$0xff]
      %v1119 = vld [vmem:[#allocation3 + $0x71] sm:$0xff]
      %v1120 = vld [vmem:[#allocation3 + $0x89] sm:$0xff]
      %v1121 = vld [vmem:[#allocation3 + $0x91] sm:$0xff]
      %v1122 = vld [vmem:[#allocation3 + $0xa9] sm:$0xff]
      %v1123 = vld [vmem:[#allocation3 + $0xb1] sm:$0xff]
      %v1124 = vld [vmem:[#allocation3 + $0xc9] sm:$0xff]
      %v1125 = vld [vmem:[#allocation3 + $0xd1] sm:$0xff]
      %v1126 = vld [vmem:[#allocation3 + $0xe9] sm:$0xff]
      %v1127 = vld [vmem:[#allocation3 + $0xf1] sm:$0xff]
      %v1128 = vld [vmem:[#allocation3 + $0x109] sm:$0xff]
      %v1129 = vld [vmem:[#allocation3 + $0x111] sm:$0xff]
      %v1130 = vld [vmem:[#allocation3 + $0x129] sm:$0xff]
      %v1131 = vld [vmem:[#allocation3 + $0x131] sm:$0xff]
      %v1132 = vld [vmem:[#allocation3 + $0x149] sm:$0xff]
      %v1133 = vld [vmem:[#allocation3 + $0x151] sm:$0xff]
      %v1134 = vld [vmem:[#allocation3 + $0x169] sm:$0xff]
      %v1135 = vld [vmem:[#allocation3 + $0x171] sm:$0xff]
      %v1136 = vld [vmem:[#allocation3 + $0x189] sm:$0xff]
      %v1137 = vld [vmem:[#allocation3 + $0x191] sm:$0xff]
      %v1138 = vld [vmem:[#allocation3 + $0x1a9] sm:$0xff]
      %v1139 = vld [vmem:[#allocation3 + $0x1b1] sm:$0xff]
      %v1140 = vld [vmem:[#allocation3 + $0x1c9] sm:$0xff]
      %v1141 = vld [vmem:[#allocation3 + $0x1d1] sm:$0xff]
      %v1142 = vld [vmem:[#allocation3 + $0x1e9] sm:$0xff]
      %v1143 = vld [vmem:[#allocation3 + $0x1f1] sm:$0xff]
      %1176 = vrot.lane.b32.xlu0 %v1112, 120
      %v1177 = vpop.permute.xlu0 %1176
      %1178 = vrot.lane.b32.xlu0 %v1113, 120
      %v1179 = vpop.permute.xlu0 %1178
      %1180 = vrot.lane.b32.xlu0 %v1114, 120
      %v1181 = vpop.permute.xlu0 %1180
      %1182 = vrot.lane.b32.xlu0 %v1115, 120
      %v1183 = vpop.permute.xlu0 %1182
      %1184 = vrot.lane.b32.xlu0 %v1116, 120
      %v1185 = vpop.permute.xlu0 %1184
      %1186 = vrot.lane.b32.xlu0 %v1117, 120
      %v1187 = vpop.permute.xlu0 %1186
      %1188 = vrot.lane.b32.xlu0 %v1118, 120
      %v1189 = vpop.permute.xlu0 %1188
      %1190 = vrot.lane.b32.xlu0 %v1119, 120
      %v1191 = vpop.permute.xlu0 %1190
      %1192 = vrot.lane.b32.xlu0 %v1120, 120
      %v1193 = vpop.permute.xlu0 %1192
      %1194 = vrot.lane.b32.xlu0 %v1121, 120
      %v1195 = vpop.permute.xlu0 %1194
      %1196 = vrot.lane.b32.xlu0 %v1122, 120
      %v1197 = vpop.permute.xlu0 %1196
      %1198 = vrot.lane.b32.xlu0 %v1123, 120
      %v1199 = vpop.permute.xlu0 %1198
      %1200 = vrot.lane.b32.xlu0 %v1124, 120
      %v1201 = vpop.permute.xlu0 %1200
      %1202 = vrot.lane.b32.xlu0 %v1125, 120
      %v1203 = vpop.permute.xlu0 %1202
      %1204 = vrot.lane.b32.xlu0 %v1126, 120
      %v1205 = vpop.permute.xlu0 %1204
      %1206 = vrot.lane.b32.xlu0 %v1127, 120
      %v1207 = vpop.permute.xlu0 %1206
      %1208 = vrot.lane.b32.xlu0 %v1128, 120
      %v1209 = vpop.permute.xlu0 %1208
      %1210 = vrot.lane.b32.xlu0 %v1129, 120
      %v1211 = vpop.permute.xlu0 %1210
      %1212 = vrot.lane.b32.xlu0 %v1130, 120
      %v1213 = vpop.permute.xlu0 %1212
      %1214 = vrot.lane.b32.xlu0 %v1131, 120
      %v1215 = vpop.permute.xlu0 %1214
      %1216 = vrot.lane.b32.xlu0 %v1132, 120
      %v1217 = vpop.permute.xlu0 %1216
      %1218 = vrot.lane.b32.xlu0 %v1133, 120
      %v1219 = vpop.permute.xlu0 %1218
      %1220 = vrot.lane.b32.xlu0 %v1134, 120
      %v1221 = vpop.permute.xlu0 %1220
      %1222 = vrot.lane.b32.xlu0 %v1135, 120
      %v1223 = vpop.permute.xlu0 %1222
      %1224 = vrot.lane.b32.xlu0 %v1136, 120
      %v1225 = vpop.permute.xlu0 %1224
      %1226 = vrot.lane.b32.xlu0 %v1137, 120
      %v1227 = vpop.permute.xlu0 %1226
      %1228 = vrot.lane.b32.xlu0 %v1138, 120
      %v1229 = vpop.permute.xlu0 %1228
      %1230 = vrot.lane.b32.xlu0 %v1139, 120
      %v1231 = vpop.permute.xlu0 %1230
      %1232 = vrot.lane.b32.xlu0 %v1140, 120
      %v1233 = vpop.permute.xlu0 %1232
      %1234 = vrot.lane.b32.xlu0 %v1141, 120
      %v1235 = vpop.permute.xlu0 %1234
      %1236 = vrot.lane.b32.xlu0 %v1142, 120
      %v1237 = vpop.permute.xlu0 %1236
      %1238 = vrot.lane.b32.xlu0 %v1143, 120
      %v1239 = vpop.permute.xlu0 %1238
      %v1272 = vadd.f32 %v1080, %v1177
      %v1273 = vadd.f32 %v1081, %v1179
      %v1274 = vadd.f32 %v1082, %v1181
      %v1275 = vadd.f32 %v1083, %v1183
      %v1276 = vadd.f32 %v1084, %v1185
      %v1277 = vadd.f32 %v1085, %v1187
      %v1278 = vadd.f32 %v1086, %v1189
      %v1279 = vadd.f32 %v1087, %v1191
      %v1280 = vadd.f32 %v1088, %v1193
      %v1281 = vadd.f32 %v1089, %v1195
      %v1282 = vadd.f32 %v1090, %v1197
      %v1283 = vadd.f32 %v1091, %v1199
      %v1284 = vadd.f32 %v1092, %v1201
      %v1285 = vadd.f32 %v1093, %v1203
      %v1286 = vadd.f32 %v1094, %v1205
      %v1287 = vadd.f32 %v1095, %v1207
      %v1288 = vadd.f32 %v1096, %v1209
      %v1289 = vadd.f32 %v1097, %v1211
      %v1290 = vadd.f32 %v1098, %v1213
      %v1291 = vadd.f32 %v1099, %v1215
      %v1292 = vadd.f32 %v1100, %v1217
      %v1293 = vadd.f32 %v1101, %v1219
      %v1294 = vadd.f32 %v1102, %v1221
      %v1295 = vadd.f32 %v1103, %v1223
      %v1296 = vadd.f32 %v1104, %v1225
      %v1297 = vadd.f32 %v1105, %v1227
      %v1298 = vadd.f32 %v1106, %v1229
      %v1299 = vadd.f32 %v1107, %v1231
      %v1300 = vadd.f32 %v1108, %v1233
      %v1301 = vadd.f32 %v1109, %v1235
      %v1302 = vadd.f32 %v1110, %v1237
      %v1303 = vadd.f32 %v1111, %v1239
      %v1304 = vld [vmem:[%s855 + $0x7] sm:$0xff]
      %v1305 = vld [vmem:[%s855 + $0xf] sm:$0xff]
      %v1306 = vld [vmem:[%s855 + $0x27] sm:$0xff]
      %v1307 = vld [vmem:[%s855 + $0x2f] sm:$0xff]
      %v1308 = vld [vmem:[%s855 + $0x47] sm:$0xff]
      %v1309 = vld [vmem:[%s855 + $0x4f] sm:$0xff]
      %v1310 = vld [vmem:[%s855 + $0x67] sm:$0xff]
      %v1311 = vld [vmem:[%s855 + $0x6f] sm:$0xff]
      %v1312 = vld [vmem:[%s855 + $0x87] sm:$0xff]
      %v1313 = vld [vmem:[%s855 + $0x8f] sm:$0xff]
      %v1314 = vld [vmem:[%s855 + $0xa7] sm:$0xff]
      %v1315 = vld [vmem:[%s855 + $0xaf] sm:$0xff]
      %v1316 = vld [vmem:[%s855 + $0xc7] sm:$0xff]
      %v1317 = vld [vmem:[%s855 + $0xcf] sm:$0xff]
      %v1318 = vld [vmem:[%s855 + $0xe7] sm:$0xff]
      %v1319 = vld [vmem:[%s855 + $0xef] sm:$0xff]
      %v1320 = vld [vmem:[%s855 + $0x107] sm:$0xff]
      %v1321 = vld [vmem:[%s855 + $0x10f] sm:$0xff]
      %v1322 = vld [vmem:[%s855 + $0x127] sm:$0xff]
      %v1323 = vld [vmem:[%s855 + $0x12f] sm:$0xff]
      %v1324 = vld [vmem:[%s855 + $0x147] sm:$0xff]
      %v1325 = vld [vmem:[%s855 + $0x14f] sm:$0xff]
      %v1326 = vld [vmem:[%s855 + $0x167] sm:$0xff]
      %v1327 = vld [vmem:[%s855 + $0x16f] sm:$0xff]
      %v1328 = vld [vmem:[%s855 + $0x187] sm:$0xff]
      %v1329 = vld [vmem:[%s855 + $0x18f] sm:$0xff]
      %v1330 = vld [vmem:[%s855 + $0x1a7] sm:$0xff]
      %v1331 = vld [vmem:[%s855 + $0x1af] sm:$0xff]
      %v1332 = vld [vmem:[%s855 + $0x1c7] sm:$0xff]
      %v1333 = vld [vmem:[%s855 + $0x1cf] sm:$0xff]
      %v1334 = vld [vmem:[%s855 + $0x1e7] sm:$0xff]
      %v1335 = vld [vmem:[%s855 + $0x1ef] sm:$0xff]
      %1368 = vrot.lane.b32.xlu0 %v1304, 116
      %v1369 = vpop.permute.xlu0 %1368
      %1370 = vrot.lane.b32.xlu0 %v1305, 116
      %v1371 = vpop.permute.xlu0 %1370
      %1372 = vrot.lane.b32.xlu0 %v1306, 116
      %v1373 = vpop.permute.xlu0 %1372
      %1374 = vrot.lane.b32.xlu0 %v1307, 116
      %v1375 = vpop.permute.xlu0 %1374
      %1376 = vrot.lane.b32.xlu0 %v1308, 116
      %v1377 = vpop.permute.xlu0 %1376
      %1378 = vrot.lane.b32.xlu0 %v1309, 116
      %v1379 = vpop.permute.xlu0 %1378
      %1380 = vrot.lane.b32.xlu0 %v1310, 116
      %v1381 = vpop.permute.xlu0 %1380
      %1382 = vrot.lane.b32.xlu0 %v1311, 116
      %v1383 = vpop.permute.xlu0 %1382
      %1384 = vrot.lane.b32.xlu0 %v1312, 116
      %v1385 = vpop.permute.xlu0 %1384
      %1386 = vrot.lane.b32.xlu0 %v1313, 116
      %v1387 = vpop.permute.xlu0 %1386
      %1388 = vrot.lane.b32.xlu0 %v1314, 116
      %v1389 = vpop.permute.xlu0 %1388
      %1390 = vrot.lane.b32.xlu0 %v1315, 116
      %v1391 = vpop.permute.xlu0 %1390
      %1392 = vrot.lane.b32.xlu0 %v1316, 116
      %v1393 = vpop.permute.xlu0 %1392
      %1394 = vrot.lane.b32.xlu0 %v1317, 116
      %v1395 = vpop.permute.xlu0 %1394
      %1396 = vrot.lane.b32.xlu0 %v1318, 116
      %v1397 = vpop.permute.xlu0 %1396
      %1398 = vrot.lane.b32.xlu0 %v1319, 116
      %v1399 = vpop.permute.xlu0 %1398
      %1400 = vrot.lane.b32.xlu0 %v1320, 116
      %v1401 = vpop.permute.xlu0 %1400
      %1402 = vrot.lane.b32.xlu0 %v1321, 116
      %v1403 = vpop.permute.xlu0 %1402
      %1404 = vrot.lane.b32.xlu0 %v1322, 116
      %v1405 = vpop.permute.xlu0 %1404
      %1406 = vrot.lane.b32.xlu0 %v1323, 116
      %v1407 = vpop.permute.xlu0 %1406
      %1408 = vrot.lane.b32.xlu0 %v1324, 116
      %v1409 = vpop.permute.xlu0 %1408
      %1410 = vrot.lane.b32.xlu0 %v1325, 116
      %v1411 = vpop.permute.xlu0 %1410
      %1412 = vrot.lane.b32.xlu0 %v1326, 116
      %v1413 = vpop.permute.xlu0 %1412
      %1414 = vrot.lane.b32.xlu0 %v1327, 116
      %v1415 = vpop.permute.xlu0 %1414
      %1416 = vrot.lane.b32.xlu0 %v1328, 116
      %v1417 = vpop.permute.xlu0 %1416
      %1418 = vrot.lane.b32.xlu0 %v1329, 116
      %v1419 = vpop.permute.xlu0 %1418
      %1420 = vrot.lane.b32.xlu0 %v1330, 116
      %v1421 = vpop.permute.xlu0 %1420
      %1422 = vrot.lane.b32.xlu0 %v1331, 116
      %v1423 = vpop.permute.xlu0 %1422
      %1424 = vrot.lane.b32.xlu0 %v1332, 116
      %v1425 = vpop.permute.xlu0 %1424
      %1426 = vrot.lane.b32.xlu0 %v1333, 116
      %v1427 = vpop.permute.xlu0 %1426
      %1428 = vrot.lane.b32.xlu0 %v1334, 116
      %v1429 = vpop.permute.xlu0 %1428
      %1430 = vrot.lane.b32.xlu0 %v1335, 116
      %v1431 = vpop.permute.xlu0 %1430
      %v1464 = vadd.f32 %v1272, %v1369
      %v1465 = vadd.f32 %v1273, %v1371
      %v1466 = vadd.f32 %v1274, %v1373
      %v1467 = vadd.f32 %v1275, %v1375
      %v1468 = vadd.f32 %v1276, %v1377
      %v1469 = vadd.f32 %v1277, %v1379
      %v1470 = vadd.f32 %v1278, %v1381
      %v1471 = vadd.f32 %v1279, %v1383
      %v1472 = vadd.f32 %v1280, %v1385
      %v1473 = vadd.f32 %v1281, %v1387
      %v1474 = vadd.f32 %v1282, %v1389
      %v1475 = vadd.f32 %v1283, %v1391
      %v1476 = vadd.f32 %v1284, %v1393
      %v1477 = vadd.f32 %v1285, %v1395
      %v1478 = vadd.f32 %v1286, %v1397
      %v1479 = vadd.f32 %v1287, %v1399
      %v1480 = vadd.f32 %v1288, %v1401
      %v1481 = vadd.f32 %v1289, %v1403
      %v1482 = vadd.f32 %v1290, %v1405
      %v1483 = vadd.f32 %v1291, %v1407
      %v1484 = vadd.f32 %v1292, %v1409
      %v1485 = vadd.f32 %v1293, %v1411
      %v1486 = vadd.f32 %v1294, %v1413
      %v1487 = vadd.f32 %v1295, %v1415
      %v1488 = vadd.f32 %v1296, %v1417
      %v1489 = vadd.f32 %v1297, %v1419
      %v1490 = vadd.f32 %v1298, %v1421
      %v1491 = vadd.f32 %v1299, %v1423
      %v1492 = vadd.f32 %v1300, %v1425
      %v1493 = vadd.f32 %v1301, %v1427
      %v1494 = vadd.f32 %v1302, %v1429
      %v1495 = vadd.f32 %v1303, %v1431
      %v1496 = vld [vmem:[%s855 + $0x8] sm:$0xff]
      %v1497 = vld [vmem:[%s855 + $0x10] sm:$0xff]
      %v1498 = vld [vmem:[%s855 + $0x28] sm:$0xff]
      %v1499 = vld [vmem:[%s855 + $0x30] sm:$0xff]
      %v1500 = vld [vmem:[%s855 + $0x48] sm:$0xff]
      %v1501 = vld [vmem:[%s855 + $0x50] sm:$0xff]
      %v1502 = vld [vmem:[%s855 + $0x68] sm:$0xff]
      %v1503 = vld [vmem:[%s855 + $0x70] sm:$0xff]
      %v1504 = vld [vmem:[%s855 + $0x88] sm:$0xff]
      %v1505 = vld [vmem:[%s855 + $0x90] sm:$0xff]
      %v1506 = vld [vmem:[%s855 + $0xa8] sm:$0xff]
      %v1507 = vld [vmem:[%s855 + $0xb0] sm:$0xff]
      %v1508 = vld [vmem:[%s855 + $0xc8] sm:$0xff]
      %v1509 = vld [vmem:[%s855 + $0xd0] sm:$0xff]
      %v1510 = vld [vmem:[%s855 + $0xe8] sm:$0xff]
      %v1511 = vld [vmem:[%s855 + $0xf0] sm:$0xff]
      %v1512 = vld [vmem:[%s855 + $0x108] sm:$0xff]
      %v1513 = vld [vmem:[%s855 + $0x110] sm:$0xff]
      %v1514 = vld [vmem:[%s855 + $0x128] sm:$0xff]
      %v1515 = vld [vmem:[%s855 + $0x130] sm:$0xff]
      %v1516 = vld [vmem:[%s855 + $0x148] sm:$0xff]
      %v1517 = vld [vmem:[%s855 + $0x150] sm:$0xff]
      %v1518 = vld [vmem:[%s855 + $0x168] sm:$0xff]
      %v1519 = vld [vmem:[%s855 + $0x170] sm:$0xff]
      %v1520 = vld [vmem:[%s855 + $0x188] sm:$0xff]
      %v1521 = vld [vmem:[%s855 + $0x190] sm:$0xff]
      %v1522 = vld [vmem:[%s855 + $0x1a8] sm:$0xff]
      %v1523 = vld [vmem:[%s855 + $0x1b0] sm:$0xff]
      %v1524 = vld [vmem:[%s855 + $0x1c8] sm:$0xff]
      %v1525 = vld [vmem:[%s855 + $0x1d0] sm:$0xff]
      %v1526 = vld [vmem:[%s855 + $0x1e8] sm:$0xff]
      %v1527 = vld [vmem:[%s855 + $0x1f0] sm:$0xff]
      %1560 = vrot.lane.b32.xlu0 %v1496, 112
      %v1561 = vpop.permute.xlu0 %1560
      %1562 = vrot.lane.b32.xlu0 %v1497, 112
      %v1563 = vpop.permute.xlu0 %1562
      %1564 = vrot.lane.b32.xlu0 %v1498, 112
      %v1565 = vpop.permute.xlu0 %1564
      %1566 = vrot.lane.b32.xlu0 %v1499, 112
      %v1567 = vpop.permute.xlu0 %1566
      %1568 = vrot.lane.b32.xlu0 %v1500, 112
      %v1569 = vpop.permute.xlu0 %1568
      %1570 = vrot.lane.b32.xlu0 %v1501, 112
      %v1571 = vpop.permute.xlu0 %1570
      %1572 = vrot.lane.b32.xlu0 %v1502, 112
      %v1573 = vpop.permute.xlu0 %1572
      %1574 = vrot.lane.b32.xlu0 %v1503, 112
      %v1575 = vpop.permute.xlu0 %1574
      %1576 = vrot.lane.b32.xlu0 %v1504, 112
      %v1577 = vpop.permute.xlu0 %1576
      %1578 = vrot.lane.b32.xlu0 %v1505, 112
      %v1579 = vpop.permute.xlu0 %1578
      %1580 = vrot.lane.b32.xlu0 %v1506, 112
      %v1581 = vpop.permute.xlu0 %1580
      %1582 = vrot.lane.b32.xlu0 %v1507, 112
      %v1583 = vpop.permute.xlu0 %1582
      %1584 = vrot.lane.b32.xlu0 %v1508, 112
      %v1585 = vpop.permute.xlu0 %1584
      %1586 = vrot.lane.b32.xlu0 %v1509, 112
      %v1587 = vpop.permute.xlu0 %1586
      %1588 = vrot.lane.b32.xlu0 %v1510, 112
      %v1589 = vpop.permute.xlu0 %1588
      %1590 = vrot.lane.b32.xlu0 %v1511, 112
      %v1591 = vpop.permute.xlu0 %1590
      %1592 = vrot.lane.b32.xlu0 %v1512, 112
      %v1593 = vpop.permute.xlu0 %1592
      %1594 = vrot.lane.b32.xlu0 %v1513, 112
      %v1595 = vpop.permute.xlu0 %1594
      %1596 = vrot.lane.b32.xlu0 %v1514, 112
      %v1597 = vpop.permute.xlu0 %1596
      %1598 = vrot.lane.b32.xlu0 %v1515, 112
      %v1599 = vpop.permute.xlu0 %1598
      %1600 = vrot.lane.b32.xlu0 %v1516, 112
      %v1601 = vpop.permute.xlu0 %1600
      %1602 = vrot.lane.b32.xlu0 %v1517, 112
      %v1603 = vpop.permute.xlu0 %1602
      %1604 = vrot.lane.b32.xlu0 %v1518, 112
      %v1605 = vpop.permute.xlu0 %1604
      %1606 = vrot.lane.b32.xlu0 %v1519, 112
      %v1607 = vpop.permute.xlu0 %1606
      %1608 = vrot.lane.b32.xlu0 %v1520, 112
      %v1609 = vpop.permute.xlu0 %1608
      %1610 = vrot.lane.b32.xlu0 %v1521, 112
      %v1611 = vpop.permute.xlu0 %1610
      %1612 = vrot.lane.b32.xlu0 %v1522, 112
      %v1613 = vpop.permute.xlu0 %1612
      %1614 = vrot.lane.b32.xlu0 %v1523, 112
      %v1615 = vpop.permute.xlu0 %1614
      %1616 = vrot.lane.b32.xlu0 %v1524, 112
      %v1617 = vpop.permute.xlu0 %1616
      %1618 = vrot.lane.b32.xlu0 %v1525, 112
      %v1619 = vpop.permute.xlu0 %1618
      %1620 = vrot.lane.b32.xlu0 %v1526, 112
      %v1621 = vpop.permute.xlu0 %1620
      %1622 = vrot.lane.b32.xlu0 %v1527, 112
      %v1623 = vpop.permute.xlu0 %1622
      %v1656 = vadd.f32 %v1464, %v1561
      %v1657 = vadd.f32 %v1465, %v1563
      %v1658 = vadd.f32 %v1466, %v1565
      %v1659 = vadd.f32 %v1467, %v1567
      %v1660 = vadd.f32 %v1468, %v1569
      %v1661 = vadd.f32 %v1469, %v1571
      %v1662 = vadd.f32 %v1470, %v1573
      %v1663 = vadd.f32 %v1471, %v1575
      %v1664 = vadd.f32 %v1472, %v1577
      %v1665 = vadd.f32 %v1473, %v1579
      %v1666 = vadd.f32 %v1474, %v1581
      %v1667 = vadd.f32 %v1475, %v1583
      %v1668 = vadd.f32 %v1476, %v1585
      %v1669 = vadd.f32 %v1477, %v1587
      %v1670 = vadd.f32 %v1478, %v1589
      %v1671 = vadd.f32 %v1479, %v1591
      %v1672 = vadd.f32 %v1480, %v1593
      %v1673 = vadd.f32 %v1481, %v1595
      %v1674 = vadd.f32 %v1482, %v1597
      %v1675 = vadd.f32 %v1483, %v1599
      %v1676 = vadd.f32 %v1484, %v1601
      %v1677 = vadd.f32 %v1485, %v1603
      %v1678 = vadd.f32 %v1486, %v1605
      %v1679 = vadd.f32 %v1487, %v1607
      %v1680 = vadd.f32 %v1488, %v1609
      %v1681 = vadd.f32 %v1489, %v1611
      %v1682 = vadd.f32 %v1490, %v1613
      %v1683 = vadd.f32 %v1491, %v1615
      %v1684 = vadd.f32 %v1492, %v1617
      %v1685 = vadd.f32 %v1493, %v1619
      %v1686 = vadd.f32 %v1494, %v1621
      %v1687 = vadd.f32 %v1495, %v1623
      %v1688 = vld [vmem:[%s855 + $0x9] sm:$0xff]
      %v1689 = vld [vmem:[%s855 + $0x11] sm:$0xff]
      %v1690 = vld [vmem:[%s855 + $0x29] sm:$0xff]
      %v1691 = vld [vmem:[%s855 + $0x31] sm:$0xff]
      %v1692 = vld [vmem:[%s855 + $0x49] sm:$0xff]
      %v1693 = vld [vmem:[%s855 + $0x51] sm:$0xff]
      %v1694 = vld [vmem:[%s855 + $0x69] sm:$0xff]
      %v1695 = vld [vmem:[%s855 + $0x71] sm:$0xff]
      %v1696 = vld [vmem:[%s855 + $0x89] sm:$0xff]
      %v1697 = vld [vmem:[%s855 + $0x91] sm:$0xff]
      %v1698 = vld [vmem:[%s855 + $0xa9] sm:$0xff]
      %v1699 = vld [vmem:[%s855 + $0xb1] sm:$0xff]
      %v1700 = vld [vmem:[%s855 + $0xc9] sm:$0xff]
      %v1701 = vld [vmem:[%s855 + $0xd1] sm:$0xff]
      %v1702 = vld [vmem:[%s855 + $0xe9] sm:$0xff]
      %v1703 = vld [vmem:[%s855 + $0xf1] sm:$0xff]
      %v1704 = vld [vmem:[%s855 + $0x109] sm:$0xff]
      %v1705 = vld [vmem:[%s855 + $0x111] sm:$0xff]
      %v1706 = vld [vmem:[%s855 + $0x129] sm:$0xff]
      %v1707 = vld [vmem:[%s855 + $0x131] sm:$0xff]
      %v1708 = vld [vmem:[%s855 + $0x149] sm:$0xff]
      %v1709 = vld [vmem:[%s855 + $0x151] sm:$0xff]
      %v1710 = vld [vmem:[%s855 + $0x169] sm:$0xff]
      %v1711 = vld [vmem:[%s855 + $0x171] sm:$0xff]
      %v1712 = vld [vmem:[%s855 + $0x189] sm:$0xff]
      %v1713 = vld [vmem:[%s855 + $0x191] sm:$0xff]
      %v1714 = vld [vmem:[%s855 + $0x1a9] sm:$0xff]
      %v1715 = vld [vmem:[%s855 + $0x1b1] sm:$0xff]
      %v1716 = vld [vmem:[%s855 + $0x1c9] sm:$0xff]
      %v1717 = vld [vmem:[%s855 + $0x1d1] sm:$0xff]
      %v1718 = vld [vmem:[%s855 + $0x1e9] sm:$0xff]
      %v1719 = vld [vmem:[%s855 + $0x1f1] sm:$0xff]
      %1752 = vrot.lane.b32.xlu0 %v1688, 108
      %v1753 = vpop.permute.xlu0 %1752
      %1754 = vrot.lane.b32.xlu0 %v1689, 108
      %v1755 = vpop.permute.xlu0 %1754
      %1756 = vrot.lane.b32.xlu0 %v1690, 108
      %v1757 = vpop.permute.xlu0 %1756
      %1758 = vrot.lane.b32.xlu0 %v1691, 108
      %v1759 = vpop.permute.xlu0 %1758
      %1760 = vrot.lane.b32.xlu0 %v1692, 108
      %v1761 = vpop.permute.xlu0 %1760
      %1762 = vrot.lane.b32.xlu0 %v1693, 108
      %v1763 = vpop.permute.xlu0 %1762
      %1764 = vrot.lane.b32.xlu0 %v1694, 108
      %v1765 = vpop.permute.xlu0 %1764
      %1766 = vrot.lane.b32.xlu0 %v1695, 108
      %v1767 = vpop.permute.xlu0 %1766
      %1768 = vrot.lane.b32.xlu0 %v1696, 108
      %v1769 = vpop.permute.xlu0 %1768
      %1770 = vrot.lane.b32.xlu0 %v1697, 108
      %v1771 = vpop.permute.xlu0 %1770
      %1772 = vrot.lane.b32.xlu0 %v1698, 108
      %v1773 = vpop.permute.xlu0 %1772
      %1774 = vrot.lane.b32.xlu0 %v1699, 108
      %v1775 = vpop.permute.xlu0 %1774
      %1776 = vrot.lane.b32.xlu0 %v1700, 108
      %v1777 = vpop.permute.xlu0 %1776
      %1778 = vrot.lane.b32.xlu0 %v1701, 108
      %v1779 = vpop.permute.xlu0 %1778
      %1780 = vrot.lane.b32.xlu0 %v1702, 108
      %v1781 = vpop.permute.xlu0 %1780
      %1782 = vrot.lane.b32.xlu0 %v1703, 108
      %v1783 = vpop.permute.xlu0 %1782
      %1784 = vrot.lane.b32.xlu0 %v1704, 108
      %v1785 = vpop.permute.xlu0 %1784
      %1786 = vrot.lane.b32.xlu0 %v1705, 108
      %v1787 = vpop.permute.xlu0 %1786
      %1788 = vrot.lane.b32.xlu0 %v1706, 108
      %v1789 = vpop.permute.xlu0 %1788
      %1790 = vrot.lane.b32.xlu0 %v1707, 108
      %v1791 = vpop.permute.xlu0 %1790
      %1792 = vrot.lane.b32.xlu0 %v1708, 108
      %v1793 = vpop.permute.xlu0 %1792
      %1794 = vrot.lane.b32.xlu0 %v1709, 108
      %v1795 = vpop.permute.xlu0 %1794
      %1796 = vrot.lane.b32.xlu0 %v1710, 108
      %v1797 = vpop.permute.xlu0 %1796
      %1798 = vrot.lane.b32.xlu0 %v1711, 108
      %v1799 = vpop.permute.xlu0 %1798
      %1800 = vrot.lane.b32.xlu0 %v1712, 108
      %v1801 = vpop.permute.xlu0 %1800
      %1802 = vrot.lane.b32.xlu0 %v1713, 108
      %v1803 = vpop.permute.xlu0 %1802
      %1804 = vrot.lane.b32.xlu0 %v1714, 108
      %v1805 = vpop.permute.xlu0 %1804
      %1806 = vrot.lane.b32.xlu0 %v1715, 108
      %v1807 = vpop.permute.xlu0 %1806
      %1808 = vrot.lane.b32.xlu0 %v1716, 108
      %v1809 = vpop.permute.xlu0 %1808
      %1810 = vrot.lane.b32.xlu0 %v1717, 108
      %v1811 = vpop.permute.xlu0 %1810
      %1812 = vrot.lane.b32.xlu0 %v1718, 108
      %v1813 = vpop.permute.xlu0 %1812
      %1814 = vrot.lane.b32.xlu0 %v1719, 108
      %v1815 = vpop.permute.xlu0 %1814
      %v1848 = vadd.f32 %v1656, %v1753
      %v1849 = vadd.f32 %v1657, %v1755
      %v1850 = vadd.f32 %v1658, %v1757
      %v1851 = vadd.f32 %v1659, %v1759
      %v1852 = vadd.f32 %v1660, %v1761
      %v1853 = vadd.f32 %v1661, %v1763
      %v1854 = vadd.f32 %v1662, %v1765
      %v1855 = vadd.f32 %v1663, %v1767
      %v1856 = vadd.f32 %v1664, %v1769
      %v1857 = vadd.f32 %v1665, %v1771
      %v1858 = vadd.f32 %v1666, %v1773
      %v1859 = vadd.f32 %v1667, %v1775
      %v1860 = vadd.f32 %v1668, %v1777
      %v1861 = vadd.f32 %v1669, %v1779
      %v1862 = vadd.f32 %v1670, %v1781
      %v1863 = vadd.f32 %v1671, %v1783
      %v1864 = vadd.f32 %v1672, %v1785
      %v1865 = vadd.f32 %v1673, %v1787
      %v1866 = vadd.f32 %v1674, %v1789
      %v1867 = vadd.f32 %v1675, %v1791
      %v1868 = vadd.f32 %v1676, %v1793
      %v1869 = vadd.f32 %v1677, %v1795
      %v1870 = vadd.f32 %v1678, %v1797
      %v1871 = vadd.f32 %v1679, %v1799
      %v1872 = vadd.f32 %v1680, %v1801
      %v1873 = vadd.f32 %v1681, %v1803
      %v1874 = vadd.f32 %v1682, %v1805
      %v1875 = vadd.f32 %v1683, %v1807
      %v1876 = vadd.f32 %v1684, %v1809
      %v1877 = vadd.f32 %v1685, %v1811
      %v1878 = vadd.f32 %v1686, %v1813
      %v1879 = vadd.f32 %v1687, %v1815
      %s1880 = scalar_lea.vmem [#allocation3], 64
      %v1881 = vld [vmem:[%s1880 + $0x7] sm:$0xff]
      %v1882 = vld [vmem:[%s1880 + $0xf] sm:$0xff]
      %v1883 = vld [vmem:[%s1880 + $0x27] sm:$0xff]
      %v1884 = vld [vmem:[%s1880 + $0x2f] sm:$0xff]
      %v1885 = vld [vmem:[%s1880 + $0x47] sm:$0xff]
      %v1886 = vld [vmem:[%s1880 + $0x4f] sm:$0xff]
      %v1887 = vld [vmem:[%s1880 + $0x67] sm:$0xff]
      %v1888 = vld [vmem:[%s1880 + $0x6f] sm:$0xff]
      %v1889 = vld [vmem:[%s1880 + $0x87] sm:$0xff]
      %v1890 = vld [vmem:[%s1880 + $0x8f] sm:$0xff]
      %v1891 = vld [vmem:[%s1880 + $0xa7] sm:$0xff]
      %v1892 = vld [vmem:[%s1880 + $0xaf] sm:$0xff]
      %v1893 = vld [vmem:[%s1880 + $0xc7] sm:$0xff]
      %v1894 = vld [vmem:[%s1880 + $0xcf] sm:$0xff]
      %v1895 = vld [vmem:[%s1880 + $0xe7] sm:$0xff]
      %v1896 = vld [vmem:[%s1880 + $0xef] sm:$0xff]
      %v1897 = vld [vmem:[%s1880 + $0x107] sm:$0xff]
      %v1898 = vld [vmem:[%s1880 + $0x10f] sm:$0xff]
      %v1899 = vld [vmem:[%s1880 + $0x127] sm:$0xff]
      %v1900 = vld [vmem:[%s1880 + $0x12f] sm:$0xff]
      %v1901 = vld [vmem:[%s1880 + $0x147] sm:$0xff]
      %v1902 = vld [vmem:[%s1880 + $0x14f] sm:$0xff]
      %v1903 = vld [vmem:[%s1880 + $0x167] sm:$0xff]
      %v1904 = vld [vmem:[%s1880 + $0x16f] sm:$0xff]
      %v1905 = vld [vmem:[%s1880 + $0x187] sm:$0xff]
      %v1906 = vld [vmem:[%s1880 + $0x18f] sm:$0xff]
      %v1907 = vld [vmem:[%s1880 + $0x1a7] sm:$0xff]
      %v1908 = vld [vmem:[%s1880 + $0x1af] sm:$0xff]
      %v1909 = vld [vmem:[%s1880 + $0x1c7] sm:$0xff]
      %v1910 = vld [vmem:[%s1880 + $0x1cf] sm:$0xff]
      %v1911 = vld [vmem:[%s1880 + $0x1e7] sm:$0xff]
      %v1912 = vld [vmem:[%s1880 + $0x1ef] sm:$0xff]
      %1945 = vrot.lane.b32.xlu0 %v1881, 104
      %v1946 = vpop.permute.xlu0 %1945
      %1947 = vrot.lane.b32.xlu0 %v1882, 104
      %v1948 = vpop.permute.xlu0 %1947
      %1949 = vrot.lane.b32.xlu0 %v1883, 104
      %v1950 = vpop.permute.xlu0 %1949
      %1951 = vrot.lane.b32.xlu0 %v1884, 104
      %v1952 = vpop.permute.xlu0 %1951
      %1953 = vrot.lane.b32.xlu0 %v1885, 104
      %v1954 = vpop.permute.xlu0 %1953
      %1955 = vrot.lane.b32.xlu0 %v1886, 104
      %v1956 = vpop.permute.xlu0 %1955
      %1957 = vrot.lane.b32.xlu0 %v1887, 104
      %v1958 = vpop.permute.xlu0 %1957
      %1959 = vrot.lane.b32.xlu0 %v1888, 104
      %v1960 = vpop.permute.xlu0 %1959
      %1961 = vrot.lane.b32.xlu0 %v1889, 104
      %v1962 = vpop.permute.xlu0 %1961
      %1963 = vrot.lane.b32.xlu0 %v1890, 104
      %v1964 = vpop.permute.xlu0 %1963
      %1965 = vrot.lane.b32.xlu0 %v1891, 104
      %v1966 = vpop.permute.xlu0 %1965
      %1967 = vrot.lane.b32.xlu0 %v1892, 104
      %v1968 = vpop.permute.xlu0 %1967
      %1969 = vrot.lane.b32.xlu0 %v1893, 104
      %v1970 = vpop.permute.xlu0 %1969
      %1971 = vrot.lane.b32.xlu0 %v1894, 104
      %v1972 = vpop.permute.xlu0 %1971
      %1973 = vrot.lane.b32.xlu0 %v1895, 104
      %v1974 = vpop.permute.xlu0 %1973
      %1975 = vrot.lane.b32.xlu0 %v1896, 104
      %v1976 = vpop.permute.xlu0 %1975
      %1977 = vrot.lane.b32.xlu0 %v1897, 104
      %v1978 = vpop.permute.xlu0 %1977
      %1979 = vrot.lane.b32.xlu0 %v1898, 104
      %v1980 = vpop.permute.xlu0 %1979
      %1981 = vrot.lane.b32.xlu0 %v1899, 104
      %v1982 = vpop.permute.xlu0 %1981
      %1983 = vrot.lane.b32.xlu0 %v1900, 104
      %v1984 = vpop.permute.xlu0 %1983
      %1985 = vrot.lane.b32.xlu0 %v1901, 104
      %v1986 = vpop.permute.xlu0 %1985
      %1987 = vrot.lane.b32.xlu0 %v1902, 104
      %v1988 = vpop.permute.xlu0 %1987
      %1989 = vrot.lane.b32.xlu0 %v1903, 104
      %v1990 = vpop.permute.xlu0 %1989
      %1991 = vrot.lane.b32.xlu0 %v1904, 104
      %v1992 = vpop.permute.xlu0 %1991
      %1993 = vrot.lane.b32.xlu0 %v1905, 104
      %v1994 = vpop.permute.xlu0 %1993
      %1995 = vrot.lane.b32.xlu0 %v1906, 104
      %v1996 = vpop.permute.xlu0 %1995
      %1997 = vrot.lane.b32.xlu0 %v1907, 104
      %v1998 = vpop.permute.xlu0 %1997
      %1999 = vrot.lane.b32.xlu0 %v1908, 104
      %v2000 = vpop.permute.xlu0 %1999
      %2001 = vrot.lane.b32.xlu0 %v1909, 104
      %v2002 = vpop.permute.xlu0 %2001
      %2003 = vrot.lane.b32.xlu0 %v1910, 104
      %v2004 = vpop.permute.xlu0 %2003
      %2005 = vrot.lane.b32.xlu0 %v1911, 104
      %v2006 = vpop.permute.xlu0 %2005
      %2007 = vrot.lane.b32.xlu0 %v1912, 104
      %v2008 = vpop.permute.xlu0 %2007
      %v2041 = vadd.f32 %v1848, %v1946
      %v2042 = vadd.f32 %v1849, %v1948
      %v2043 = vadd.f32 %v1850, %v1950
      %v2044 = vadd.f32 %v1851, %v1952
      %v2045 = vadd.f32 %v1852, %v1954
      %v2046 = vadd.f32 %v1853, %v1956
      %v2047 = vadd.f32 %v1854, %v1958
      %v2048 = vadd.f32 %v1855, %v1960
      %v2049 = vadd.f32 %v1856, %v1962
      %v2050 = vadd.f32 %v1857, %v1964
      %v2051 = vadd.f32 %v1858, %v1966
      %v2052 = vadd.f32 %v1859, %v1968
      %v2053 = vadd.f32 %v1860, %v1970
      %v2054 = vadd.f32 %v1861, %v1972
      %v2055 = vadd.f32 %v1862, %v1974
      %v2056 = vadd.f32 %v1863, %v1976
      %v2057 = vadd.f32 %v1864, %v1978
      %v2058 = vadd.f32 %v1865, %v1980
      %v2059 = vadd.f32 %v1866, %v1982
      %v2060 = vadd.f32 %v1867, %v1984
      %v2061 = vadd.f32 %v1868, %v1986
      %v2062 = vadd.f32 %v1869, %v1988
      %v2063 = vadd.f32 %v1870, %v1990
      %v2064 = vadd.f32 %v1871, %v1992
      %v2065 = vadd.f32 %v1872, %v1994
      %v2066 = vadd.f32 %v1873, %v1996
      %v2067 = vadd.f32 %v1874, %v1998
      %v2068 = vadd.f32 %v1875, %v2000
      %v2069 = vadd.f32 %v1876, %v2002
      %v2070 = vadd.f32 %v1877, %v2004
      %v2071 = vadd.f32 %v1878, %v2006
      %v2072 = vadd.f32 %v1879, %v2008
      %v2073 = vld [vmem:[%s1880 + $0x8] sm:$0xff]
      %v2074 = vld [vmem:[%s1880 + $0x10] sm:$0xff]
      %v2075 = vld [vmem:[%s1880 + $0x28] sm:$0xff]
      %v2076 = vld [vmem:[%s1880 + $0x30] sm:$0xff]
      %v2077 = vld [vmem:[%s1880 + $0x48] sm:$0xff]
      %v2078 = vld [vmem:[%s1880 + $0x50] sm:$0xff]
      %v2079 = vld [vmem:[%s1880 + $0x68] sm:$0xff]
      %v2080 = vld [vmem:[%s1880 + $0x70] sm:$0xff]
      %v2081 = vld [vmem:[%s1880 + $0x88] sm:$0xff]
      %v2082 = vld [vmem:[%s1880 + $0x90] sm:$0xff]
      %v2083 = vld [vmem:[%s1880 + $0xa8] sm:$0xff]
      %v2084 = vld [vmem:[%s1880 + $0xb0] sm:$0xff]
      %v2085 = vld [vmem:[%s1880 + $0xc8] sm:$0xff]
      %v2086 = vld [vmem:[%s1880 + $0xd0] sm:$0xff]
      %v2087 = vld [vmem:[%s1880 + $0xe8] sm:$0xff]
      %v2088 = vld [vmem:[%s1880 + $0xf0] sm:$0xff]
      %v2089 = vld [vmem:[%s1880 + $0x108] sm:$0xff]
      %v2090 = vld [vmem:[%s1880 + $0x110] sm:$0xff]
      %v2091 = vld [vmem:[%s1880 + $0x128] sm:$0xff]
      %v2092 = vld [vmem:[%s1880 + $0x130] sm:$0xff]
      %v2093 = vld [vmem:[%s1880 + $0x148] sm:$0xff]
      %v2094 = vld [vmem:[%s1880 + $0x150] sm:$0xff]
      %v2095 = vld [vmem:[%s1880 + $0x168] sm:$0xff]
      %v2096 = vld [vmem:[%s1880 + $0x170] sm:$0xff]
      %v2097 = vld [vmem:[%s1880 + $0x188] sm:$0xff]
      %v2098 = vld [vmem:[%s1880 + $0x190] sm:$0xff]
      %v2099 = vld [vmem:[%s1880 + $0x1a8] sm:$0xff]
      %v2100 = vld [vmem:[%s1880 + $0x1b0] sm:$0xff]
      %v2101 = vld [vmem:[%s1880 + $0x1c8] sm:$0xff]
      %v2102 = vld [vmem:[%s1880 + $0x1d0] sm:$0xff]
      %v2103 = vld [vmem:[%s1880 + $0x1e8] sm:$0xff]
      %v2104 = vld [vmem:[%s1880 + $0x1f0] sm:$0xff]
      %2137 = vrot.lane.b32.xlu0 %v2073, 100
      %v2138 = vpop.permute.xlu0 %2137
      %2139 = vrot.lane.b32.xlu0 %v2074, 100
      %v2140 = vpop.permute.xlu0 %2139
      %2141 = vrot.lane.b32.xlu0 %v2075, 100
      %v2142 = vpop.permute.xlu0 %2141
      %2143 = vrot.lane.b32.xlu0 %v2076, 100
      %v2144 = vpop.permute.xlu0 %2143
      %2145 = vrot.lane.b32.xlu0 %v2077, 100
      %v2146 = vpop.permute.xlu0 %2145
      %2147 = vrot.lane.b32.xlu0 %v2078, 100
      %v2148 = vpop.permute.xlu0 %2147
      %2149 = vrot.lane.b32.xlu0 %v2079, 100
      %v2150 = vpop.permute.xlu0 %2149
      %2151 = vrot.lane.b32.xlu0 %v2080, 100
      %v2152 = vpop.permute.xlu0 %2151
      %2153 = vrot.lane.b32.xlu0 %v2081, 100
      %v2154 = vpop.permute.xlu0 %2153
      %2155 = vrot.lane.b32.xlu0 %v2082, 100
      %v2156 = vpop.permute.xlu0 %2155
      %2157 = vrot.lane.b32.xlu0 %v2083, 100
      %v2158 = vpop.permute.xlu0 %2157
      %2159 = vrot.lane.b32.xlu0 %v2084, 100
      %v2160 = vpop.permute.xlu0 %2159
      %2161 = vrot.lane.b32.xlu0 %v2085, 100
      %v2162 = vpop.permute.xlu0 %2161
      %2163 = vrot.lane.b32.xlu0 %v2086, 100
      %v2164 = vpop.permute.xlu0 %2163
      %2165 = vrot.lane.b32.xlu0 %v2087, 100
      %v2166 = vpop.permute.xlu0 %2165
      %2167 = vrot.lane.b32.xlu0 %v2088, 100
      %v2168 = vpop.permute.xlu0 %2167
      %2169 = vrot.lane.b32.xlu0 %v2089, 100
      %v2170 = vpop.permute.xlu0 %2169
      %2171 = vrot.lane.b32.xlu0 %v2090, 100
      %v2172 = vpop.permute.xlu0 %2171
      %2173 = vrot.lane.b32.xlu0 %v2091, 100
      %v2174 = vpop.permute.xlu0 %2173
      %2175 = vrot.lane.b32.xlu0 %v2092, 100
      %v2176 = vpop.permute.xlu0 %2175
      %2177 = vrot.lane.b32.xlu0 %v2093, 100
      %v2178 = vpop.permute.xlu0 %2177
      %2179 = vrot.lane.b32.xlu0 %v2094, 100
      %v2180 = vpop.permute.xlu0 %2179
      %2181 = vrot.lane.b32.xlu0 %v2095, 100
      %v2182 = vpop.permute.xlu0 %2181
      %2183 = vrot.lane.b32.xlu0 %v2096, 100
      %v2184 = vpop.permute.xlu0 %2183
      %2185 = vrot.lane.b32.xlu0 %v2097, 100
      %v2186 = vpop.permute.xlu0 %2185
      %2187 = vrot.lane.b32.xlu0 %v2098, 100
      %v2188 = vpop.permute.xlu0 %2187
      %2189 = vrot.lane.b32.xlu0 %v2099, 100
      %v2190 = vpop.permute.xlu0 %2189
      %2191 = vrot.lane.b32.xlu0 %v2100, 100
      %v2192 = vpop.permute.xlu0 %2191
      %2193 = vrot.lane.b32.xlu0 %v2101, 100
      %v2194 = vpop.permute.xlu0 %2193
      %2195 = vrot.lane.b32.xlu0 %v2102, 100
      %v2196 = vpop.permute.xlu0 %2195
      %2197 = vrot.lane.b32.xlu0 %v2103, 100
      %v2198 = vpop.permute.xlu0 %2197
      %2199 = vrot.lane.b32.xlu0 %v2104, 100
      %v2200 = vpop.permute.xlu0 %2199
      %v2233 = vadd.f32 %v2041, %v2138
      %v2234 = vadd.f32 %v2042, %v2140
      %v2235 = vadd.f32 %v2043, %v2142
      %v2236 = vadd.f32 %v2044, %v2144
      %v2237 = vadd.f32 %v2045, %v2146
      %v2238 = vadd.f32 %v2046, %v2148
      %v2239 = vadd.f32 %v2047, %v2150
      %v2240 = vadd.f32 %v2048, %v2152
      %v2241 = vadd.f32 %v2049, %v2154
      %v2242 = vadd.f32 %v2050, %v2156
      %v2243 = vadd.f32 %v2051, %v2158
      %v2244 = vadd.f32 %v2052, %v2160
      %v2245 = vadd.f32 %v2053, %v2162
      %v2246 = vadd.f32 %v2054, %v2164
      %v2247 = vadd.f32 %v2055, %v2166
      %v2248 = vadd.f32 %v2056, %v2168
      %v2249 = vadd.f32 %v2057, %v2170
      %v2250 = vadd.f32 %v2058, %v2172
      %v2251 = vadd.f32 %v2059, %v2174
      %v2252 = vadd.f32 %v2060, %v2176
      %v2253 = vadd.f32 %v2061, %v2178
      %v2254 = vadd.f32 %v2062, %v2180
      %v2255 = vadd.f32 %v2063, %v2182
      %v2256 = vadd.f32 %v2064, %v2184
      %v2257 = vadd.f32 %v2065, %v2186
      %v2258 = vadd.f32 %v2066, %v2188
      %v2259 = vadd.f32 %v2067, %v2190
      %v2260 = vadd.f32 %v2068, %v2192
      %v2261 = vadd.f32 %v2069, %v2194
      %v2262 = vadd.f32 %v2070, %v2196
      %v2263 = vadd.f32 %v2071, %v2198
      %v2264 = vadd.f32 %v2072, %v2200
      %v2265 = vld [vmem:[%s1880 + $0x9] sm:$0xff]
      %v2266 = vld [vmem:[%s1880 + $0x11] sm:$0xff]
      %v2267 = vld [vmem:[%s1880 + $0x29] sm:$0xff]
      %v2268 = vld [vmem:[%s1880 + $0x31] sm:$0xff]
      %v2269 = vld [vmem:[%s1880 + $0x49] sm:$0xff]
      %v2270 = vld [vmem:[%s1880 + $0x51] sm:$0xff]
      %v2271 = vld [vmem:[%s1880 + $0x69] sm:$0xff]
      %v2272 = vld [vmem:[%s1880 + $0x71] sm:$0xff]
      %v2273 = vld [vmem:[%s1880 + $0x89] sm:$0xff]
      %v2274 = vld [vmem:[%s1880 + $0x91] sm:$0xff]
      %v2275 = vld [vmem:[%s1880 + $0xa9] sm:$0xff]
      %v2276 = vld [vmem:[%s1880 + $0xb1] sm:$0xff]
      %v2277 = vld [vmem:[%s1880 + $0xc9] sm:$0xff]
      %v2278 = vld [vmem:[%s1880 + $0xd1] sm:$0xff]
      %v2279 = vld [vmem:[%s1880 + $0xe9] sm:$0xff]
      %v2280 = vld [vmem:[%s1880 + $0xf1] sm:$0xff]
      %v2281 = vld [vmem:[%s1880 + $0x109] sm:$0xff]
      %v2282 = vld [vmem:[%s1880 + $0x111] sm:$0xff]
      %v2283 = vld [vmem:[%s1880 + $0x129] sm:$0xff]
      %v2284 = vld [vmem:[%s1880 + $0x131] sm:$0xff]
      %v2285 = vld [vmem:[%s1880 + $0x149] sm:$0xff]
      %v2286 = vld [vmem:[%s1880 + $0x151] sm:$0xff]
      %v2287 = vld [vmem:[%s1880 + $0x169] sm:$0xff]
      %v2288 = vld [vmem:[%s1880 + $0x171] sm:$0xff]
      %v2289 = vld [vmem:[%s1880 + $0x189] sm:$0xff]
      %v2290 = vld [vmem:[%s1880 + $0x191] sm:$0xff]
      %v2291 = vld [vmem:[%s1880 + $0x1a9] sm:$0xff]
      %v2292 = vld [vmem:[%s1880 + $0x1b1] sm:$0xff]
      %v2293 = vld [vmem:[%s1880 + $0x1c9] sm:$0xff]
      %v2294 = vld [vmem:[%s1880 + $0x1d1] sm:$0xff]
      %v2295 = vld [vmem:[%s1880 + $0x1e9] sm:$0xff]
      %v2296 = vld [vmem:[%s1880 + $0x1f1] sm:$0xff]
      %2329 = vrot.lane.b32.xlu0 %v2265, 96
      %v2330 = vpop.permute.xlu0 %2329
      %2331 = vrot.lane.b32.xlu0 %v2266, 96
      %v2332 = vpop.permute.xlu0 %2331
      %2333 = vrot.lane.b32.xlu0 %v2267, 96
      %v2334 = vpop.permute.xlu0 %2333
      %2335 = vrot.lane.b32.xlu0 %v2268, 96
      %v2336 = vpop.permute.xlu0 %2335
      %2337 = vrot.lane.b32.xlu0 %v2269, 96
      %v2338 = vpop.permute.xlu0 %2337
      %2339 = vrot.lane.b32.xlu0 %v2270, 96
      %v2340 = vpop.permute.xlu0 %2339
      %2341 = vrot.lane.b32.xlu0 %v2271, 96
      %v2342 = vpop.permute.xlu0 %2341
      %2343 = vrot.lane.b32.xlu0 %v2272, 96
      %v2344 = vpop.permute.xlu0 %2343
      %2345 = vrot.lane.b32.xlu0 %v2273, 96
      %v2346 = vpop.permute.xlu0 %2345
      %2347 = vrot.lane.b32.xlu0 %v2274, 96
      %v2348 = vpop.permute.xlu0 %2347
      %2349 = vrot.lane.b32.xlu0 %v2275, 96
      %v2350 = vpop.permute.xlu0 %2349
      %2351 = vrot.lane.b32.xlu0 %v2276, 96
      %v2352 = vpop.permute.xlu0 %2351
      %2353 = vrot.lane.b32.xlu0 %v2277, 96
      %v2354 = vpop.permute.xlu0 %2353
      %2355 = vrot.lane.b32.xlu0 %v2278, 96
      %v2356 = vpop.permute.xlu0 %2355
      %2357 = vrot.lane.b32.xlu0 %v2279, 96
      %v2358 = vpop.permute.xlu0 %2357
      %2359 = vrot.lane.b32.xlu0 %v2280, 96
      %v2360 = vpop.permute.xlu0 %2359
      %2361 = vrot.lane.b32.xlu0 %v2281, 96
      %v2362 = vpop.permute.xlu0 %2361
      %2363 = vrot.lane.b32.xlu0 %v2282, 96
      %v2364 = vpop.permute.xlu0 %2363
      %2365 = vrot.lane.b32.xlu0 %v2283, 96
      %v2366 = vpop.permute.xlu0 %2365
      %2367 = vrot.lane.b32.xlu0 %v2284, 96
      %v2368 = vpop.permute.xlu0 %2367
      %2369 = vrot.lane.b32.xlu0 %v2285, 96
      %v2370 = vpop.permute.xlu0 %2369
      %2371 = vrot.lane.b32.xlu0 %v2286, 96
      %v2372 = vpop.permute.xlu0 %2371
      %2373 = vrot.lane.b32.xlu0 %v2287, 96
      %v2374 = vpop.permute.xlu0 %2373
      %2375 = vrot.lane.b32.xlu0 %v2288, 96
      %v2376 = vpop.permute.xlu0 %2375
      %2377 = vrot.lane.b32.xlu0 %v2289, 96
      %v2378 = vpop.permute.xlu0 %2377
      %2379 = vrot.lane.b32.xlu0 %v2290, 96
      %v2380 = vpop.permute.xlu0 %2379
      %2381 = vrot.lane.b32.xlu0 %v2291, 96
      %v2382 = vpop.permute.xlu0 %2381
      %2383 = vrot.lane.b32.xlu0 %v2292, 96
      %v2384 = vpop.permute.xlu0 %2383
      %2385 = vrot.lane.b32.xlu0 %v2293, 96
      %v2386 = vpop.permute.xlu0 %2385
      %2387 = vrot.lane.b32.xlu0 %v2294, 96
      %v2388 = vpop.permute.xlu0 %2387
      %2389 = vrot.lane.b32.xlu0 %v2295, 96
      %v2390 = vpop.permute.xlu0 %2389
      %2391 = vrot.lane.b32.xlu0 %v2296, 96
      %v2392 = vpop.permute.xlu0 %2391
      %v2425 = vadd.f32 %v2233, %v2330
      %v2426 = vadd.f32 %v2234, %v2332
      %v2427 = vadd.f32 %v2235, %v2334
      %v2428 = vadd.f32 %v2236, %v2336
      %v2429 = vadd.f32 %v2237, %v2338
      %v2430 = vadd.f32 %v2238, %v2340
      %v2431 = vadd.f32 %v2239, %v2342
      %v2432 = vadd.f32 %v2240, %v2344
      %v2433 = vadd.f32 %v2241, %v2346
      %v2434 = vadd.f32 %v2242, %v2348
      %v2435 = vadd.f32 %v2243, %v2350
      %v2436 = vadd.f32 %v2244, %v2352
      %v2437 = vadd.f32 %v2245, %v2354
      %v2438 = vadd.f32 %v2246, %v2356
      %v2439 = vadd.f32 %v2247, %v2358
      %v2440 = vadd.f32 %v2248, %v2360
      %v2441 = vadd.f32 %v2249, %v2362
      %v2442 = vadd.f32 %v2250, %v2364
      %v2443 = vadd.f32 %v2251, %v2366
      %v2444 = vadd.f32 %v2252, %v2368
      %v2445 = vadd.f32 %v2253, %v2370
      %v2446 = vadd.f32 %v2254, %v2372
      %v2447 = vadd.f32 %v2255, %v2374
      %v2448 = vadd.f32 %v2256, %v2376
      %v2449 = vadd.f32 %v2257, %v2378
      %v2450 = vadd.f32 %v2258, %v2380
      %v2451 = vadd.f32 %v2259, %v2382
      %v2452 = vadd.f32 %v2260, %v2384
      %v2453 = vadd.f32 %v2261, %v2386
      %v2454 = vadd.f32 %v2262, %v2388
      %v2455 = vadd.f32 %v2263, %v2390
      %v2456 = vadd.f32 %v2264, %v2392
      %v2457 = vlaneseq
      %v2458 = vshrl.u32 %v2457, 7
      %v2459 = vsub.s32 0, %v2458
      %v2460 = vrot.slane %v392, %v2459
      %v2461 = vadd.f32 %v2425, %v2460
      %v2462 = vadd.f32 %v2426, %v2460
      %v2463 = vadd.f32 %v2427, %v2460
      %v2464 = vadd.f32 %v2428, %v2460
      %v2465 = vadd.f32 %v2429, %v2460
      %v2466 = vadd.f32 %v2430, %v2460
      %v2467 = vadd.f32 %v2431, %v2460
      %v2468 = vadd.f32 %v2432, %v2460
      %v2469 = vadd.f32 %v2433, %v2460
      %v2470 = vadd.f32 %v2434, %v2460
      %v2471 = vadd.f32 %v2435, %v2460
      %v2472 = vadd.f32 %v2436, %v2460
      %v2473 = vadd.f32 %v2437, %v2460
      %v2474 = vadd.f32 %v2438, %v2460
      %v2475 = vadd.f32 %v2439, %v2460
      %v2476 = vadd.f32 %v2440, %v2460
      %v2477 = vadd.f32 %v2441, %v2460
      %v2478 = vadd.f32 %v2442, %v2460
      %v2479 = vadd.f32 %v2443, %v2460
      %v2480 = vadd.f32 %v2444, %v2460
      %v2481 = vadd.f32 %v2445, %v2460
      %v2482 = vadd.f32 %v2446, %v2460
      %v2483 = vadd.f32 %v2447, %v2460
      %v2484 = vadd.f32 %v2448, %v2460
      %v2485 = vadd.f32 %v2449, %v2460
      %v2486 = vadd.f32 %v2450, %v2460
      %v2487 = vadd.f32 %v2451, %v2460
      %v2488 = vadd.f32 %v2452, %v2460
      %v2489 = vadd.f32 %v2453, %v2460
      %v2490 = vadd.f32 %v2454, %v2460
      %v2491 = vadd.f32 %v2455, %v2460
      %v2492 = vadd.f32 %v2456, %v2460
      %2525 = vrot.lane.b32.xlu0 %v2461, 4
      %v2526 = vpop.permute.xlu0 %2525
      %2527 = vrot.lane.b32.xlu0 %v2462, 4
      %v2528 = vpop.permute.xlu0 %2527
      %2529 = vrot.lane.b32.xlu0 %v2463, 4
      %v2530 = vpop.permute.xlu0 %2529
      %2531 = vrot.lane.b32.xlu0 %v2464, 4
      %v2532 = vpop.permute.xlu0 %2531
      %2533 = vrot.lane.b32.xlu0 %v2465, 4
      %v2534 = vpop.permute.xlu0 %2533
      %2535 = vrot.lane.b32.xlu0 %v2466, 4
      %v2536 = vpop.permute.xlu0 %2535
      %2537 = vrot.lane.b32.xlu0 %v2467, 4
      %v2538 = vpop.permute.xlu0 %2537
      %2539 = vrot.lane.b32.xlu0 %v2468, 4
      %v2540 = vpop.permute.xlu0 %2539
      %2541 = vrot.lane.b32.xlu0 %v2469, 4
      %v2542 = vpop.permute.xlu0 %2541
      %2543 = vrot.lane.b32.xlu0 %v2470, 4
      %v2544 = vpop.permute.xlu0 %2543
      %2545 = vrot.lane.b32.xlu0 %v2471, 4
      %v2546 = vpop.permute.xlu0 %2545
      %2547 = vrot.lane.b32.xlu0 %v2472, 4
      %v2548 = vpop.permute.xlu0 %2547
      %2549 = vrot.lane.b32.xlu0 %v2473, 4
      %v2550 = vpop.permute.xlu0 %2549
      %2551 = vrot.lane.b32.xlu0 %v2474, 4
      %v2552 = vpop.permute.xlu0 %2551
      %2553 = vrot.lane.b32.xlu0 %v2475, 4
      %v2554 = vpop.permute.xlu0 %2553
      %2555 = vrot.lane.b32.xlu0 %v2476, 4
      %v2556 = vpop.permute.xlu0 %2555
      %2557 = vrot.lane.b32.xlu0 %v2477, 4
      %v2558 = vpop.permute.xlu0 %2557
      %2559 = vrot.lane.b32.xlu0 %v2478, 4
      %v2560 = vpop.permute.xlu0 %2559
      %2561 = vrot.lane.b32.xlu0 %v2479, 4
      %v2562 = vpop.permute.xlu0 %2561
      %2563 = vrot.lane.b32.xlu0 %v2480, 4
      %v2564 = vpop.permute.xlu0 %2563
      %2565 = vrot.lane.b32.xlu0 %v2481, 4
      %v2566 = vpop.permute.xlu0 %2565
      %2567 = vrot.lane.b32.xlu0 %v2482, 4
      %v2568 = vpop.permute.xlu0 %2567
      %2569 = vrot.lane.b32.xlu0 %v2483, 4
      %v2570 = vpop.permute.xlu0 %2569
      %2571 = vrot.lane.b32.xlu0 %v2484, 4
      %v2572 = vpop.permute.xlu0 %2571
      %2573 = vrot.lane.b32.xlu0 %v2485, 4
      %v2574 = vpop.permute.xlu0 %2573
      %2575 = vrot.lane.b32.xlu0 %v2486, 4
      %v2576 = vpop.permute.xlu0 %2575
      %2577 = vrot.lane.b32.xlu0 %v2487, 4
      %v2578 = vpop.permute.xlu0 %2577
      %2579 = vrot.lane.b32.xlu0 %v2488, 4
      %v2580 = vpop.permute.xlu0 %2579
      %2581 = vrot.lane.b32.xlu0 %v2489, 4
      %v2582 = vpop.permute.xlu0 %2581
      %2583 = vrot.lane.b32.xlu0 %v2490, 4
      %v2584 = vpop.permute.xlu0 %2583
      %2585 = vrot.lane.b32.xlu0 %v2491, 4
      %v2586 = vpop.permute.xlu0 %2585
      %2587 = vrot.lane.b32.xlu0 %v2492, 4
      %v2588 = vpop.permute.xlu0 %2587
      %vm2621 = vcmask 64544
      %2622 = vst.msk [vmem:[#allocation2] sm:$0xff] %vm2621, %v2526
      %2623 = vst.msk [vmem:[#allocation2 + $0x8] sm:$0xff] %vm2621, %v2528
      %2624 = vst.msk [vmem:[#allocation2 + $0x10] sm:$0xff] %vm2621, %v2530
      %2625 = vst.msk [vmem:[#allocation2 + $0x18] sm:$0xff] %vm2621, %v2532
      %2626 = vst.msk [vmem:[#allocation2 + $0x20] sm:$0xff] %vm2621, %v2534
      %2627 = vst.msk [vmem:[#allocation2 + $0x28] sm:$0xff] %vm2621, %v2536
      %2628 = vst.msk [vmem:[#allocation2 + $0x30] sm:$0xff] %vm2621, %v2538
      %2629 = vst.msk [vmem:[#allocation2 + $0x38] sm:$0xff] %vm2621, %v2540
      %2630 = vst.msk [vmem:[#allocation2 + $0x40] sm:$0xff] %vm2621, %v2542
      %2631 = vst.msk [vmem:[#allocation2 + $0x48] sm:$0xff] %vm2621, %v2544
      %2632 = vst.msk [vmem:[#allocation2 + $0x50] sm:$0xff] %vm2621, %v2546
      %2633 = vst.msk [vmem:[#allocation2 + $0x58] sm:$0xff] %vm2621, %v2548
      %2634 = vst.msk [vmem:[#allocation2 + $0x60] sm:$0xff] %vm2621, %v2550
      %2635 = vst.msk [vmem:[#allocation2 + $0x68] sm:$0xff] %vm2621, %v2552
      %2636 = vst.msk [vmem:[#allocation2 + $0x70] sm:$0xff] %vm2621, %v2554
      %2637 = vst.msk [vmem:[#allocation2 + $0x78] sm:$0xff] %vm2621, %v2556
      %2638 = vst.msk [vmem:[#allocation2 + $0x80] sm:$0xff] %vm2621, %v2558
      %2639 = vst.msk [vmem:[#allocation2 + $0x88] sm:$0xff] %vm2621, %v2560
      %2640 = vst.msk [vmem:[#allocation2 + $0x90] sm:$0xff] %vm2621, %v2562
      %2641 = vst.msk [vmem:[#allocation2 + $0x98] sm:$0xff] %vm2621, %v2564
      %2642 = vst.msk [vmem:[#allocation2 + $0xa0] sm:$0xff] %vm2621, %v2566
      %2643 = vst.msk [vmem:[#allocation2 + $0xa8] sm:$0xff] %vm2621, %v2568
      %2644 = vst.msk [vmem:[#allocation2 + $0xb0] sm:$0xff] %vm2621, %v2570
      %2645 = vst.msk [vmem:[#allocation2 + $0xb8] sm:$0xff] %vm2621, %v2572
      %2646 = vst.msk [vmem:[#allocation2 + $0xc0] sm:$0xff] %vm2621, %v2574
      %2647 = vst.msk [vmem:[#allocation2 + $0xc8] sm:$0xff] %vm2621, %v2576
      %2648 = vst.msk [vmem:[#allocation2 + $0xd0] sm:$0xff] %vm2621, %v2578
      %2649 = vst.msk [vmem:[#allocation2 + $0xd8] sm:$0xff] %vm2621, %v2580
      %2650 = vst.msk [vmem:[#allocation2 + $0xe0] sm:$0xff] %vm2621, %v2582
      %2651 = vst.msk [vmem:[#allocation2 + $0xe8] sm:$0xff] %vm2621, %v2584
      %2652 = vst.msk [vmem:[#allocation2 + $0xf0] sm:$0xff] %vm2621, %v2586
      %2653 = vst.msk [vmem:[#allocation2 + $0xf8] sm:$0xff] %vm2621, %v2588
      %v2654 = vld [vmem:[%s1 + $0x1] sm:$0x1]
      %v2655 = vld [vmem:[%s2 + $0x1] sm:$0x1]
      %v2656 = vld [vmem:[%s3 + $0x1] sm:$0x1]
      %v2657 = vld [vmem:[#allocation2] sm:$0xff]
      %v2658 = vld [vmem:[#allocation2 + $0x8] sm:$0xff]
      %v2659 = vld [vmem:[#allocation2 + $0x10] sm:$0xff]
      %v2660 = vld [vmem:[#allocation2 + $0x18] sm:$0xff]
      %v2661 = vld [vmem:[#allocation2 + $0x20] sm:$0xff]
      %v2662 = vld [vmem:[#allocation2 + $0x28] sm:$0xff]
      %v2663 = vld [vmem:[#allocation2 + $0x30] sm:$0xff]
      %v2664 = vld [vmem:[#allocation2 + $0x38] sm:$0xff]
      %v2665 = vld [vmem:[#allocation2 + $0x40] sm:$0xff]
      %v2666 = vld [vmem:[#allocation2 + $0x48] sm:$0xff]
      %v2667 = vld [vmem:[#allocation2 + $0x50] sm:$0xff]
      %v2668 = vld [vmem:[#allocation2 + $0x58] sm:$0xff]
      %v2669 = vld [vmem:[#allocation2 + $0x60] sm:$0xff]
      %v2670 = vld [vmem:[#allocation2 + $0x68] sm:$0xff]
      %v2671 = vld [vmem:[#allocation2 + $0x70] sm:$0xff]
      %v2672 = vld [vmem:[#allocation2 + $0x78] sm:$0xff]
      %v2673 = vld [vmem:[#allocation2 + $0x80] sm:$0xff]
      %v2674 = vld [vmem:[#allocation2 + $0x88] sm:$0xff]
      %v2675 = vld [vmem:[#allocation2 + $0x90] sm:$0xff]
      %v2676 = vld [vmem:[#allocation2 + $0x98] sm:$0xff]
      %v2677 = vld [vmem:[#allocation2 + $0xa0] sm:$0xff]
      %v2678 = vld [vmem:[#allocation2 + $0xa8] sm:$0xff]
      %v2679 = vld [vmem:[#allocation2 + $0xb0] sm:$0xff]
      %v2680 = vld [vmem:[#allocation2 + $0xb8] sm:$0xff]
      %v2681 = vld [vmem:[#allocation2 + $0xc0] sm:$0xff]
      %v2682 = vld [vmem:[#allocation2 + $0xc8] sm:$0xff]
      %v2683 = vld [vmem:[#allocation2 + $0xd0] sm:$0xff]
      %v2684 = vld [vmem:[#allocation2 + $0xd8] sm:$0xff]
      %v2685 = vld [vmem:[#allocation2 + $0xe0] sm:$0xff]
      %v2686 = vld [vmem:[#allocation2 + $0xe8] sm:$0xff]
      %v2687 = vld [vmem:[#allocation2 + $0xf0] sm:$0xff]
      %v2688 = vld [vmem:[#allocation2 + $0xf8] sm:$0xff]
      %v2689 = vlaneseq
      %v2690 = vshrl.u32 %v2689, 7
      %v2691 = vsub.s32 0, %v2690
      %v2692 = vrot.slane %v2654, %v2691
      %v2693 = vmul.f32 %v2657, %v2692
      %v2694 = vmul.f32 %v2658, %v2692
      %v2695 = vmul.f32 %v2659, %v2692
      %v2696 = vmul.f32 %v2660, %v2692
      %v2697 = vmul.f32 %v2661, %v2692
      %v2698 = vmul.f32 %v2662, %v2692
      %v2699 = vmul.f32 %v2663, %v2692
      %v2700 = vmul.f32 %v2664, %v2692
      %v2701 = vmul.f32 %v2665, %v2692
      %v2702 = vmul.f32 %v2666, %v2692
      %v2703 = vmul.f32 %v2667, %v2692
      %v2704 = vmul.f32 %v2668, %v2692
      %v2705 = vmul.f32 %v2669, %v2692
      %v2706 = vmul.f32 %v2670, %v2692
      %v2707 = vmul.f32 %v2671, %v2692
      %v2708 = vmul.f32 %v2672, %v2692
      %v2709 = vmul.f32 %v2673, %v2692
      %v2710 = vmul.f32 %v2674, %v2692
      %v2711 = vmul.f32 %v2675, %v2692
      %v2712 = vmul.f32 %v2676, %v2692
      %v2713 = vmul.f32 %v2677, %v2692
      %v2714 = vmul.f32 %v2678, %v2692
      %v2715 = vmul.f32 %v2679, %v2692
      %v2716 = vmul.f32 %v2680, %v2692
      %v2717 = vmul.f32 %v2681, %v2692
      %v2718 = vmul.f32 %v2682, %v2692
      %v2719 = vmul.f32 %v2683, %v2692
      %v2720 = vmul.f32 %v2684, %v2692
      %v2721 = vmul.f32 %v2685, %v2692
      %v2722 = vmul.f32 %v2686, %v2692
      %v2723 = vmul.f32 %v2687, %v2692
      %v2724 = vmul.f32 %v2688, %v2692
      %v2725 = vlaneseq
      %v2726 = vshrl.u32 %v2725, 7
      %v2727 = vsub.s32 0, %v2726
      %v2728 = vrot.slane %v2655, %v2727
      %v2729 = vadd.f32 %v2693, %v2728
      %v2730 = vadd.f32 %v2694, %v2728
      %v2731 = vadd.f32 %v2695, %v2728
      %v2732 = vadd.f32 %v2696, %v2728
      %v2733 = vadd.f32 %v2697, %v2728
      %v2734 = vadd.f32 %v2698, %v2728
      %v2735 = vadd.f32 %v2699, %v2728
      %v2736 = vadd.f32 %v2700, %v2728
      %v2737 = vadd.f32 %v2701, %v2728
      %v2738 = vadd.f32 %v2702, %v2728
      %v2739 = vadd.f32 %v2703, %v2728
      %v2740 = vadd.f32 %v2704, %v2728
      %v2741 = vadd.f32 %v2705, %v2728
      %v2742 = vadd.f32 %v2706, %v2728
      %v2743 = vadd.f32 %v2707, %v2728
      %v2744 = vadd.f32 %v2708, %v2728
      %v2745 = vadd.f32 %v2709, %v2728
      %v2746 = vadd.f32 %v2710, %v2728
      %v2747 = vadd.f32 %v2711, %v2728
      %v2748 = vadd.f32 %v2712, %v2728
      %v2749 = vadd.f32 %v2713, %v2728
      %v2750 = vadd.f32 %v2714, %v2728
      %v2751 = vadd.f32 %v2715, %v2728
      %v2752 = vadd.f32 %v2716, %v2728
      %v2753 = vadd.f32 %v2717, %v2728
      %v2754 = vadd.f32 %v2718, %v2728
      %v2755 = vadd.f32 %v2719, %v2728
      %v2756 = vadd.f32 %v2720, %v2728
      %v2757 = vadd.f32 %v2721, %v2728
      %v2758 = vadd.f32 %v2722, %v2728
      %v2759 = vadd.f32 %v2723, %v2728
      %v2760 = vadd.f32 %v2724, %v2728
      %v2761 = vmax.f32 %v2729, 0.0
      %v2762 = vmax.f32 %v2730, 0.0
      %v2763 = vmax.f32 %v2731, 0.0
      %v2764 = vmax.f32 %v2732, 0.0
      %v2765 = vmax.f32 %v2733, 0.0
      %v2766 = vmax.f32 %v2734, 0.0
      %v2767 = vmax.f32 %v2735, 0.0
      %v2768 = vmax.f32 %v2736, 0.0
      %v2769 = vmax.f32 %v2737, 0.0
      %v2770 = vmax.f32 %v2738, 0.0
      %v2771 = vmax.f32 %v2739, 0.0
      %v2772 = vmax.f32 %v2740, 0.0
      %v2773 = vmax.f32 %v2741, 0.0
      %v2774 = vmax.f32 %v2742, 0.0
      %v2775 = vmax.f32 %v2743, 0.0
      %v2776 = vmax.f32 %v2744, 0.0
      %v2777 = vmax.f32 %v2745, 0.0
      %v2778 = vmax.f32 %v2746, 0.0
      %v2779 = vmax.f32 %v2747, 0.0
      %v2780 = vmax.f32 %v2748, 0.0
      %v2781 = vmax.f32 %v2749, 0.0
      %v2782 = vmax.f32 %v2750, 0.0
      %v2783 = vmax.f32 %v2751, 0.0
      %v2784 = vmax.f32 %v2752, 0.0
      %v2785 = vmax.f32 %v2753, 0.0
      %v2786 = vmax.f32 %v2754, 0.0
      %v2787 = vmax.f32 %v2755, 0.0
      %v2788 = vmax.f32 %v2756, 0.0
      %v2789 = vmax.f32 %v2757, 0.0
      %v2790 = vmax.f32 %v2758, 0.0
      %v2791 = vmax.f32 %v2759, 0.0
      %v2792 = vmax.f32 %v2760, 0.0
      %v2793 = vld [vmem:[%s5] sm:$0xff]
      %vm2794 = vcmask 64512
      %v2796 = vsel %vm2794, %v2761, 0
      %v2799 = vsel %vm2794, %v2762, 0
      %v2802 = vsel %vm2794, %v2763, 0
      %v2805 = vsel %vm2794, %v2764, 0
      %v2808 = vsel %vm2794, %v2765, 0
      %v2811 = vsel %vm2794, %v2766, 0
      %v2814 = vsel %vm2794, %v2767, 0
      %v2817 = vsel %vm2794, %v2768, 0
      %v2820 = vsel %vm2794, %v2769, 0
      %v2823 = vsel %vm2794, %v2770, 0
      %v2826 = vsel %vm2794, %v2771, 0
      %v2829 = vsel %vm2794, %v2772, 0
      %v2832 = vsel %vm2794, %v2773, 0
      %v2835 = vsel %vm2794, %v2774, 0
      %v2838 = vsel %vm2794, %v2775, 0
      %v2841 = vsel %vm2794, %v2776, 0
      %v2844 = vsel %vm2794, %v2777, 0
      %v2847 = vsel %vm2794, %v2778, 0
      %v2850 = vsel %vm2794, %v2779, 0
      %v2853 = vsel %vm2794, %v2780, 0
      %v2856 = vsel %vm2794, %v2781, 0
      %v2859 = vsel %vm2794, %v2782, 0
      %v2862 = vsel %vm2794, %v2783, 0
      %v2865 = vsel %vm2794, %v2784, 0
      %v2868 = vsel %vm2794, %v2785, 0
      %v2871 = vsel %vm2794, %v2786, 0
      %v2874 = vsel %vm2794, %v2787, 0
      %v2877 = vsel %vm2794, %v2788, 0
      %v2880 = vsel %vm2794, %v2789, 0
      %v2883 = vsel %vm2794, %v2790, 0
      %v2886 = vsel %vm2794, %v2791, 0
      %v2889 = vsel %vm2794, %v2792, 0
      %2891 = vmatprep.subr.mxu0 0.0
      %2892 = vmatpush1.msra.mxu0 %v2793
      %2893 = vmatprep.subr.mxu0 0.0
      %2894 = vmatpush1.msra.mxu0 0.0
      %2895 = vmatprep.subr.mxu0 0.0
      %2896 = vmatpush1.msra.mxu0 0.0
      %2897 = vmatprep.subr.mxu0 0.0
      %2898 = vmatpush1.msra.mxu0 0.0
      %2899 = vmatprep.subr.mxu0 0.0
      %2900 = vmatpush1.msra.mxu0 0.0
      %2901 = vmatprep.subr.mxu0 0.0
      %2902 = vmatpush1.msra.mxu0 0.0
      %2903 = vmatprep.subr.mxu0 0.0
      %2904 = vmatpush1.msra.mxu0 0.0
      %2905 = vmatprep.subr.mxu0 0.0
      %2906 = vmatpush1.msra.mxu0 0.0
      %2907 = vmatprep.subr.mxu0 0.0
      %2908 = vmatpush1.msra.mxu0 0.0
      %2909 = vmatprep.subr.mxu0 0.0
      %2910 = vmatpush1.msra.mxu0 0.0
      %2911 = vmatprep.subr.mxu0 0.0
      %2912 = vmatpush1.msra.mxu0 0.0
      %2913 = vmatprep.subr.mxu0 0.0
      %2914 = vmatpush1.msra.mxu0 0.0
      %2915 = vmatprep.subr.mxu0 0.0
      %2916 = vmatpush1.msra.mxu0 0.0
      %2917 = vmatprep.subr.mxu0 0.0
      %2918 = vmatpush1.msra.mxu0 0.0
      %2919 = vmatprep.subr.mxu0 0.0
      %2920 = vmatpush1.msra.mxu0 0.0
      %2921 = vmatprep.subr.mxu0 0.0
      %2922 = vmatpush1.msra.mxu0 0.0
      %2923 = vmatprep.subr.mxu0 0.0
      %2924 = vmatpush1.msra.mxu0 0.0
      %2925 = vmatprep.subr.mxu0 0.0
      %2926 = vmatpush1.msra.mxu0 0.0
      %2927 = vmatprep.subr.mxu0 0.0
      %2928 = vmatpush1.msra.mxu0 0.0
      %2929 = vmatprep.subr.mxu0 0.0
      %2930 = vmatpush1.msra.mxu0 0.0
      %2931 = vmatprep.subr.mxu0 0.0
      %2932 = vmatpush1.msra.mxu0 0.0
      %2933 = vmatprep.subr.mxu0 0.0
      %2934 = vmatpush1.msra.mxu0 0.0
      %2935 = vmatprep.subr.mxu0 0.0
      %2936 = vmatpush1.msra.mxu0 0.0
      %2937 = vmatprep.subr.mxu0 0.0
      %2938 = vmatpush1.msra.mxu0 0.0
      %2939 = vmatprep.subr.mxu0 0.0
      %2940 = vmatpush1.msra.mxu0 0.0
      %2941 = vmatprep.subr.mxu0 0.0
      %2942 = vmatpush1.msra.mxu0 0.0
      %2943 = vmatprep.subr.mxu0 0.0
      %2944 = vmatpush1.msra.mxu0 0.0
      %2945 = vmatprep.subr.mxu0 0.0
      %2946 = vmatpush1.msra.mxu0 0.0
      %2947 = vmatprep.subr.mxu0 0.0
      %2948 = vmatpush1.msra.mxu0 0.0
      %2949 = vmatprep.subr.mxu0 0.0
      %2950 = vmatpush1.msra.mxu0 0.0
      %2951 = vmatprep.subr.mxu0 0.0
      %2952 = vmatpush1.msra.mxu0 0.0
      %2953 = vmatprep.subr.mxu0 0.0
      %2954 = vmatpush1.msra.mxu0 0.0
      %2955 = vmatprep.mubr.f32.mxu0 0.0
      %2956 = vmatmul.mubr.f32.gmra.mrb[0].mxu0 %v2796
      %v2957 = vpop.f32.mrb[0].mxu0
      %v2958 = vadd.f32 0.0, %v2957
      %v2959 = vpop.f32.mrb[0].mxu0
      %2960 = vmatprep.mubr.f32.mxu0 0.0
      %2961 = vmatmul.mubr.f32.gmra.mrb[0].mxu0 %v2799
      %v2962 = vpop.f32.mrb[0].mxu0
      %v2963 = vadd.f32 0.0, %v2962
      %v2964 = vpop.f32.mrb[0].mxu0
      %2965 = vmatprep.mubr.f32.mxu0 0.0
      %2966 = vmatmul.mubr.f32.gmra.mrb[0].mxu0 %v2802
      %v2967 = vpop.f32.mrb[0].mxu0
      %v2968 = vadd.f32 0.0, %v2967
      %v2969 = vpop.f32.mrb[0].mxu0
      %2970 = vmatprep.mubr.f32.mxu0 0.0
      %2971 = vmatmul.mubr.f32.gmra.mrb[0].mxu0 %v2805
      %v2972 = vpop.f32.mrb[0].mxu0
      %v2973 = vadd.f32 0.0, %v2972
      %v2974 = vpop.f32.mrb[0].mxu0
      %2975 = vmatprep.mubr.f32.mxu0 0.0
      %2976 = vmatmul.mubr.f32.gmra.mrb[0].mxu0 %v2808
      %v2977 = vpop.f32.mrb[0].mxu0
      %v2978 = vadd.f32 0.0, %v2977
      %v2979 = vpop.f32.mrb[0].mxu0
      %2980 = vmatprep.mubr.f32.mxu0 0.0
      %2981 = vmatmul.mubr.f32.gmra.mrb[0].mxu0 %v2811
      %v2982 = vpop.f32.mrb[0].mxu0
      %v2983 = vadd.f32 0.0, %v2982
      %v2984 = vpop.f32.mrb[0].mxu0
      %2985 = vmatprep.mubr.f32.mxu0 0.0
      %2986 = vmatmul.mubr.f32.gmra.mrb[0].mxu0 %v2814
      %v2987 = vpop.f32.mrb[0].mxu0
      %v2988 = vadd.f32 0.0, %v2987
      %v2989 = vpop.f32.mrb[0].mxu0
      %2990 = vmatprep.mubr.f32.mxu0 0.0
      %2991 = vmatmul.mubr.f32.gmra.mrb[0].mxu0 %v2817
      %v2992 = vpop.f32.mrb[0].mxu0
      %v2993 = vadd.f32 0.0, %v2992
      %v2994 = vpop.f32.mrb[0].mxu0
      %2995 = vmatprep.mubr.f32.mxu0 0.0
      %2996 = vmatmul.mubr.f32.gmra.mrb[0].mxu0 %v2820
      %v2997 = vpop.f32.mrb[0].mxu0
      %v2998 = vadd.f32 0.0, %v2997
      %v2999 = vpop.f32.mrb[0].mxu0
      %3000 = vmatprep.mubr.f32.mxu0 0.0
      %3001 = vmatmul.mubr.f32.gmra.mrb[0].mxu0 %v2823
      %v3002 = vpop.f32.mrb[0].mxu0
      %v3003 = vadd.f32 0.0, %v3002
      %v3004 = vpop.f32.mrb[0].mxu0
      %3005 = vmatprep.mubr.f32.mxu0 0.0
      %3006 = vmatmul.mubr.f32.gmra.mrb[0].mxu0 %v2826
      %v3007 = vpop.f32.mrb[0].mxu0
      %v3008 = vadd.f32 0.0, %v3007
      %v3009 = vpop.f32.mrb[0].mxu0
      %3010 = vmatprep.mubr.f32.mxu0 0.0
      %3011 = vmatmul.mubr.f32.gmra.mrb[0].mxu0 %v2829
      %v3012 = vpop.f32.mrb[0].mxu0
      %v3013 = vadd.f32 0.0, %v3012
      %v3014 = vpop.f32.mrb[0].mxu0
      %3015 = vmatprep.mubr.f32.mxu0 0.0
      %3016 = vmatmul.mubr.f32.gmra.mrb[0].mxu0 %v2832
      %v3017 = vpop.f32.mrb[0].mxu0
      %v3018 = vadd.f32 0.0, %v3017
      %v3019 = vpop.f32.mrb[0].mxu0
      %3020 = vmatprep.mubr.f32.mxu0 0.0
      %3021 = vmatmul.mubr.f32.gmra.mrb[0].mxu0 %v2835
      %v3022 = vpop.f32.mrb[0].mxu0
      %v3023 = vadd.f32 0.0, %v3022
      %v3024 = vpop.f32.mrb[0].mxu0
      %3025 = vmatprep.mubr.f32.mxu0 0.0
      %3026 = vmatmul.mubr.f32.gmra.mrb[0].mxu0 %v2838
      %v3027 = vpop.f32.mrb[0].mxu0
      %v3028 = vadd.f32 0.0, %v3027
      %v3029 = vpop.f32.mrb[0].mxu0
      %3030 = vmatprep.mubr.f32.mxu0 0.0
      %3031 = vmatmul.mubr.f32.gmra.mrb[0].mxu0 %v2841
      %v3032 = vpop.f32.mrb[0].mxu0
      %v3033 = vadd.f32 0.0, %v3032
      %v3034 = vpop.f32.mrb[0].mxu0
      %3035 = vmatprep.mubr.f32.mxu0 0.0
      %3036 = vmatmul.mubr.f32.gmra.mrb[0].mxu0 %v2844
      %v3037 = vpop.f32.mrb[0].mxu0
      %v3038 = vadd.f32 0.0, %v3037
      %v3039 = vpop.f32.mrb[0].mxu0
      %3040 = vmatprep.mubr.f32.mxu0 0.0
      %3041 = vmatmul.mubr.f32.gmra.mrb[0].mxu0 %v2847
      %v3042 = vpop.f32.mrb[0].mxu0
      %v3043 = vadd.f32 0.0, %v3042
      %v3044 = vpop.f32.mrb[0].mxu0
      %3045 = vmatprep.mubr.f32.mxu0 0.0
      %3046 = vmatmul.mubr.f32.gmra.mrb[0].mxu0 %v2850
      %v3047 = vpop.f32.mrb[0].mxu0
      %v3048 = vadd.f32 0.0, %v3047
      %v3049 = vpop.f32.mrb[0].mxu0
      %3050 = vmatprep.mubr.f32.mxu0 0.0
      %3051 = vmatmul.mubr.f32.gmra.mrb[0].mxu0 %v2853
      %v3052 = vpop.f32.mrb[0].mxu0
      %v3053 = vadd.f32 0.0, %v3052
      %v3054 = vpop.f32.mrb[0].mxu0
      %3055 = vmatprep.mubr.f32.mxu0 0.0
      %3056 = vmatmul.mubr.f32.gmra.mrb[0].mxu0 %v2856
      %v3057 = vpop.f32.mrb[0].mxu0
      %v3058 = vadd.f32 0.0, %v3057
      %v3059 = vpop.f32.mrb[0].mxu0
      %3060 = vmatprep.mubr.f32.mxu0 0.0
      %3061 = vmatmul.mubr.f32.gmra.mrb[0].mxu0 %v2859
      %v3062 = vpop.f32.mrb[0].mxu0
      %v3063 = vadd.f32 0.0, %v3062
      %v3064 = vpop.f32.mrb[0].mxu0
      %3065 = vmatprep.mubr.f32.mxu0 0.0
      %3066 = vmatmul.mubr.f32.gmra.mrb[0].mxu0 %v2862
      %v3067 = vpop.f32.mrb[0].mxu0
      %v3068 = vadd.f32 0.0, %v3067
      %v3069 = vpop.f32.mrb[0].mxu0
      %3070 = vmatprep.mubr.f32.mxu0 0.0
      %3071 = vmatmul.mubr.f32.gmra.mrb[0].mxu0 %v2865
      %v3072 = vpop.f32.mrb[0].mxu0
      %v3073 = vadd.f32 0.0, %v3072
      %v3074 = vpop.f32.mrb[0].mxu0
      %3075 = vmatprep.mubr.f32.mxu0 0.0
      %3076 = vmatmul.mubr.f32.gmra.mrb[0].mxu0 %v2868
      %v3077 = vpop.f32.mrb[0].mxu0
      %v3078 = vadd.f32 0.0, %v3077
      %v3079 = vpop.f32.mrb[0].mxu0
      %3080 = vmatprep.mubr.f32.mxu0 0.0
      %3081 = vmatmul.mubr.f32.gmra.mrb[0].mxu0 %v2871
      %v3082 = vpop.f32.mrb[0].mxu0
      %v3083 = vadd.f32 0.0, %v3082
      %v3084 = vpop.f32.mrb[0].mxu0
      %3085 = vmatprep.mubr.f32.mxu0 0.0
      %3086 = vmatmul.mubr.f32.gmra.mrb[0].mxu0 %v2874
      %v3087 = vpop.f32.mrb[0].mxu0
      %v3088 = vadd.f32 0.0, %v3087
      %v3089 = vpop.f32.mrb[0].mxu0
      %3090 = vmatprep.mubr.f32.mxu0 0.0
      %3091 = vmatmul.mubr.f32.gmra.mrb[0].mxu0 %v2877
      %v3092 = vpop.f32.mrb[0].mxu0
      %v3093 = vadd.f32 0.0, %v3092
      %v3094 = vpop.f32.mrb[0].mxu0
      %3095 = vmatprep.mubr.f32.mxu0 0.0
      %3096 = vmatmul.mubr.f32.gmra.mrb[0].mxu0 %v2880
      %v3097 = vpop.f32.mrb[0].mxu0
      %v3098 = vadd.f32 0.0, %v3097
      %v3099 = vpop.f32.mrb[0].mxu0
      %3100 = vmatprep.mubr.f32.mxu0 0.0
      %3101 = vmatmul.mubr.f32.gmra.mrb[0].mxu0 %v2883
      %v3102 = vpop.f32.mrb[0].mxu0
      %v3103 = vadd.f32 0.0, %v3102
      %v3104 = vpop.f32.mrb[0].mxu0
      %3105 = vmatprep.mubr.f32.mxu0 0.0
      %3106 = vmatmul.mubr.f32.gmra.mrb[0].mxu0 %v2886
      %v3107 = vpop.f32.mrb[0].mxu0
      %v3108 = vadd.f32 0.0, %v3107
      %v3109 = vpop.f32.mrb[0].mxu0
      %3110 = vmatprep.mubr.f32.mxu0 0.0
      %3111 = vmatmul.mubr.f32.gmra.mrb[0].mxu0 %v2889
      %v3112 = vpop.f32.mrb[0].mxu0
      %v3113 = vadd.f32 0.0, %v3112
      %v3114 = vpop.f32.mrb[0].mxu0
      %3115 = vdwg.mxu0
      %3116 = vst.msk [vmem:[%s855 + $0x8] sm:$0xff] %vm279, %v2958
      %3117 = vst.msk [vmem:[%s855 + $0x10] sm:$0xff] %vm279, %v2963
      %3118 = vst.msk [vmem:[%s855 + $0x28] sm:$0xff] %vm279, %v2968
      %3119 = vst.msk [vmem:[%s855 + $0x30] sm:$0xff] %vm279, %v2973
      %3120 = vst.msk [vmem:[%s855 + $0x48] sm:$0xff] %vm279, %v2978
      %3121 = vst.msk [vmem:[%s855 + $0x50] sm:$0xff] %vm279, %v2983
      %3122 = vst.msk [vmem:[%s855 + $0x68] sm:$0xff] %vm279, %v2988
      %3123 = vst.msk [vmem:[%s855 + $0x70] sm:$0xff] %vm279, %v2993
      %3124 = vst.msk [vmem:[%s855 + $0x88] sm:$0xff] %vm279, %v2998
      %3125 = vst.msk [vmem:[%s855 + $0x90] sm:$0xff] %vm279, %v3003
      %3126 = vst.msk [vmem:[%s855 + $0xa8] sm:$0xff] %vm279, %v3008
      %3127 = vst.msk [vmem:[%s855 + $0xb0] sm:$0xff] %vm279, %v3013
      %3128 = vst.msk [vmem:[%s855 + $0xc8] sm:$0xff] %vm279, %v3018
      %3129 = vst.msk [vmem:[%s855 + $0xd0] sm:$0xff] %vm279, %v3023
      %3130 = vst.msk [vmem:[%s855 + $0xe8] sm:$0xff] %vm279, %v3028
      %3131 = vst.msk [vmem:[%s855 + $0xf0] sm:$0xff] %vm279, %v3033
      %3132 = vst.msk [vmem:[%s855 + $0x108] sm:$0xff] %vm279, %v3038
      %3133 = vst.msk [vmem:[%s855 + $0x110] sm:$0xff] %vm279, %v3043
      %3134 = vst.msk [vmem:[%s855 + $0x128] sm:$0xff] %vm279, %v3048
      %3135 = vst.msk [vmem:[%s855 + $0x130] sm:$0xff] %vm279, %v3053
      %3136 = vst.msk [vmem:[%s855 + $0x148] sm:$0xff] %vm279, %v3058
      %3137 = vst.msk [vmem:[%s855 + $0x150] sm:$0xff] %vm279, %v3063
      %3138 = vst.msk [vmem:[%s855 + $0x168] sm:$0xff] %vm279, %v3068
      %3139 = vst.msk [vmem:[%s855 + $0x170] sm:$0xff] %vm279, %v3073
      %3140 = vst.msk [vmem:[%s855 + $0x188] sm:$0xff] %vm279, %v3078
      %3141 = vst.msk [vmem:[%s855 + $0x190] sm:$0xff] %vm279, %v3083
      %3142 = vst.msk [vmem:[%s855 + $0x1a8] sm:$0xff] %vm279, %v3088
      %3143 = vst.msk [vmem:[%s855 + $0x1b0] sm:$0xff] %vm279, %v3093
      %3144 = vst.msk [vmem:[%s855 + $0x1c8] sm:$0xff] %vm279, %v3098
      %3145 = vst.msk [vmem:[%s855 + $0x1d0] sm:$0xff] %vm279, %v3103
      %3146 = vst.msk [vmem:[%s855 + $0x1e8] sm:$0xff] %vm279, %v3108
      %3147 = vst.msk [vmem:[%s855 + $0x1f0] sm:$0xff] %vm279, %v3113
      %v3148 = vld [vmem:[#allocation3 + $0x7] sm:$0xff]
      %v3149 = vld [vmem:[#allocation3 + $0xf] sm:$0xff]
      %v3150 = vld [vmem:[#allocation3 + $0x27] sm:$0xff]
      %v3151 = vld [vmem:[#allocation3 + $0x2f] sm:$0xff]
      %v3152 = vld [vmem:[#allocation3 + $0x47] sm:$0xff]
      %v3153 = vld [vmem:[#allocation3 + $0x4f] sm:$0xff]
      %v3154 = vld [vmem:[#allocation3 + $0x67] sm:$0xff]
      %v3155 = vld [vmem:[#allocation3 + $0x6f] sm:$0xff]
      %v3156 = vld [vmem:[#allocation3 + $0x87] sm:$0xff]
      %v3157 = vld [vmem:[#allocation3 + $0x8f] sm:$0xff]
      %v3158 = vld [vmem:[#allocation3 + $0xa7] sm:$0xff]
      %v3159 = vld [vmem:[#allocation3 + $0xaf] sm:$0xff]
      %v3160 = vld [vmem:[#allocation3 + $0xc7] sm:$0xff]
      %v3161 = vld [vmem:[#allocation3 + $0xcf] sm:$0xff]
      %v3162 = vld [vmem:[#allocation3 + $0xe7] sm:$0xff]
      %v3163 = vld [vmem:[#allocation3 + $0xef] sm:$0xff]
      %v3164 = vld [vmem:[#allocation3 + $0x107] sm:$0xff]
      %v3165 = vld [vmem:[#allocation3 + $0x10f] sm:$0xff]
      %v3166 = vld [vmem:[#allocation3 + $0x127] sm:$0xff]
      %v3167 = vld [vmem:[#allocation3 + $0x12f] sm:$0xff]
      %v3168 = vld [vmem:[#allocation3 + $0x147] sm:$0xff]
      %v3169 = vld [vmem:[#allocation3 + $0x14f] sm:$0xff]
      %v3170 = vld [vmem:[#allocation3 + $0x167] sm:$0xff]
      %v3171 = vld [vmem:[#allocation3 + $0x16f] sm:$0xff]
      %v3172 = vld [vmem:[#allocation3 + $0x187] sm:$0xff]
      %v3173 = vld [vmem:[#allocation3 + $0x18f] sm:$0xff]
      %v3174 = vld [vmem:[#allocation3 + $0x1a7] sm:$0xff]
      %v3175 = vld [vmem:[#allocation3 + $0x1af] sm:$0xff]
      %v3176 = vld [vmem:[#allocation3 + $0x1c7] sm:$0xff]
      %v3177 = vld [vmem:[#allocation3 + $0x1cf] sm:$0xff]
      %v3178 = vld [vmem:[#allocation3 + $0x1e7] sm:$0xff]
      %v3179 = vld [vmem:[#allocation3 + $0x1ef] sm:$0xff]
      %v3180 = vld [vmem:[#allocation3 + $0x8] sm:$0xff]
      %v3181 = vld [vmem:[#allocation3 + $0x10] sm:$0xff]
      %v3182 = vld [vmem:[#allocation3 + $0x28] sm:$0xff]
      %v3183 = vld [vmem:[#allocation3 + $0x30] sm:$0xff]
      %v3184 = vld [vmem:[#allocation3 + $0x48] sm:$0xff]
      %v3185 = vld [vmem:[#allocation3 + $0x50] sm:$0xff]
      %v3186 = vld [vmem:[#allocation3 + $0x68] sm:$0xff]
      %v3187 = vld [vmem:[#allocation3 + $0x70] sm:$0xff]
      %v3188 = vld [vmem:[#allocation3 + $0x88] sm:$0xff]
      %v3189 = vld [vmem:[#allocation3 + $0x90] sm:$0xff]
      %v3190 = vld [vmem:[#allocation3 + $0xa8] sm:$0xff]
      %v3191 = vld [vmem:[#allocation3 + $0xb0] sm:$0xff]
      %v3192 = vld [vmem:[#allocation3 + $0xc8] sm:$0xff]
      %v3193 = vld [vmem:[#allocation3 + $0xd0] sm:$0xff]
      %v3194 = vld [vmem:[#allocation3 + $0xe8] sm:$0xff]
      %v3195 = vld [vmem:[#allocation3 + $0xf0] sm:$0xff]
      %v3196 = vld [vmem:[#allocation3 + $0x108] sm:$0xff]
      %v3197 = vld [vmem:[#allocation3 + $0x110] sm:$0xff]
      %v3198 = vld [vmem:[#allocation3 + $0x128] sm:$0xff]
      %v3199 = vld [vmem:[#allocation3 + $0x130] sm:$0xff]
      %v3200 = vld [vmem:[#allocation3 + $0x148] sm:$0xff]
      %v3201 = vld [vmem:[#allocation3 + $0x150] sm:$0xff]
      %v3202 = vld [vmem:[#allocation3 + $0x168] sm:$0xff]
      %v3203 = vld [vmem:[#allocation3 + $0x170] sm:$0xff]
      %v3204 = vld [vmem:[#allocation3 + $0x188] sm:$0xff]
      %v3205 = vld [vmem:[#allocation3 + $0x190] sm:$0xff]
      %v3206 = vld [vmem:[#allocation3 + $0x1a8] sm:$0xff]
      %v3207 = vld [vmem:[#allocation3 + $0x1b0] sm:$0xff]
      %v3208 = vld [vmem:[#allocation3 + $0x1c8] sm:$0xff]
      %v3209 = vld [vmem:[#allocation3 + $0x1d0] sm:$0xff]
      %v3210 = vld [vmem:[#allocation3 + $0x1e8] sm:$0xff]
      %v3211 = vld [vmem:[#allocation3 + $0x1f0] sm:$0xff]
      %3244 = vrot.lane.b32.xlu0 %v3180, 124
      %v3245 = vpop.permute.xlu0 %3244
      %3246 = vrot.lane.b32.xlu0 %v3181, 124
      %v3247 = vpop.permute.xlu0 %3246
      %3248 = vrot.lane.b32.xlu0 %v3182, 124
      %v3249 = vpop.permute.xlu0 %3248
      %3250 = vrot.lane.b32.xlu0 %v3183, 124
      %v3251 = vpop.permute.xlu0 %3250
      %3252 = vrot.lane.b32.xlu0 %v3184, 124
      %v3253 = vpop.permute.xlu0 %3252
      %3254 = vrot.lane.b32.xlu0 %v3185, 124
      %v3255 = vpop.permute.xlu0 %3254
      %3256 = vrot.lane.b32.xlu0 %v3186, 124
      %v3257 = vpop.permute.xlu0 %3256
      %3258 = vrot.lane.b32.xlu0 %v3187, 124
      %v3259 = vpop.permute.xlu0 %3258
      %3260 = vrot.lane.b32.xlu0 %v3188, 124
      %v3261 = vpop.permute.xlu0 %3260
      %3262 = vrot.lane.b32.xlu0 %v3189, 124
      %v3263 = vpop.permute.xlu0 %3262
      %3264 = vrot.lane.b32.xlu0 %v3190, 124
      %v3265 = vpop.permute.xlu0 %3264
      %3266 = vrot.lane.b32.xlu0 %v3191, 124
      %v3267 = vpop.permute.xlu0 %3266
      %3268 = vrot.lane.b32.xlu0 %v3192, 124
      %v3269 = vpop.permute.xlu0 %3268
      %3270 = vrot.lane.b32.xlu0 %v3193, 124
      %v3271 = vpop.permute.xlu0 %3270
      %3272 = vrot.lane.b32.xlu0 %v3194, 124
      %v3273 = vpop.permute.xlu0 %3272
      %3274 = vrot.lane.b32.xlu0 %v3195, 124
      %v3275 = vpop.permute.xlu0 %3274
      %3276 = vrot.lane.b32.xlu0 %v3196, 124
      %v3277 = vpop.permute.xlu0 %3276
      %3278 = vrot.lane.b32.xlu0 %v3197, 124
      %v3279 = vpop.permute.xlu0 %3278
      %3280 = vrot.lane.b32.xlu0 %v3198, 124
      %v3281 = vpop.permute.xlu0 %3280
      %3282 = vrot.lane.b32.xlu0 %v3199, 124
      %v3283 = vpop.permute.xlu0 %3282
      %3284 = vrot.lane.b32.xlu0 %v3200, 124
      %v3285 = vpop.permute.xlu0 %3284
      %3286 = vrot.lane.b32.xlu0 %v3201, 124
      %v3287 = vpop.permute.xlu0 %3286
      %3288 = vrot.lane.b32.xlu0 %v3202, 124
      %v3289 = vpop.permute.xlu0 %3288
      %3290 = vrot.lane.b32.xlu0 %v3203, 124
      %v3291 = vpop.permute.xlu0 %3290
      %3292 = vrot.lane.b32.xlu0 %v3204, 124
      %v3293 = vpop.permute.xlu0 %3292
      %3294 = vrot.lane.b32.xlu0 %v3205, 124
      %v3295 = vpop.permute.xlu0 %3294
      %3296 = vrot.lane.b32.xlu0 %v3206, 124
      %v3297 = vpop.permute.xlu0 %3296
      %3298 = vrot.lane.b32.xlu0 %v3207, 124
      %v3299 = vpop.permute.xlu0 %3298
      %3300 = vrot.lane.b32.xlu0 %v3208, 124
      %v3301 = vpop.permute.xlu0 %3300
      %3302 = vrot.lane.b32.xlu0 %v3209, 124
      %v3303 = vpop.permute.xlu0 %3302
      %3304 = vrot.lane.b32.xlu0 %v3210, 124
      %v3305 = vpop.permute.xlu0 %3304
      %3306 = vrot.lane.b32.xlu0 %v3211, 124
      %v3307 = vpop.permute.xlu0 %3306
      %v3340 = vadd.f32 %v3148, %v3245
      %v3341 = vadd.f32 %v3149, %v3247
      %v3342 = vadd.f32 %v3150, %v3249
      %v3343 = vadd.f32 %v3151, %v3251
      %v3344 = vadd.f32 %v3152, %v3253
      %v3345 = vadd.f32 %v3153, %v3255
      %v3346 = vadd.f32 %v3154, %v3257
      %v3347 = vadd.f32 %v3155, %v3259
      %v3348 = vadd.f32 %v3156, %v3261
      %v3349 = vadd.f32 %v3157, %v3263
      %v3350 = vadd.f32 %v3158, %v3265
      %v3351 = vadd.f32 %v3159, %v3267
      %v3352 = vadd.f32 %v3160, %v3269
      %v3353 = vadd.f32 %v3161, %v3271
      %v3354 = vadd.f32 %v3162, %v3273
      %v3355 = vadd.f32 %v3163, %v3275
      %v3356 = vadd.f32 %v3164, %v3277
      %v3357 = vadd.f32 %v3165, %v3279
      %v3358 = vadd.f32 %v3166, %v3281
      %v3359 = vadd.f32 %v3167, %v3283
      %v3360 = vadd.f32 %v3168, %v3285
      %v3361 = vadd.f32 %v3169, %v3287
      %v3362 = vadd.f32 %v3170, %v3289
      %v3363 = vadd.f32 %v3171, %v3291
      %v3364 = vadd.f32 %v3172, %v3293
      %v3365 = vadd.f32 %v3173, %v3295
      %v3366 = vadd.f32 %v3174, %v3297
      %v3367 = vadd.f32 %v3175, %v3299
      %v3368 = vadd.f32 %v3176, %v3301
      %v3369 = vadd.f32 %v3177, %v3303
      %v3370 = vadd.f32 %v3178, %v3305
      %v3371 = vadd.f32 %v3179, %v3307
      %v3372 = vld [vmem:[#allocation3 + $0x9] sm:$0xff]
      %v3373 = vld [vmem:[#allocation3 + $0x11] sm:$0xff]
      %v3374 = vld [vmem:[#allocation3 + $0x29] sm:$0xff]
      %v3375 = vld [vmem:[#allocation3 + $0x31] sm:$0xff]
      %v3376 = vld [vmem:[#allocation3 + $0x49] sm:$0xff]
      %v3377 = vld [vmem:[#allocation3 + $0x51] sm:$0xff]
      %v3378 = vld [vmem:[#allocation3 + $0x69] sm:$0xff]
      %v3379 = vld [vmem:[#allocation3 + $0x71] sm:$0xff]
      %v3380 = vld [vmem:[#allocation3 + $0x89] sm:$0xff]
      %v3381 = vld [vmem:[#allocation3 + $0x91] sm:$0xff]
      %v3382 = vld [vmem:[#allocation3 + $0xa9] sm:$0xff]
      %v3383 = vld [vmem:[#allocation3 + $0xb1] sm:$0xff]
      %v3384 = vld [vmem:[#allocation3 + $0xc9] sm:$0xff]
      %v3385 = vld [vmem:[#allocation3 + $0xd1] sm:$0xff]
      %v3386 = vld [vmem:[#allocation3 + $0xe9] sm:$0xff]
      %v3387 = vld [vmem:[#allocation3 + $0xf1] sm:$0xff]
      %v3388 = vld [vmem:[#allocation3 + $0x109] sm:$0xff]
      %v3389 = vld [vmem:[#allocation3 + $0x111] sm:$0xff]
      %v3390 = vld [vmem:[#allocation3 + $0x129] sm:$0xff]
      %v3391 = vld [vmem:[#allocation3 + $0x131] sm:$0xff]
      %v3392 = vld [vmem:[#allocation3 + $0x149] sm:$0xff]
      %v3393 = vld [vmem:[#allocation3 + $0x151] sm:$0xff]
      %v3394 = vld [vmem:[#allocation3 + $0x169] sm:$0xff]
      %v3395 = vld [vmem:[#allocation3 + $0x171] sm:$0xff]
      %v3396 = vld [vmem:[#allocation3 + $0x189] sm:$0xff]
      %v3397 = vld [vmem:[#allocation3 + $0x191] sm:$0xff]
      %v3398 = vld [vmem:[#allocation3 + $0x1a9] sm:$0xff]
      %v3399 = vld [vmem:[#allocation3 + $0x1b1] sm:$0xff]
      %v3400 = vld [vmem:[#allocation3 + $0x1c9] sm:$0xff]
      %v3401 = vld [vmem:[#allocation3 + $0x1d1] sm:$0xff]
      %v3402 = vld [vmem:[#allocation3 + $0x1e9] sm:$0xff]
      %v3403 = vld [vmem:[#allocation3 + $0x1f1] sm:$0xff]
      %3436 = vrot.lane.b32.xlu0 %v3372, 120
      %v3437 = vpop.permute.xlu0 %3436
      %3438 = vrot.lane.b32.xlu0 %v3373, 120
      %v3439 = vpop.permute.xlu0 %3438
      %3440 = vrot.lane.b32.xlu0 %v3374, 120
      %v3441 = vpop.permute.xlu0 %3440
      %3442 = vrot.lane.b32.xlu0 %v3375, 120
      %v3443 = vpop.permute.xlu0 %3442
      %3444 = vrot.lane.b32.xlu0 %v3376, 120
      %v3445 = vpop.permute.xlu0 %3444
      %3446 = vrot.lane.b32.xlu0 %v3377, 120
      %v3447 = vpop.permute.xlu0 %3446
      %3448 = vrot.lane.b32.xlu0 %v3378, 120
      %v3449 = vpop.permute.xlu0 %3448
      %3450 = vrot.lane.b32.xlu0 %v3379, 120
      %v3451 = vpop.permute.xlu0 %3450
      %3452 = vrot.lane.b32.xlu0 %v3380, 120
      %v3453 = vpop.permute.xlu0 %3452
      %3454 = vrot.lane.b32.xlu0 %v3381, 120
      %v3455 = vpop.permute.xlu0 %3454
      %3456 = vrot.lane.b32.xlu0 %v3382, 120
      %v3457 = vpop.permute.xlu0 %3456
      %3458 = vrot.lane.b32.xlu0 %v3383, 120
      %v3459 = vpop.permute.xlu0 %3458
      %3460 = vrot.lane.b32.xlu0 %v3384, 120
      %v3461 = vpop.permute.xlu0 %3460
      %3462 = vrot.lane.b32.xlu0 %v3385, 120
      %v3463 = vpop.permute.xlu0 %3462
      %3464 = vrot.lane.b32.xlu0 %v3386, 120
      %v3465 = vpop.permute.xlu0 %3464
      %3466 = vrot.lane.b32.xlu0 %v3387, 120
      %v3467 = vpop.permute.xlu0 %3466
      %3468 = vrot.lane.b32.xlu0 %v3388, 120
      %v3469 = vpop.permute.xlu0 %3468
      %3470 = vrot.lane.b32.xlu0 %v3389, 120
      %v3471 = vpop.permute.xlu0 %3470
      %3472 = vrot.lane.b32.xlu0 %v3390, 120
      %v3473 = vpop.permute.xlu0 %3472
      %3474 = vrot.lane.b32.xlu0 %v3391, 120
      %v3475 = vpop.permute.xlu0 %3474
      %3476 = vrot.lane.b32.xlu0 %v3392, 120
      %v3477 = vpop.permute.xlu0 %3476
      %3478 = vrot.lane.b32.xlu0 %v3393, 120
      %v3479 = vpop.permute.xlu0 %3478
      %3480 = vrot.lane.b32.xlu0 %v3394, 120
      %v3481 = vpop.permute.xlu0 %3480
      %3482 = vrot.lane.b32.xlu0 %v3395, 120
      %v3483 = vpop.permute.xlu0 %3482
      %3484 = vrot.lane.b32.xlu0 %v3396, 120
      %v3485 = vpop.permute.xlu0 %3484
      %3486 = vrot.lane.b32.xlu0 %v3397, 120
      %v3487 = vpop.permute.xlu0 %3486
      %3488 = vrot.lane.b32.xlu0 %v3398, 120
      %v3489 = vpop.permute.xlu0 %3488
      %3490 = vrot.lane.b32.xlu0 %v3399, 120
      %v3491 = vpop.permute.xlu0 %3490
      %3492 = vrot.lane.b32.xlu0 %v3400, 120
      %v3493 = vpop.permute.xlu0 %3492
      %3494 = vrot.lane.b32.xlu0 %v3401, 120
      %v3495 = vpop.permute.xlu0 %3494
      %3496 = vrot.lane.b32.xlu0 %v3402, 120
      %v3497 = vpop.permute.xlu0 %3496
      %3498 = vrot.lane.b32.xlu0 %v3403, 120
      %v3499 = vpop.permute.xlu0 %3498
      %v3532 = vadd.f32 %v3340, %v3437
      %v3533 = vadd.f32 %v3341, %v3439
      %v3534 = vadd.f32 %v3342, %v3441
      %v3535 = vadd.f32 %v3343, %v3443
      %v3536 = vadd.f32 %v3344, %v3445
      %v3537 = vadd.f32 %v3345, %v3447
      %v3538 = vadd.f32 %v3346, %v3449
      %v3539 = vadd.f32 %v3347, %v3451
      %v3540 = vadd.f32 %v3348, %v3453
      %v3541 = vadd.f32 %v3349, %v3455
      %v3542 = vadd.f32 %v3350, %v3457
      %v3543 = vadd.f32 %v3351, %v3459
      %v3544 = vadd.f32 %v3352, %v3461
      %v3545 = vadd.f32 %v3353, %v3463
      %v3546 = vadd.f32 %v3354, %v3465
      %v3547 = vadd.f32 %v3355, %v3467
      %v3548 = vadd.f32 %v3356, %v3469
      %v3549 = vadd.f32 %v3357, %v3471
      %v3550 = vadd.f32 %v3358, %v3473
      %v3551 = vadd.f32 %v3359, %v3475
      %v3552 = vadd.f32 %v3360, %v3477
      %v3553 = vadd.f32 %v3361, %v3479
      %v3554 = vadd.f32 %v3362, %v3481
      %v3555 = vadd.f32 %v3363, %v3483
      %v3556 = vadd.f32 %v3364, %v3485
      %v3557 = vadd.f32 %v3365, %v3487
      %v3558 = vadd.f32 %v3366, %v3489
      %v3559 = vadd.f32 %v3367, %v3491
      %v3560 = vadd.f32 %v3368, %v3493
      %v3561 = vadd.f32 %v3369, %v3495
      %v3562 = vadd.f32 %v3370, %v3497
      %v3563 = vadd.f32 %v3371, %v3499
      %v3564 = vld [vmem:[%s855 + $0x7] sm:$0xff]
      %v3565 = vld [vmem:[%s855 + $0xf] sm:$0xff]
      %v3566 = vld [vmem:[%s855 + $0x27] sm:$0xff]
      %v3567 = vld [vmem:[%s855 + $0x2f] sm:$0xff]
      %v3568 = vld [vmem:[%s855 + $0x47] sm:$0xff]
      %v3569 = vld [vmem:[%s855 + $0x4f] sm:$0xff]
      %v3570 = vld [vmem:[%s855 + $0x67] sm:$0xff]
      %v3571 = vld [vmem:[%s855 + $0x6f] sm:$0xff]
      %v3572 = vld [vmem:[%s855 + $0x87] sm:$0xff]
      %v3573 = vld [vmem:[%s855 + $0x8f] sm:$0xff]
      %v3574 = vld [vmem:[%s855 + $0xa7] sm:$0xff]
      %v3575 = vld [vmem:[%s855 + $0xaf] sm:$0xff]
      %v3576 = vld [vmem:[%s855 + $0xc7] sm:$0xff]
      %v3577 = vld [vmem:[%s855 + $0xcf] sm:$0xff]
      %v3578 = vld [vmem:[%s855 + $0xe7] sm:$0xff]
      %v3579 = vld [vmem:[%s855 + $0xef] sm:$0xff]
      %v3580 = vld [vmem:[%s855 + $0x107] sm:$0xff]
      %v3581 = vld [vmem:[%s855 + $0x10f] sm:$0xff]
      %v3582 = vld [vmem:[%s855 + $0x127] sm:$0xff]
      %v3583 = vld [vmem:[%s855 + $0x12f] sm:$0xff]
      %v3584 = vld [vmem:[%s855 + $0x147] sm:$0xff]
      %v3585 = vld [vmem:[%s855 + $0x14f] sm:$0xff]
      %v3586 = vld [vmem:[%s855 + $0x167] sm:$0xff]
      %v3587 = vld [vmem:[%s855 + $0x16f] sm:$0xff]
      %v3588 = vld [vmem:[%s855 + $0x187] sm:$0xff]
      %v3589 = vld [vmem:[%s855 + $0x18f] sm:$0xff]
      %v3590 = vld [vmem:[%s855 + $0x1a7] sm:$0xff]
      %v3591 = vld [vmem:[%s855 + $0x1af] sm:$0xff]
      %v3592 = vld [vmem:[%s855 + $0x1c7] sm:$0xff]
      %v3593 = vld [vmem:[%s855 + $0x1cf] sm:$0xff]
      %v3594 = vld [vmem:[%s855 + $0x1e7] sm:$0xff]
      %v3595 = vld [vmem:[%s855 + $0x1ef] sm:$0xff]
      %3628 = vrot.lane.b32.xlu0 %v3564, 116
      %v3629 = vpop.permute.xlu0 %3628
      %3630 = vrot.lane.b32.xlu0 %v3565, 116
      %v3631 = vpop.permute.xlu0 %3630
      %3632 = vrot.lane.b32.xlu0 %v3566, 116
      %v3633 = vpop.permute.xlu0 %3632
      %3634 = vrot.lane.b32.xlu0 %v3567, 116
      %v3635 = vpop.permute.xlu0 %3634
      %3636 = vrot.lane.b32.xlu0 %v3568, 116
      %v3637 = vpop.permute.xlu0 %3636
      %3638 = vrot.lane.b32.xlu0 %v3569, 116
      %v3639 = vpop.permute.xlu0 %3638
      %3640 = vrot.lane.b32.xlu0 %v3570, 116
      %v3641 = vpop.permute.xlu0 %3640
      %3642 = vrot.lane.b32.xlu0 %v3571, 116
      %v3643 = vpop.permute.xlu0 %3642
      %3644 = vrot.lane.b32.xlu0 %v3572, 116
      %v3645 = vpop.permute.xlu0 %3644
      %3646 = vrot.lane.b32.xlu0 %v3573, 116
      %v3647 = vpop.permute.xlu0 %3646
      %3648 = vrot.lane.b32.xlu0 %v3574, 116
      %v3649 = vpop.permute.xlu0 %3648
      %3650 = vrot.lane.b32.xlu0 %v3575, 116
      %v3651 = vpop.permute.xlu0 %3650
      %3652 = vrot.lane.b32.xlu0 %v3576, 116
      %v3653 = vpop.permute.xlu0 %3652
      %3654 = vrot.lane.b32.xlu0 %v3577, 116
      %v3655 = vpop.permute.xlu0 %3654
      %3656 = vrot.lane.b32.xlu0 %v3578, 116
      %v3657 = vpop.permute.xlu0 %3656
      %3658 = vrot.lane.b32.xlu0 %v3579, 116
      %v3659 = vpop.permute.xlu0 %3658
      %3660 = vrot.lane.b32.xlu0 %v3580, 116
      %v3661 = vpop.permute.xlu0 %3660
      %3662 = vrot.lane.b32.xlu0 %v3581, 116
      %v3663 = vpop.permute.xlu0 %3662
      %3664 = vrot.lane.b32.xlu0 %v3582, 116
      %v3665 = vpop.permute.xlu0 %3664
      %3666 = vrot.lane.b32.xlu0 %v3583, 116
      %v3667 = vpop.permute.xlu0 %3666
      %3668 = vrot.lane.b32.xlu0 %v3584, 116
      %v3669 = vpop.permute.xlu0 %3668
      %3670 = vrot.lane.b32.xlu0 %v3585, 116
      %v3671 = vpop.permute.xlu0 %3670
      %3672 = vrot.lane.b32.xlu0 %v3586, 116
      %v3673 = vpop.permute.xlu0 %3672
      %3674 = vrot.lane.b32.xlu0 %v3587, 116
      %v3675 = vpop.permute.xlu0 %3674
      %3676 = vrot.lane.b32.xlu0 %v3588, 116
      %v3677 = vpop.permute.xlu0 %3676
      %3678 = vrot.lane.b32.xlu0 %v3589, 116
      %v3679 = vpop.permute.xlu0 %3678
      %3680 = vrot.lane.b32.xlu0 %v3590, 116
      %v3681 = vpop.permute.xlu0 %3680
      %3682 = vrot.lane.b32.xlu0 %v3591, 116
      %v3683 = vpop.permute.xlu0 %3682
      %3684 = vrot.lane.b32.xlu0 %v3592, 116
      %v3685 = vpop.permute.xlu0 %3684
      %3686 = vrot.lane.b32.xlu0 %v3593, 116
      %v3687 = vpop.permute.xlu0 %3686
      %3688 = vrot.lane.b32.xlu0 %v3594, 116
      %v3689 = vpop.permute.xlu0 %3688
      %3690 = vrot.lane.b32.xlu0 %v3595, 116
      %v3691 = vpop.permute.xlu0 %3690
      %v3724 = vadd.f32 %v3532, %v3629
      %v3725 = vadd.f32 %v3533, %v3631
      %v3726 = vadd.f32 %v3534, %v3633
      %v3727 = vadd.f32 %v3535, %v3635
      %v3728 = vadd.f32 %v3536, %v3637
      %v3729 = vadd.f32 %v3537, %v3639
      %v3730 = vadd.f32 %v3538, %v3641
      %v3731 = vadd.f32 %v3539, %v3643
      %v3732 = vadd.f32 %v3540, %v3645
      %v3733 = vadd.f32 %v3541, %v3647
      %v3734 = vadd.f32 %v3542, %v3649
      %v3735 = vadd.f32 %v3543, %v3651
      %v3736 = vadd.f32 %v3544, %v3653
      %v3737 = vadd.f32 %v3545, %v3655
      %v3738 = vadd.f32 %v3546, %v3657
      %v3739 = vadd.f32 %v3547, %v3659
      %v3740 = vadd.f32 %v3548, %v3661
      %v3741 = vadd.f32 %v3549, %v3663
      %v3742 = vadd.f32 %v3550, %v3665
      %v3743 = vadd.f32 %v3551, %v3667
      %v3744 = vadd.f32 %v3552, %v3669
      %v3745 = vadd.f32 %v3553, %v3671
      %v3746 = vadd.f32 %v3554, %v3673
      %v3747 = vadd.f32 %v3555, %v3675
      %v3748 = vadd.f32 %v3556, %v3677
      %v3749 = vadd.f32 %v3557, %v3679
      %v3750 = vadd.f32 %v3558, %v3681
      %v3751 = vadd.f32 %v3559, %v3683
      %v3752 = vadd.f32 %v3560, %v3685
      %v3753 = vadd.f32 %v3561, %v3687
      %v3754 = vadd.f32 %v3562, %v3689
      %v3755 = vadd.f32 %v3563, %v3691
      %v3756 = vld [vmem:[%s855 + $0x8] sm:$0xff]
      %v3757 = vld [vmem:[%s855 + $0x10] sm:$0xff]
      %v3758 = vld [vmem:[%s855 + $0x28] sm:$0xff]
      %v3759 = vld [vmem:[%s855 + $0x30] sm:$0xff]
      %v3760 = vld [vmem:[%s855 + $0x48] sm:$0xff]
      %v3761 = vld [vmem:[%s855 + $0x50] sm:$0xff]
      %v3762 = vld [vmem:[%s855 + $0x68] sm:$0xff]
      %v3763 = vld [vmem:[%s855 + $0x70] sm:$0xff]
      %v3764 = vld [vmem:[%s855 + $0x88] sm:$0xff]
      %v3765 = vld [vmem:[%s855 + $0x90] sm:$0xff]
      %v3766 = vld [vmem:[%s855 + $0xa8] sm:$0xff]
      %v3767 = vld [vmem:[%s855 + $0xb0] sm:$0xff]
      %v3768 = vld [vmem:[%s855 + $0xc8] sm:$0xff]
      %v3769 = vld [vmem:[%s855 + $0xd0] sm:$0xff]
      %v3770 = vld [vmem:[%s855 + $0xe8] sm:$0xff]
      %v3771 = vld [vmem:[%s855 + $0xf0] sm:$0xff]
      %v3772 = vld [vmem:[%s855 + $0x108] sm:$0xff]
      %v3773 = vld [vmem:[%s855 + $0x110] sm:$0xff]
      %v3774 = vld [vmem:[%s855 + $0x128] sm:$0xff]
      %v3775 = vld [vmem:[%s855 + $0x130] sm:$0xff]
      %v3776 = vld [vmem:[%s855 + $0x148] sm:$0xff]
      %v3777 = vld [vmem:[%s855 + $0x150] sm:$0xff]
      %v3778 = vld [vmem:[%s855 + $0x168] sm:$0xff]
      %v3779 = vld [vmem:[%s855 + $0x170] sm:$0xff]
      %v3780 = vld [vmem:[%s855 + $0x188] sm:$0xff]
      %v3781 = vld [vmem:[%s855 + $0x190] sm:$0xff]
      %v3782 = vld [vmem:[%s855 + $0x1a8] sm:$0xff]
      %v3783 = vld [vmem:[%s855 + $0x1b0] sm:$0xff]
      %v3784 = vld [vmem:[%s855 + $0x1c8] sm:$0xff]
      %v3785 = vld [vmem:[%s855 + $0x1d0] sm:$0xff]
      %v3786 = vld [vmem:[%s855 + $0x1e8] sm:$0xff]
      %v3787 = vld [vmem:[%s855 + $0x1f0] sm:$0xff]
      %3820 = vrot.lane.b32.xlu0 %v3756, 112
      %v3821 = vpop.permute.xlu0 %3820
      %3822 = vrot.lane.b32.xlu0 %v3757, 112
      %v3823 = vpop.permute.xlu0 %3822
      %3824 = vrot.lane.b32.xlu0 %v3758, 112
      %v3825 = vpop.permute.xlu0 %3824
      %3826 = vrot.lane.b32.xlu0 %v3759, 112
      %v3827 = vpop.permute.xlu0 %3826
      %3828 = vrot.lane.b32.xlu0 %v3760, 112
      %v3829 = vpop.permute.xlu0 %3828
      %3830 = vrot.lane.b32.xlu0 %v3761, 112
      %v3831 = vpop.permute.xlu0 %3830
      %3832 = vrot.lane.b32.xlu0 %v3762, 112
      %v3833 = vpop.permute.xlu0 %3832
      %3834 = vrot.lane.b32.xlu0 %v3763, 112
      %v3835 = vpop.permute.xlu0 %3834
      %3836 = vrot.lane.b32.xlu0 %v3764, 112
      %v3837 = vpop.permute.xlu0 %3836
      %3838 = vrot.lane.b32.xlu0 %v3765, 112
      %v3839 = vpop.permute.xlu0 %3838
      %3840 = vrot.lane.b32.xlu0 %v3766, 112
      %v3841 = vpop.permute.xlu0 %3840
      %3842 = vrot.lane.b32.xlu0 %v3767, 112
      %v3843 = vpop.permute.xlu0 %3842
      %3844 = vrot.lane.b32.xlu0 %v3768, 112
      %v3845 = vpop.permute.xlu0 %3844
      %3846 = vrot.lane.b32.xlu0 %v3769, 112
      %v3847 = vpop.permute.xlu0 %3846
      %3848 = vrot.lane.b32.xlu0 %v3770, 112
      %v3849 = vpop.permute.xlu0 %3848
      %3850 = vrot.lane.b32.xlu0 %v3771, 112
      %v3851 = vpop.permute.xlu0 %3850
      %3852 = vrot.lane.b32.xlu0 %v3772, 112
      %v3853 = vpop.permute.xlu0 %3852
      %3854 = vrot.lane.b32.xlu0 %v3773, 112
      %v3855 = vpop.permute.xlu0 %3854
      %3856 = vrot.lane.b32.xlu0 %v3774, 112
      %v3857 = vpop.permute.xlu0 %3856
      %3858 = vrot.lane.b32.xlu0 %v3775, 112
      %v3859 = vpop.permute.xlu0 %3858
      %3860 = vrot.lane.b32.xlu0 %v3776, 112
      %v3861 = vpop.permute.xlu0 %3860
      %3862 = vrot.lane.b32.xlu0 %v3777, 112
      %v3863 = vpop.permute.xlu0 %3862
      %3864 = vrot.lane.b32.xlu0 %v3778, 112
      %v3865 = vpop.permute.xlu0 %3864
      %3866 = vrot.lane.b32.xlu0 %v3779, 112
      %v3867 = vpop.permute.xlu0 %3866
      %3868 = vrot.lane.b32.xlu0 %v3780, 112
      %v3869 = vpop.permute.xlu0 %3868
      %3870 = vrot.lane.b32.xlu0 %v3781, 112
      %v3871 = vpop.permute.xlu0 %3870
      %3872 = vrot.lane.b32.xlu0 %v3782, 112
      %v3873 = vpop.permute.xlu0 %3872
      %3874 = vrot.lane.b32.xlu0 %v3783, 112
      %v3875 = vpop.permute.xlu0 %3874
      %3876 = vrot.lane.b32.xlu0 %v3784, 112
      %v3877 = vpop.permute.xlu0 %3876
      %3878 = vrot.lane.b32.xlu0 %v3785, 112
      %v3879 = vpop.permute.xlu0 %3878
      %3880 = vrot.lane.b32.xlu0 %v3786, 112
      %v3881 = vpop.permute.xlu0 %3880
      %3882 = vrot.lane.b32.xlu0 %v3787, 112
      %v3883 = vpop.permute.xlu0 %3882
      %v3916 = vadd.f32 %v3724, %v3821
      %v3917 = vadd.f32 %v3725, %v3823
      %v3918 = vadd.f32 %v3726, %v3825
      %v3919 = vadd.f32 %v3727, %v3827
      %v3920 = vadd.f32 %v3728, %v3829
      %v3921 = vadd.f32 %v3729, %v3831
      %v3922 = vadd.f32 %v3730, %v3833
      %v3923 = vadd.f32 %v3731, %v3835
      %v3924 = vadd.f32 %v3732, %v3837
      %v3925 = vadd.f32 %v3733, %v3839
      %v3926 = vadd.f32 %v3734, %v3841
      %v3927 = vadd.f32 %v3735, %v3843
      %v3928 = vadd.f32 %v3736, %v3845
      %v3929 = vadd.f32 %v3737, %v3847
      %v3930 = vadd.f32 %v3738, %v3849
      %v3931 = vadd.f32 %v3739, %v3851
      %v3932 = vadd.f32 %v3740, %v3853
      %v3933 = vadd.f32 %v3741, %v3855
      %v3934 = vadd.f32 %v3742, %v3857
      %v3935 = vadd.f32 %v3743, %v3859
      %v3936 = vadd.f32 %v3744, %v3861
      %v3937 = vadd.f32 %v3745, %v3863
      %v3938 = vadd.f32 %v3746, %v3865
      %v3939 = vadd.f32 %v3747, %v3867
      %v3940 = vadd.f32 %v3748, %v3869
      %v3941 = vadd.f32 %v3749, %v3871
      %v3942 = vadd.f32 %v3750, %v3873
      %v3943 = vadd.f32 %v3751, %v3875
      %v3944 = vadd.f32 %v3752, %v3877
      %v3945 = vadd.f32 %v3753, %v3879
      %v3946 = vadd.f32 %v3754, %v3881
      %v3947 = vadd.f32 %v3755, %v3883
      %v3948 = vld [vmem:[%s855 + $0x9] sm:$0xff]
      %v3949 = vld [vmem:[%s855 + $0x11] sm:$0xff]
      %v3950 = vld [vmem:[%s855 + $0x29] sm:$0xff]
      %v3951 = vld [vmem:[%s855 + $0x31] sm:$0xff]
      %v3952 = vld [vmem:[%s855 + $0x49] sm:$0xff]
      %v3953 = vld [vmem:[%s855 + $0x51] sm:$0xff]
      %v3954 = vld [vmem:[%s855 + $0x69] sm:$0xff]
      %v3955 = vld [vmem:[%s855 + $0x71] sm:$0xff]
      %v3956 = vld [vmem:[%s855 + $0x89] sm:$0xff]
      %v3957 = vld [vmem:[%s855 + $0x91] sm:$0xff]
      %v3958 = vld [vmem:[%s855 + $0xa9] sm:$0xff]
      %v3959 = vld [vmem:[%s855 + $0xb1] sm:$0xff]
      %v3960 = vld [vmem:[%s855 + $0xc9] sm:$0xff]
      %v3961 = vld [vmem:[%s855 + $0xd1] sm:$0xff]
      %v3962 = vld [vmem:[%s855 + $0xe9] sm:$0xff]
      %v3963 = vld [vmem:[%s855 + $0xf1] sm:$0xff]
      %v3964 = vld [vmem:[%s855 + $0x109] sm:$0xff]
      %v3965 = vld [vmem:[%s855 + $0x111] sm:$0xff]
      %v3966 = vld [vmem:[%s855 + $0x129] sm:$0xff]
      %v3967 = vld [vmem:[%s855 + $0x131] sm:$0xff]
      %v3968 = vld [vmem:[%s855 + $0x149] sm:$0xff]
      %v3969 = vld [vmem:[%s855 + $0x151] sm:$0xff]
      %v3970 = vld [vmem:[%s855 + $0x169] sm:$0xff]
      %v3971 = vld [vmem:[%s855 + $0x171] sm:$0xff]
      %v3972 = vld [vmem:[%s855 + $0x189] sm:$0xff]
      %v3973 = vld [vmem:[%s855 + $0x191] sm:$0xff]
      %v3974 = vld [vmem:[%s855 + $0x1a9] sm:$0xff]
      %v3975 = vld [vmem:[%s855 + $0x1b1] sm:$0xff]
      %v3976 = vld [vmem:[%s855 + $0x1c9] sm:$0xff]
      %v3977 = vld [vmem:[%s855 + $0x1d1] sm:$0xff]
      %v3978 = vld [vmem:[%s855 + $0x1e9] sm:$0xff]
      %v3979 = vld [vmem:[%s855 + $0x1f1] sm:$0xff]
      %4012 = vrot.lane.b32.xlu0 %v3948, 108
      %v4013 = vpop.permute.xlu0 %4012
      %4014 = vrot.lane.b32.xlu0 %v3949, 108
      %v4015 = vpop.permute.xlu0 %4014
      %4016 = vrot.lane.b32.xlu0 %v3950, 108
      %v4017 = vpop.permute.xlu0 %4016
      %4018 = vrot.lane.b32.xlu0 %v3951, 108
      %v4019 = vpop.permute.xlu0 %4018
      %4020 = vrot.lane.b32.xlu0 %v3952, 108
      %v4021 = vpop.permute.xlu0 %4020
      %4022 = vrot.lane.b32.xlu0 %v3953, 108
      %v4023 = vpop.permute.xlu0 %4022
      %4024 = vrot.lane.b32.xlu0 %v3954, 108
      %v4025 = vpop.permute.xlu0 %4024
      %4026 = vrot.lane.b32.xlu0 %v3955, 108
      %v4027 = vpop.permute.xlu0 %4026
      %4028 = vrot.lane.b32.xlu0 %v3956, 108
      %v4029 = vpop.permute.xlu0 %4028
      %4030 = vrot.lane.b32.xlu0 %v3957, 108
      %v4031 = vpop.permute.xlu0 %4030
      %4032 = vrot.lane.b32.xlu0 %v3958, 108
      %v4033 = vpop.permute.xlu0 %4032
      %4034 = vrot.lane.b32.xlu0 %v3959, 108
      %v4035 = vpop.permute.xlu0 %4034
      %4036 = vrot.lane.b32.xlu0 %v3960, 108
      %v4037 = vpop.permute.xlu0 %4036
      %4038 = vrot.lane.b32.xlu0 %v3961, 108
      %v4039 = vpop.permute.xlu0 %4038
      %4040 = vrot.lane.b32.xlu0 %v3962, 108
      %v4041 = vpop.permute.xlu0 %4040
      %4042 = vrot.lane.b32.xlu0 %v3963, 108
      %v4043 = vpop.permute.xlu0 %4042
      %4044 = vrot.lane.b32.xlu0 %v3964, 108
      %v4045 = vpop.permute.xlu0 %4044
      %4046 = vrot.lane.b32.xlu0 %v3965, 108
      %v4047 = vpop.permute.xlu0 %4046
      %4048 = vrot.lane.b32.xlu0 %v3966, 108
      %v4049 = vpop.permute.xlu0 %4048
      %4050 = vrot.lane.b32.xlu0 %v3967, 108
      %v4051 = vpop.permute.xlu0 %4050
      %4052 = vrot.lane.b32.xlu0 %v3968, 108
      %v4053 = vpop.permute.xlu0 %4052
      %4054 = vrot.lane.b32.xlu0 %v3969, 108
      %v4055 = vpop.permute.xlu0 %4054
      %4056 = vrot.lane.b32.xlu0 %v3970, 108
      %v4057 = vpop.permute.xlu0 %4056
      %4058 = vrot.lane.b32.xlu0 %v3971, 108
      %v4059 = vpop.permute.xlu0 %4058
      %4060 = vrot.lane.b32.xlu0 %v3972, 108
      %v4061 = vpop.permute.xlu0 %4060
      %4062 = vrot.lane.b32.xlu0 %v3973, 108
      %v4063 = vpop.permute.xlu0 %4062
      %4064 = vrot.lane.b32.xlu0 %v3974, 108
      %v4065 = vpop.permute.xlu0 %4064
      %4066 = vrot.lane.b32.xlu0 %v3975, 108
      %v4067 = vpop.permute.xlu0 %4066
      %4068 = vrot.lane.b32.xlu0 %v3976, 108
      %v4069 = vpop.permute.xlu0 %4068
      %4070 = vrot.lane.b32.xlu0 %v3977, 108
      %v4071 = vpop.permute.xlu0 %4070
      %4072 = vrot.lane.b32.xlu0 %v3978, 108
      %v4073 = vpop.permute.xlu0 %4072
      %4074 = vrot.lane.b32.xlu0 %v3979, 108
      %v4075 = vpop.permute.xlu0 %4074
      %v4108 = vadd.f32 %v3916, %v4013
      %v4109 = vadd.f32 %v3917, %v4015
      %v4110 = vadd.f32 %v3918, %v4017
      %v4111 = vadd.f32 %v3919, %v4019
      %v4112 = vadd.f32 %v3920, %v4021
      %v4113 = vadd.f32 %v3921, %v4023
      %v4114 = vadd.f32 %v3922, %v4025
      %v4115 = vadd.f32 %v3923, %v4027
      %v4116 = vadd.f32 %v3924, %v4029
      %v4117 = vadd.f32 %v3925, %v4031
      %v4118 = vadd.f32 %v3926, %v4033
      %v4119 = vadd.f32 %v3927, %v4035
      %v4120 = vadd.f32 %v3928, %v4037
      %v4121 = vadd.f32 %v3929, %v4039
      %v4122 = vadd.f32 %v3930, %v4041
      %v4123 = vadd.f32 %v3931, %v4043
      %v4124 = vadd.f32 %v3932, %v4045
      %v4125 = vadd.f32 %v3933, %v4047
      %v4126 = vadd.f32 %v3934, %v4049
      %v4127 = vadd.f32 %v3935, %v4051
      %v4128 = vadd.f32 %v3936, %v4053
      %v4129 = vadd.f32 %v3937, %v4055
      %v4130 = vadd.f32 %v3938, %v4057
      %v4131 = vadd.f32 %v3939, %v4059
      %v4132 = vadd.f32 %v3940, %v4061
      %v4133 = vadd.f32 %v3941, %v4063
      %v4134 = vadd.f32 %v3942, %v4065
      %v4135 = vadd.f32 %v3943, %v4067
      %v4136 = vadd.f32 %v3944, %v4069
      %v4137 = vadd.f32 %v3945, %v4071
      %v4138 = vadd.f32 %v3946, %v4073
      %v4139 = vadd.f32 %v3947, %v4075
      %v4140 = vld [vmem:[%s1880 + $0x7] sm:$0xff]
      %v4141 = vld [vmem:[%s1880 + $0xf] sm:$0xff]
      %v4142 = vld [vmem:[%s1880 + $0x27] sm:$0xff]
      %v4143 = vld [vmem:[%s1880 + $0x2f] sm:$0xff]
      %v4144 = vld [vmem:[%s1880 + $0x47] sm:$0xff]
      %v4145 = vld [vmem:[%s1880 + $0x4f] sm:$0xff]
      %v4146 = vld [vmem:[%s1880 + $0x67] sm:$0xff]
      %v4147 = vld [vmem:[%s1880 + $0x6f] sm:$0xff]
      %v4148 = vld [vmem:[%s1880 + $0x87] sm:$0xff]
      %v4149 = vld [vmem:[%s1880 + $0x8f] sm:$0xff]
      %v4150 = vld [vmem:[%s1880 + $0xa7] sm:$0xff]
      %v4151 = vld [vmem:[%s1880 + $0xaf] sm:$0xff]
      %v4152 = vld [vmem:[%s1880 + $0xc7] sm:$0xff]
      %v4153 = vld [vmem:[%s1880 + $0xcf] sm:$0xff]
      %v4154 = vld [vmem:[%s1880 + $0xe7] sm:$0xff]
      %v4155 = vld [vmem:[%s1880 + $0xef] sm:$0xff]
      %v4156 = vld [vmem:[%s1880 + $0x107] sm:$0xff]
      %v4157 = vld [vmem:[%s1880 + $0x10f] sm:$0xff]
      %v4158 = vld [vmem:[%s1880 + $0x127] sm:$0xff]
      %v4159 = vld [vmem:[%s1880 + $0x12f] sm:$0xff]
      %v4160 = vld [vmem:[%s1880 + $0x147] sm:$0xff]
      %v4161 = vld [vmem:[%s1880 + $0x14f] sm:$0xff]
      %v4162 = vld [vmem:[%s1880 + $0x167] sm:$0xff]
      %v4163 = vld [vmem:[%s1880 + $0x16f] sm:$0xff]
      %v4164 = vld [vmem:[%s1880 + $0x187] sm:$0xff]
      %v4165 = vld [vmem:[%s1880 + $0x18f] sm:$0xff]
      %v4166 = vld [vmem:[%s1880 + $0x1a7] sm:$0xff]
      %v4167 = vld [vmem:[%s1880 + $0x1af] sm:$0xff]
      %v4168 = vld [vmem:[%s1880 + $0x1c7] sm:$0xff]
      %v4169 = vld [vmem:[%s1880 + $0x1cf] sm:$0xff]
      %v4170 = vld [vmem:[%s1880 + $0x1e7] sm:$0xff]
      %v4171 = vld [vmem:[%s1880 + $0x1ef] sm:$0xff]
      %4204 = vrot.lane.b32.xlu0 %v4140, 104
      %v4205 = vpop.permute.xlu0 %4204
      %4206 = vrot.lane.b32.xlu0 %v4141, 104
      %v4207 = vpop.permute.xlu0 %4206
      %4208 = vrot.lane.b32.xlu0 %v4142, 104
      %v4209 = vpop.permute.xlu0 %4208
      %4210 = vrot.lane.b32.xlu0 %v4143, 104
      %v4211 = vpop.permute.xlu0 %4210
      %4212 = vrot.lane.b32.xlu0 %v4144, 104
      %v4213 = vpop.permute.xlu0 %4212
      %4214 = vrot.lane.b32.xlu0 %v4145, 104
      %v4215 = vpop.permute.xlu0 %4214
      %4216 = vrot.lane.b32.xlu0 %v4146, 104
      %v4217 = vpop.permute.xlu0 %4216
      %4218 = vrot.lane.b32.xlu0 %v4147, 104
      %v4219 = vpop.permute.xlu0 %4218
      %4220 = vrot.lane.b32.xlu0 %v4148, 104
      %v4221 = vpop.permute.xlu0 %4220
      %4222 = vrot.lane.b32.xlu0 %v4149, 104
      %v4223 = vpop.permute.xlu0 %4222
      %4224 = vrot.lane.b32.xlu0 %v4150, 104
      %v4225 = vpop.permute.xlu0 %4224
      %4226 = vrot.lane.b32.xlu0 %v4151, 104
      %v4227 = vpop.permute.xlu0 %4226
      %4228 = vrot.lane.b32.xlu0 %v4152, 104
      %v4229 = vpop.permute.xlu0 %4228
      %4230 = vrot.lane.b32.xlu0 %v4153, 104
      %v4231 = vpop.permute.xlu0 %4230
      %4232 = vrot.lane.b32.xlu0 %v4154, 104
      %v4233 = vpop.permute.xlu0 %4232
      %4234 = vrot.lane.b32.xlu0 %v4155, 104
      %v4235 = vpop.permute.xlu0 %4234
      %4236 = vrot.lane.b32.xlu0 %v4156, 104
      %v4237 = vpop.permute.xlu0 %4236
      %4238 = vrot.lane.b32.xlu0 %v4157, 104
      %v4239 = vpop.permute.xlu0 %4238
      %4240 = vrot.lane.b32.xlu0 %v4158, 104
      %v4241 = vpop.permute.xlu0 %4240
      %4242 = vrot.lane.b32.xlu0 %v4159, 104
      %v4243 = vpop.permute.xlu0 %4242
      %4244 = vrot.lane.b32.xlu0 %v4160, 104
      %v4245 = vpop.permute.xlu0 %4244
      %4246 = vrot.lane.b32.xlu0 %v4161, 104
      %v4247 = vpop.permute.xlu0 %4246
      %4248 = vrot.lane.b32.xlu0 %v4162, 104
      %v4249 = vpop.permute.xlu0 %4248
      %4250 = vrot.lane.b32.xlu0 %v4163, 104
      %v4251 = vpop.permute.xlu0 %4250
      %4252 = vrot.lane.b32.xlu0 %v4164, 104
      %v4253 = vpop.permute.xlu0 %4252
      %4254 = vrot.lane.b32.xlu0 %v4165, 104
      %v4255 = vpop.permute.xlu0 %4254
      %4256 = vrot.lane.b32.xlu0 %v4166, 104
      %v4257 = vpop.permute.xlu0 %4256
      %4258 = vrot.lane.b32.xlu0 %v4167, 104
      %v4259 = vpop.permute.xlu0 %4258
      %4260 = vrot.lane.b32.xlu0 %v4168, 104
      %v4261 = vpop.permute.xlu0 %4260
      %4262 = vrot.lane.b32.xlu0 %v4169, 104
      %v4263 = vpop.permute.xlu0 %4262
      %4264 = vrot.lane.b32.xlu0 %v4170, 104
      %v4265 = vpop.permute.xlu0 %4264
      %4266 = vrot.lane.b32.xlu0 %v4171, 104
      %v4267 = vpop.permute.xlu0 %4266
      %v4300 = vadd.f32 %v4108, %v4205
      %v4301 = vadd.f32 %v4109, %v4207
      %v4302 = vadd.f32 %v4110, %v4209
      %v4303 = vadd.f32 %v4111, %v4211
      %v4304 = vadd.f32 %v4112, %v4213
      %v4305 = vadd.f32 %v4113, %v4215
      %v4306 = vadd.f32 %v4114, %v4217
      %v4307 = vadd.f32 %v4115, %v4219
      %v4308 = vadd.f32 %v4116, %v4221
      %v4309 = vadd.f32 %v4117, %v4223
      %v4310 = vadd.f32 %v4118, %v4225
      %v4311 = vadd.f32 %v4119, %v4227
      %v4312 = vadd.f32 %v4120, %v4229
      %v4313 = vadd.f32 %v4121, %v4231
      %v4314 = vadd.f32 %v4122, %v4233
      %v4315 = vadd.f32 %v4123, %v4235
      %v4316 = vadd.f32 %v4124, %v4237
      %v4317 = vadd.f32 %v4125, %v4239
      %v4318 = vadd.f32 %v4126, %v4241
      %v4319 = vadd.f32 %v4127, %v4243
      %v4320 = vadd.f32 %v4128, %v4245
      %v4321 = vadd.f32 %v4129, %v4247
      %v4322 = vadd.f32 %v4130, %v4249
      %v4323 = vadd.f32 %v4131, %v4251
      %v4324 = vadd.f32 %v4132, %v4253
      %v4325 = vadd.f32 %v4133, %v4255
      %v4326 = vadd.f32 %v4134, %v4257
      %v4327 = vadd.f32 %v4135, %v4259
      %v4328 = vadd.f32 %v4136, %v4261
      %v4329 = vadd.f32 %v4137, %v4263
      %v4330 = vadd.f32 %v4138, %v4265
      %v4331 = vadd.f32 %v4139, %v4267
      %v4332 = vld [vmem:[%s1880 + $0x8] sm:$0xff]
      %v4333 = vld [vmem:[%s1880 + $0x10] sm:$0xff]
      %v4334 = vld [vmem:[%s1880 + $0x28] sm:$0xff]
      %v4335 = vld [vmem:[%s1880 + $0x30] sm:$0xff]
      %v4336 = vld [vmem:[%s1880 + $0x48] sm:$0xff]
      %v4337 = vld [vmem:[%s1880 + $0x50] sm:$0xff]
      %v4338 = vld [vmem:[%s1880 + $0x68] sm:$0xff]
      %v4339 = vld [vmem:[%s1880 + $0x70] sm:$0xff]
      %v4340 = vld [vmem:[%s1880 + $0x88] sm:$0xff]
      %v4341 = vld [vmem:[%s1880 + $0x90] sm:$0xff]
      %v4342 = vld [vmem:[%s1880 + $0xa8] sm:$0xff]
      %v4343 = vld [vmem:[%s1880 + $0xb0] sm:$0xff]
      %v4344 = vld [vmem:[%s1880 + $0xc8] sm:$0xff]
      %v4345 = vld [vmem:[%s1880 + $0xd0] sm:$0xff]
      %v4346 = vld [vmem:[%s1880 + $0xe8] sm:$0xff]
      %v4347 = vld [vmem:[%s1880 + $0xf0] sm:$0xff]
      %v4348 = vld [vmem:[%s1880 + $0x108] sm:$0xff]
      %v4349 = vld [vmem:[%s1880 + $0x110] sm:$0xff]
      %v4350 = vld [vmem:[%s1880 + $0x128] sm:$0xff]
      %v4351 = vld [vmem:[%s1880 + $0x130] sm:$0xff]
      %v4352 = vld [vmem:[%s1880 + $0x148] sm:$0xff]
      %v4353 = vld [vmem:[%s1880 + $0x150] sm:$0xff]
      %v4354 = vld [vmem:[%s1880 + $0x168] sm:$0xff]
      %v4355 = vld [vmem:[%s1880 + $0x170] sm:$0xff]
      %v4356 = vld [vmem:[%s1880 + $0x188] sm:$0xff]
      %v4357 = vld [vmem:[%s1880 + $0x190] sm:$0xff]
      %v4358 = vld [vmem:[%s1880 + $0x1a8] sm:$0xff]
      %v4359 = vld [vmem:[%s1880 + $0x1b0] sm:$0xff]
      %v4360 = vld [vmem:[%s1880 + $0x1c8] sm:$0xff]
      %v4361 = vld [vmem:[%s1880 + $0x1d0] sm:$0xff]
      %v4362 = vld [vmem:[%s1880 + $0x1e8] sm:$0xff]
      %v4363 = vld [vmem:[%s1880 + $0x1f0] sm:$0xff]
      %4396 = vrot.lane.b32.xlu0 %v4332, 100
      %v4397 = vpop.permute.xlu0 %4396
      %4398 = vrot.lane.b32.xlu0 %v4333, 100
      %v4399 = vpop.permute.xlu0 %4398
      %4400 = vrot.lane.b32.xlu0 %v4334, 100
      %v4401 = vpop.permute.xlu0 %4400
      %4402 = vrot.lane.b32.xlu0 %v4335, 100
      %v4403 = vpop.permute.xlu0 %4402
      %4404 = vrot.lane.b32.xlu0 %v4336, 100
      %v4405 = vpop.permute.xlu0 %4404
      %4406 = vrot.lane.b32.xlu0 %v4337, 100
      %v4407 = vpop.permute.xlu0 %4406
      %4408 = vrot.lane.b32.xlu0 %v4338, 100
      %v4409 = vpop.permute.xlu0 %4408
      %4410 = vrot.lane.b32.xlu0 %v4339, 100
      %v4411 = vpop.permute.xlu0 %4410
      %4412 = vrot.lane.b32.xlu0 %v4340, 100
      %v4413 = vpop.permute.xlu0 %4412
      %4414 = vrot.lane.b32.xlu0 %v4341, 100
      %v4415 = vpop.permute.xlu0 %4414
      %4416 = vrot.lane.b32.xlu0 %v4342, 100
      %v4417 = vpop.permute.xlu0 %4416
      %4418 = vrot.lane.b32.xlu0 %v4343, 100
      %v4419 = vpop.permute.xlu0 %4418
      %4420 = vrot.lane.b32.xlu0 %v4344, 100
      %v4421 = vpop.permute.xlu0 %4420
      %4422 = vrot.lane.b32.xlu0 %v4345, 100
      %v4423 = vpop.permute.xlu0 %4422
      %4424 = vrot.lane.b32.xlu0 %v4346, 100
      %v4425 = vpop.permute.xlu0 %4424
      %4426 = vrot.lane.b32.xlu0 %v4347, 100
      %v4427 = vpop.permute.xlu0 %4426
      %4428 = vrot.lane.b32.xlu0 %v4348, 100
      %v4429 = vpop.permute.xlu0 %4428
      %4430 = vrot.lane.b32.xlu0 %v4349, 100
      %v4431 = vpop.permute.xlu0 %4430
      %4432 = vrot.lane.b32.xlu0 %v4350, 100
      %v4433 = vpop.permute.xlu0 %4432
      %4434 = vrot.lane.b32.xlu0 %v4351, 100
      %v4435 = vpop.permute.xlu0 %4434
      %4436 = vrot.lane.b32.xlu0 %v4352, 100
      %v4437 = vpop.permute.xlu0 %4436
      %4438 = vrot.lane.b32.xlu0 %v4353, 100
      %v4439 = vpop.permute.xlu0 %4438
      %4440 = vrot.lane.b32.xlu0 %v4354, 100
      %v4441 = vpop.permute.xlu0 %4440
      %4442 = vrot.lane.b32.xlu0 %v4355, 100
      %v4443 = vpop.permute.xlu0 %4442
      %4444 = vrot.lane.b32.xlu0 %v4356, 100
      %v4445 = vpop.permute.xlu0 %4444
      %4446 = vrot.lane.b32.xlu0 %v4357, 100
      %v4447 = vpop.permute.xlu0 %4446
      %4448 = vrot.lane.b32.xlu0 %v4358, 100
      %v4449 = vpop.permute.xlu0 %4448
      %4450 = vrot.lane.b32.xlu0 %v4359, 100
      %v4451 = vpop.permute.xlu0 %4450
      %4452 = vrot.lane.b32.xlu0 %v4360, 100
      %v4453 = vpop.permute.xlu0 %4452
      %4454 = vrot.lane.b32.xlu0 %v4361, 100
      %v4455 = vpop.permute.xlu0 %4454
      %4456 = vrot.lane.b32.xlu0 %v4362, 100
      %v4457 = vpop.permute.xlu0 %4456
      %4458 = vrot.lane.b32.xlu0 %v4363, 100
      %v4459 = vpop.permute.xlu0 %4458
      %v4492 = vadd.f32 %v4300, %v4397
      %v4493 = vadd.f32 %v4301, %v4399
      %v4494 = vadd.f32 %v4302, %v4401
      %v4495 = vadd.f32 %v4303, %v4403
      %v4496 = vadd.f32 %v4304, %v4405
      %v4497 = vadd.f32 %v4305, %v4407
      %v4498 = vadd.f32 %v4306, %v4409
      %v4499 = vadd.f32 %v4307, %v4411
      %v4500 = vadd.f32 %v4308, %v4413
      %v4501 = vadd.f32 %v4309, %v4415
      %v4502 = vadd.f32 %v4310, %v4417
      %v4503 = vadd.f32 %v4311, %v4419
      %v4504 = vadd.f32 %v4312, %v4421
      %v4505 = vadd.f32 %v4313, %v4423
      %v4506 = vadd.f32 %v4314, %v4425
      %v4507 = vadd.f32 %v4315, %v4427
      %v4508 = vadd.f32 %v4316, %v4429
      %v4509 = vadd.f32 %v4317, %v4431
      %v4510 = vadd.f32 %v4318, %v4433
      %v4511 = vadd.f32 %v4319, %v4435
      %v4512 = vadd.f32 %v4320, %v4437
      %v4513 = vadd.f32 %v4321, %v4439
      %v4514 = vadd.f32 %v4322, %v4441
      %v4515 = vadd.f32 %v4323, %v4443
      %v4516 = vadd.f32 %v4324, %v4445
      %v4517 = vadd.f32 %v4325, %v4447
      %v4518 = vadd.f32 %v4326, %v4449
      %v4519 = vadd.f32 %v4327, %v4451
      %v4520 = vadd.f32 %v4328, %v4453
      %v4521 = vadd.f32 %v4329, %v4455
      %v4522 = vadd.f32 %v4330, %v4457
      %v4523 = vadd.f32 %v4331, %v4459
      %v4524 = vld [vmem:[%s1880 + $0x9] sm:$0xff]
      %v4525 = vld [vmem:[%s1880 + $0x11] sm:$0xff]
      %v4526 = vld [vmem:[%s1880 + $0x29] sm:$0xff]
      %v4527 = vld [vmem:[%s1880 + $0x31] sm:$0xff]
      %v4528 = vld [vmem:[%s1880 + $0x49] sm:$0xff]
      %v4529 = vld [vmem:[%s1880 + $0x51] sm:$0xff]
      %v4530 = vld [vmem:[%s1880 + $0x69] sm:$0xff]
      %v4531 = vld [vmem:[%s1880 + $0x71] sm:$0xff]
      %v4532 = vld [vmem:[%s1880 + $0x89] sm:$0xff]
      %v4533 = vld [vmem:[%s1880 + $0x91] sm:$0xff]
      %v4534 = vld [vmem:[%s1880 + $0xa9] sm:$0xff]
      %v4535 = vld [vmem:[%s1880 + $0xb1] sm:$0xff]
      %v4536 = vld [vmem:[%s1880 + $0xc9] sm:$0xff]
      %v4537 = vld [vmem:[%s1880 + $0xd1] sm:$0xff]
      %v4538 = vld [vmem:[%s1880 + $0xe9] sm:$0xff]
      %v4539 = vld [vmem:[%s1880 + $0xf1] sm:$0xff]
      %v4540 = vld [vmem:[%s1880 + $0x109] sm:$0xff]
      %v4541 = vld [vmem:[%s1880 + $0x111] sm:$0xff]
      %v4542 = vld [vmem:[%s1880 + $0x129] sm:$0xff]
      %v4543 = vld [vmem:[%s1880 + $0x131] sm:$0xff]
      %v4544 = vld [vmem:[%s1880 + $0x149] sm:$0xff]
      %v4545 = vld [vmem:[%s1880 + $0x151] sm:$0xff]
      %v4546 = vld [vmem:[%s1880 + $0x169] sm:$0xff]
      %v4547 = vld [vmem:[%s1880 + $0x171] sm:$0xff]
      %v4548 = vld [vmem:[%s1880 + $0x189] sm:$0xff]
      %v4549 = vld [vmem:[%s1880 + $0x191] sm:$0xff]
      %v4550 = vld [vmem:[%s1880 + $0x1a9] sm:$0xff]
      %v4551 = vld [vmem:[%s1880 + $0x1b1] sm:$0xff]
      %v4552 = vld [vmem:[%s1880 + $0x1c9] sm:$0xff]
      %v4553 = vld [vmem:[%s1880 + $0x1d1] sm:$0xff]
      %v4554 = vld [vmem:[%s1880 + $0x1e9] sm:$0xff]
      %v4555 = vld [vmem:[%s1880 + $0x1f1] sm:$0xff]
      %4588 = vrot.lane.b32.xlu0 %v4524, 96
      %v4589 = vpop.permute.xlu0 %4588
      %4590 = vrot.lane.b32.xlu0 %v4525, 96
      %v4591 = vpop.permute.xlu0 %4590
      %4592 = vrot.lane.b32.xlu0 %v4526, 96
      %v4593 = vpop.permute.xlu0 %4592
      %4594 = vrot.lane.b32.xlu0 %v4527, 96
      %v4595 = vpop.permute.xlu0 %4594
      %4596 = vrot.lane.b32.xlu0 %v4528, 96
      %v4597 = vpop.permute.xlu0 %4596
      %4598 = vrot.lane.b32.xlu0 %v4529, 96
      %v4599 = vpop.permute.xlu0 %4598
      %4600 = vrot.lane.b32.xlu0 %v4530, 96
      %v4601 = vpop.permute.xlu0 %4600
      %4602 = vrot.lane.b32.xlu0 %v4531, 96
      %v4603 = vpop.permute.xlu0 %4602
      %4604 = vrot.lane.b32.xlu0 %v4532, 96
      %v4605 = vpop.permute.xlu0 %4604
      %4606 = vrot.lane.b32.xlu0 %v4533, 96
      %v4607 = vpop.permute.xlu0 %4606
      %4608 = vrot.lane.b32.xlu0 %v4534, 96
      %v4609 = vpop.permute.xlu0 %4608
      %4610 = vrot.lane.b32.xlu0 %v4535, 96
      %v4611 = vpop.permute.xlu0 %4610
      %4612 = vrot.lane.b32.xlu0 %v4536, 96
      %v4613 = vpop.permute.xlu0 %4612
      %4614 = vrot.lane.b32.xlu0 %v4537, 96
      %v4615 = vpop.permute.xlu0 %4614
      %4616 = vrot.lane.b32.xlu0 %v4538, 96
      %v4617 = vpop.permute.xlu0 %4616
      %4618 = vrot.lane.b32.xlu0 %v4539, 96
      %v4619 = vpop.permute.xlu0 %4618
      %4620 = vrot.lane.b32.xlu0 %v4540, 96
      %v4621 = vpop.permute.xlu0 %4620
      %4622 = vrot.lane.b32.xlu0 %v4541, 96
      %v4623 = vpop.permute.xlu0 %4622
      %4624 = vrot.lane.b32.xlu0 %v4542, 96
      %v4625 = vpop.permute.xlu0 %4624
      %4626 = vrot.lane.b32.xlu0 %v4543, 96
      %v4627 = vpop.permute.xlu0 %4626
      %4628 = vrot.lane.b32.xlu0 %v4544, 96
      %v4629 = vpop.permute.xlu0 %4628
      %4630 = vrot.lane.b32.xlu0 %v4545, 96
      %v4631 = vpop.permute.xlu0 %4630
      %4632 = vrot.lane.b32.xlu0 %v4546, 96
      %v4633 = vpop.permute.xlu0 %4632
      %4634 = vrot.lane.b32.xlu0 %v4547, 96
      %v4635 = vpop.permute.xlu0 %4634
      %4636 = vrot.lane.b32.xlu0 %v4548, 96
      %v4637 = vpop.permute.xlu0 %4636
      %4638 = vrot.lane.b32.xlu0 %v4549, 96
      %v4639 = vpop.permute.xlu0 %4638
      %4640 = vrot.lane.b32.xlu0 %v4550, 96
      %v4641 = vpop.permute.xlu0 %4640
      %4642 = vrot.lane.b32.xlu0 %v4551, 96
      %v4643 = vpop.permute.xlu0 %4642
      %4644 = vrot.lane.b32.xlu0 %v4552, 96
      %v4645 = vpop.permute.xlu0 %4644
      %4646 = vrot.lane.b32.xlu0 %v4553, 96
      %v4647 = vpop.permute.xlu0 %4646
      %4648 = vrot.lane.b32.xlu0 %v4554, 96
      %v4649 = vpop.permute.xlu0 %4648
      %4650 = vrot.lane.b32.xlu0 %v4555, 96
      %v4651 = vpop.permute.xlu0 %4650
      %v4684 = vadd.f32 %v4492, %v4589
      %v4685 = vadd.f32 %v4493, %v4591
      %v4686 = vadd.f32 %v4494, %v4593
      %v4687 = vadd.f32 %v4495, %v4595
      %v4688 = vadd.f32 %v4496, %v4597
      %v4689 = vadd.f32 %v4497, %v4599
      %v4690 = vadd.f32 %v4498, %v4601
      %v4691 = vadd.f32 %v4499, %v4603
      %v4692 = vadd.f32 %v4500, %v4605
      %v4693 = vadd.f32 %v4501, %v4607
      %v4694 = vadd.f32 %v4502, %v4609
      %v4695 = vadd.f32 %v4503, %v4611
      %v4696 = vadd.f32 %v4504, %v4613
      %v4697 = vadd.f32 %v4505, %v4615
      %v4698 = vadd.f32 %v4506, %v4617
      %v4699 = vadd.f32 %v4507, %v4619
      %v4700 = vadd.f32 %v4508, %v4621
      %v4701 = vadd.f32 %v4509, %v4623
      %v4702 = vadd.f32 %v4510, %v4625
      %v4703 = vadd.f32 %v4511, %v4627
      %v4704 = vadd.f32 %v4512, %v4629
      %v4705 = vadd.f32 %v4513, %v4631
      %v4706 = vadd.f32 %v4514, %v4633
      %v4707 = vadd.f32 %v4515, %v4635
      %v4708 = vadd.f32 %v4516, %v4637
      %v4709 = vadd.f32 %v4517, %v4639
      %v4710 = vadd.f32 %v4518, %v4641
      %v4711 = vadd.f32 %v4519, %v4643
      %v4712 = vadd.f32 %v4520, %v4645
      %v4713 = vadd.f32 %v4521, %v4647
      %v4714 = vadd.f32 %v4522, %v4649
      %v4715 = vadd.f32 %v4523, %v4651
      %v4716 = vlaneseq
      %v4717 = vshrl.u32 %v4716, 7
      %v4718 = vsub.s32 0, %v4717
      %v4719 = vrot.slane %v2656, %v4718
      %v4720 = vadd.f32 %v4684, %v4719
      %v4721 = vadd.f32 %v4685, %v4719
      %v4722 = vadd.f32 %v4686, %v4719
      %v4723 = vadd.f32 %v4687, %v4719
      %v4724 = vadd.f32 %v4688, %v4719
      %v4725 = vadd.f32 %v4689, %v4719
      %v4726 = vadd.f32 %v4690, %v4719
      %v4727 = vadd.f32 %v4691, %v4719
      %v4728 = vadd.f32 %v4692, %v4719
      %v4729 = vadd.f32 %v4693, %v4719
      %v4730 = vadd.f32 %v4694, %v4719
      %v4731 = vadd.f32 %v4695, %v4719
      %v4732 = vadd.f32 %v4696, %v4719
      %v4733 = vadd.f32 %v4697, %v4719
      %v4734 = vadd.f32 %v4698, %v4719
      %v4735 = vadd.f32 %v4699, %v4719
      %v4736 = vadd.f32 %v4700, %v4719
      %v4737 = vadd.f32 %v4701, %v4719
      %v4738 = vadd.f32 %v4702, %v4719
      %v4739 = vadd.f32 %v4703, %v4719
      %v4740 = vadd.f32 %v4704, %v4719
      %v4741 = vadd.f32 %v4705, %v4719
      %v4742 = vadd.f32 %v4706, %v4719
      %v4743 = vadd.f32 %v4707, %v4719
      %v4744 = vadd.f32 %v4708, %v4719
      %v4745 = vadd.f32 %v4709, %v4719
      %v4746 = vadd.f32 %v4710, %v4719
      %v4747 = vadd.f32 %v4711, %v4719
      %v4748 = vadd.f32 %v4712, %v4719
      %v4749 = vadd.f32 %v4713, %v4719
      %v4750 = vadd.f32 %v4714, %v4719
      %v4751 = vadd.f32 %v4715, %v4719
      %4784 = vrot.lane.b32.xlu0 %v4720, 8
      %v4785 = vpop.permute.xlu0 %4784
      %4786 = vrot.lane.b32.xlu0 %v4721, 8
      %v4787 = vpop.permute.xlu0 %4786
      %4788 = vrot.lane.b32.xlu0 %v4722, 8
      %v4789 = vpop.permute.xlu0 %4788
      %4790 = vrot.lane.b32.xlu0 %v4723, 8
      %v4791 = vpop.permute.xlu0 %4790
      %4792 = vrot.lane.b32.xlu0 %v4724, 8
      %v4793 = vpop.permute.xlu0 %4792
      %4794 = vrot.lane.b32.xlu0 %v4725, 8
      %v4795 = vpop.permute.xlu0 %4794
      %4796 = vrot.lane.b32.xlu0 %v4726, 8
      %v4797 = vpop.permute.xlu0 %4796
      %4798 = vrot.lane.b32.xlu0 %v4727, 8
      %v4799 = vpop.permute.xlu0 %4798
      %4800 = vrot.lane.b32.xlu0 %v4728, 8
      %v4801 = vpop.permute.xlu0 %4800
      %4802 = vrot.lane.b32.xlu0 %v4729, 8
      %v4803 = vpop.permute.xlu0 %4802
      %4804 = vrot.lane.b32.xlu0 %v4730, 8
      %v4805 = vpop.permute.xlu0 %4804
      %4806 = vrot.lane.b32.xlu0 %v4731, 8
      %v4807 = vpop.permute.xlu0 %4806
      %4808 = vrot.lane.b32.xlu0 %v4732, 8
      %v4809 = vpop.permute.xlu0 %4808
      %4810 = vrot.lane.b32.xlu0 %v4733, 8
      %v4811 = vpop.permute.xlu0 %4810
      %4812 = vrot.lane.b32.xlu0 %v4734, 8
      %v4813 = vpop.permute.xlu0 %4812
      %4814 = vrot.lane.b32.xlu0 %v4735, 8
      %v4815 = vpop.permute.xlu0 %4814
      %4816 = vrot.lane.b32.xlu0 %v4736, 8
      %v4817 = vpop.permute.xlu0 %4816
      %4818 = vrot.lane.b32.xlu0 %v4737, 8
      %v4819 = vpop.permute.xlu0 %4818
      %4820 = vrot.lane.b32.xlu0 %v4738, 8
      %v4821 = vpop.permute.xlu0 %4820
      %4822 = vrot.lane.b32.xlu0 %v4739, 8
      %v4823 = vpop.permute.xlu0 %4822
      %4824 = vrot.lane.b32.xlu0 %v4740, 8
      %v4825 = vpop.permute.xlu0 %4824
      %4826 = vrot.lane.b32.xlu0 %v4741, 8
      %v4827 = vpop.permute.xlu0 %4826
      %4828 = vrot.lane.b32.xlu0 %v4742, 8
      %v4829 = vpop.permute.xlu0 %4828
      %4830 = vrot.lane.b32.xlu0 %v4743, 8
      %v4831 = vpop.permute.xlu0 %4830
      %4832 = vrot.lane.b32.xlu0 %v4744, 8
      %v4833 = vpop.permute.xlu0 %4832
      %4834 = vrot.lane.b32.xlu0 %v4745, 8
      %v4835 = vpop.permute.xlu0 %4834
      %4836 = vrot.lane.b32.xlu0 %v4746, 8
      %v4837 = vpop.permute.xlu0 %4836
      %4838 = vrot.lane.b32.xlu0 %v4747, 8
      %v4839 = vpop.permute.xlu0 %4838
      %4840 = vrot.lane.b32.xlu0 %v4748, 8
      %v4841 = vpop.permute.xlu0 %4840
      %4842 = vrot.lane.b32.xlu0 %v4749, 8
      %v4843 = vpop.permute.xlu0 %4842
      %4844 = vrot.lane.b32.xlu0 %v4750, 8
      %v4845 = vpop.permute.xlu0 %4844
      %4846 = vrot.lane.b32.xlu0 %v4751, 8
      %v4847 = vpop.permute.xlu0 %4846
      %vm4880 = vcmask 97344
      %4881 = vst.msk [vmem:[#allocation2] sm:$0xff] %vm4880, %v4785
      %4882 = vst.msk [vmem:[#allocation2 + $0x8] sm:$0xff] %vm4880, %v4787
      %4883 = vst.msk [vmem:[#allocation2 + $0x10] sm:$0xff] %vm4880, %v4789
      %4884 = vst.msk [vmem:[#allocation2 + $0x18] sm:$0xff] %vm4880, %v4791
      %4885 = vst.msk [vmem:[#allocation2 + $0x20] sm:$0xff] %vm4880, %v4793
      %4886 = vst.msk [vmem:[#allocation2 + $0x28] sm:$0xff] %vm4880, %v4795
      %4887 = vst.msk [vmem:[#allocation2 + $0x30] sm:$0xff] %vm4880, %v4797
      %4888 = vst.msk [vmem:[#allocation2 + $0x38] sm:$0xff] %vm4880, %v4799
      %4889 = vst.msk [vmem:[#allocation2 + $0x40] sm:$0xff] %vm4880, %v4801
      %4890 = vst.msk [vmem:[#allocation2 + $0x48] sm:$0xff] %vm4880, %v4803
      %4891 = vst.msk [vmem:[#allocation2 + $0x50] sm:$0xff] %vm4880, %v4805
      %4892 = vst.msk [vmem:[#allocation2 + $0x58] sm:$0xff] %vm4880, %v4807
      %4893 = vst.msk [vmem:[#allocation2 + $0x60] sm:$0xff] %vm4880, %v4809
      %4894 = vst.msk [vmem:[#allocation2 + $0x68] sm:$0xff] %vm4880, %v4811
      %4895 = vst.msk [vmem:[#allocation2 + $0x70] sm:$0xff] %vm4880, %v4813
      %4896 = vst.msk [vmem:[#allocation2 + $0x78] sm:$0xff] %vm4880, %v4815
      %4897 = vst.msk [vmem:[#allocation2 + $0x80] sm:$0xff] %vm4880, %v4817
      %4898 = vst.msk [vmem:[#allocation2 + $0x88] sm:$0xff] %vm4880, %v4819
      %4899 = vst.msk [vmem:[#allocation2 + $0x90] sm:$0xff] %vm4880, %v4821
      %4900 = vst.msk [vmem:[#allocation2 + $0x98] sm:$0xff] %vm4880, %v4823
      %4901 = vst.msk [vmem:[#allocation2 + $0xa0] sm:$0xff] %vm4880, %v4825
      %4902 = vst.msk [vmem:[#allocation2 + $0xa8] sm:$0xff] %vm4880, %v4827
      %4903 = vst.msk [vmem:[#allocation2 + $0xb0] sm:$0xff] %vm4880, %v4829
      %4904 = vst.msk [vmem:[#allocation2 + $0xb8] sm:$0xff] %vm4880, %v4831
      %4905 = vst.msk [vmem:[#allocation2 + $0xc0] sm:$0xff] %vm4880, %v4833
      %4906 = vst.msk [vmem:[#allocation2 + $0xc8] sm:$0xff] %vm4880, %v4835
      %4907 = vst.msk [vmem:[#allocation2 + $0xd0] sm:$0xff] %vm4880, %v4837
      %4908 = vst.msk [vmem:[#allocation2 + $0xd8] sm:$0xff] %vm4880, %v4839
      %4909 = vst.msk [vmem:[#allocation2 + $0xe0] sm:$0xff] %vm4880, %v4841
      %4910 = vst.msk [vmem:[#allocation2 + $0xe8] sm:$0xff] %vm4880, %v4843
      %4911 = vst.msk [vmem:[#allocation2 + $0xf0] sm:$0xff] %vm4880, %v4845
      %4912 = vst.msk [vmem:[#allocation2 + $0xf8] sm:$0xff] %vm4880, %v4847
      %v4913 = vld [vmem:[%s1 + $0x2] sm:$0x1]
      %v4914 = vld [vmem:[%s2 + $0x2] sm:$0x1]
      %v4915 = vld [vmem:[%s3 + $0x2] sm:$0x1]
      %v4916 = vld [vmem:[#allocation2] sm:$0xff]
      %v4917 = vld [vmem:[#allocation2 + $0x8] sm:$0xff]
      %v4918 = vld [vmem:[#allocation2 + $0x10] sm:$0xff]
      %v4919 = vld [vmem:[#allocation2 + $0x18] sm:$0xff]
      %v4920 = vld [vmem:[#allocation2 + $0x20] sm:$0xff]
      %v4921 = vld [vmem:[#allocation2 + $0x28] sm:$0xff]
      %v4922 = vld [vmem:[#allocation2 + $0x30] sm:$0xff]
      %v4923 = vld [vmem:[#allocation2 + $0x38] sm:$0xff]
      %v4924 = vld [vmem:[#allocation2 + $0x40] sm:$0xff]
      %v4925 = vld [vmem:[#allocation2 + $0x48] sm:$0xff]
      %v4926 = vld [vmem:[#allocation2 + $0x50] sm:$0xff]
      %v4927 = vld [vmem:[#allocation2 + $0x58] sm:$0xff]
      %v4928 = vld [vmem:[#allocation2 + $0x60] sm:$0xff]
      %v4929 = vld [vmem:[#allocation2 + $0x68] sm:$0xff]
      %v4930 = vld [vmem:[#allocation2 + $0x70] sm:$0xff]
      %v4931 = vld [vmem:[#allocation2 + $0x78] sm:$0xff]
      %v4932 = vld [vmem:[#allocation2 + $0x80] sm:$0xff]
      %v4933 = vld [vmem:[#allocation2 + $0x88] sm:$0xff]
      %v4934 = vld [vmem:[#allocation2 + $0x90] sm:$0xff]
      %v4935 = vld [vmem:[#allocation2 + $0x98] sm:$0xff]
      %v4936 = vld [vmem:[#allocation2 + $0xa0] sm:$0xff]
      %v4937 = vld [vmem:[#allocation2 + $0xa8] sm:$0xff]
      %v4938 = vld [vmem:[#allocation2 + $0xb0] sm:$0xff]
      %v4939 = vld [vmem:[#allocation2 + $0xb8] sm:$0xff]
      %v4940 = vld [vmem:[#allocation2 + $0xc0] sm:$0xff]
      %v4941 = vld [vmem:[#allocation2 + $0xc8] sm:$0xff]
      %v4942 = vld [vmem:[#allocation2 + $0xd0] sm:$0xff]
      %v4943 = vld [vmem:[#allocation2 + $0xd8] sm:$0xff]
      %v4944 = vld [vmem:[#allocation2 + $0xe0] sm:$0xff]
      %v4945 = vld [vmem:[#allocation2 + $0xe8] sm:$0xff]
      %v4946 = vld [vmem:[#allocation2 + $0xf0] sm:$0xff]
      %v4947 = vld [vmem:[#allocation2 + $0xf8] sm:$0xff]
      %v4948 = vlaneseq
      %v4949 = vshrl.u32 %v4948, 7
      %v4950 = vsub.s32 0, %v4949
      %v4951 = vrot.slane %v4913, %v4950
      %v4952 = vmul.f32 %v4916, %v4951
      %v4953 = vmul.f32 %v4917, %v4951
      %v4954 = vmul.f32 %v4918, %v4951
      %v4955 = vmul.f32 %v4919, %v4951
      %v4956 = vmul.f32 %v4920, %v4951
      %v4957 = vmul.f32 %v4921, %v4951
      %v4958 = vmul.f32 %v4922, %v4951
      %v4959 = vmul.f32 %v4923, %v4951
      %v4960 = vmul.f32 %v4924, %v4951
      %v4961 = vmul.f32 %v4925, %v4951
      %v4962 = vmul.f32 %v4926, %v4951
      %v4963 = vmul.f32 %v4927, %v4951
      %v4964 = vmul.f32 %v4928, %v4951
      %v4965 = vmul.f32 %v4929, %v4951
      %v4966 = vmul.f32 %v4930, %v4951
      %v4967 = vmul.f32 %v4931, %v4951
      %v4968 = vmul.f32 %v4932, %v4951
      %v4969 = vmul.f32 %v4933, %v4951
      %v4970 = vmul.f32 %v4934, %v4951
      %v4971 = vmul.f32 %v4935, %v4951
      %v4972 = vmul.f32 %v4936, %v4951
      %v4973 = vmul.f32 %v4937, %v4951
      %v4974 = vmul.f32 %v4938, %v4951
      %v4975 = vmul.f32 %v4939, %v4951
      %v4976 = vmul.f32 %v4940, %v4951
      %v4977 = vmul.f32 %v4941, %v4951
      %v4978 = vmul.f32 %v4942, %v4951
      %v4979 = vmul.f32 %v4943, %v4951
      %v4980 = vmul.f32 %v4944, %v4951
      %v4981 = vmul.f32 %v4945, %v4951
      %v4982 = vmul.f32 %v4946, %v4951
      %v4983 = vmul.f32 %v4947, %v4951
      %v4984 = vlaneseq
      %v4985 = vshrl.u32 %v4984, 7
      %v4986 = vsub.s32 0, %v4985
      %v4987 = vrot.slane %v4914, %v4986
      %v4988 = vadd.f32 %v4952, %v4987
      %v4989 = vadd.f32 %v4953, %v4987
      %v4990 = vadd.f32 %v4954, %v4987
      %v4991 = vadd.f32 %v4955, %v4987
      %v4992 = vadd.f32 %v4956, %v4987
      %v4993 = vadd.f32 %v4957, %v4987
      %v4994 = vadd.f32 %v4958, %v4987
      %v4995 = vadd.f32 %v4959, %v4987
      %v4996 = vadd.f32 %v4960, %v4987
      %v4997 = vadd.f32 %v4961, %v4987
      %v4998 = vadd.f32 %v4962, %v4987
      %v4999 = vadd.f32 %v4963, %v4987
      %v5000 = vadd.f32 %v4964, %v4987
      %v5001 = vadd.f32 %v4965, %v4987
      %v5002 = vadd.f32 %v4966, %v4987
      %v5003 = vadd.f32 %v4967, %v4987
      %v5004 = vadd.f32 %v4968, %v4987
      %v5005 = vadd.f32 %v4969, %v4987
      %v5006 = vadd.f32 %v4970, %v4987
      %v5007 = vadd.f32 %v4971, %v4987
      %v5008 = vadd.f32 %v4972, %v4987
      %v5009 = vadd.f32 %v4973, %v4987
      %v5010 = vadd.f32 %v4974, %v4987
      %v5011 = vadd.f32 %v4975, %v4987
      %v5012 = vadd.f32 %v4976, %v4987
      %v5013 = vadd.f32 %v4977, %v4987
      %v5014 = vadd.f32 %v4978, %v4987
      %v5015 = vadd.f32 %v4979, %v4987
      %v5016 = vadd.f32 %v4980, %v4987
      %v5017 = vadd.f32 %v4981, %v4987
      %v5018 = vadd.f32 %v4982, %v4987
      %v5019 = vadd.f32 %v4983, %v4987
      %v5020 = vmax.f32 %v4988, 0.0
      %v5021 = vmax.f32 %v4989, 0.0
      %v5022 = vmax.f32 %v4990, 0.0
      %v5023 = vmax.f32 %v4991, 0.0
      %v5024 = vmax.f32 %v4992, 0.0
      %v5025 = vmax.f32 %v4993, 0.0
      %v5026 = vmax.f32 %v4994, 0.0
      %v5027 = vmax.f32 %v4995, 0.0
      %v5028 = vmax.f32 %v4996, 0.0
      %v5029 = vmax.f32 %v4997, 0.0
      %v5030 = vmax.f32 %v4998, 0.0
      %v5031 = vmax.f32 %v4999, 0.0
      %v5032 = vmax.f32 %v5000, 0.0
      %v5033 = vmax.f32 %v5001, 0.0
      %v5034 = vmax.f32 %v5002, 0.0
      %v5035 = vmax.f32 %v5003, 0.0
      %v5036 = vmax.f32 %v5004, 0.0
      %v5037 = vmax.f32 %v5005, 0.0
      %v5038 = vmax.f32 %v5006, 0.0
      %v5039 = vmax.f32 %v5007, 0.0
      %v5040 = vmax.f32 %v5008, 0.0
      %v5041 = vmax.f32 %v5009, 0.0
      %v5042 = vmax.f32 %v5010, 0.0
      %v5043 = vmax.f32 %v5011, 0.0
      %v5044 = vmax.f32 %v5012, 0.0
      %v5045 = vmax.f32 %v5013, 0.0
      %v5046 = vmax.f32 %v5014, 0.0
      %v5047 = vmax.f32 %v5015, 0.0
      %v5048 = vmax.f32 %v5016, 0.0
      %v5049 = vmax.f32 %v5017, 0.0
      %v5050 = vmax.f32 %v5018, 0.0
      %v5051 = vmax.f32 %v5019, 0.0
      %v5052 = vld [vmem:[%s6] sm:$0xff]
      %v5053 = vld [vmem:[%s6 + $0x8] sm:$0xf]
      %vm5054 = vcmask 97280
      %v5056 = vsel %vm5054, %v5020, 0
      %v5059 = vsel %vm5054, %v5021, 0
      %v5062 = vsel %vm5054, %v5022, 0
      %v5065 = vsel %vm5054, %v5023, 0
      %v5068 = vsel %vm5054, %v5024, 0
      %v5071 = vsel %vm5054, %v5025, 0
      %v5074 = vsel %vm5054, %v5026, 0
      %v5077 = vsel %vm5054, %v5027, 0
      %v5080 = vsel %vm5054, %v5028, 0
      %v5083 = vsel %vm5054, %v5029, 0
      %v5086 = vsel %vm5054, %v5030, 0
      %v5089 = vsel %vm5054, %v5031, 0
      %v5092 = vsel %vm5054, %v5032, 0
      %v5095 = vsel %vm5054, %v5033, 0
      %v5098 = vsel %vm5054, %v5034, 0
      %v5101 = vsel %vm5054, %v5035, 0
      %v5104 = vsel %vm5054, %v5036, 0
      %v5107 = vsel %vm5054, %v5037, 0
      %v5110 = vsel %vm5054, %v5038, 0
      %v5113 = vsel %vm5054, %v5039, 0
      %v5116 = vsel %vm5054, %v5040, 0
      %v5119 = vsel %vm5054, %v5041, 0
      %v5122 = vsel %vm5054, %v5042, 0
      %v5125 = vsel %vm5054, %v5043, 0
      %v5128 = vsel %vm5054, %v5044, 0
      %v5131 = vsel %vm5054, %v5045, 0
      %v5134 = vsel %vm5054, %v5046, 0
      %v5137 = vsel %vm5054, %v5047, 0
      %v5140 = vsel %vm5054, %v5048, 0
      %v5143 = vsel %vm5054, %v5049, 0
      %v5146 = vsel %vm5054, %v5050, 0
      %v5149 = vsel %vm5054, %v5051, 0
      %v5152 = vsel %vm626, %v5053, 0
      %5154 = vmatprep.subr.mxu0 0.0
      %5155 = vmatpush1.msra.mxu0 %v5052
      %5156 = vmatprep.subr.mxu0 0.0
      %5157 = vmatpush1.msra.mxu0 %v5152
      %5158 = vmatprep.subr.mxu0 0.0
      %5159 = vmatpush1.msra.mxu0 0.0
      %5160 = vmatprep.subr.mxu0 0.0
      %5161 = vmatpush1.msra.mxu0 0.0
      %5162 = vmatprep.subr.mxu0 0.0
      %5163 = vmatpush1.msra.mxu0 0.0
      %5164 = vmatprep.subr.mxu0 0.0
      %5165 = vmatpush1.msra.mxu0 0.0
      %5166 = vmatprep.subr.mxu0 0.0
      %5167 = vmatpush1.msra.mxu0 0.0
      %5168 = vmatprep.subr.mxu0 0.0
      %5169 = vmatpush1.msra.mxu0 0.0
      %5170 = vmatprep.subr.mxu0 0.0
      %5171 = vmatpush1.msra.mxu0 0.0
      %5172 = vmatprep.subr.mxu0 0.0
      %5173 = vmatpush1.msra.mxu0 0.0
      %5174 = vmatprep.subr.mxu0 0.0
      %5175 = vmatpush1.msra.mxu0 0.0
      %5176 = vmatprep.subr.mxu0 0.0
      %5177 = vmatpush1.msra.mxu0 0.0
      %5178 = vmatprep.subr.mxu0 0.0
      %5179 = vmatpush1.msra.mxu0 0.0
      %5180 = vmatprep.subr.mxu0 0.0
      %5181 = vmatpush1.msra.mxu0 0.0
      %5182 = vmatprep.subr.mxu0 0.0
      %5183 = vmatpush1.msra.mxu0 0.0
      %5184 = vmatprep.subr.mxu0 0.0
      %5185 = vmatpush1.msra.mxu0 0.0
      %5186 = vmatprep.subr.mxu0 0.0
      %5187 = vmatpush1.msra.mxu0 0.0
      %5188 = vmatprep.subr.mxu0 0.0
      %5189 = vmatpush1.msra.mxu0 0.0
      %5190 = vmatprep.subr.mxu0 0.0
      %5191 = vmatpush1.msra.mxu0 0.0
      %5192 = vmatprep.subr.mxu0 0.0
      %5193 = vmatpush1.msra.mxu0 0.0
      %5194 = vmatprep.subr.mxu0 0.0
      %5195 = vmatpush1.msra.mxu0 0.0
      %5196 = vmatprep.subr.mxu0 0.0
      %5197 = vmatpush1.msra.mxu0 0.0
      %5198 = vmatprep.subr.mxu0 0.0
      %5199 = vmatpush1.msra.mxu0 0.0
      %5200 = vmatprep.subr.mxu0 0.0
      %5201 = vmatpush1.msra.mxu0 0.0
      %5202 = vmatprep.subr.mxu0 0.0
      %5203 = vmatpush1.msra.mxu0 0.0
      %5204 = vmatprep.subr.mxu0 0.0
      %5205 = vmatpush1.msra.mxu0 0.0
      %5206 = vmatprep.subr.mxu0 0.0
      %5207 = vmatpush1.msra.mxu0 0.0
      %5208 = vmatprep.subr.mxu0 0.0
      %5209 = vmatpush1.msra.mxu0 0.0
      %5210 = vmatprep.subr.mxu0 0.0
      %5211 = vmatpush1.msra.mxu0 0.0
      %5212 = vmatprep.subr.mxu0 0.0
      %5213 = vmatpush1.msra.mxu0 0.0
      %5214 = vmatprep.subr.mxu0 0.0
      %5215 = vmatpush1.msra.mxu0 0.0
      %5216 = vmatprep.subr.mxu0 0.0
      %5217 = vmatpush1.msra.mxu0 0.0
      %5218 = vmatprep.mubr.f32.mxu0 0.0
      %5219 = vmatmul.mubr.f32.gmra.mrb[0].mxu0 %v5056
      %v5220 = vpop.f32.mrb[0].mxu0
      %v5221 = vadd.f32 0.0, %v5220
      %v5222 = vpop.f32.mrb[0].mxu0
      %5223 = vmatprep.mubr.f32.mxu0 0.0
      %5224 = vmatmul.mubr.f32.gmra.mrb[0].mxu0 %v5059
      %v5225 = vpop.f32.mrb[0].mxu0
      %v5226 = vadd.f32 0.0, %v5225
      %v5227 = vpop.f32.mrb[0].mxu0
      %5228 = vmatprep.mubr.f32.mxu0 0.0
      %5229 = vmatmul.mubr.f32.gmra.mrb[0].mxu0 %v5062
      %v5230 = vpop.f32.mrb[0].mxu0
      %v5231 = vadd.f32 0.0, %v5230
      %v5232 = vpop.f32.mrb[0].mxu0
      %5233 = vmatprep.mubr.f32.mxu0 0.0
      %5234 = vmatmul.mubr.f32.gmra.mrb[0].mxu0 %v5065
      %v5235 = vpop.f32.mrb[0].mxu0
      %v5236 = vadd.f32 0.0, %v5235
      %v5237 = vpop.f32.mrb[0].mxu0
      %5238 = vmatprep.mubr.f32.mxu0 0.0
      %5239 = vmatmul.mubr.f32.gmra.mrb[0].mxu0 %v5068
      %v5240 = vpop.f32.mrb[0].mxu0
      %v5241 = vadd.f32 0.0, %v5240
      %v5242 = vpop.f32.mrb[0].mxu0
      %5243 = vmatprep.mubr.f32.mxu0 0.0
      %5244 = vmatmul.mubr.f32.gmra.mrb[0].mxu0 %v5071
      %v5245 = vpop.f32.mrb[0].mxu0
      %v5246 = vadd.f32 0.0, %v5245
      %v5247 = vpop.f32.mrb[0].mxu0
      %5248 = vmatprep.mubr.f32.mxu0 0.0
      %5249 = vmatmul.mubr.f32.gmra.mrb[0].mxu0 %v5074
      %v5250 = vpop.f32.mrb[0].mxu0
      %v5251 = vadd.f32 0.0, %v5250
      %v5252 = vpop.f32.mrb[0].mxu0
      %5253 = vmatprep.mubr.f32.mxu0 0.0
      %5254 = vmatmul.mubr.f32.gmra.mrb[0].mxu0 %v5077
      %v5255 = vpop.f32.mrb[0].mxu0
      %v5256 = vadd.f32 0.0, %v5255
      %v5257 = vpop.f32.mrb[0].mxu0
      %5258 = vmatprep.mubr.f32.mxu0 0.0
      %5259 = vmatmul.mubr.f32.gmra.mrb[0].mxu0 %v5080
      %v5260 = vpop.f32.mrb[0].mxu0
      %v5261 = vadd.f32 0.0, %v5260
      %v5262 = vpop.f32.mrb[0].mxu0
      %5263 = vmatprep.mubr.f32.mxu0 0.0
      %5264 = vmatmul.mubr.f32.gmra.mrb[0].mxu0 %v5083
      %v5265 = vpop.f32.mrb[0].mxu0
      %v5266 = vadd.f32 0.0, %v5265
      %v5267 = vpop.f32.mrb[0].mxu0
      %5268 = vmatprep.mubr.f32.mxu0 0.0
      %5269 = vmatmul.mubr.f32.gmra.mrb[0].mxu0 %v5086
      %v5270 = vpop.f32.mrb[0].mxu0
      %v5271 = vadd.f32 0.0, %v5270
      %v5272 = vpop.f32.mrb[0].mxu0
      %5273 = vmatprep.mubr.f32.mxu0 0.0
      %5274 = vmatmul.mubr.f32.gmra.mrb[0].mxu0 %v5089
      %v5275 = vpop.f32.mrb[0].mxu0
      %v5276 = vadd.f32 0.0, %v5275
      %v5277 = vpop.f32.mrb[0].mxu0
      %5278 = vmatprep.mubr.f32.mxu0 0.0
      %5279 = vmatmul.mubr.f32.gmra.mrb[0].mxu0 %v5092
      %v5280 = vpop.f32.mrb[0].mxu0
      %v5281 = vadd.f32 0.0, %v5280
      %v5282 = vpop.f32.mrb[0].mxu0
      %5283 = vmatprep.mubr.f32.mxu0 0.0
      %5284 = vmatmul.mubr.f32.gmra.mrb[0].mxu0 %v5095
      %v5285 = vpop.f32.mrb[0].mxu0
      %v5286 = vadd.f32 0.0, %v5285
      %v5287 = vpop.f32.mrb[0].mxu0
      %5288 = vmatprep.mubr.f32.mxu0 0.0
      %5289 = vmatmul.mubr.f32.gmra.mrb[0].mxu0 %v5098
      %v5290 = vpop.f32.mrb[0].mxu0
      %v5291 = vadd.f32 0.0, %v5290
      %v5292 = vpop.f32.mrb[0].mxu0
      %5293 = vmatprep.mubr.f32.mxu0 0.0
      %5294 = vmatmul.mubr.f32.gmra.mrb[0].mxu0 %v5101
      %v5295 = vpop.f32.mrb[0].mxu0
      %v5296 = vadd.f32 0.0, %v5295
      %v5297 = vpop.f32.mrb[0].mxu0
      %5298 = vmatprep.mubr.f32.mxu0 0.0
      %5299 = vmatmul.mubr.f32.gmra.mrb[0].mxu0 %v5104
      %v5300 = vpop.f32.mrb[0].mxu0
      %v5301 = vadd.f32 0.0, %v5300
      %v5302 = vpop.f32.mrb[0].mxu0
      %5303 = vmatprep.mubr.f32.mxu0 0.0
      %5304 = vmatmul.mubr.f32.gmra.mrb[0].mxu0 %v5107
      %v5305 = vpop.f32.mrb[0].mxu0
      %v5306 = vadd.f32 0.0, %v5305
      %v5307 = vpop.f32.mrb[0].mxu0
      %5308 = vmatprep.mubr.f32.mxu0 0.0
      %5309 = vmatmul.mubr.f32.gmra.mrb[0].mxu0 %v5110
      %v5310 = vpop.f32.mrb[0].mxu0
      %v5311 = vadd.f32 0.0, %v5310
      %v5312 = vpop.f32.mrb[0].mxu0
      %5313 = vmatprep.mubr.f32.mxu0 0.0
      %5314 = vmatmul.mubr.f32.gmra.mrb[0].mxu0 %v5113
      %v5315 = vpop.f32.mrb[0].mxu0
      %v5316 = vadd.f32 0.0, %v5315
      %v5317 = vpop.f32.mrb[0].mxu0
      %5318 = vmatprep.mubr.f32.mxu0 0.0
      %5319 = vmatmul.mubr.f32.gmra.mrb[0].mxu0 %v5116
      %v5320 = vpop.f32.mrb[0].mxu0
      %v5321 = vadd.f32 0.0, %v5320
      %v5322 = vpop.f32.mrb[0].mxu0
      %5323 = vmatprep.mubr.f32.mxu0 0.0
      %5324 = vmatmul.mubr.f32.gmra.mrb[0].mxu0 %v5119
      %v5325 = vpop.f32.mrb[0].mxu0
      %v5326 = vadd.f32 0.0, %v5325
      %v5327 = vpop.f32.mrb[0].mxu0
      %5328 = vmatprep.mubr.f32.mxu0 0.0
      %5329 = vmatmul.mubr.f32.gmra.mrb[0].mxu0 %v5122
      %v5330 = vpop.f32.mrb[0].mxu0
      %v5331 = vadd.f32 0.0, %v5330
      %v5332 = vpop.f32.mrb[0].mxu0
      %5333 = vmatprep.mubr.f32.mxu0 0.0
      %5334 = vmatmul.mubr.f32.gmra.mrb[0].mxu0 %v5125
      %v5335 = vpop.f32.mrb[0].mxu0
      %v5336 = vadd.f32 0.0, %v5335
      %v5337 = vpop.f32.mrb[0].mxu0
      %5338 = vmatprep.mubr.f32.mxu0 0.0
      %5339 = vmatmul.mubr.f32.gmra.mrb[0].mxu0 %v5128
      %v5340 = vpop.f32.mrb[0].mxu0
      %v5341 = vadd.f32 0.0, %v5340
      %v5342 = vpop.f32.mrb[0].mxu0
      %5343 = vmatprep.mubr.f32.mxu0 0.0
      %5344 = vmatmul.mubr.f32.gmra.mrb[0].mxu0 %v5131
      %v5345 = vpop.f32.mrb[0].mxu0
      %v5346 = vadd.f32 0.0, %v5345
      %v5347 = vpop.f32.mrb[0].mxu0
      %5348 = vmatprep.mubr.f32.mxu0 0.0
      %5349 = vmatmul.mubr.f32.gmra.mrb[0].mxu0 %v5134
      %v5350 = vpop.f32.mrb[0].mxu0
      %v5351 = vadd.f32 0.0, %v5350
      %v5352 = vpop.f32.mrb[0].mxu0
      %5353 = vmatprep.mubr.f32.mxu0 0.0
      %5354 = vmatmul.mubr.f32.gmra.mrb[0].mxu0 %v5137
      %v5355 = vpop.f32.mrb[0].mxu0
      %v5356 = vadd.f32 0.0, %v5355
      %v5357 = vpop.f32.mrb[0].mxu0
      %5358 = vmatprep.mubr.f32.mxu0 0.0
      %5359 = vmatmul.mubr.f32.gmra.mrb[0].mxu0 %v5140
      %v5360 = vpop.f32.mrb[0].mxu0
      %v5361 = vadd.f32 0.0, %v5360
      %v5362 = vpop.f32.mrb[0].mxu0
      %5363 = vmatprep.mubr.f32.mxu0 0.0
      %5364 = vmatmul.mubr.f32.gmra.mrb[0].mxu0 %v5143
      %v5365 = vpop.f32.mrb[0].mxu0
      %v5366 = vadd.f32 0.0, %v5365
      %v5367 = vpop.f32.mrb[0].mxu0
      %5368 = vmatprep.mubr.f32.mxu0 0.0
      %5369 = vmatmul.mubr.f32.gmra.mrb[0].mxu0 %v5146
      %v5370 = vpop.f32.mrb[0].mxu0
      %v5371 = vadd.f32 0.0, %v5370
      %v5372 = vpop.f32.mrb[0].mxu0
      %5373 = vmatprep.mubr.f32.mxu0 0.0
      %5374 = vmatmul.mubr.f32.gmra.mrb[0].mxu0 %v5149
      %v5375 = vpop.f32.mrb[0].mxu0
      %v5376 = vadd.f32 0.0, %v5375
      %v5377 = vpop.f32.mrb[0].mxu0
      %5378 = vdwg.mxu0
      %5379 = vst.msk [vmem:[%s855 + $0x8] sm:$0xff] %vm279, %v5221
      %5380 = vst.msk [vmem:[%s855 + $0x10] sm:$0xff] %vm279, %v5226
      %5381 = vst.msk [vmem:[%s855 + $0x28] sm:$0xff] %vm279, %v5231
      %5382 = vst.msk [vmem:[%s855 + $0x30] sm:$0xff] %vm279, %v5236
      %5383 = vst.msk [vmem:[%s855 + $0x48] sm:$0xff] %vm279, %v5241
      %5384 = vst.msk [vmem:[%s855 + $0x50] sm:$0xff] %vm279, %v5246
      %5385 = vst.msk [vmem:[%s855 + $0x68] sm:$0xff] %vm279, %v5251
      %5386 = vst.msk [vmem:[%s855 + $0x70] sm:$0xff] %vm279, %v5256
      %5387 = vst.msk [vmem:[%s855 + $0x88] sm:$0xff] %vm279, %v5261
      %5388 = vst.msk [vmem:[%s855 + $0x90] sm:$0xff] %vm279, %v5266
      %5389 = vst.msk [vmem:[%s855 + $0xa8] sm:$0xff] %vm279, %v5271
      %5390 = vst.msk [vmem:[%s855 + $0xb0] sm:$0xff] %vm279, %v5276
      %5391 = vst.msk [vmem:[%s855 + $0xc8] sm:$0xff] %vm279, %v5281
      %5392 = vst.msk [vmem:[%s855 + $0xd0] sm:$0xff] %vm279, %v5286
      %5393 = vst.msk [vmem:[%s855 + $0xe8] sm:$0xff] %vm279, %v5291
      %5394 = vst.msk [vmem:[%s855 + $0xf0] sm:$0xff] %vm279, %v5296
      %5395 = vst.msk [vmem:[%s855 + $0x108] sm:$0xff] %vm279, %v5301
      %5396 = vst.msk [vmem:[%s855 + $0x110] sm:$0xff] %vm279, %v5306
      %5397 = vst.msk [vmem:[%s855 + $0x128] sm:$0xff] %vm279, %v5311
      %5398 = vst.msk [vmem:[%s855 + $0x130] sm:$0xff] %vm279, %v5316
      %5399 = vst.msk [vmem:[%s855 + $0x148] sm:$0xff] %vm279, %v5321
      %5400 = vst.msk [vmem:[%s855 + $0x150] sm:$0xff] %vm279, %v5326
      %5401 = vst.msk [vmem:[%s855 + $0x168] sm:$0xff] %vm279, %v5331
      %5402 = vst.msk [vmem:[%s855 + $0x170] sm:$0xff] %vm279, %v5336
      %5403 = vst.msk [vmem:[%s855 + $0x188] sm:$0xff] %vm279, %v5341
      %5404 = vst.msk [vmem:[%s855 + $0x190] sm:$0xff] %vm279, %v5346
      %5405 = vst.msk [vmem:[%s855 + $0x1a8] sm:$0xff] %vm279, %v5351
      %5406 = vst.msk [vmem:[%s855 + $0x1b0] sm:$0xff] %vm279, %v5356
      %5407 = vst.msk [vmem:[%s855 + $0x1c8] sm:$0xff] %vm279, %v5361
      %5408 = vst.msk [vmem:[%s855 + $0x1d0] sm:$0xff] %vm279, %v5366
      %5409 = vst.msk [vmem:[%s855 + $0x1e8] sm:$0xff] %vm279, %v5371
      %5410 = vst.msk [vmem:[%s855 + $0x1f0] sm:$0xff] %vm279, %v5376
      %v5411 = vld [vmem:[#allocation3 + $0x7] sm:$0xff]
      %v5412 = vld [vmem:[#allocation3 + $0xf] sm:$0xff]
      %v5413 = vld [vmem:[#allocation3 + $0x27] sm:$0xff]
      %v5414 = vld [vmem:[#allocation3 + $0x2f] sm:$0xff]
      %v5415 = vld [vmem:[#allocation3 + $0x47] sm:$0xff]
      %v5416 = vld [vmem:[#allocation3 + $0x4f] sm:$0xff]
      %v5417 = vld [vmem:[#allocation3 + $0x67] sm:$0xff]
      %v5418 = vld [vmem:[#allocation3 + $0x6f] sm:$0xff]
      %v5419 = vld [vmem:[#allocation3 + $0x87] sm:$0xff]
      %v5420 = vld [vmem:[#allocation3 + $0x8f] sm:$0xff]
      %v5421 = vld [vmem:[#allocation3 + $0xa7] sm:$0xff]
      %v5422 = vld [vmem:[#allocation3 + $0xaf] sm:$0xff]
      %v5423 = vld [vmem:[#allocation3 + $0xc7] sm:$0xff]
      %v5424 = vld [vmem:[#allocation3 + $0xcf] sm:$0xff]
      %v5425 = vld [vmem:[#allocation3 + $0xe7] sm:$0xff]
      %v5426 = vld [vmem:[#allocation3 + $0xef] sm:$0xff]
      %v5427 = vld [vmem:[#allocation3 + $0x107] sm:$0xff]
      %v5428 = vld [vmem:[#allocation3 + $0x10f] sm:$0xff]
      %v5429 = vld [vmem:[#allocation3 + $0x127] sm:$0xff]
      %v5430 = vld [vmem:[#allocation3 + $0x12f] sm:$0xff]
      %v5431 = vld [vmem:[#allocation3 + $0x147] sm:$0xff]
      %v5432 = vld [vmem:[#allocation3 + $0x14f] sm:$0xff]
      %v5433 = vld [vmem:[#allocation3 + $0x167] sm:$0xff]
      %v5434 = vld [vmem:[#allocation3 + $0x16f] sm:$0xff]
      %v5435 = vld [vmem:[#allocation3 + $0x187] sm:$0xff]
      %v5436 = vld [vmem:[#allocation3 + $0x18f] sm:$0xff]
      %v5437 = vld [vmem:[#allocation3 + $0x1a7] sm:$0xff]
      %v5438 = vld [vmem:[#allocation3 + $0x1af] sm:$0xff]
      %v5439 = vld [vmem:[#allocation3 + $0x1c7] sm:$0xff]
      %v5440 = vld [vmem:[#allocation3 + $0x1cf] sm:$0xff]
      %v5441 = vld [vmem:[#allocation3 + $0x1e7] sm:$0xff]
      %v5442 = vld [vmem:[#allocation3 + $0x1ef] sm:$0xff]
      %v5443 = vld [vmem:[#allocation3 + $0x8] sm:$0xff]
      %v5444 = vld [vmem:[#allocation3 + $0x10] sm:$0xff]
      %v5445 = vld [vmem:[#allocation3 + $0x28] sm:$0xff]
      %v5446 = vld [vmem:[#allocation3 + $0x30] sm:$0xff]
      %v5447 = vld [vmem:[#allocation3 + $0x48] sm:$0xff]
      %v5448 = vld [vmem:[#allocation3 + $0x50] sm:$0xff]
      %v5449 = vld [vmem:[#allocation3 + $0x68] sm:$0xff]
      %v5450 = vld [vmem:[#allocation3 + $0x70] sm:$0xff]
      %v5451 = vld [vmem:[#allocation3 + $0x88] sm:$0xff]
      %v5452 = vld [vmem:[#allocation3 + $0x90] sm:$0xff]
      %v5453 = vld [vmem:[#allocation3 + $0xa8] sm:$0xff]
      %v5454 = vld [vmem:[#allocation3 + $0xb0] sm:$0xff]
      %v5455 = vld [vmem:[#allocation3 + $0xc8] sm:$0xff]
      %v5456 = vld [vmem:[#allocation3 + $0xd0] sm:$0xff]
      %v5457 = vld [vmem:[#allocation3 + $0xe8] sm:$0xff]
      %v5458 = vld [vmem:[#allocation3 + $0xf0] sm:$0xff]
      %v5459 = vld [vmem:[#allocation3 + $0x108] sm:$0xff]
      %v5460 = vld [vmem:[#allocation3 + $0x110] sm:$0xff]
      %v5461 = vld [vmem:[#allocation3 + $0x128] sm:$0xff]
      %v5462 = vld [vmem:[#allocation3 + $0x130] sm:$0xff]
      %v5463 = vld [vmem:[#allocation3 + $0x148] sm:$0xff]
      %v5464 = vld [vmem:[#allocation3 + $0x150] sm:$0xff]
      %v5465 = vld [vmem:[#allocation3 + $0x168] sm:$0xff]
      %v5466 = vld [vmem:[#allocation3 + $0x170] sm:$0xff]
      %v5467 = vld [vmem:[#allocation3 + $0x188] sm:$0xff]
      %v5468 = vld [vmem:[#allocation3 + $0x190] sm:$0xff]
      %v5469 = vld [vmem:[#allocation3 + $0x1a8] sm:$0xff]
      %v5470 = vld [vmem:[#allocation3 + $0x1b0] sm:$0xff]
      %v5471 = vld [vmem:[#allocation3 + $0x1c8] sm:$0xff]
      %v5472 = vld [vmem:[#allocation3 + $0x1d0] sm:$0xff]
      %v5473 = vld [vmem:[#allocation3 + $0x1e8] sm:$0xff]
      %v5474 = vld [vmem:[#allocation3 + $0x1f0] sm:$0xff]
      %5507 = vrot.lane.b32.xlu0 %v5443, 124
      %v5508 = vpop.permute.xlu0 %5507
      %5509 = vrot.lane.b32.xlu0 %v5444, 124
      %v5510 = vpop.permute.xlu0 %5509
      %5511 = vrot.lane.b32.xlu0 %v5445, 124
      %v5512 = vpop.permute.xlu0 %5511
      %5513 = vrot.lane.b32.xlu0 %v5446, 124
      %v5514 = vpop.permute.xlu0 %5513
      %5515 = vrot.lane.b32.xlu0 %v5447, 124
      %v5516 = vpop.permute.xlu0 %5515
      %5517 = vrot.lane.b32.xlu0 %v5448, 124
      %v5518 = vpop.permute.xlu0 %5517
      %5519 = vrot.lane.b32.xlu0 %v5449, 124
      %v5520 = vpop.permute.xlu0 %5519
      %5521 = vrot.lane.b32.xlu0 %v5450, 124
      %v5522 = vpop.permute.xlu0 %5521
      %5523 = vrot.lane.b32.xlu0 %v5451, 124
      %v5524 = vpop.permute.xlu0 %5523
      %5525 = vrot.lane.b32.xlu0 %v5452, 124
      %v5526 = vpop.permute.xlu0 %5525
      %5527 = vrot.lane.b32.xlu0 %v5453, 124
      %v5528 = vpop.permute.xlu0 %5527
      %5529 = vrot.lane.b32.xlu0 %v5454, 124
      %v5530 = vpop.permute.xlu0 %5529
      %5531 = vrot.lane.b32.xlu0 %v5455, 124
      %v5532 = vpop.permute.xlu0 %5531
      %5533 = vrot.lane.b32.xlu0 %v5456, 124
      %v5534 = vpop.permute.xlu0 %5533
      %5535 = vrot.lane.b32.xlu0 %v5457, 124
      %v5536 = vpop.permute.xlu0 %5535
      %5537 = vrot.lane.b32.xlu0 %v5458, 124
      %v5538 = vpop.permute.xlu0 %5537
      %5539 = vrot.lane.b32.xlu0 %v5459, 124
      %v5540 = vpop.permute.xlu0 %5539
      %5541 = vrot.lane.b32.xlu0 %v5460, 124
      %v5542 = vpop.permute.xlu0 %5541
      %5543 = vrot.lane.b32.xlu0 %v5461, 124
      %v5544 = vpop.permute.xlu0 %5543
      %5545 = vrot.lane.b32.xlu0 %v5462, 124
      %v5546 = vpop.permute.xlu0 %5545
      %5547 = vrot.lane.b32.xlu0 %v5463, 124
      %v5548 = vpop.permute.xlu0 %5547
      %5549 = vrot.lane.b32.xlu0 %v5464, 124
      %v5550 = vpop.permute.xlu0 %5549
      %5551 = vrot.lane.b32.xlu0 %v5465, 124
      %v5552 = vpop.permute.xlu0 %5551
      %5553 = vrot.lane.b32.xlu0 %v5466, 124
      %v5554 = vpop.permute.xlu0 %5553
      %5555 = vrot.lane.b32.xlu0 %v5467, 124
      %v5556 = vpop.permute.xlu0 %5555
      %5557 = vrot.lane.b32.xlu0 %v5468, 124
      %v5558 = vpop.permute.xlu0 %5557
      %5559 = vrot.lane.b32.xlu0 %v5469, 124
      %v5560 = vpop.permute.xlu0 %5559
      %5561 = vrot.lane.b32.xlu0 %v5470, 124
      %v5562 = vpop.permute.xlu0 %5561
      %5563 = vrot.lane.b32.xlu0 %v5471, 124
      %v5564 = vpop.permute.xlu0 %5563
      %5565 = vrot.lane.b32.xlu0 %v5472, 124
      %v5566 = vpop.permute.xlu0 %5565
      %5567 = vrot.lane.b32.xlu0 %v5473, 124
      %v5568 = vpop.permute.xlu0 %5567
      %5569 = vrot.lane.b32.xlu0 %v5474, 124
      %v5570 = vpop.permute.xlu0 %5569
      %v5603 = vadd.f32 %v5411, %v5508
      %v5604 = vadd.f32 %v5412, %v5510
      %v5605 = vadd.f32 %v5413, %v5512
      %v5606 = vadd.f32 %v5414, %v5514
      %v5607 = vadd.f32 %v5415, %v5516
      %v5608 = vadd.f32 %v5416, %v5518
      %v5609 = vadd.f32 %v5417, %v5520
      %v5610 = vadd.f32 %v5418, %v5522
      %v5611 = vadd.f32 %v5419, %v5524
      %v5612 = vadd.f32 %v5420, %v5526
      %v5613 = vadd.f32 %v5421, %v5528
      %v5614 = vadd.f32 %v5422, %v5530
      %v5615 = vadd.f32 %v5423, %v5532
      %v5616 = vadd.f32 %v5424, %v5534
      %v5617 = vadd.f32 %v5425, %v5536
      %v5618 = vadd.f32 %v5426, %v5538
      %v5619 = vadd.f32 %v5427, %v5540
      %v5620 = vadd.f32 %v5428, %v5542
      %v5621 = vadd.f32 %v5429, %v5544
      %v5622 = vadd.f32 %v5430, %v5546
      %v5623 = vadd.f32 %v5431, %v5548
      %v5624 = vadd.f32 %v5432, %v5550
      %v5625 = vadd.f32 %v5433, %v5552
      %v5626 = vadd.f32 %v5434, %v5554
      %v5627 = vadd.f32 %v5435, %v5556
      %v5628 = vadd.f32 %v5436, %v5558
      %v5629 = vadd.f32 %v5437, %v5560
      %v5630 = vadd.f32 %v5438, %v5562
      %v5631 = vadd.f32 %v5439, %v5564
      %v5632 = vadd.f32 %v5440, %v5566
      %v5633 = vadd.f32 %v5441, %v5568
      %v5634 = vadd.f32 %v5442, %v5570
      %v5635 = vld [vmem:[#allocation3 + $0x9] sm:$0xff]
      %v5636 = vld [vmem:[#allocation3 + $0x11] sm:$0xff]
      %v5637 = vld [vmem:[#allocation3 + $0x29] sm:$0xff]
      %v5638 = vld [vmem:[#allocation3 + $0x31] sm:$0xff]
      %v5639 = vld [vmem:[#allocation3 + $0x49] sm:$0xff]
      %v5640 = vld [vmem:[#allocation3 + $0x51] sm:$0xff]
      %v5641 = vld [vmem:[#allocation3 + $0x69] sm:$0xff]
      %v5642 = vld [vmem:[#allocation3 + $0x71] sm:$0xff]
      %v5643 = vld [vmem:[#allocation3 + $0x89] sm:$0xff]
      %v5644 = vld [vmem:[#allocation3 + $0x91] sm:$0xff]
      %v5645 = vld [vmem:[#allocation3 + $0xa9] sm:$0xff]
      %v5646 = vld [vmem:[#allocation3 + $0xb1] sm:$0xff]
      %v5647 = vld [vmem:[#allocation3 + $0xc9] sm:$0xff]
      %v5648 = vld [vmem:[#allocation3 + $0xd1] sm:$0xff]
      %v5649 = vld [vmem:[#allocation3 + $0xe9] sm:$0xff]
      %v5650 = vld [vmem:[#allocation3 + $0xf1] sm:$0xff]
      %v5651 = vld [vmem:[#allocation3 + $0x109] sm:$0xff]
      %v5652 = vld [vmem:[#allocation3 + $0x111] sm:$0xff]
      %v5653 = vld [vmem:[#allocation3 + $0x129] sm:$0xff]
      %v5654 = vld [vmem:[#allocation3 + $0x131] sm:$0xff]
      %v5655 = vld [vmem:[#allocation3 + $0x149] sm:$0xff]
      %v5656 = vld [vmem:[#allocation3 + $0x151] sm:$0xff]
      %v5657 = vld [vmem:[#allocation3 + $0x169] sm:$0xff]
      %v5658 = vld [vmem:[#allocation3 + $0x171] sm:$0xff]
      %v5659 = vld [vmem:[#allocation3 + $0x189] sm:$0xff]
      %v5660 = vld [vmem:[#allocation3 + $0x191] sm:$0xff]
      %v5661 = vld [vmem:[#allocation3 + $0x1a9] sm:$0xff]
      %v5662 = vld [vmem:[#allocation3 + $0x1b1] sm:$0xff]
      %v5663 = vld [vmem:[#allocation3 + $0x1c9] sm:$0xff]
      %v5664 = vld [vmem:[#allocation3 + $0x1d1] sm:$0xff]
      %v5665 = vld [vmem:[#allocation3 + $0x1e9] sm:$0xff]
      %v5666 = vld [vmem:[#allocation3 + $0x1f1] sm:$0xff]
      %5699 = vrot.lane.b32.xlu0 %v5635, 120
      %v5700 = vpop.permute.xlu0 %5699
      %5701 = vrot.lane.b32.xlu0 %v5636, 120
      %v5702 = vpop.permute.xlu0 %5701
      %5703 = vrot.lane.b32.xlu0 %v5637, 120
      %v5704 = vpop.permute.xlu0 %5703
      %5705 = vrot.lane.b32.xlu0 %v5638, 120
      %v5706 = vpop.permute.xlu0 %5705
      %5707 = vrot.lane.b32.xlu0 %v5639, 120
      %v5708 = vpop.permute.xlu0 %5707
      %5709 = vrot.lane.b32.xlu0 %v5640, 120
      %v5710 = vpop.permute.xlu0 %5709
      %5711 = vrot.lane.b32.xlu0 %v5641, 120
      %v5712 = vpop.permute.xlu0 %5711
      %5713 = vrot.lane.b32.xlu0 %v5642, 120
      %v5714 = vpop.permute.xlu0 %5713
      %5715 = vrot.lane.b32.xlu0 %v5643, 120
      %v5716 = vpop.permute.xlu0 %5715
      %5717 = vrot.lane.b32.xlu0 %v5644, 120
      %v5718 = vpop.permute.xlu0 %5717
      %5719 = vrot.lane.b32.xlu0 %v5645, 120
      %v5720 = vpop.permute.xlu0 %5719
      %5721 = vrot.lane.b32.xlu0 %v5646, 120
      %v5722 = vpop.permute.xlu0 %5721
      %5723 = vrot.lane.b32.xlu0 %v5647, 120
      %v5724 = vpop.permute.xlu0 %5723
      %5725 = vrot.lane.b32.xlu0 %v5648, 120
      %v5726 = vpop.permute.xlu0 %5725
      %5727 = vrot.lane.b32.xlu0 %v5649, 120
      %v5728 = vpop.permute.xlu0 %5727
      %5729 = vrot.lane.b32.xlu0 %v5650, 120
      %v5730 = vpop.permute.xlu0 %5729
      %5731 = vrot.lane.b32.xlu0 %v5651, 120
      %v5732 = vpop.permute.xlu0 %5731
      %5733 = vrot.lane.b32.xlu0 %v5652, 120
      %v5734 = vpop.permute.xlu0 %5733
      %5735 = vrot.lane.b32.xlu0 %v5653, 120
      %v5736 = vpop.permute.xlu0 %5735
      %5737 = vrot.lane.b32.xlu0 %v5654, 120
      %v5738 = vpop.permute.xlu0 %5737
      %5739 = vrot.lane.b32.xlu0 %v5655, 120
      %v5740 = vpop.permute.xlu0 %5739
      %5741 = vrot.lane.b32.xlu0 %v5656, 120
      %v5742 = vpop.permute.xlu0 %5741
      %5743 = vrot.lane.b32.xlu0 %v5657, 120
      %v5744 = vpop.permute.xlu0 %5743
      %5745 = vrot.lane.b32.xlu0 %v5658, 120
      %v5746 = vpop.permute.xlu0 %5745
      %5747 = vrot.lane.b32.xlu0 %v5659, 120
      %v5748 = vpop.permute.xlu0 %5747
      %5749 = vrot.lane.b32.xlu0 %v5660, 120
      %v5750 = vpop.permute.xlu0 %5749
      %5751 = vrot.lane.b32.xlu0 %v5661, 120
      %v5752 = vpop.permute.xlu0 %5751
      %5753 = vrot.lane.b32.xlu0 %v5662, 120
      %v5754 = vpop.permute.xlu0 %5753
      %5755 = vrot.lane.b32.xlu0 %v5663, 120
      %v5756 = vpop.permute.xlu0 %5755
      %5757 = vrot.lane.b32.xlu0 %v5664, 120
      %v5758 = vpop.permute.xlu0 %5757
      %5759 = vrot.lane.b32.xlu0 %v5665, 120
      %v5760 = vpop.permute.xlu0 %5759
      %5761 = vrot.lane.b32.xlu0 %v5666, 120
      %v5762 = vpop.permute.xlu0 %5761
      %v5795 = vadd.f32 %v5603, %v5700
      %v5796 = vadd.f32 %v5604, %v5702
      %v5797 = vadd.f32 %v5605, %v5704
      %v5798 = vadd.f32 %v5606, %v5706
      %v5799 = vadd.f32 %v5607, %v5708
      %v5800 = vadd.f32 %v5608, %v5710
      %v5801 = vadd.f32 %v5609, %v5712
      %v5802 = vadd.f32 %v5610, %v5714
      %v5803 = vadd.f32 %v5611, %v5716
      %v5804 = vadd.f32 %v5612, %v5718
      %v5805 = vadd.f32 %v5613, %v5720
      %v5806 = vadd.f32 %v5614, %v5722
      %v5807 = vadd.f32 %v5615, %v5724
      %v5808 = vadd.f32 %v5616, %v5726
      %v5809 = vadd.f32 %v5617, %v5728
      %v5810 = vadd.f32 %v5618, %v5730
      %v5811 = vadd.f32 %v5619, %v5732
      %v5812 = vadd.f32 %v5620, %v5734
      %v5813 = vadd.f32 %v5621, %v5736
      %v5814 = vadd.f32 %v5622, %v5738
      %v5815 = vadd.f32 %v5623, %v5740
      %v5816 = vadd.f32 %v5624, %v5742
      %v5817 = vadd.f32 %v5625, %v5744
      %v5818 = vadd.f32 %v5626, %v5746
      %v5819 = vadd.f32 %v5627, %v5748
      %v5820 = vadd.f32 %v5628, %v5750
      %v5821 = vadd.f32 %v5629, %v5752
      %v5822 = vadd.f32 %v5630, %v5754
      %v5823 = vadd.f32 %v5631, %v5756
      %v5824 = vadd.f32 %v5632, %v5758
      %v5825 = vadd.f32 %v5633, %v5760
      %v5826 = vadd.f32 %v5634, %v5762
      %v5827 = vld [vmem:[%s855 + $0x7] sm:$0xff]
      %v5828 = vld [vmem:[%s855 + $0xf] sm:$0xff]
      %v5829 = vld [vmem:[%s855 + $0x27] sm:$0xff]
      %v5830 = vld [vmem:[%s855 + $0x2f] sm:$0xff]
      %v5831 = vld [vmem:[%s855 + $0x47] sm:$0xff]
      %v5832 = vld [vmem:[%s855 + $0x4f] sm:$0xff]
      %v5833 = vld [vmem:[%s855 + $0x67] sm:$0xff]
      %v5834 = vld [vmem:[%s855 + $0x6f] sm:$0xff]
      %v5835 = vld [vmem:[%s855 + $0x87] sm:$0xff]
      %v5836 = vld [vmem:[%s855 + $0x8f] sm:$0xff]
      %v5837 = vld [vmem:[%s855 + $0xa7] sm:$0xff]
      %v5838 = vld [vmem:[%s855 + $0xaf] sm:$0xff]
      %v5839 = vld [vmem:[%s855 + $0xc7] sm:$0xff]
      %v5840 = vld [vmem:[%s855 + $0xcf] sm:$0xff]
      %v5841 = vld [vmem:[%s855 + $0xe7] sm:$0xff]
      %v5842 = vld [vmem:[%s855 + $0xef] sm:$0xff]
      %v5843 = vld [vmem:[%s855 + $0x107] sm:$0xff]
      %v5844 = vld [vmem:[%s855 + $0x10f] sm:$0xff]
      %v5845 = vld [vmem:[%s855 + $0x127] sm:$0xff]
      %v5846 = vld [vmem:[%s855 + $0x12f] sm:$0xff]
      %v5847 = vld [vmem:[%s855 + $0x147] sm:$0xff]
      %v5848 = vld [vmem:[%s855 + $0x14f] sm:$0xff]
      %v5849 = vld [vmem:[%s855 + $0x167] sm:$0xff]
      %v5850 = vld [vmem:[%s855 + $0x16f] sm:$0xff]
      %v5851 = vld [vmem:[%s855 + $0x187] sm:$0xff]
      %v5852 = vld [vmem:[%s855 + $0x18f] sm:$0xff]
      %v5853 = vld [vmem:[%s855 + $0x1a7] sm:$0xff]
      %v5854 = vld [vmem:[%s855 + $0x1af] sm:$0xff]
      %v5855 = vld [vmem:[%s855 + $0x1c7] sm:$0xff]
      %v5856 = vld [vmem:[%s855 + $0x1cf] sm:$0xff]
      %v5857 = vld [vmem:[%s855 + $0x1e7] sm:$0xff]
      %v5858 = vld [vmem:[%s855 + $0x1ef] sm:$0xff]
      %5891 = vrot.lane.b32.xlu0 %v5827, 116
      %v5892 = vpop.permute.xlu0 %5891
      %5893 = vrot.lane.b32.xlu0 %v5828, 116
      %v5894 = vpop.permute.xlu0 %5893
      %5895 = vrot.lane.b32.xlu0 %v5829, 116
      %v5896 = vpop.permute.xlu0 %5895
      %5897 = vrot.lane.b32.xlu0 %v5830, 116
      %v5898 = vpop.permute.xlu0 %5897
      %5899 = vrot.lane.b32.xlu0 %v5831, 116
      %v5900 = vpop.permute.xlu0 %5899
      %5901 = vrot.lane.b32.xlu0 %v5832, 116
      %v5902 = vpop.permute.xlu0 %5901
      %5903 = vrot.lane.b32.xlu0 %v5833, 116
      %v5904 = vpop.permute.xlu0 %5903
      %5905 = vrot.lane.b32.xlu0 %v5834, 116
      %v5906 = vpop.permute.xlu0 %5905
      %5907 = vrot.lane.b32.xlu0 %v5835, 116
      %v5908 = vpop.permute.xlu0 %5907
      %5909 = vrot.lane.b32.xlu0 %v5836, 116
      %v5910 = vpop.permute.xlu0 %5909
      %5911 = vrot.lane.b32.xlu0 %v5837, 116
      %v5912 = vpop.permute.xlu0 %5911
      %5913 = vrot.lane.b32.xlu0 %v5838, 116
      %v5914 = vpop.permute.xlu0 %5913
      %5915 = vrot.lane.b32.xlu0 %v5839, 116
      %v5916 = vpop.permute.xlu0 %5915
      %5917 = vrot.lane.b32.xlu0 %v5840, 116
      %v5918 = vpop.permute.xlu0 %5917
      %5919 = vrot.lane.b32.xlu0 %v5841, 116
      %v5920 = vpop.permute.xlu0 %5919
      %5921 = vrot.lane.b32.xlu0 %v5842, 116
      %v5922 = vpop.permute.xlu0 %5921
      %5923 = vrot.lane.b32.xlu0 %v5843, 116
      %v5924 = vpop.permute.xlu0 %5923
      %5925 = vrot.lane.b32.xlu0 %v5844, 116
      %v5926 = vpop.permute.xlu0 %5925
      %5927 = vrot.lane.b32.xlu0 %v5845, 116
      %v5928 = vpop.permute.xlu0 %5927
      %5929 = vrot.lane.b32.xlu0 %v5846, 116
      %v5930 = vpop.permute.xlu0 %5929
      %5931 = vrot.lane.b32.xlu0 %v5847, 116
      %v5932 = vpop.permute.xlu0 %5931
      %5933 = vrot.lane.b32.xlu0 %v5848, 116
      %v5934 = vpop.permute.xlu0 %5933
      %5935 = vrot.lane.b32.xlu0 %v5849, 116
      %v5936 = vpop.permute.xlu0 %5935
      %5937 = vrot.lane.b32.xlu0 %v5850, 116
      %v5938 = vpop.permute.xlu0 %5937
      %5939 = vrot.lane.b32.xlu0 %v5851, 116
      %v5940 = vpop.permute.xlu0 %5939
      %5941 = vrot.lane.b32.xlu0 %v5852, 116
      %v5942 = vpop.permute.xlu0 %5941
      %5943 = vrot.lane.b32.xlu0 %v5853, 116
      %v5944 = vpop.permute.xlu0 %5943
      %5945 = vrot.lane.b32.xlu0 %v5854, 116
      %v5946 = vpop.permute.xlu0 %5945
      %5947 = vrot.lane.b32.xlu0 %v5855, 116
      %v5948 = vpop.permute.xlu0 %5947
      %5949 = vrot.lane.b32.xlu0 %v5856, 116
      %v5950 = vpop.permute.xlu0 %5949
      %5951 = vrot.lane.b32.xlu0 %v5857, 116
      %v5952 = vpop.permute.xlu0 %5951
      %5953 = vrot.lane.b32.xlu0 %v5858, 116
      %v5954 = vpop.permute.xlu0 %5953
      %v5987 = vadd.f32 %v5795, %v5892
      %v5988 = vadd.f32 %v5796, %v5894
      %v5989 = vadd.f32 %v5797, %v5896
      %v5990 = vadd.f32 %v5798, %v5898
      %v5991 = vadd.f32 %v5799, %v5900
      %v5992 = vadd.f32 %v5800, %v5902
      %v5993 = vadd.f32 %v5801, %v5904
      %v5994 = vadd.f32 %v5802, %v5906
      %v5995 = vadd.f32 %v5803, %v5908
      %v5996 = vadd.f32 %v5804, %v5910
      %v5997 = vadd.f32 %v5805, %v5912
      %v5998 = vadd.f32 %v5806, %v5914
      %v5999 = vadd.f32 %v5807, %v5916
      %v6000 = vadd.f32 %v5808, %v5918
      %v6001 = vadd.f32 %v5809, %v5920
      %v6002 = vadd.f32 %v5810, %v5922
      %v6003 = vadd.f32 %v5811, %v5924
      %v6004 = vadd.f32 %v5812, %v5926
      %v6005 = vadd.f32 %v5813, %v5928
      %v6006 = vadd.f32 %v5814, %v5930
      %v6007 = vadd.f32 %v5815, %v5932
      %v6008 = vadd.f32 %v5816, %v5934
      %v6009 = vadd.f32 %v5817, %v5936
      %v6010 = vadd.f32 %v5818, %v5938
      %v6011 = vadd.f32 %v5819, %v5940
      %v6012 = vadd.f32 %v5820, %v5942
      %v6013 = vadd.f32 %v5821, %v5944
      %v6014 = vadd.f32 %v5822, %v5946
      %v6015 = vadd.f32 %v5823, %v5948
      %v6016 = vadd.f32 %v5824, %v5950
      %v6017 = vadd.f32 %v5825, %v5952
      %v6018 = vadd.f32 %v5826, %v5954
      %v6019 = vld [vmem:[%s855 + $0x8] sm:$0xff]
      %v6020 = vld [vmem:[%s855 + $0x10] sm:$0xff]
      %v6021 = vld [vmem:[%s855 + $0x28] sm:$0xff]
      %v6022 = vld [vmem:[%s855 + $0x30] sm:$0xff]
      %v6023 = vld [vmem:[%s855 + $0x48] sm:$0xff]
      %v6024 = vld [vmem:[%s855 + $0x50] sm:$0xff]
      %v6025 = vld [vmem:[%s855 + $0x68] sm:$0xff]
      %v6026 = vld [vmem:[%s855 + $0x70] sm:$0xff]
      %v6027 = vld [vmem:[%s855 + $0x88] sm:$0xff]
      %v6028 = vld [vmem:[%s855 + $0x90] sm:$0xff]
      %v6029 = vld [vmem:[%s855 + $0xa8] sm:$0xff]
      %v6030 = vld [vmem:[%s855 + $0xb0] sm:$0xff]
      %v6031 = vld [vmem:[%s855 + $0xc8] sm:$0xff]
      %v6032 = vld [vmem:[%s855 + $0xd0] sm:$0xff]
      %v6033 = vld [vmem:[%s855 + $0xe8] sm:$0xff]
      %v6034 = vld [vmem:[%s855 + $0xf0] sm:$0xff]
      %v6035 = vld [vmem:[%s855 + $0x108] sm:$0xff]
      %v6036 = vld [vmem:[%s855 + $0x110] sm:$0xff]
      %v6037 = vld [vmem:[%s855 + $0x128] sm:$0xff]
      %v6038 = vld [vmem:[%s855 + $0x130] sm:$0xff]
      %v6039 = vld [vmem:[%s855 + $0x148] sm:$0xff]
      %v6040 = vld [vmem:[%s855 + $0x150] sm:$0xff]
      %v6041 = vld [vmem:[%s855 + $0x168] sm:$0xff]
      %v6042 = vld [vmem:[%s855 + $0x170] sm:$0xff]
      %v6043 = vld [vmem:[%s855 + $0x188] sm:$0xff]
      %v6044 = vld [vmem:[%s855 + $0x190] sm:$0xff]
      %v6045 = vld [vmem:[%s855 + $0x1a8] sm:$0xff]
      %v6046 = vld [vmem:[%s855 + $0x1b0] sm:$0xff]
      %v6047 = vld [vmem:[%s855 + $0x1c8] sm:$0xff]
      %v6048 = vld [vmem:[%s855 + $0x1d0] sm:$0xff]
      %v6049 = vld [vmem:[%s855 + $0x1e8] sm:$0xff]
      %v6050 = vld [vmem:[%s855 + $0x1f0] sm:$0xff]
      %6083 = vrot.lane.b32.xlu0 %v6019, 112
      %v6084 = vpop.permute.xlu0 %6083
      %6085 = vrot.lane.b32.xlu0 %v6020, 112
      %v6086 = vpop.permute.xlu0 %6085
      %6087 = vrot.lane.b32.xlu0 %v6021, 112
      %v6088 = vpop.permute.xlu0 %6087
      %6089 = vrot.lane.b32.xlu0 %v6022, 112
      %v6090 = vpop.permute.xlu0 %6089
      %6091 = vrot.lane.b32.xlu0 %v6023, 112
      %v6092 = vpop.permute.xlu0 %6091
      %6093 = vrot.lane.b32.xlu0 %v6024, 112
      %v6094 = vpop.permute.xlu0 %6093
      %6095 = vrot.lane.b32.xlu0 %v6025, 112
      %v6096 = vpop.permute.xlu0 %6095
      %6097 = vrot.lane.b32.xlu0 %v6026, 112
      %v6098 = vpop.permute.xlu0 %6097
      %6099 = vrot.lane.b32.xlu0 %v6027, 112
      %v6100 = vpop.permute.xlu0 %6099
      %6101 = vrot.lane.b32.xlu0 %v6028, 112
      %v6102 = vpop.permute.xlu0 %6101
      %6103 = vrot.lane.b32.xlu0 %v6029, 112
      %v6104 = vpop.permute.xlu0 %6103
      %6105 = vrot.lane.b32.xlu0 %v6030, 112
      %v6106 = vpop.permute.xlu0 %6105
      %6107 = vrot.lane.b32.xlu0 %v6031, 112
      %v6108 = vpop.permute.xlu0 %6107
      %6109 = vrot.lane.b32.xlu0 %v6032, 112
      %v6110 = vpop.permute.xlu0 %6109
      %6111 = vrot.lane.b32.xlu0 %v6033, 112
      %v6112 = vpop.permute.xlu0 %6111
      %6113 = vrot.lane.b32.xlu0 %v6034, 112
      %v6114 = vpop.permute.xlu0 %6113
      %6115 = vrot.lane.b32.xlu0 %v6035, 112
      %v6116 = vpop.permute.xlu0 %6115
      %6117 = vrot.lane.b32.xlu0 %v6036, 112
      %v6118 = vpop.permute.xlu0 %6117
      %6119 = vrot.lane.b32.xlu0 %v6037, 112
      %v6120 = vpop.permute.xlu0 %6119
      %6121 = vrot.lane.b32.xlu0 %v6038, 112
      %v6122 = vpop.permute.xlu0 %6121
      %6123 = vrot.lane.b32.xlu0 %v6039, 112
      %v6124 = vpop.permute.xlu0 %6123
      %6125 = vrot.lane.b32.xlu0 %v6040, 112
      %v6126 = vpop.permute.xlu0 %6125
      %6127 = vrot.lane.b32.xlu0 %v6041, 112
      %v6128 = vpop.permute.xlu0 %6127
      %6129 = vrot.lane.b32.xlu0 %v6042, 112
      %v6130 = vpop.permute.xlu0 %6129
      %6131 = vrot.lane.b32.xlu0 %v6043, 112
      %v6132 = vpop.permute.xlu0 %6131
      %6133 = vrot.lane.b32.xlu0 %v6044, 112
      %v6134 = vpop.permute.xlu0 %6133
      %6135 = vrot.lane.b32.xlu0 %v6045, 112
      %v6136 = vpop.permute.xlu0 %6135
      %6137 = vrot.lane.b32.xlu0 %v6046, 112
      %v6138 = vpop.permute.xlu0 %6137
      %6139 = vrot.lane.b32.xlu0 %v6047, 112
      %v6140 = vpop.permute.xlu0 %6139
      %6141 = vrot.lane.b32.xlu0 %v6048, 112
      %v6142 = vpop.permute.xlu0 %6141
      %6143 = vrot.lane.b32.xlu0 %v6049, 112
      %v6144 = vpop.permute.xlu0 %6143
      %6145 = vrot.lane.b32.xlu0 %v6050, 112
      %v6146 = vpop.permute.xlu0 %6145
      %v6179 = vadd.f32 %v5987, %v6084
      %v6180 = vadd.f32 %v5988, %v6086
      %v6181 = vadd.f32 %v5989, %v6088
      %v6182 = vadd.f32 %v5990, %v6090
      %v6183 = vadd.f32 %v5991, %v6092
      %v6184 = vadd.f32 %v5992, %v6094
      %v6185 = vadd.f32 %v5993, %v6096
      %v6186 = vadd.f32 %v5994, %v6098
      %v6187 = vadd.f32 %v5995, %v6100
      %v6188 = vadd.f32 %v5996, %v6102
      %v6189 = vadd.f32 %v5997, %v6104
      %v6190 = vadd.f32 %v5998, %v6106
      %v6191 = vadd.f32 %v5999, %v6108
      %v6192 = vadd.f32 %v6000, %v6110
      %v6193 = vadd.f32 %v6001, %v6112
      %v6194 = vadd.f32 %v6002, %v6114
      %v6195 = vadd.f32 %v6003, %v6116
      %v6196 = vadd.f32 %v6004, %v6118
      %v6197 = vadd.f32 %v6005, %v6120
      %v6198 = vadd.f32 %v6006, %v6122
      %v6199 = vadd.f32 %v6007, %v6124
      %v6200 = vadd.f32 %v6008, %v6126
      %v6201 = vadd.f32 %v6009, %v6128
      %v6202 = vadd.f32 %v6010, %v6130
      %v6203 = vadd.f32 %v6011, %v6132
      %v6204 = vadd.f32 %v6012, %v6134
      %v6205 = vadd.f32 %v6013, %v6136
      %v6206 = vadd.f32 %v6014, %v6138
      %v6207 = vadd.f32 %v6015, %v6140
      %v6208 = vadd.f32 %v6016, %v6142
      %v6209 = vadd.f32 %v6017, %v6144
      %v6210 = vadd.f32 %v6018, %v6146
      %v6211 = vld [vmem:[%s855 + $0x9] sm:$0xff]
      %v6212 = vld [vmem:[%s855 + $0x11] sm:$0xff]
      %v6213 = vld [vmem:[%s855 + $0x29] sm:$0xff]
      %v6214 = vld [vmem:[%s855 + $0x31] sm:$0xff]
      %v6215 = vld [vmem:[%s855 + $0x49] sm:$0xff]
      %v6216 = vld [vmem:[%s855 + $0x51] sm:$0xff]
      %v6217 = vld [vmem:[%s855 + $0x69] sm:$0xff]
      %v6218 = vld [vmem:[%s855 + $0x71] sm:$0xff]
      %v6219 = vld [vmem:[%s855 + $0x89] sm:$0xff]
      %v6220 = vld [vmem:[%s855 + $0x91] sm:$0xff]
      %v6221 = vld [vmem:[%s855 + $0xa9] sm:$0xff]
      %v6222 = vld [vmem:[%s855 + $0xb1] sm:$0xff]
      %v6223 = vld [vmem:[%s855 + $0xc9] sm:$0xff]
      %v6224 = vld [vmem:[%s855 + $0xd1] sm:$0xff]
      %v6225 = vld [vmem:[%s855 + $0xe9] sm:$0xff]
      %v6226 = vld [vmem:[%s855 + $0xf1] sm:$0xff]
      %v6227 = vld [vmem:[%s855 + $0x109] sm:$0xff]
      %v6228 = vld [vmem:[%s855 + $0x111] sm:$0xff]
      %v6229 = vld [vmem:[%s855 + $0x129] sm:$0xff]
      %v6230 = vld [vmem:[%s855 + $0x131] sm:$0xff]
      %v6231 = vld [vmem:[%s855 + $0x149] sm:$0xff]
      %v6232 = vld [vmem:[%s855 + $0x151] sm:$0xff]
      %v6233 = vld [vmem:[%s855 + $0x169] sm:$0xff]
      %v6234 = vld [vmem:[%s855 + $0x171] sm:$0xff]
      %v6235 = vld [vmem:[%s855 + $0x189] sm:$0xff]
      %v6236 = vld [vmem:[%s855 + $0x191] sm:$0xff]
      %v6237 = vld [vmem:[%s855 + $0x1a9] sm:$0xff]
      %v6238 = vld [vmem:[%s855 + $0x1b1] sm:$0xff]
      %v6239 = vld [vmem:[%s855 + $0x1c9] sm:$0xff]
      %v6240 = vld [vmem:[%s855 + $0x1d1] sm:$0xff]
      %v6241 = vld [vmem:[%s855 + $0x1e9] sm:$0xff]
      %v6242 = vld [vmem:[%s855 + $0x1f1] sm:$0xff]
      %6275 = vrot.lane.b32.xlu0 %v6211, 108
      %v6276 = vpop.permute.xlu0 %6275
      %6277 = vrot.lane.b32.xlu0 %v6212, 108
      %v6278 = vpop.permute.xlu0 %6277
      %6279 = vrot.lane.b32.xlu0 %v6213, 108
      %v6280 = vpop.permute.xlu0 %6279
      %6281 = vrot.lane.b32.xlu0 %v6214, 108
      %v6282 = vpop.permute.xlu0 %6281
      %6283 = vrot.lane.b32.xlu0 %v6215, 108
      %v6284 = vpop.permute.xlu0 %6283
      %6285 = vrot.lane.b32.xlu0 %v6216, 108
      %v6286 = vpop.permute.xlu0 %6285
      %6287 = vrot.lane.b32.xlu0 %v6217, 108
      %v6288 = vpop.permute.xlu0 %6287
      %6289 = vrot.lane.b32.xlu0 %v6218, 108
      %v6290 = vpop.permute.xlu0 %6289
      %6291 = vrot.lane.b32.xlu0 %v6219, 108
      %v6292 = vpop.permute.xlu0 %6291
      %6293 = vrot.lane.b32.xlu0 %v6220, 108
      %v6294 = vpop.permute.xlu0 %6293
      %6295 = vrot.lane.b32.xlu0 %v6221, 108
      %v6296 = vpop.permute.xlu0 %6295
      %6297 = vrot.lane.b32.xlu0 %v6222, 108
      %v6298 = vpop.permute.xlu0 %6297
      %6299 = vrot.lane.b32.xlu0 %v6223, 108
      %v6300 = vpop.permute.xlu0 %6299
      %6301 = vrot.lane.b32.xlu0 %v6224, 108
      %v6302 = vpop.permute.xlu0 %6301
      %6303 = vrot.lane.b32.xlu0 %v6225, 108
      %v6304 = vpop.permute.xlu0 %6303
      %6305 = vrot.lane.b32.xlu0 %v6226, 108
      %v6306 = vpop.permute.xlu0 %6305
      %6307 = vrot.lane.b32.xlu0 %v6227, 108
      %v6308 = vpop.permute.xlu0 %6307
      %6309 = vrot.lane.b32.xlu0 %v6228, 108
      %v6310 = vpop.permute.xlu0 %6309
      %6311 = vrot.lane.b32.xlu0 %v6229, 108
      %v6312 = vpop.permute.xlu0 %6311
      %6313 = vrot.lane.b32.xlu0 %v6230, 108
      %v6314 = vpop.permute.xlu0 %6313
      %6315 = vrot.lane.b32.xlu0 %v6231, 108
      %v6316 = vpop.permute.xlu0 %6315
      %6317 = vrot.lane.b32.xlu0 %v6232, 108
      %v6318 = vpop.permute.xlu0 %6317
      %6319 = vrot.lane.b32.xlu0 %v6233, 108
      %v6320 = vpop.permute.xlu0 %6319
      %6321 = vrot.lane.b32.xlu0 %v6234, 108
      %v6322 = vpop.permute.xlu0 %6321
      %6323 = vrot.lane.b32.xlu0 %v6235, 108
      %v6324 = vpop.permute.xlu0 %6323
      %6325 = vrot.lane.b32.xlu0 %v6236, 108
      %v6326 = vpop.permute.xlu0 %6325
      %6327 = vrot.lane.b32.xlu0 %v6237, 108
      %v6328 = vpop.permute.xlu0 %6327
      %6329 = vrot.lane.b32.xlu0 %v6238, 108
      %v6330 = vpop.permute.xlu0 %6329
      %6331 = vrot.lane.b32.xlu0 %v6239, 108
      %v6332 = vpop.permute.xlu0 %6331
      %6333 = vrot.lane.b32.xlu0 %v6240, 108
      %v6334 = vpop.permute.xlu0 %6333
      %6335 = vrot.lane.b32.xlu0 %v6241, 108
      %v6336 = vpop.permute.xlu0 %6335
      %6337 = vrot.lane.b32.xlu0 %v6242, 108
      %v6338 = vpop.permute.xlu0 %6337
      %v6371 = vadd.f32 %v6179, %v6276
      %v6372 = vadd.f32 %v6180, %v6278
      %v6373 = vadd.f32 %v6181, %v6280
      %v6374 = vadd.f32 %v6182, %v6282
      %v6375 = vadd.f32 %v6183, %v6284
      %v6376 = vadd.f32 %v6184, %v6286
      %v6377 = vadd.f32 %v6185, %v6288
      %v6378 = vadd.f32 %v6186, %v6290
      %v6379 = vadd.f32 %v6187, %v6292
      %v6380 = vadd.f32 %v6188, %v6294
      %v6381 = vadd.f32 %v6189, %v6296
      %v6382 = vadd.f32 %v6190, %v6298
      %v6383 = vadd.f32 %v6191, %v6300
      %v6384 = vadd.f32 %v6192, %v6302
      %v6385 = vadd.f32 %v6193, %v6304
      %v6386 = vadd.f32 %v6194, %v6306
      %v6387 = vadd.f32 %v6195, %v6308
      %v6388 = vadd.f32 %v6196, %v6310
      %v6389 = vadd.f32 %v6197, %v6312
      %v6390 = vadd.f32 %v6198, %v6314
      %v6391 = vadd.f32 %v6199, %v6316
      %v6392 = vadd.f32 %v6200, %v6318
      %v6393 = vadd.f32 %v6201, %v6320
      %v6394 = vadd.f32 %v6202, %v6322
      %v6395 = vadd.f32 %v6203, %v6324
      %v6396 = vadd.f32 %v6204, %v6326
      %v6397 = vadd.f32 %v6205, %v6328
      %v6398 = vadd.f32 %v6206, %v6330
      %v6399 = vadd.f32 %v6207, %v6332
      %v6400 = vadd.f32 %v6208, %v6334
      %v6401 = vadd.f32 %v6209, %v6336
      %v6402 = vadd.f32 %v6210, %v6338
      %v6403 = vld [vmem:[%s1880 + $0x7] sm:$0xff]
      %v6404 = vld [vmem:[%s1880 + $0xf] sm:$0xff]
      %v6405 = vld [vmem:[%s1880 + $0x27] sm:$0xff]
      %v6406 = vld [vmem:[%s1880 + $0x2f] sm:$0xff]
      %v6407 = vld [vmem:[%s1880 + $0x47] sm:$0xff]
      %v6408 = vld [vmem:[%s1880 + $0x4f] sm:$0xff]
      %v6409 = vld [vmem:[%s1880 + $0x67] sm:$0xff]
      %v6410 = vld [vmem:[%s1880 + $0x6f] sm:$0xff]
      %v6411 = vld [vmem:[%s1880 + $0x87] sm:$0xff]
      %v6412 = vld [vmem:[%s1880 + $0x8f] sm:$0xff]
      %v6413 = vld [vmem:[%s1880 + $0xa7] sm:$0xff]
      %v6414 = vld [vmem:[%s1880 + $0xaf] sm:$0xff]
      %v6415 = vld [vmem:[%s1880 + $0xc7] sm:$0xff]
      %v6416 = vld [vmem:[%s1880 + $0xcf] sm:$0xff]
      %v6417 = vld [vmem:[%s1880 + $0xe7] sm:$0xff]
      %v6418 = vld [vmem:[%s1880 + $0xef] sm:$0xff]
      %v6419 = vld [vmem:[%s1880 + $0x107] sm:$0xff]
      %v6420 = vld [vmem:[%s1880 + $0x10f] sm:$0xff]
      %v6421 = vld [vmem:[%s1880 + $0x127] sm:$0xff]
      %v6422 = vld [vmem:[%s1880 + $0x12f] sm:$0xff]
      %v6423 = vld [vmem:[%s1880 + $0x147] sm:$0xff]
      %v6424 = vld [vmem:[%s1880 + $0x14f] sm:$0xff]
      %v6425 = vld [vmem:[%s1880 + $0x167] sm:$0xff]
      %v6426 = vld [vmem:[%s1880 + $0x16f] sm:$0xff]
      %v6427 = vld [vmem:[%s1880 + $0x187] sm:$0xff]
      %v6428 = vld [vmem:[%s1880 + $0x18f] sm:$0xff]
      %v6429 = vld [vmem:[%s1880 + $0x1a7] sm:$0xff]
      %v6430 = vld [vmem:[%s1880 + $0x1af] sm:$0xff]
      %v6431 = vld [vmem:[%s1880 + $0x1c7] sm:$0xff]
      %v6432 = vld [vmem:[%s1880 + $0x1cf] sm:$0xff]
      %v6433 = vld [vmem:[%s1880 + $0x1e7] sm:$0xff]
      %v6434 = vld [vmem:[%s1880 + $0x1ef] sm:$0xff]
      %6467 = vrot.lane.b32.xlu0 %v6403, 104
      %v6468 = vpop.permute.xlu0 %6467
      %6469 = vrot.lane.b32.xlu0 %v6404, 104
      %v6470 = vpop.permute.xlu0 %6469
      %6471 = vrot.lane.b32.xlu0 %v6405, 104
      %v6472 = vpop.permute.xlu0 %6471
      %6473 = vrot.lane.b32.xlu0 %v6406, 104
      %v6474 = vpop.permute.xlu0 %6473
      %6475 = vrot.lane.b32.xlu0 %v6407, 104
      %v6476 = vpop.permute.xlu0 %6475
      %6477 = vrot.lane.b32.xlu0 %v6408, 104
      %v6478 = vpop.permute.xlu0 %6477
      %6479 = vrot.lane.b32.xlu0 %v6409, 104
      %v6480 = vpop.permute.xlu0 %6479
      %6481 = vrot.lane.b32.xlu0 %v6410, 104
      %v6482 = vpop.permute.xlu0 %6481
      %6483 = vrot.lane.b32.xlu0 %v6411, 104
      %v6484 = vpop.permute.xlu0 %6483
      %6485 = vrot.lane.b32.xlu0 %v6412, 104
      %v6486 = vpop.permute.xlu0 %6485
      %6487 = vrot.lane.b32.xlu0 %v6413, 104
      %v6488 = vpop.permute.xlu0 %6487
      %6489 = vrot.lane.b32.xlu0 %v6414, 104
      %v6490 = vpop.permute.xlu0 %6489
      %6491 = vrot.lane.b32.xlu0 %v6415, 104
      %v6492 = vpop.permute.xlu0 %6491
      %6493 = vrot.lane.b32.xlu0 %v6416, 104
      %v6494 = vpop.permute.xlu0 %6493
      %6495 = vrot.lane.b32.xlu0 %v6417, 104
      %v6496 = vpop.permute.xlu0 %6495
      %6497 = vrot.lane.b32.xlu0 %v6418, 104
      %v6498 = vpop.permute.xlu0 %6497
      %6499 = vrot.lane.b32.xlu0 %v6419, 104
      %v6500 = vpop.permute.xlu0 %6499
      %6501 = vrot.lane.b32.xlu0 %v6420, 104
      %v6502 = vpop.permute.xlu0 %6501
      %6503 = vrot.lane.b32.xlu0 %v6421, 104
      %v6504 = vpop.permute.xlu0 %6503
      %6505 = vrot.lane.b32.xlu0 %v6422, 104
      %v6506 = vpop.permute.xlu0 %6505
      %6507 = vrot.lane.b32.xlu0 %v6423, 104
      %v6508 = vpop.permute.xlu0 %6507
      %6509 = vrot.lane.b32.xlu0 %v6424, 104
      %v6510 = vpop.permute.xlu0 %6509
      %6511 = vrot.lane.b32.xlu0 %v6425, 104
      %v6512 = vpop.permute.xlu0 %6511
      %6513 = vrot.lane.b32.xlu0 %v6426, 104
      %v6514 = vpop.permute.xlu0 %6513
      %6515 = vrot.lane.b32.xlu0 %v6427, 104
      %v6516 = vpop.permute.xlu0 %6515
      %6517 = vrot.lane.b32.xlu0 %v6428, 104
      %v6518 = vpop.permute.xlu0 %6517
      %6519 = vrot.lane.b32.xlu0 %v6429, 104
      %v6520 = vpop.permute.xlu0 %6519
      %6521 = vrot.lane.b32.xlu0 %v6430, 104
      %v6522 = vpop.permute.xlu0 %6521
      %6523 = vrot.lane.b32.xlu0 %v6431, 104
      %v6524 = vpop.permute.xlu0 %6523
      %6525 = vrot.lane.b32.xlu0 %v6432, 104
      %v6526 = vpop.permute.xlu0 %6525
      %6527 = vrot.lane.b32.xlu0 %v6433, 104
      %v6528 = vpop.permute.xlu0 %6527
      %6529 = vrot.lane.b32.xlu0 %v6434, 104
      %v6530 = vpop.permute.xlu0 %6529
      %v6563 = vadd.f32 %v6371, %v6468
      %v6564 = vadd.f32 %v6372, %v6470
      %v6565 = vadd.f32 %v6373, %v6472
      %v6566 = vadd.f32 %v6374, %v6474
      %v6567 = vadd.f32 %v6375, %v6476
      %v6568 = vadd.f32 %v6376, %v6478
      %v6569 = vadd.f32 %v6377, %v6480
      %v6570 = vadd.f32 %v6378, %v6482
      %v6571 = vadd.f32 %v6379, %v6484
      %v6572 = vadd.f32 %v6380, %v6486
      %v6573 = vadd.f32 %v6381, %v6488
      %v6574 = vadd.f32 %v6382, %v6490
      %v6575 = vadd.f32 %v6383, %v6492
      %v6576 = vadd.f32 %v6384, %v6494
      %v6577 = vadd.f32 %v6385, %v6496
      %v6578 = vadd.f32 %v6386, %v6498
      %v6579 = vadd.f32 %v6387, %v6500
      %v6580 = vadd.f32 %v6388, %v6502
      %v6581 = vadd.f32 %v6389, %v6504
      %v6582 = vadd.f32 %v6390, %v6506
      %v6583 = vadd.f32 %v6391, %v6508
      %v6584 = vadd.f32 %v6392, %v6510
      %v6585 = vadd.f32 %v6393, %v6512
      %v6586 = vadd.f32 %v6394, %v6514
      %v6587 = vadd.f32 %v6395, %v6516
      %v6588 = vadd.f32 %v6396, %v6518
      %v6589 = vadd.f32 %v6397, %v6520
      %v6590 = vadd.f32 %v6398, %v6522
      %v6591 = vadd.f32 %v6399, %v6524
      %v6592 = vadd.f32 %v6400, %v6526
      %v6593 = vadd.f32 %v6401, %v6528
      %v6594 = vadd.f32 %v6402, %v6530
      %v6595 = vld [vmem:[%s1880 + $0x8] sm:$0xff]
      %v6596 = vld [vmem:[%s1880 + $0x10] sm:$0xff]
      %v6597 = vld [vmem:[%s1880 + $0x28] sm:$0xff]
      %v6598 = vld [vmem:[%s1880 + $0x30] sm:$0xff]
      %v6599 = vld [vmem:[%s1880 + $0x48] sm:$0xff]
      %v6600 = vld [vmem:[%s1880 + $0x50] sm:$0xff]
      %v6601 = vld [vmem:[%s1880 + $0x68] sm:$0xff]
      %v6602 = vld [vmem:[%s1880 + $0x70] sm:$0xff]
      %v6603 = vld [vmem:[%s1880 + $0x88] sm:$0xff]
      %v6604 = vld [vmem:[%s1880 + $0x90] sm:$0xff]
      %v6605 = vld [vmem:[%s1880 + $0xa8] sm:$0xff]
      %v6606 = vld [vmem:[%s1880 + $0xb0] sm:$0xff]
      %v6607 = vld [vmem:[%s1880 + $0xc8] sm:$0xff]
      %v6608 = vld [vmem:[%s1880 + $0xd0] sm:$0xff]
      %v6609 = vld [vmem:[%s1880 + $0xe8] sm:$0xff]
      %v6610 = vld [vmem:[%s1880 + $0xf0] sm:$0xff]
      %v6611 = vld [vmem:[%s1880 + $0x108] sm:$0xff]
      %v6612 = vld [vmem:[%s1880 + $0x110] sm:$0xff]
      %v6613 = vld [vmem:[%s1880 + $0x128] sm:$0xff]
      %v6614 = vld [vmem:[%s1880 + $0x130] sm:$0xff]
      %v6615 = vld [vmem:[%s1880 + $0x148] sm:$0xff]
      %v6616 = vld [vmem:[%s1880 + $0x150] sm:$0xff]
      %v6617 = vld [vmem:[%s1880 + $0x168] sm:$0xff]
      %v6618 = vld [vmem:[%s1880 + $0x170] sm:$0xff]
      %v6619 = vld [vmem:[%s1880 + $0x188] sm:$0xff]
      %v6620 = vld [vmem:[%s1880 + $0x190] sm:$0xff]
      %v6621 = vld [vmem:[%s1880 + $0x1a8] sm:$0xff]
      %v6622 = vld [vmem:[%s1880 + $0x1b0] sm:$0xff]
      %v6623 = vld [vmem:[%s1880 + $0x1c8] sm:$0xff]
      %v6624 = vld [vmem:[%s1880 + $0x1d0] sm:$0xff]
      %v6625 = vld [vmem:[%s1880 + $0x1e8] sm:$0xff]
      %v6626 = vld [vmem:[%s1880 + $0x1f0] sm:$0xff]
      %6659 = vrot.lane.b32.xlu0 %v6595, 100
      %v6660 = vpop.permute.xlu0 %6659
      %6661 = vrot.lane.b32.xlu0 %v6596, 100
      %v6662 = vpop.permute.xlu0 %6661
      %6663 = vrot.lane.b32.xlu0 %v6597, 100
      %v6664 = vpop.permute.xlu0 %6663
      %6665 = vrot.lane.b32.xlu0 %v6598, 100
      %v6666 = vpop.permute.xlu0 %6665
      %6667 = vrot.lane.b32.xlu0 %v6599, 100
      %v6668 = vpop.permute.xlu0 %6667
      %6669 = vrot.lane.b32.xlu0 %v6600, 100
      %v6670 = vpop.permute.xlu0 %6669
      %6671 = vrot.lane.b32.xlu0 %v6601, 100
      %v6672 = vpop.permute.xlu0 %6671
      %6673 = vrot.lane.b32.xlu0 %v6602, 100
      %v6674 = vpop.permute.xlu0 %6673
      %6675 = vrot.lane.b32.xlu0 %v6603, 100
      %v6676 = vpop.permute.xlu0 %6675
      %6677 = vrot.lane.b32.xlu0 %v6604, 100
      %v6678 = vpop.permute.xlu0 %6677
      %6679 = vrot.lane.b32.xlu0 %v6605, 100
      %v6680 = vpop.permute.xlu0 %6679
      %6681 = vrot.lane.b32.xlu0 %v6606, 100
      %v6682 = vpop.permute.xlu0 %6681
      %6683 = vrot.lane.b32.xlu0 %v6607, 100
      %v6684 = vpop.permute.xlu0 %6683
      %6685 = vrot.lane.b32.xlu0 %v6608, 100
      %v6686 = vpop.permute.xlu0 %6685
      %6687 = vrot.lane.b32.xlu0 %v6609, 100
      %v6688 = vpop.permute.xlu0 %6687
      %6689 = vrot.lane.b32.xlu0 %v6610, 100
      %v6690 = vpop.permute.xlu0 %6689
      %6691 = vrot.lane.b32.xlu0 %v6611, 100
      %v6692 = vpop.permute.xlu0 %6691
      %6693 = vrot.lane.b32.xlu0 %v6612, 100
      %v6694 = vpop.permute.xlu0 %6693
      %6695 = vrot.lane.b32.xlu0 %v6613, 100
      %v6696 = vpop.permute.xlu0 %6695
      %6697 = vrot.lane.b32.xlu0 %v6614, 100
      %v6698 = vpop.permute.xlu0 %6697
      %6699 = vrot.lane.b32.xlu0 %v6615, 100
      %v6700 = vpop.permute.xlu0 %6699
      %6701 = vrot.lane.b32.xlu0 %v6616, 100
      %v6702 = vpop.permute.xlu0 %6701
      %6703 = vrot.lane.b32.xlu0 %v6617, 100
      %v6704 = vpop.permute.xlu0 %6703
      %6705 = vrot.lane.b32.xlu0 %v6618, 100
      %v6706 = vpop.permute.xlu0 %6705
      %6707 = vrot.lane.b32.xlu0 %v6619, 100
      %v6708 = vpop.permute.xlu0 %6707
      %6709 = vrot.lane.b32.xlu0 %v6620, 100
      %v6710 = vpop.permute.xlu0 %6709
      %6711 = vrot.lane.b32.xlu0 %v6621, 100
      %v6712 = vpop.permute.xlu0 %6711
      %6713 = vrot.lane.b32.xlu0 %v6622, 100
      %v6714 = vpop.permute.xlu0 %6713
      %6715 = vrot.lane.b32.xlu0 %v6623, 100
      %v6716 = vpop.permute.xlu0 %6715
      %6717 = vrot.lane.b32.xlu0 %v6624, 100
      %v6718 = vpop.permute.xlu0 %6717
      %6719 = vrot.lane.b32.xlu0 %v6625, 100
      %v6720 = vpop.permute.xlu0 %6719
      %6721 = vrot.lane.b32.xlu0 %v6626, 100
      %v6722 = vpop.permute.xlu0 %6721
      %v6755 = vadd.f32 %v6563, %v6660
      %v6756 = vadd.f32 %v6564, %v6662
      %v6757 = vadd.f32 %v6565, %v6664
      %v6758 = vadd.f32 %v6566, %v6666
      %v6759 = vadd.f32 %v6567, %v6668
      %v6760 = vadd.f32 %v6568, %v6670
      %v6761 = vadd.f32 %v6569, %v6672
      %v6762 = vadd.f32 %v6570, %v6674
      %v6763 = vadd.f32 %v6571, %v6676
      %v6764 = vadd.f32 %v6572, %v6678
      %v6765 = vadd.f32 %v6573, %v6680
      %v6766 = vadd.f32 %v6574, %v6682
      %v6767 = vadd.f32 %v6575, %v6684
      %v6768 = vadd.f32 %v6576, %v6686
      %v6769 = vadd.f32 %v6577, %v6688
      %v6770 = vadd.f32 %v6578, %v6690
      %v6771 = vadd.f32 %v6579, %v6692
      %v6772 = vadd.f32 %v6580, %v6694
      %v6773 = vadd.f32 %v6581, %v6696
      %v6774 = vadd.f32 %v6582, %v6698
      %v6775 = vadd.f32 %v6583, %v6700
      %v6776 = vadd.f32 %v6584, %v6702
      %v6777 = vadd.f32 %v6585, %v6704
      %v6778 = vadd.f32 %v6586, %v6706
      %v6779 = vadd.f32 %v6587, %v6708
      %v6780 = vadd.f32 %v6588, %v6710
      %v6781 = vadd.f32 %v6589, %v6712
      %v6782 = vadd.f32 %v6590, %v6714
      %v6783 = vadd.f32 %v6591, %v6716
      %v6784 = vadd.f32 %v6592, %v6718
      %v6785 = vadd.f32 %v6593, %v6720
      %v6786 = vadd.f32 %v6594, %v6722
      %v6787 = vld [vmem:[%s1880 + $0x9] sm:$0xff]
      %v6788 = vld [vmem:[%s1880 + $0x11] sm:$0xff]
      %v6789 = vld [vmem:[%s1880 + $0x29] sm:$0xff]
      %v6790 = vld [vmem:[%s1880 + $0x31] sm:$0xff]
      %v6791 = vld [vmem:[%s1880 + $0x49] sm:$0xff]
      %v6792 = vld [vmem:[%s1880 + $0x51] sm:$0xff]
      %v6793 = vld [vmem:[%s1880 + $0x69] sm:$0xff]
      %v6794 = vld [vmem:[%s1880 + $0x71] sm:$0xff]
      %v6795 = vld [vmem:[%s1880 + $0x89] sm:$0xff]
      %v6796 = vld [vmem:[%s1880 + $0x91] sm:$0xff]
      %v6797 = vld [vmem:[%s1880 + $0xa9] sm:$0xff]
      %v6798 = vld [vmem:[%s1880 + $0xb1] sm:$0xff]
      %v6799 = vld [vmem:[%s1880 + $0xc9] sm:$0xff]
      %v6800 = vld [vmem:[%s1880 + $0xd1] sm:$0xff]
      %v6801 = vld [vmem:[%s1880 + $0xe9] sm:$0xff]
      %v6802 = vld [vmem:[%s1880 + $0xf1] sm:$0xff]
      %v6803 = vld [vmem:[%s1880 + $0x109] sm:$0xff]
      %v6804 = vld [vmem:[%s1880 + $0x111] sm:$0xff]
      %v6805 = vld [vmem:[%s1880 + $0x129] sm:$0xff]
      %v6806 = vld [vmem:[%s1880 + $0x131] sm:$0xff]
      %v6807 = vld [vmem:[%s1880 + $0x149] sm:$0xff]
      %v6808 = vld [vmem:[%s1880 + $0x151] sm:$0xff]
      %v6809 = vld [vmem:[%s1880 + $0x169] sm:$0xff]
      %v6810 = vld [vmem:[%s1880 + $0x171] sm:$0xff]
      %v6811 = vld [vmem:[%s1880 + $0x189] sm:$0xff]
      %v6812 = vld [vmem:[%s1880 + $0x191] sm:$0xff]
      %v6813 = vld [vmem:[%s1880 + $0x1a9] sm:$0xff]
      %v6814 = vld [vmem:[%s1880 + $0x1b1] sm:$0xff]
      %v6815 = vld [vmem:[%s1880 + $0x1c9] sm:$0xff]
      %v6816 = vld [vmem:[%s1880 + $0x1d1] sm:$0xff]
      %v6817 = vld [vmem:[%s1880 + $0x1e9] sm:$0xff]
      %v6818 = vld [vmem:[%s1880 + $0x1f1] sm:$0xff]
      %6851 = vrot.lane.b32.xlu0 %v6787, 96
      %v6852 = vpop.permute.xlu0 %6851
      %6853 = vrot.lane.b32.xlu0 %v6788, 96
      %v6854 = vpop.permute.xlu0 %6853
      %6855 = vrot.lane.b32.xlu0 %v6789, 96
      %v6856 = vpop.permute.xlu0 %6855
      %6857 = vrot.lane.b32.xlu0 %v6790, 96
      %v6858 = vpop.permute.xlu0 %6857
      %6859 = vrot.lane.b32.xlu0 %v6791, 96
      %v6860 = vpop.permute.xlu0 %6859
      %6861 = vrot.lane.b32.xlu0 %v6792, 96
      %v6862 = vpop.permute.xlu0 %6861
      %6863 = vrot.lane.b32.xlu0 %v6793, 96
      %v6864 = vpop.permute.xlu0 %6863
      %6865 = vrot.lane.b32.xlu0 %v6794, 96
      %v6866 = vpop.permute.xlu0 %6865
      %6867 = vrot.lane.b32.xlu0 %v6795, 96
      %v6868 = vpop.permute.xlu0 %6867
      %6869 = vrot.lane.b32.xlu0 %v6796, 96
      %v6870 = vpop.permute.xlu0 %6869
      %6871 = vrot.lane.b32.xlu0 %v6797, 96
      %v6872 = vpop.permute.xlu0 %6871
      %6873 = vrot.lane.b32.xlu0 %v6798, 96
      %v6874 = vpop.permute.xlu0 %6873
      %6875 = vrot.lane.b32.xlu0 %v6799, 96
      %v6876 = vpop.permute.xlu0 %6875
      %6877 = vrot.lane.b32.xlu0 %v6800, 96
      %v6878 = vpop.permute.xlu0 %6877
      %6879 = vrot.lane.b32.xlu0 %v6801, 96
      %v6880 = vpop.permute.xlu0 %6879
      %6881 = vrot.lane.b32.xlu0 %v6802, 96
      %v6882 = vpop.permute.xlu0 %6881
      %6883 = vrot.lane.b32.xlu0 %v6803, 96
      %v6884 = vpop.permute.xlu0 %6883
      %6885 = vrot.lane.b32.xlu0 %v6804, 96
      %v6886 = vpop.permute.xlu0 %6885
      %6887 = vrot.lane.b32.xlu0 %v6805, 96
      %v6888 = vpop.permute.xlu0 %6887
      %6889 = vrot.lane.b32.xlu0 %v6806, 96
      %v6890 = vpop.permute.xlu0 %6889
      %6891 = vrot.lane.b32.xlu0 %v6807, 96
      %v6892 = vpop.permute.xlu0 %6891
      %6893 = vrot.lane.b32.xlu0 %v6808, 96
      %v6894 = vpop.permute.xlu0 %6893
      %6895 = vrot.lane.b32.xlu0 %v6809, 96
      %v6896 = vpop.permute.xlu0 %6895
      %6897 = vrot.lane.b32.xlu0 %v6810, 96
      %v6898 = vpop.permute.xlu0 %6897
      %6899 = vrot.lane.b32.xlu0 %v6811, 96
      %v6900 = vpop.permute.xlu0 %6899
      %6901 = vrot.lane.b32.xlu0 %v6812, 96
      %v6902 = vpop.permute.xlu0 %6901
      %6903 = vrot.lane.b32.xlu0 %v6813, 96
      %v6904 = vpop.permute.xlu0 %6903
      %6905 = vrot.lane.b32.xlu0 %v6814, 96
      %v6906 = vpop.permute.xlu0 %6905
      %6907 = vrot.lane.b32.xlu0 %v6815, 96
      %v6908 = vpop.permute.xlu0 %6907
      %6909 = vrot.lane.b32.xlu0 %v6816, 96
      %v6910 = vpop.permute.xlu0 %6909
      %6911 = vrot.lane.b32.xlu0 %v6817, 96
      %v6912 = vpop.permute.xlu0 %6911
      %6913 = vrot.lane.b32.xlu0 %v6818, 96
      %v6914 = vpop.permute.xlu0 %6913
      %v6947 = vadd.f32 %v6755, %v6852
      %v6948 = vadd.f32 %v6756, %v6854
      %v6949 = vadd.f32 %v6757, %v6856
      %v6950 = vadd.f32 %v6758, %v6858
      %v6951 = vadd.f32 %v6759, %v6860
      %v6952 = vadd.f32 %v6760, %v6862
      %v6953 = vadd.f32 %v6761, %v6864
      %v6954 = vadd.f32 %v6762, %v6866
      %v6955 = vadd.f32 %v6763, %v6868
      %v6956 = vadd.f32 %v6764, %v6870
      %v6957 = vadd.f32 %v6765, %v6872
      %v6958 = vadd.f32 %v6766, %v6874
      %v6959 = vadd.f32 %v6767, %v6876
      %v6960 = vadd.f32 %v6768, %v6878
      %v6961 = vadd.f32 %v6769, %v6880
      %v6962 = vadd.f32 %v6770, %v6882
      %v6963 = vadd.f32 %v6771, %v6884
      %v6964 = vadd.f32 %v6772, %v6886
      %v6965 = vadd.f32 %v6773, %v6888
      %v6966 = vadd.f32 %v6774, %v6890
      %v6967 = vadd.f32 %v6775, %v6892
      %v6968 = vadd.f32 %v6776, %v6894
      %v6969 = vadd.f32 %v6777, %v6896
      %v6970 = vadd.f32 %v6778, %v6898
      %v6971 = vadd.f32 %v6779, %v6900
      %v6972 = vadd.f32 %v6780, %v6902
      %v6973 = vadd.f32 %v6781, %v6904
      %v6974 = vadd.f32 %v6782, %v6906
      %v6975 = vadd.f32 %v6783, %v6908
      %v6976 = vadd.f32 %v6784, %v6910
      %v6977 = vadd.f32 %v6785, %v6912
      %v6978 = vadd.f32 %v6786, %v6914
      %v6979 = vlaneseq
      %v6980 = vshrl.u32 %v6979, 7
      %v6981 = vsub.s32 0, %v6980
      %v6982 = vrot.slane %v4915, %v6981
      %v6983 = vadd.f32 %v6947, %v6982
      %v6984 = vadd.f32 %v6948, %v6982
      %v6985 = vadd.f32 %v6949, %v6982
      %v6986 = vadd.f32 %v6950, %v6982
      %v6987 = vadd.f32 %v6951, %v6982
      %v6988 = vadd.f32 %v6952, %v6982
      %v6989 = vadd.f32 %v6953, %v6982
      %v6990 = vadd.f32 %v6954, %v6982
      %v6991 = vadd.f32 %v6955, %v6982
      %v6992 = vadd.f32 %v6956, %v6982
      %v6993 = vadd.f32 %v6957, %v6982
      %v6994 = vadd.f32 %v6958, %v6982
      %v6995 = vadd.f32 %v6959, %v6982
      %v6996 = vadd.f32 %v6960, %v6982
      %v6997 = vadd.f32 %v6961, %v6982
      %v6998 = vadd.f32 %v6962, %v6982
      %v6999 = vadd.f32 %v6963, %v6982
      %v7000 = vadd.f32 %v6964, %v6982
      %v7001 = vadd.f32 %v6965, %v6982
      %v7002 = vadd.f32 %v6966, %v6982
      %v7003 = vadd.f32 %v6967, %v6982
      %v7004 = vadd.f32 %v6968, %v6982
      %v7005 = vadd.f32 %v6969, %v6982
      %v7006 = vadd.f32 %v6970, %v6982
      %v7007 = vadd.f32 %v6971, %v6982
      %v7008 = vadd.f32 %v6972, %v6982
      %v7009 = vadd.f32 %v6973, %v6982
      %v7010 = vadd.f32 %v6974, %v6982
      %v7011 = vadd.f32 %v6975, %v6982
      %v7012 = vadd.f32 %v6976, %v6982
      %v7013 = vadd.f32 %v6977, %v6982
      %v7014 = vadd.f32 %v6978, %v6982
      %7047 = vrot.lane.b32.xlu0 %v6983, 12
      %v7048 = vpop.permute.xlu0 %7047
      %7049 = vrot.lane.b32.xlu0 %v6984, 12
      %v7050 = vpop.permute.xlu0 %7049
      %7051 = vrot.lane.b32.xlu0 %v6985, 12
      %v7052 = vpop.permute.xlu0 %7051
      %7053 = vrot.lane.b32.xlu0 %v6986, 12
      %v7054 = vpop.permute.xlu0 %7053
      %7055 = vrot.lane.b32.xlu0 %v6987, 12
      %v7056 = vpop.permute.xlu0 %7055
      %7057 = vrot.lane.b32.xlu0 %v6988, 12
      %v7058 = vpop.permute.xlu0 %7057
      %7059 = vrot.lane.b32.xlu0 %v6989, 12
      %v7060 = vpop.permute.xlu0 %7059
      %7061 = vrot.lane.b32.xlu0 %v6990, 12
      %v7062 = vpop.permute.xlu0 %7061
      %7063 = vrot.lane.b32.xlu0 %v6991, 12
      %v7064 = vpop.permute.xlu0 %7063
      %7065 = vrot.lane.b32.xlu0 %v6992, 12
      %v7066 = vpop.permute.xlu0 %7065
      %7067 = vrot.lane.b32.xlu0 %v6993, 12
      %v7068 = vpop.permute.xlu0 %7067
      %7069 = vrot.lane.b32.xlu0 %v6994, 12
      %v7070 = vpop.permute.xlu0 %7069
      %7071 = vrot.lane.b32.xlu0 %v6995, 12
      %v7072 = vpop.permute.xlu0 %7071
      %7073 = vrot.lane.b32.xlu0 %v6996, 12
      %v7074 = vpop.permute.xlu0 %7073
      %7075 = vrot.lane.b32.xlu0 %v6997, 12
      %v7076 = vpop.permute.xlu0 %7075
      %7077 = vrot.lane.b32.xlu0 %v6998, 12
      %v7078 = vpop.permute.xlu0 %7077
      %7079 = vrot.lane.b32.xlu0 %v6999, 12
      %v7080 = vpop.permute.xlu0 %7079
      %7081 = vrot.lane.b32.xlu0 %v7000, 12
      %v7082 = vpop.permute.xlu0 %7081
      %7083 = vrot.lane.b32.xlu0 %v7001, 12
      %v7084 = vpop.permute.xlu0 %7083
      %7085 = vrot.lane.b32.xlu0 %v7002, 12
      %v7086 = vpop.permute.xlu0 %7085
      %7087 = vrot.lane.b32.xlu0 %v7003, 12
      %v7088 = vpop.permute.xlu0 %7087
      %7089 = vrot.lane.b32.xlu0 %v7004, 12
      %v7090 = vpop.permute.xlu0 %7089
      %7091 = vrot.lane.b32.xlu0 %v7005, 12
      %v7092 = vpop.permute.xlu0 %7091
      %7093 = vrot.lane.b32.xlu0 %v7006, 12
      %v7094 = vpop.permute.xlu0 %7093
      %7095 = vrot.lane.b32.xlu0 %v7007, 12
      %v7096 = vpop.permute.xlu0 %7095
      %7097 = vrot.lane.b32.xlu0 %v7008, 12
      %v7098 = vpop.permute.xlu0 %7097
      %7099 = vrot.lane.b32.xlu0 %v7009, 12
      %v7100 = vpop.permute.xlu0 %7099
      %7101 = vrot.lane.b32.xlu0 %v7010, 12
      %v7102 = vpop.permute.xlu0 %7101
      %7103 = vrot.lane.b32.xlu0 %v7011, 12
      %v7104 = vpop.permute.xlu0 %7103
      %7105 = vrot.lane.b32.xlu0 %v7012, 12
      %v7106 = vpop.permute.xlu0 %7105
      %7107 = vrot.lane.b32.xlu0 %v7013, 12
      %v7108 = vpop.permute.xlu0 %7107
      %7109 = vrot.lane.b32.xlu0 %v7014, 12
      %v7110 = vpop.permute.xlu0 %7109
      %vm7143 = vcmask 130144
      %7144 = vst.msk [vmem:[#allocation2] sm:$0xff] %vm7143, %v7048
      %7145 = vst.msk [vmem:[#allocation2 + $0x8] sm:$0xff] %vm7143, %v7050
      %7146 = vst.msk [vmem:[#allocation2 + $0x10] sm:$0xff] %vm7143, %v7052
      %7147 = vst.msk [vmem:[#allocation2 + $0x18] sm:$0xff] %vm7143, %v7054
      %7148 = vst.msk [vmem:[#allocation2 + $0x20] sm:$0xff] %vm7143, %v7056
      %7149 = vst.msk [vmem:[#allocation2 + $0x28] sm:$0xff] %vm7143, %v7058
      %7150 = vst.msk [vmem:[#allocation2 + $0x30] sm:$0xff] %vm7143, %v7060
      %7151 = vst.msk [vmem:[#allocation2 + $0x38] sm:$0xff] %vm7143, %v7062
      %7152 = vst.msk [vmem:[#allocation2 + $0x40] sm:$0xff] %vm7143, %v7064
      %7153 = vst.msk [vmem:[#allocation2 + $0x48] sm:$0xff] %vm7143, %v7066
      %7154 = vst.msk [vmem:[#allocation2 + $0x50] sm:$0xff] %vm7143, %v7068
      %7155 = vst.msk [vmem:[#allocation2 + $0x58] sm:$0xff] %vm7143, %v7070
      %7156 = vst.msk [vmem:[#allocation2 + $0x60] sm:$0xff] %vm7143, %v7072
      %7157 = vst.msk [vmem:[#allocation2 + $0x68] sm:$0xff] %vm7143, %v7074
      %7158 = vst.msk [vmem:[#allocation2 + $0x70] sm:$0xff] %vm7143, %v7076
      %7159 = vst.msk [vmem:[#allocation2 + $0x78] sm:$0xff] %vm7143, %v7078
      %7160 = vst.msk [vmem:[#allocation2 + $0x80] sm:$0xff] %vm7143, %v7080
      %7161 = vst.msk [vmem:[#allocation2 + $0x88] sm:$0xff] %vm7143, %v7082
      %7162 = vst.msk [vmem:[#allocation2 + $0x90] sm:$0xff] %vm7143, %v7084
      %7163 = vst.msk [vmem:[#allocation2 + $0x98] sm:$0xff] %vm7143, %v7086
      %7164 = vst.msk [vmem:[#allocation2 + $0xa0] sm:$0xff] %vm7143, %v7088
      %7165 = vst.msk [vmem:[#allocation2 + $0xa8] sm:$0xff] %vm7143, %v7090
      %7166 = vst.msk [vmem:[#allocation2 + $0xb0] sm:$0xff] %vm7143, %v7092
      %7167 = vst.msk [vmem:[#allocation2 + $0xb8] sm:$0xff] %vm7143, %v7094
      %7168 = vst.msk [vmem:[#allocation2 + $0xc0] sm:$0xff] %vm7143, %v7096
      %7169 = vst.msk [vmem:[#allocation2 + $0xc8] sm:$0xff] %vm7143, %v7098
      %7170 = vst.msk [vmem:[#allocation2 + $0xd0] sm:$0xff] %vm7143, %v7100
      %7171 = vst.msk [vmem:[#allocation2 + $0xd8] sm:$0xff] %vm7143, %v7102
      %7172 = vst.msk [vmem:[#allocation2 + $0xe0] sm:$0xff] %vm7143, %v7104
      %7173 = vst.msk [vmem:[#allocation2 + $0xe8] sm:$0xff] %vm7143, %v7106
      %7174 = vst.msk [vmem:[#allocation2 + $0xf0] sm:$0xff] %vm7143, %v7108
      %7175 = vst.msk [vmem:[#allocation2 + $0xf8] sm:$0xff] %vm7143, %v7110
      %v7176 = vld [vmem:[#allocation2] sm:$0xff]
      %v7177 = vld [vmem:[#allocation2 + $0x8] sm:$0xff]
      %v7178 = vld [vmem:[#allocation2 + $0x10] sm:$0xff]
      %v7179 = vld [vmem:[#allocation2 + $0x18] sm:$0xff]
      %v7180 = vld [vmem:[#allocation2 + $0x20] sm:$0xff]
      %v7181 = vld [vmem:[#allocation2 + $0x28] sm:$0xff]
      %v7182 = vld [vmem:[#allocation2 + $0x30] sm:$0xff]
      %v7183 = vld [vmem:[#allocation2 + $0x38] sm:$0xff]
      %v7184 = vld [vmem:[#allocation2 + $0x40] sm:$0xff]
      %v7185 = vld [vmem:[#allocation2 + $0x48] sm:$0xff]
      %v7186 = vld [vmem:[#allocation2 + $0x50] sm:$0xff]
      %v7187 = vld [vmem:[#allocation2 + $0x58] sm:$0xff]
      %v7188 = vld [vmem:[#allocation2 + $0x60] sm:$0xff]
      %v7189 = vld [vmem:[#allocation2 + $0x68] sm:$0xff]
      %v7190 = vld [vmem:[#allocation2 + $0x70] sm:$0xff]
      %v7191 = vld [vmem:[#allocation2 + $0x78] sm:$0xff]
      %v7192 = vld [vmem:[#allocation2 + $0x80] sm:$0xff]
      %v7193 = vld [vmem:[#allocation2 + $0x88] sm:$0xff]
      %v7194 = vld [vmem:[#allocation2 + $0x90] sm:$0xff]
      %v7195 = vld [vmem:[#allocation2 + $0x98] sm:$0xff]
      %v7196 = vld [vmem:[#allocation2 + $0xa0] sm:$0xff]
      %v7197 = vld [vmem:[#allocation2 + $0xa8] sm:$0xff]
      %v7198 = vld [vmem:[#allocation2 + $0xb0] sm:$0xff]
      %v7199 = vld [vmem:[#allocation2 + $0xb8] sm:$0xff]
      %v7200 = vld [vmem:[#allocation2 + $0xc0] sm:$0xff]
      %v7201 = vld [vmem:[#allocation2 + $0xc8] sm:$0xff]
      %v7202 = vld [vmem:[#allocation2 + $0xd0] sm:$0xff]
      %v7203 = vld [vmem:[#allocation2 + $0xd8] sm:$0xff]
      %v7204 = vld [vmem:[#allocation2 + $0xe0] sm:$0xff]
      %v7205 = vld [vmem:[#allocation2 + $0xe8] sm:$0xff]
      %v7206 = vld [vmem:[#allocation2 + $0xf0] sm:$0xff]
      %v7207 = vld [vmem:[#allocation2 + $0xf8] sm:$0xff]
      %7240 = vrot.lane.b32.xlu0 %v7176, 124
      %v7241 = vpop.permute.xlu0 %7240
      %7242 = vrot.lane.b32.xlu0 %v7177, 124
      %v7243 = vpop.permute.xlu0 %7242
      %7244 = vrot.lane.b32.xlu0 %v7178, 124
      %v7245 = vpop.permute.xlu0 %7244
      %7246 = vrot.lane.b32.xlu0 %v7179, 124
      %v7247 = vpop.permute.xlu0 %7246
      %7248 = vrot.lane.b32.xlu0 %v7180, 124
      %v7249 = vpop.permute.xlu0 %7248
      %7250 = vrot.lane.b32.xlu0 %v7181, 124
      %v7251 = vpop.permute.xlu0 %7250
      %7252 = vrot.lane.b32.xlu0 %v7182, 124
      %v7253 = vpop.permute.xlu0 %7252
      %7254 = vrot.lane.b32.xlu0 %v7183, 124
      %v7255 = vpop.permute.xlu0 %7254
      %7256 = vrot.lane.b32.xlu0 %v7184, 124
      %v7257 = vpop.permute.xlu0 %7256
      %7258 = vrot.lane.b32.xlu0 %v7185, 124
      %v7259 = vpop.permute.xlu0 %7258
      %7260 = vrot.lane.b32.xlu0 %v7186, 124
      %v7261 = vpop.permute.xlu0 %7260
      %7262 = vrot.lane.b32.xlu0 %v7187, 124
      %v7263 = vpop.permute.xlu0 %7262
      %7264 = vrot.lane.b32.xlu0 %v7188, 124
      %v7265 = vpop.permute.xlu0 %7264
      %7266 = vrot.lane.b32.xlu0 %v7189, 124
      %v7267 = vpop.permute.xlu0 %7266
      %7268 = vrot.lane.b32.xlu0 %v7190, 124
      %v7269 = vpop.permute.xlu0 %7268
      %7270 = vrot.lane.b32.xlu0 %v7191, 124
      %v7271 = vpop.permute.xlu0 %7270
      %7272 = vrot.lane.b32.xlu0 %v7192, 124
      %v7273 = vpop.permute.xlu0 %7272
      %7274 = vrot.lane.b32.xlu0 %v7193, 124
      %v7275 = vpop.permute.xlu0 %7274
      %7276 = vrot.lane.b32.xlu0 %v7194, 124
      %v7277 = vpop.permute.xlu0 %7276
      %7278 = vrot.lane.b32.xlu0 %v7195, 124
      %v7279 = vpop.permute.xlu0 %7278
      %7280 = vrot.lane.b32.xlu0 %v7196, 124
      %v7281 = vpop.permute.xlu0 %7280
      %7282 = vrot.lane.b32.xlu0 %v7197, 124
      %v7283 = vpop.permute.xlu0 %7282
      %7284 = vrot.lane.b32.xlu0 %v7198, 124
      %v7285 = vpop.permute.xlu0 %7284
      %7286 = vrot.lane.b32.xlu0 %v7199, 124
      %v7287 = vpop.permute.xlu0 %7286
      %7288 = vrot.lane.b32.xlu0 %v7200, 124
      %v7289 = vpop.permute.xlu0 %7288
      %7290 = vrot.lane.b32.xlu0 %v7201, 124
      %v7291 = vpop.permute.xlu0 %7290
      %7292 = vrot.lane.b32.xlu0 %v7202, 124
      %v7293 = vpop.permute.xlu0 %7292
      %7294 = vrot.lane.b32.xlu0 %v7203, 124
      %v7295 = vpop.permute.xlu0 %7294
      %7296 = vrot.lane.b32.xlu0 %v7204, 124
      %v7297 = vpop.permute.xlu0 %7296
      %7298 = vrot.lane.b32.xlu0 %v7205, 124
      %v7299 = vpop.permute.xlu0 %7298
      %7300 = vrot.lane.b32.xlu0 %v7206, 124
      %v7301 = vpop.permute.xlu0 %7300
      %7302 = vrot.lane.b32.xlu0 %v7207, 124
      %v7303 = vpop.permute.xlu0 %7302
      %7336 = vst.msk [vmem:[%s278] sm:$0xff] %vm5054, %v7241
      %7337 = vst.msk [vmem:[%s278 + $0x8] sm:$0xff] %vm5054, %v7243
      %7338 = vst.msk [vmem:[%s278 + $0x10] sm:$0xff] %vm5054, %v7245
      %7339 = vst.msk [vmem:[%s278 + $0x18] sm:$0xff] %vm5054, %v7247
      %7340 = vst.msk [vmem:[%s278 + $0x20] sm:$0xff] %vm5054, %v7249
      %7341 = vst.msk [vmem:[%s278 + $0x28] sm:$0xff] %vm5054, %v7251
      %7342 = vst.msk [vmem:[%s278 + $0x30] sm:$0xff] %vm5054, %v7253
      %7343 = vst.msk [vmem:[%s278 + $0x38] sm:$0xff] %vm5054, %v7255
      %7344 = vst.msk [vmem:[%s278 + $0x40] sm:$0xff] %vm5054, %v7257
      %7345 = vst.msk [vmem:[%s278 + $0x48] sm:$0xff] %vm5054, %v7259
      %7346 = vst.msk [vmem:[%s278 + $0x50] sm:$0xff] %vm5054, %v7261
      %7347 = vst.msk [vmem:[%s278 + $0x58] sm:$0xff] %vm5054, %v7263
      %7348 = vst.msk [vmem:[%s278 + $0x60] sm:$0xff] %vm5054, %v7265
      %7349 = vst.msk [vmem:[%s278 + $0x68] sm:$0xff] %vm5054, %v7267
      %7350 = vst.msk [vmem:[%s278 + $0x70] sm:$0xff] %vm5054, %v7269
      %7351 = vst.msk [vmem:[%s278 + $0x78] sm:$0xff] %vm5054, %v7271
      %7352 = vst.msk [vmem:[%s278 + $0x80] sm:$0xff] %vm5054, %v7273
      %7353 = vst.msk [vmem:[%s278 + $0x88] sm:$0xff] %vm5054, %v7275
      %7354 = vst.msk [vmem:[%s278 + $0x90] sm:$0xff] %vm5054, %v7277
      %7355 = vst.msk [vmem:[%s278 + $0x98] sm:$0xff] %vm5054, %v7279
      %7356 = vst.msk [vmem:[%s278 + $0xa0] sm:$0xff] %vm5054, %v7281
      %7357 = vst.msk [vmem:[%s278 + $0xa8] sm:$0xff] %vm5054, %v7283
      %7358 = vst.msk [vmem:[%s278 + $0xb0] sm:$0xff] %vm5054, %v7285
      %7359 = vst.msk [vmem:[%s278 + $0xb8] sm:$0xff] %vm5054, %v7287
      %7360 = vst.msk [vmem:[%s278 + $0xc0] sm:$0xff] %vm5054, %v7289
      %7361 = vst.msk [vmem:[%s278 + $0xc8] sm:$0xff] %vm5054, %v7291
      %7362 = vst.msk [vmem:[%s278 + $0xd0] sm:$0xff] %vm5054, %v7293
      %7363 = vst.msk [vmem:[%s278 + $0xd8] sm:$0xff] %vm5054, %v7295
      %7364 = vst.msk [vmem:[%s278 + $0xe0] sm:$0xff] %vm5054, %v7297
      %7365 = vst.msk [vmem:[%s278 + $0xe8] sm:$0xff] %vm5054, %v7299
      %7366 = vst.msk [vmem:[%s278 + $0xf0] sm:$0xff] %vm5054, %v7301
      %7367 = vst.msk [vmem:[%s278 + $0xf8] sm:$0xff] %vm5054, %v7303
      %p7368 = scmp.lt.s32.totalorder %s18, 1
      %s7369 = scalar_select %p7368, %s18, 1
      %s7370 = smul.addr %s7369, 32
      %s7371 = smul.addr %s7370, 8
      %s7372 = scalar_lea.vmem %s7, %s7371
      // Predicated region
      $region49: #{tpu_custom_call.1} parent=47 // pred_check
        %p7373 = pneg %p188
      $region50: #{tpu_custom_call.1} parent=47 // pred_check_branch
        %7375 = sbr.rel (%p7373) target = $region52
      $region51: #{tpu_custom_call.1} parent=47 // pred_region
        _
      $region52: #{tpu_custom_call.1} parent=47 // pred_fallthru
        _
    $region48: #{tpu_custom_call.1} parent=5 // pred_fallthru
      _
    %p7376 = scmp.le.s32.totalorder 2, %s13
    // Predicated region
    $region53: #{tpu_custom_call.1} parent=5 // pred_check
      %p7377 = pneg %p7376
    $region54: #{tpu_custom_call.1} parent=5 // pred_check_branch
      %7379 = sbr.rel (%p7377) target = $region56
    $region55: #{tpu_custom_call.1} parent=5 // pred_region
      %s7380 = ssub.s32 %s13, 2
      // Predicated region
      $region57: #{tpu_custom_call.1} parent=55 // pred_check
        %p7381 = pneg %p194
      $region58: #{tpu_custom_call.1} parent=55 // pred_check_branch
        %7383 = sbr.rel (%p7381) target = $region60
      $region59: #{tpu_custom_call.1} parent=55 // pred_region
        %p7384 = scmp.lt.s32.totalorder %s19, 1
        %s7385 = scalar_select %p7384, %s19, 1
        %s7386 = smul.addr %s7385, 32
        %s7387 = smul.addr %s7386, 8
        %s7388 = scalar_lea.vmem %s7, %s7387
      $region60: #{tpu_custom_call.1} parent=55 // pred_fallthru
        _
    $region56: #{tpu_custom_call.1} parent=5 // pred_fallthru
      _
  $region6: #{tpu_custom_call.1} parent=0 // loop_footer
    %s17 = sadd.s32 1, %s13
  $region7: #{tpu_custom_call.1} parent=0 // loop_footer_branch
    %12 = sbr.rel target = $region3
  $region8: #{tpu_custom_call.1} parent=0 // loop_exit
    _

</llo_original>
